<compile_context>
chip_gen: v6e
topology: v6e:2x2x1
jax: 0.10.0
libtpu: 0.0.40
codegen_flags: <defaults>
</compile_context>

<pallas_src>
import jax
import jax.numpy as jnp
import numpy as np
from jax.experimental import pallas as pl
from jax.experimental.pallas import tpu as pltpu


# ----------------------------- host-side helpers ------------------------------

def _flatten_conv_weight(w):
    """(C_out, C_in, K, K) PyTorch layout -> (C_out, K*K*C_in)."""
    C_out, C_in, K, _ = w.shape
    return jnp.transpose(w, (0, 2, 3, 1)).reshape(C_out, K * K * C_in)


def _valid_masks(H, W, K):
    """(K*K, H*W) 0/1 f32 zero-padding validity mask for each conv tap."""
    p = (K - 1) // 2
    idx = np.arange(H * W)
    hh, ww = idx // W, idx % W
    rows = []
    for ky in range(K):
        for kx in range(K):
            dy, dx = ky - p, kx - p
            rows.append(((hh + dy >= 0) & (hh + dy < H) &
                         (ww + dx >= 0) & (ww + dx < W)).astype(np.float32))
    return jnp.asarray(np.stack(rows, axis=0))


def _group_onehot(C, group_size):
    """(C, C) 0/1 f32 same-group matrix (group reduce + broadcast as one matmul)."""
    g = np.arange(C) // group_size
    return jnp.asarray((g[:, None] == g[None, :]).astype(np.float32))


def _pick_images_per_step(B, HW, target_lanes=2048):
    """Images per grid step: fatten the matmul lane axis, keep >= 2 grid steps."""
    cap = max(1, target_lanes // HW)
    if B >= 2:
        cap = min(cap, B // 2)   # v7x: keep >= 2 steps so both TensorCores get work
    tb = 1
    for d in range(1, B + 1):
        if B % d == 0 and d <= cap:
            tb = d
    return tb


# --------------------------------- kernel -------------------------------------

def _make_residual_block_kernel(H, W, C_in, C_out, K, gs1, gs2, TB,
                                has_shortcut, mm_dtype):
    HW = H * W
    KK = K * K
    pad = (K - 1) // 2
    inv_n1 = 1.0 / float(gs1 * HW)
    inv_n2 = 1.0 / float(gs2 * HW)

    def group_norm(v, gmat, gamma, beta, inv_n, eps=1e-5):
        # v: (C, HW) f32; gmat: precomputed (C, C) same-group one-hot (resident
        # input shared by both norms -- no per-step iota/compare construction).
        s1 = jnp.sum(v, axis=1, keepdims=True)                          # (C, 1)
        mean = jnp.dot(gmat, s1, preferred_element_type=jnp.float32) * inv_n
        d = v - mean
        s2 = jnp.sum(d * d, axis=1, keepdims=True)                      # (C, 1)
        var = jnp.dot(gmat, s2, preferred_element_type=jnp.float32) * inv_n
        inv = jax.lax.rsqrt(var + eps)                                  # EUP rsqrt
        return d * (inv * gamma) + beta

    def write_taps(patch_ref, h, mask, img, C):
        # Scatter the K*K spatially shifted, zero-padded copies of h into the
        # shared patch scratch: rows [t*C, (t+1)*C), lanes [img*HW, (img+1)*HW).
        lane0 = img * HW
        for ky in range(K):
            dy = ky - pad
            for kx in range(K):
                dx = kx - pad
                t = ky * K + kx
                off = dy * W + dx
                # shifted[:, i] = h[:, (i + off) mod HW]; wrap-around positions
                # are exactly the ones the validity mask zeroes out.
                shifted = h if off == 0 else jnp.roll(h, -off, axis=1)
                if dy == 0 and dx == 0:
                    tap = shifted                         # centre mask == all-ones
                else:
                    tap = shifted * mask[t:t + 1, :]
                patch_ref[pl.ds(t * C, C), pl.ds(lane0, HW)] = tap.astype(mm_dtype)

    def kernel(*refs):
        if has_shortcut:
            (x_ref, mask_ref, g1m_ref, g2m_ref,
             g1w_ref, g1b_ref, w1_ref, b1_ref,
             g2w_ref, g2b_ref, w2_ref, b2_ref,
             sw_ref, sb_ref, o_ref, patch_ref) = refs
        else:
            (x_ref, mask_ref, g1m_ref, g2m_ref,
             g1w_ref, g1b_ref, w1_ref, b1_ref,
             g2w_ref, g2b_ref, w2_ref, b2_ref,
             o_ref, patch_ref) = refs

        mask = mask_ref[...]                  # (K*K, HW) resident, loaded once
        gmat1 = g1m_ref[...]
        gmat2 = g2m_ref[...]

        # Stage A: norm1 -> ReLU -> conv1 taps, per image, into the shared scratch.
        for t in range(TB):
            h = group_norm(x_ref[t], gmat1, g1w_ref[...], g1b_ref[...], inv_n1)
            h = jnp.maximum(h, 0.0)
            write_taps(patch_ref, h, mask, t, C_in)
        # conv1: one MXU matmul over all TB images (contraction depth K*K*C_in).
        y1 = jnp.dot(w1_ref[...], patch_ref[0:KK * C_in, :],
                     preferred_element_type=jnp.float32) + b1_ref[...]

        # Stage B: norm2 -> ReLU -> conv2 taps, reusing the same patch scratch.
        for t in range(TB):
            h = group_norm(y1[:, t * HW:(t + 1) * HW], gmat2,
                           g2w_ref[...], g2b_ref[...], inv_n2)
            h = jnp.maximum(h, 0.0)
            write_taps(patch_ref, h, mask, t, C_out)
        y2 = jnp.dot(w2_ref[...], patch_ref[0:KK * C_out, :],
                     preferred_element_type=jnp.float32) + b2_ref[...]

        # Stage C: shortcut (identity or 1x1 conv) + residual add; lane-dense writes.
        for t in range(TB):
            if has_shortcut:
                sc = jnp.dot(sw_ref[...], x_ref[t].astype(mm_dtype),
                             preferred_element_type=jnp.float32) + sb_ref[...]
            else:
                sc = x_ref[t]
            o_ref[t] = (y2[:, t * HW:(t + 1) * HW] + sc).astype(o_ref.dtype)

    return kernel


# -------------------------------- wrapper --------------------------------------

def residual_block(x, params, matmul_dtype=jnp.bfloat16):
    """Forward pass of ResidualBlock (stride 1).  x: (B, C_in, H, W) NCHW."""
    B, C_in, H, W = x.shape
    w1 = params["conv1_w"]
    C_out, _, K, _ = w1.shape
    assert C_in % 16 == 0 and C_out % 16 == 0, "GroupNorm uses C // 16 groups"
    HW = H * W
    assert HW % 128 == 0, "flattened pixel axis must be a multiple of 128 lanes"
    gs1 = C_in // (C_in // 16)       # channels per group (== 16)
    gs2 = C_out // (C_out // 16)
    has_shortcut = "shortcut_w" in params
    if not has_shortcut:
        assert C_in == C_out
    # TODO(synk): stride > 1 (strided convs + strided 1x1 shortcut) not implemented.
    # TODO(synk): at production sizes (C>=256, HW>=4096) the pixel axis should also
    # be lane-tiled inside the kernel so the (K*K*C, HW) patch scratch fits v7x VMEM.

    TB = _pick_images_per_step(B, HW)
    grid = (B // TB,)
    C_max = max(C_in, C_out)
    KK = K * K

    col = lambda v: jnp.asarray(v, jnp.float32).reshape(-1, 1)
    x_flat = x.reshape(B, C_in, HW)
    w1_k = _flatten_conv_weight(w1).astype(matmul_dtype)
    w2_k = _flatten_conv_weight(params["conv2_w"]).astype(matmul_dtype)
    masks = _valid_masks(H, W, K)
    gmat1 = _group_onehot(C_in, gs1)
    gmat2 = _group_onehot(C_out, gs2)

    inputs = [
        x_flat, masks, gmat1, gmat2,
        col(params["norm1_w"]), col(params["norm1_b"]),
        w1_k, col(params["conv1_b"]),
        col(params["norm2_w"]), col(params["norm2_b"]),
        w2_k, col(params["conv2_b"]),
    ]
    const_shapes = [
        (KK, HW), (C_in, C_in), (C_out, C_out),
        (C_in, 1), (C_in, 1),
        (C_out, KK * C_in), (C_out, 1),
        (C_out, 1), (C_out, 1),
        (C_out, KK * C_out), (C_out, 1),
    ]
    if has_shortcut:
        sw = _flatten_conv_weight(params["shortcut_w"]).astype(matmul_dtype)
        inputs += [sw, col(params["shortcut_b"])]
        const_shapes += [(C_out, C_in), (C_out, 1)]

    kernel = _make_residual_block_kernel(H, W, C_in, C_out, K, gs1, gs2, TB,
                                         has_shortcut, matmul_dtype)

    # VMEM budget: double-buffered activation blocks, resident params, the shared
    # patch scratch and f32 temporaries, with 1.5x headroom, capped at 80% of the
    # running generation's physical VMEM (128 MiB-class v5e/v6e, 64 MiB v7x).
    mmb = np.dtype(matmul_dtype).itemsize
    io_bytes = 2 * TB * (C_in + C_out) * HW * 4
    wt_bytes = 2 * ((C_out * KK * (C_in + C_out) + C_out * C_in) * mmb
                    + (KK * HW + C_in * C_in + C_out * C_out
                       + 2 * C_in + 5 * C_out) * 4)
    scratch_bytes = KK * C_max * TB * HW * mmb
    tmp_bytes = (2 * C_out * TB * HW + 4 * C_max * HW) * 4
    need = io_bytes + wt_bytes + scratch_bytes + tmp_bytes
    try:
        cap = int(getattr(pltpu.get_tpu_info(), "vmem_capacity_bytes", 64 << 20))
    except Exception:                       # no TPU info -> assume smallest (v7x)
        cap = 64 << 20
    vmem_limit = int(min(max(int(1.5 * need), 32 << 20), int(cap * 0.8)))

    def build_and_run(single_buffer_weights):
        def const_spec(shape):
            index_map = lambda b: (0,) * len(shape)
            if single_buffer_weights:
                return pl.BlockSpec(shape, index_map, pipeline_mode=pl.Buffered(1))
            return pl.BlockSpec(shape, index_map)

        in_specs = ([pl.BlockSpec((TB, C_in, HW), lambda b: (b, 0, 0))]
                    + [const_spec(s) for s in const_shapes])
        return pl.pallas_call(
            kernel,
            out_shape=jax.ShapeDtypeStruct((B, C_out, HW), x.dtype),
            grid_spec=pltpu.PrefetchScalarGridSpec(
                num_scalar_prefetch=0,
                grid=grid,
                in_specs=in_specs,
                out_specs=pl.BlockSpec((TB, C_out, HW), lambda b: (b, 0, 0)),
                scratch_shapes=[pltpu.VMEM((KK * C_max, TB * HW), matmul_dtype)],
            ),
            compiler_params=pltpu.CompilerParams(
                dimension_semantics=("parallel",),
                vmem_limit_bytes=vmem_limit,
            ),
        )(*inputs)

    try:
        out = build_and_run(single_buffer_weights=True)
    except Exception:
        # pipeline_mode / pl.Buffered(1) unsupported on this JAX: default buffering.
        out = build_and_run(single_buffer_weights=False)
    return out.reshape(B, C_out, H, W)


# --------------------------- pure-JAX reference --------------------------------

def residual_block_ref(x, params):
    eps = 1e-5

    def group_norm(v, gamma, beta):
        B, C, H, W = v.shape
        G = C // 16
        vg = v.reshape(B, G, C // G, H, W)
        mu = vg.mean(axis=(2, 3, 4), keepdims=True)
        var = ((vg - mu) ** 2).mean(axis=(2, 3, 4), keepdims=True)
        vg = (vg - mu) / jnp.sqrt(var + eps)
        return (vg.reshape(B, C, H, W) * gamma.reshape(1, C, 1, 1)
                + beta.reshape(1, C, 1, 1))

    def conv(v, w, b):
        k = w.shape[-1]
        p = (k - 1) // 2
        out = jax.lax.conv_general_dilated(
            v, w, window_strides=(1, 1), padding=((p, p), (p, p)),
            dimension_numbers=("NCHW", "OIHW", "NCHW"),
            precision=jax.lax.Precision.HIGHEST)
        return out + b.reshape(1, -1, 1, 1)

    shortcut = (conv(x, params["shortcut_w"], params["shortcut_b"])
                if "shortcut_w" in params else x)
    h = group_norm(x, params["norm1_w"], params["norm1_b"])
    h = jax.nn.relu(h)
    h = conv(h, params["conv1_w"], params["conv1_b"])
    h = group_norm(h, params["norm2_w"], params["norm2_b"])
    h = jax.nn.relu(h)
    h = conv(h, params["conv2_w"], params["conv2_b"])
    return h + shortcut


# ----------------------------------- main ---------------------------------------

if __name__ == "__main__":
    B, C_in, C_out, H, W, K = 2, 32, 64, 16, 16, 3

    ks = jax.random.split(jax.random.PRNGKey(0), 11)
    params = {
        "norm1_w": 1.0 + 0.1 * jax.random.normal(ks[0], (C_in,), jnp.float32),
        "norm1_b": 0.05 * jax.random.normal(ks[1], (C_in,), jnp.float32),
        "conv1_w": 0.05 * jax.random.normal(ks[2], (C_out, C_in, K, K), jnp.float32),
        "conv1_b": 0.02 * jax.random.normal(ks[3], (C_out,), jnp.float32),
        "norm2_w": 1.0 + 0.1 * jax.random.normal(ks[4], (C_out,), jnp.float32),
        "norm2_b": 0.05 * jax.random.normal(ks[5], (C_out,), jnp.float32),
        "conv2_w": 0.05 * jax.random.normal(ks[6], (C_out, C_out, K, K), jnp.float32),
        "conv2_b": 0.02 * jax.random.normal(ks[7], (C_out,), jnp.float32),
        # in_channels != out_channels -> 1x1 conv shortcut, as in the module
        "shortcut_w": 0.1 * jax.random.normal(ks[8], (C_out, C_in, 1, 1), jnp.float32),
        "shortcut_b": 0.02 * jax.random.normal(ks[9], (C_out,), jnp.float32),
    }
    x = jax.random.normal(ks[10], (B, C_in, H, W), jnp.float32)

    ref = residual_block_ref(x, params)

    # Strict-precision path (f32 MXU operands) must match the module tightly.
    out_f32 = jax.block_until_ready(
        residual_block(x, params, matmul_dtype=jnp.float32))
    assert out_f32.shape == (B, C_out, H, W)
    err_f32 = float(jnp.max(jnp.abs(out_f32 - ref)))
    assert jnp.allclose(out_f32, ref, atol=5e-4, rtol=5e-4), (
        f"f32 path mismatch vs reference (max abs err {err_f32:.3e})")

    # Default performance path: bf16 conv-matmul operands, f32 accumulation.
    out_bf16 = jax.block_until_ready(residual_block(x, params))
    err_bf16 = float(jnp.max(jnp.abs(out_bf16 - ref)))
    assert jnp.allclose(out_bf16, ref, atol=5e-2, rtol=5e-2), (
        f"bf16 path mismatch vs reference (max abs err {err_bf16:.3e})")

    print("KERNEL_OK")
</pallas_src>

<mosaic_0001>
module attributes {stable_mosaic.version = 11 : i64} {
  func.func @kernel(%arg0: i32, %arg1: memref<1x32x256xf32, #tpu.memory_space<vmem>>, %arg2: memref<9x256xf32, #tpu.memory_space<vmem>>, %arg3: memref<32x32xf32, #tpu.memory_space<vmem>>, %arg4: memref<64x64xf32, #tpu.memory_space<vmem>>, %arg5: memref<32x1xf32, #tpu.memory_space<vmem>>, %arg6: memref<32x1xf32, #tpu.memory_space<vmem>>, %arg7: memref<64x288xf32, #tpu.memory_space<vmem>>, %arg8: memref<64x1xf32, #tpu.memory_space<vmem>>, %arg9: memref<64x1xf32, #tpu.memory_space<vmem>>, %arg10: memref<64x1xf32, #tpu.memory_space<vmem>>, %arg11: memref<64x576xf32, #tpu.memory_space<vmem>>, %arg12: memref<64x1xf32, #tpu.memory_space<vmem>>, %arg13: memref<64x32xf32, #tpu.memory_space<vmem>>, %arg14: memref<64x1xf32, #tpu.memory_space<vmem>>, %arg15: memref<1x64x256xf32, #tpu.memory_space<vmem>>, %arg16: memref<576x256xf32, #tpu.memory_space<vmem>>) attributes {dimension_semantics = [#tpu.dimension_semantics<parallel>], iteration_bounds = array<i64: 2>, scalar_prefetch = 0 : i64, scratch_operands = 1 : i64, tpu.core_type = #tpu.core_type<tc>, window_params = [{transform_indices = @transform_0, window_bounds = array<i64: 1, 32, 256>}, {pipeline_mode = #tpu.pipeline_mode<synchronous>, transform_indices = @transform_1, window_bounds = array<i64: 9, 256>}, {pipeline_mode = #tpu.pipeline_mode<synchronous>, transform_indices = @transform_2, window_bounds = array<i64: 32, 32>}, {pipeline_mode = #tpu.pipeline_mode<synchronous>, transform_indices = @transform_3, window_bounds = array<i64: 64, 64>}, {pipeline_mode = #tpu.pipeline_mode<synchronous>, transform_indices = @transform_4, window_bounds = array<i64: 32, 1>}, {pipeline_mode = #tpu.pipeline_mode<synchronous>, transform_indices = @transform_5, window_bounds = array<i64: 32, 1>}, {pipeline_mode = #tpu.pipeline_mode<synchronous>, transform_indices = @transform_6, window_bounds = array<i64: 64, 288>}, {pipeline_mode = #tpu.pipeline_mode<synchronous>, transform_indices = @transform_7, window_bounds = array<i64: 64, 1>}, {pipeline_mode = #tpu.pipeline_mode<synchronous>, transform_indices = @transform_8, window_bounds = array<i64: 64, 1>}, {pipeline_mode = #tpu.pipeline_mode<synchronous>, transform_indices = @transform_9, window_bounds = array<i64: 64, 1>}, {pipeline_mode = #tpu.pipeline_mode<synchronous>, transform_indices = @transform_10, window_bounds = array<i64: 64, 576>}, {pipeline_mode = #tpu.pipeline_mode<synchronous>, transform_indices = @transform_11, window_bounds = array<i64: 64, 1>}, {pipeline_mode = #tpu.pipeline_mode<synchronous>, transform_indices = @transform_12, window_bounds = array<i64: 64, 32>}, {pipeline_mode = #tpu.pipeline_mode<synchronous>, transform_indices = @transform_13, window_bounds = array<i64: 64, 1>}, {transform_indices = @transform_14, window_bounds = array<i64: 1, 64, 256>}]} {
    %c0 = arith.constant 0 : index
    %c0_0 = arith.constant 0 : index
    %0 = vector.load %arg2[%c0, %c0_0] : memref<9x256xf32, #tpu.memory_space<vmem>>, vector<9x256xf32>
    %c0_1 = arith.constant 0 : index
    %c0_2 = arith.constant 0 : index
    %1 = vector.load %arg3[%c0_1, %c0_2] : memref<32x32xf32, #tpu.memory_space<vmem>>, vector<32x32xf32>
    %c0_3 = arith.constant 0 : index
    %c0_4 = arith.constant 0 : index
    %2 = vector.load %arg4[%c0_3, %c0_4] : memref<64x64xf32, #tpu.memory_space<vmem>>, vector<64x64xf32>
    %c0_5 = arith.constant 0 : index
    %c0_6 = arith.constant 0 : index
    %c0_7 = arith.constant 0 : index
    %3 = vector.load %arg1[%c0_5, %c0_6, %c0_7] : memref<1x32x256xf32, #tpu.memory_space<vmem>>, vector<1x32x256xf32>
    %4 = vector.shape_cast %3 : vector<1x32x256xf32> to vector<32x256xf32>
    %c0_8 = arith.constant 0 : index
    %c0_9 = arith.constant 0 : index
    %5 = vector.load %arg5[%c0_8, %c0_9] : memref<32x1xf32, #tpu.memory_space<vmem>>, vector<32x1xf32>
    %c0_10 = arith.constant 0 : index
    %c0_11 = arith.constant 0 : index
    %6 = vector.load %arg6[%c0_10, %c0_11] : memref<32x1xf32, #tpu.memory_space<vmem>>, vector<32x1xf32>
    %cst = arith.constant dense<0.000000e+00> : vector<32xf32>
    %7 = vector.multi_reduction <add>, %4, %cst [1] : vector<32x256xf32> to vector<32xf32>
    %8 = vector.shape_cast %7 : vector<32xf32> to vector<32x1xf32>
    %cst_12 = arith.constant dense<0.000000e+00> : vector<32x1xf32>
    %9 = tpu.matmul %1, %8, %cst_12 {dimension_numbers = #tpu.dot_dimension_numbers<[1], [0], [0], [1], [0, 0, 1, 1], [], []>} : vector<32x32xf32>, vector<32x1xf32>, vector<32x1xf32> -> vector<32x1xf32>
    %cst_13 = arith.constant 2.44140625E-4 : f32
    %10 = vector.broadcast %cst_13 : f32 to vector<32x1xf32>
    %11 = arith.mulf %9, %10 : vector<32x1xf32>
    %12 = vector.broadcast %11 : vector<32x1xf32> to vector<32x256xf32>
    %13 = arith.subf %4, %12 : vector<32x256xf32>
    %14 = arith.mulf %13, %13 : vector<32x256xf32>
    %cst_14 = arith.constant dense<0.000000e+00> : vector<32xf32>
    %15 = vector.multi_reduction <add>, %14, %cst_14 [1] : vector<32x256xf32> to vector<32xf32>
    %16 = vector.shape_cast %15 : vector<32xf32> to vector<32x1xf32>
    %cst_15 = arith.constant dense<0.000000e+00> : vector<32x1xf32>
    %17 = tpu.matmul %1, %16, %cst_15 {dimension_numbers = #tpu.dot_dimension_numbers<[1], [0], [0], [1], [0, 0, 1, 1], [], []>} : vector<32x32xf32>, vector<32x1xf32>, vector<32x1xf32> -> vector<32x1xf32>
    %cst_16 = arith.constant 2.44140625E-4 : f32
    %18 = vector.broadcast %cst_16 : f32 to vector<32x1xf32>
    %19 = arith.mulf %17, %18 : vector<32x1xf32>
    %cst_17 = arith.constant 9.99999974E-6 : f32
    %20 = vector.broadcast %cst_17 : f32 to vector<32x1xf32>
    %21 = arith.addf %19, %20 : vector<32x1xf32>
    %22 = math.rsqrt %21 : vector<32x1xf32>
    %23 = arith.mulf %22, %5 : vector<32x1xf32>
    %24 = vector.broadcast %23 : vector<32x1xf32> to vector<32x256xf32>
    %25 = arith.mulf %13, %24 : vector<32x256xf32>
    %26 = vector.broadcast %6 : vector<32x1xf32> to vector<32x256xf32>
    %27 = arith.addf %25, %26 : vector<32x256xf32>
    %cst_18 = arith.constant 0.000000e+00 : f32
    %28 = vector.broadcast %cst_18 : f32 to vector<32x256xf32>
    %29 = arith.maximumf %27, %28 : vector<32x256xf32>
    %30 = vector.extract_strided_slice %29 {offsets = [0, 239], sizes = [32, 17], strides = [1, 1]} : vector<32x256xf32> to vector<32x17xf32>
    %31 = vector.extract_strided_slice %29 {offsets = [0, 0], sizes = [32, 239], strides = [1, 1]} : vector<32x256xf32> to vector<32x239xf32>
    %32 = tpu.concatenate %30, %31 in 1 : vector<32x17xf32>, vector<32x239xf32> -> vector<32x256xf32>
    %33 = vector.extract_strided_slice %0 {offsets = [0, 0], sizes = [1, 256], strides = [1, 1]} : vector<9x256xf32> to vector<1x256xf32>
    %34 = vector.broadcast %33 : vector<1x256xf32> to vector<32x256xf32>
    %35 = arith.mulf %32, %34 : vector<32x256xf32>
    %c0_19 = arith.constant 0 : index
    %c0_20 = arith.constant 0 : index
    %36 = vector.load %arg16[%c0_19, %c0_20] : memref<576x256xf32, #tpu.memory_space<vmem>>, vector<32x256xf32>
    tpu.vector_store %arg16[%c0_19, %c0_20], %35 {strides = array<i32>} : memref<576x256xf32, #tpu.memory_space<vmem>>, vector<32x256xf32>,
    %37 = vector.extract_strided_slice %29 {offsets = [0, 240], sizes = [32, 16], strides = [1, 1]} : vector<32x256xf32> to vector<32x16xf32>
    %38 = vector.extract_strided_slice %29 {offsets = [0, 0], sizes = [32, 240], strides = [1, 1]} : vector<32x256xf32> to vector<32x240xf32>
    %39 = tpu.concatenate %37, %38 in 1 : vector<32x16xf32>, vector<32x240xf32> -> vector<32x256xf32>
    %40 = vector.extract_strided_slice %0 {offsets = [1, 0], sizes = [1, 256], strides = [1, 1]} : vector<9x256xf32> to vector<1x256xf32>
    %41 = vector.broadcast %40 : vector<1x256xf32> to vector<32x256xf32>
    %42 = arith.mulf %39, %41 : vector<32x256xf32>
    %c32 = arith.constant 32 : index
    %c0_21 = arith.constant 0 : index
    %43 = vector.load %arg16[%c32, %c0_21] : memref<576x256xf32, #tpu.memory_space<vmem>>, vector<32x256xf32>
    tpu.vector_store %arg16[%c32, %c0_21], %42 {strides = array<i32>} : memref<576x256xf32, #tpu.memory_space<vmem>>, vector<32x256xf32>,
    %44 = vector.extract_strided_slice %29 {offsets = [0, 241], sizes = [32, 15], strides = [1, 1]} : vector<32x256xf32> to vector<32x15xf32>
    %45 = vector.extract_strided_slice %29 {offsets = [0, 0], sizes = [32, 241], strides = [1, 1]} : vector<32x256xf32> to vector<32x241xf32>
    %46 = tpu.concatenate %44, %45 in 1 : vector<32x15xf32>, vector<32x241xf32> -> vector<32x256xf32>
    %47 = vector.extract_strided_slice %0 {offsets = [2, 0], sizes = [1, 256], strides = [1, 1]} : vector<9x256xf32> to vector<1x256xf32>
    %48 = vector.broadcast %47 : vector<1x256xf32> to vector<32x256xf32>
    %49 = arith.mulf %46, %48 : vector<32x256xf32>
    %c64 = arith.constant 64 : index
    %c0_22 = arith.constant 0 : index
    %50 = vector.load %arg16[%c64, %c0_22] : memref<576x256xf32, #tpu.memory_space<vmem>>, vector<32x256xf32>
    tpu.vector_store %arg16[%c64, %c0_22], %49 {strides = array<i32>} : memref<576x256xf32, #tpu.memory_space<vmem>>, vector<32x256xf32>,
    %51 = vector.extract_strided_slice %29 {offsets = [0, 255], sizes = [32, 1], strides = [1, 1]} : vector<32x256xf32> to vector<32x1xf32>
    %52 = vector.extract_strided_slice %29 {offsets = [0, 0], sizes = [32, 255], strides = [1, 1]} : vector<32x256xf32> to vector<32x255xf32>
    %53 = tpu.concatenate %51, %52 in 1 : vector<32x1xf32>, vector<32x255xf32> -> vector<32x256xf32>
    %54 = vector.extract_strided_slice %0 {offsets = [3, 0], sizes = [1, 256], strides = [1, 1]} : vector<9x256xf32> to vector<1x256xf32>
    %55 = vector.broadcast %54 : vector<1x256xf32> to vector<32x256xf32>
    %56 = arith.mulf %53, %55 : vector<32x256xf32>
    %c96 = arith.constant 96 : index
    %c0_23 = arith.constant 0 : index
    %57 = vector.load %arg16[%c96, %c0_23] : memref<576x256xf32, #tpu.memory_space<vmem>>, vector<32x256xf32>
    tpu.vector_store %arg16[%c96, %c0_23], %56 {strides = array<i32>} : memref<576x256xf32, #tpu.memory_space<vmem>>, vector<32x256xf32>,
    %c128 = arith.constant 128 : index
    %c0_24 = arith.constant 0 : index
    %58 = vector.load %arg16[%c128, %c0_24] : memref<576x256xf32, #tpu.memory_space<vmem>>, vector<32x256xf32>
    tpu.vector_store %arg16[%c128, %c0_24], %29 {strides = array<i32>} : memref<576x256xf32, #tpu.memory_space<vmem>>, vector<32x256xf32>,
    %59 = vector.extract_strided_slice %29 {offsets = [0, 1], sizes = [32, 255], strides = [1, 1]} : vector<32x256xf32> to vector<32x255xf32>
    %60 = vector.extract_strided_slice %29 {offsets = [0, 0], sizes = [32, 1], strides = [1, 1]} : vector<32x256xf32> to vector<32x1xf32>
    %61 = tpu.concatenate %59, %60 in 1 : vector<32x255xf32>, vector<32x1xf32> -> vector<32x256xf32>
    %62 = vector.extract_strided_slice %0 {offsets = [5, 0], sizes = [1, 256], strides = [1, 1]} : vector<9x256xf32> to vector<1x256xf32>
    %63 = vector.broadcast %62 : vector<1x256xf32> to vector<32x256xf32>
    %64 = arith.mulf %61, %63 : vector<32x256xf32>
    %c160 = arith.constant 160 : index
    %c0_25 = arith.constant 0 : index
    %65 = vector.load %arg16[%c160, %c0_25] : memref<576x256xf32, #tpu.memory_space<vmem>>, vector<32x256xf32>
    tpu.vector_store %arg16[%c160, %c0_25], %64 {strides = array<i32>} : memref<576x256xf32, #tpu.memory_space<vmem>>, vector<32x256xf32>,
    %66 = vector.extract_strided_slice %29 {offsets = [0, 15], sizes = [32, 241], strides = [1, 1]} : vector<32x256xf32> to vector<32x241xf32>
    %67 = vector.extract_strided_slice %29 {offsets = [0, 0], sizes = [32, 15], strides = [1, 1]} : vector<32x256xf32> to vector<32x15xf32>
    %68 = tpu.concatenate %66, %67 in 1 : vector<32x241xf32>, vector<32x15xf32> -> vector<32x256xf32>
    %69 = vector.extract_strided_slice %0 {offsets = [6, 0], sizes = [1, 256], strides = [1, 1]} : vector<9x256xf32> to vector<1x256xf32>
    %70 = vector.broadcast %69 : vector<1x256xf32> to vector<32x256xf32>
    %71 = arith.mulf %68, %70 : vector<32x256xf32>
    %c192 = arith.constant 192 : index
    %c0_26 = arith.constant 0 : index
    %72 = vector.load %arg16[%c192, %c0_26] : memref<576x256xf32, #tpu.memory_space<vmem>>, vector<32x256xf32>
    tpu.vector_store %arg16[%c192, %c0_26], %71 {strides = array<i32>} : memref<576x256xf32, #tpu.memory_space<vmem>>, vector<32x256xf32>,
    %73 = vector.extract_strided_slice %29 {offsets = [0, 16], sizes = [32, 240], strides = [1, 1]} : vector<32x256xf32> to vector<32x240xf32>
    %74 = vector.extract_strided_slice %29 {offsets = [0, 0], sizes = [32, 16], strides = [1, 1]} : vector<32x256xf32> to vector<32x16xf32>
    %75 = tpu.concatenate %73, %74 in 1 : vector<32x240xf32>, vector<32x16xf32> -> vector<32x256xf32>
    %76 = vector.extract_strided_slice %0 {offsets = [7, 0], sizes = [1, 256], strides = [1, 1]} : vector<9x256xf32> to vector<1x256xf32>
    %77 = vector.broadcast %76 : vector<1x256xf32> to vector<32x256xf32>
    %78 = arith.mulf %75, %77 : vector<32x256xf32>
    %c224 = arith.constant 224 : index
    %c0_27 = arith.constant 0 : index
    %79 = vector.load %arg16[%c224, %c0_27] : memref<576x256xf32, #tpu.memory_space<vmem>>, vector<32x256xf32>
    tpu.vector_store %arg16[%c224, %c0_27], %78 {strides = array<i32>} : memref<576x256xf32, #tpu.memory_space<vmem>>, vector<32x256xf32>,
    %80 = vector.extract_strided_slice %29 {offsets = [0, 17], sizes = [32, 239], strides = [1, 1]} : vector<32x256xf32> to vector<32x239xf32>
    %81 = vector.extract_strided_slice %29 {offsets = [0, 0], sizes = [32, 17], strides = [1, 1]} : vector<32x256xf32> to vector<32x17xf32>
    %82 = tpu.concatenate %80, %81 in 1 : vector<32x239xf32>, vector<32x17xf32> -> vector<32x256xf32>
    %83 = vector.extract_strided_slice %0 {offsets = [8, 0], sizes = [1, 256], strides = [1, 1]} : vector<9x256xf32> to vector<1x256xf32>
    %84 = vector.broadcast %83 : vector<1x256xf32> to vector<32x256xf32>
    %85 = arith.mulf %82, %84 : vector<32x256xf32>
    %c256 = arith.constant 256 : index
    %c0_28 = arith.constant 0 : index
    %86 = vector.load %arg16[%c256, %c0_28] : memref<576x256xf32, #tpu.memory_space<vmem>>, vector<32x256xf32>
    tpu.vector_store %arg16[%c256, %c0_28], %85 {strides = array<i32>} : memref<576x256xf32, #tpu.memory_space<vmem>>, vector<32x256xf32>,
    %c0_29 = arith.constant 0 : index
    %c0_30 = arith.constant 0 : index
    %87 = vector.load %arg7[%c0_29, %c0_30] : memref<64x288xf32, #tpu.memory_space<vmem>>, vector<64x288xf32>
    %c0_31 = arith.constant 0 : index
    %c0_32 = arith.constant 0 : index
    %88 = vector.load %arg16[%c0_31, %c0_32] : memref<576x256xf32, #tpu.memory_space<vmem>>, vector<288x256xf32>
    %cst_33 = arith.constant dense<0.000000e+00> : vector<64x256xf32>
    %89 = tpu.matmul %87, %88, %cst_33 {dimension_numbers = #tpu.dot_dimension_numbers<[1], [0], [0], [1], [0, 0, 1, 1], [], []>} : vector<64x288xf32>, vector<288x256xf32>, vector<64x256xf32> -> vector<64x256xf32>
    %c0_34 = arith.constant 0 : index
    %c0_35 = arith.constant 0 : index
    %90 = vector.load %arg8[%c0_34, %c0_35] : memref<64x1xf32, #tpu.memory_space<vmem>>, vector<64x1xf32>
    %91 = vector.broadcast %90 : vector<64x1xf32> to vector<64x256xf32>
    %92 = arith.addf %89, %91 : vector<64x256xf32>
    %c0_36 = arith.constant 0 : index
    %c0_37 = arith.constant 0 : index
    %93 = vector.load %arg9[%c0_36, %c0_37] : memref<64x1xf32, #tpu.memory_space<vmem>>, vector<64x1xf32>
    %c0_38 = arith.constant 0 : index
    %c0_39 = arith.constant 0 : index
    %94 = vector.load %arg10[%c0_38, %c0_39] : memref<64x1xf32, #tpu.memory_space<vmem>>, vector<64x1xf32>
    %cst_40 = arith.constant dense<0.000000e+00> : vector<64xf32>
    %95 = vector.multi_reduction <add>, %92, %cst_40 [1] : vector<64x256xf32> to vector<64xf32>
    %96 = vector.shape_cast %95 : vector<64xf32> to vector<64x1xf32>
    %cst_41 = arith.constant dense<0.000000e+00> : vector<64x1xf32>
    %97 = tpu.matmul %2, %96, %cst_41 {dimension_numbers = #tpu.dot_dimension_numbers<[1], [0], [0], [1], [0, 0, 1, 1], [], []>} : vector<64x64xf32>, vector<64x1xf32>, vector<64x1xf32> -> vector<64x1xf32>
    %cst_42 = arith.constant 2.44140625E-4 : f32
    %98 = vector.broadcast %cst_42 : f32 to vector<64x1xf32>
    %99 = arith.mulf %97, %98 : vector<64x1xf32>
    %100 = vector.broadcast %99 : vector<64x1xf32> to vector<64x256xf32>
    %101 = arith.subf %92, %100 : vector<64x256xf32>
    %102 = arith.mulf %101, %101 : vector<64x256xf32>
    %cst_43 = arith.constant dense<0.000000e+00> : vector<64xf32>
    %103 = vector.multi_reduction <add>, %102, %cst_43 [1] : vector<64x256xf32> to vector<64xf32>
    %104 = vector.shape_cast %103 : vector<64xf32> to vector<64x1xf32>
    %cst_44 = arith.constant dense<0.000000e+00> : vector<64x1xf32>
    %105 = tpu.matmul %2, %104, %cst_44 {dimension_numbers = #tpu.dot_dimension_numbers<[1], [0], [0], [1], [0, 0, 1, 1], [], []>} : vector<64x64xf32>, vector<64x1xf32>, vector<64x1xf32> -> vector<64x1xf32>
    %cst_45 = arith.constant 2.44140625E-4 : f32
    %106 = vector.broadcast %cst_45 : f32 to vector<64x1xf32>
    %107 = arith.mulf %105, %106 : vector<64x1xf32>
    %cst_46 = arith.constant 9.99999974E-6 : f32
    %108 = vector.broadcast %cst_46 : f32 to vector<64x1xf32>
    %109 = arith.addf %107, %108 : vector<64x1xf32>
    %110 = math.rsqrt %109 : vector<64x1xf32>
    %111 = arith.mulf %110, %93 : vector<64x1xf32>
    %112 = vector.broadcast %111 : vector<64x1xf32> to vector<64x256xf32>
    %113 = arith.mulf %101, %112 : vector<64x256xf32>
    %114 = vector.broadcast %94 : vector<64x1xf32> to vector<64x256xf32>
    %115 = arith.addf %113, %114 : vector<64x256xf32>
    %cst_47 = arith.constant 0.000000e+00 : f32
    %116 = vector.broadcast %cst_47 : f32 to vector<64x256xf32>
    %117 = arith.maximumf %115, %116 : vector<64x256xf32>
    %118 = vector.extract_strided_slice %117 {offsets = [0, 239], sizes = [64, 17], strides = [1, 1]} : vector<64x256xf32> to vector<64x17xf32>
    %119 = vector.extract_strided_slice %117 {offsets = [0, 0], sizes = [64, 239], strides = [1, 1]} : vector<64x256xf32> to vector<64x239xf32>
    %120 = tpu.concatenate %118, %119 in 1 : vector<64x17xf32>, vector<64x239xf32> -> vector<64x256xf32>
    %121 = vector.extract_strided_slice %0 {offsets = [0, 0], sizes = [1, 256], strides = [1, 1]} : vector<9x256xf32> to vector<1x256xf32>
    %122 = vector.broadcast %121 : vector<1x256xf32> to vector<64x256xf32>
    %123 = arith.mulf %120, %122 : vector<64x256xf32>
    %c0_48 = arith.constant 0 : index
    %c0_49 = arith.constant 0 : index
    %124 = vector.load %arg16[%c0_48, %c0_49] : memref<576x256xf32, #tpu.memory_space<vmem>>, vector<64x256xf32>
    tpu.vector_store %arg16[%c0_48, %c0_49], %123 {strides = array<i32>} : memref<576x256xf32, #tpu.memory_space<vmem>>, vector<64x256xf32>,
    %125 = vector.extract_strided_slice %117 {offsets = [0, 240], sizes = [64, 16], strides = [1, 1]} : vector<64x256xf32> to vector<64x16xf32>
    %126 = vector.extract_strided_slice %117 {offsets = [0, 0], sizes = [64, 240], strides = [1, 1]} : vector<64x256xf32> to vector<64x240xf32>
    %127 = tpu.concatenate %125, %126 in 1 : vector<64x16xf32>, vector<64x240xf32> -> vector<64x256xf32>
    %128 = vector.extract_strided_slice %0 {offsets = [1, 0], sizes = [1, 256], strides = [1, 1]} : vector<9x256xf32> to vector<1x256xf32>
    %129 = vector.broadcast %128 : vector<1x256xf32> to vector<64x256xf32>
    %130 = arith.mulf %127, %129 : vector<64x256xf32>
    %c64_50 = arith.constant 64 : index
    %c0_51 = arith.constant 0 : index
    %131 = vector.load %arg16[%c64_50, %c0_51] : memref<576x256xf32, #tpu.memory_space<vmem>>, vector<64x256xf32>
    tpu.vector_store %arg16[%c64_50, %c0_51], %130 {strides = array<i32>} : memref<576x256xf32, #tpu.memory_space<vmem>>, vector<64x256xf32>,
    %132 = vector.extract_strided_slice %117 {offsets = [0, 241], sizes = [64, 15], strides = [1, 1]} : vector<64x256xf32> to vector<64x15xf32>
    %133 = vector.extract_strided_slice %117 {offsets = [0, 0], sizes = [64, 241], strides = [1, 1]} : vector<64x256xf32> to vector<64x241xf32>
    %134 = tpu.concatenate %132, %133 in 1 : vector<64x15xf32>, vector<64x241xf32> -> vector<64x256xf32>
    %135 = vector.extract_strided_slice %0 {offsets = [2, 0], sizes = [1, 256], strides = [1, 1]} : vector<9x256xf32> to vector<1x256xf32>
    %136 = vector.broadcast %135 : vector<1x256xf32> to vector<64x256xf32>
    %137 = arith.mulf %134, %136 : vector<64x256xf32>
    %c128_52 = arith.constant 128 : index
    %c0_53 = arith.constant 0 : index
    %138 = vector.load %arg16[%c128_52, %c0_53] : memref<576x256xf32, #tpu.memory_space<vmem>>, vector<64x256xf32>
    tpu.vector_store %arg16[%c128_52, %c0_53], %137 {strides = array<i32>} : memref<576x256xf32, #tpu.memory_space<vmem>>, vector<64x256xf32>,
    %139 = vector.extract_strided_slice %117 {offsets = [0, 255], sizes = [64, 1], strides = [1, 1]} : vector<64x256xf32> to vector<64x1xf32>
    %140 = vector.extract_strided_slice %117 {offsets = [0, 0], sizes = [64, 255], strides = [1, 1]} : vector<64x256xf32> to vector<64x255xf32>
    %141 = tpu.concatenate %139, %140 in 1 : vector<64x1xf32>, vector<64x255xf32> -> vector<64x256xf32>
    %142 = vector.extract_strided_slice %0 {offsets = [3, 0], sizes = [1, 256], strides = [1, 1]} : vector<9x256xf32> to vector<1x256xf32>
    %143 = vector.broadcast %142 : vector<1x256xf32> to vector<64x256xf32>
    %144 = arith.mulf %141, %143 : vector<64x256xf32>
    %c192_54 = arith.constant 192 : index
    %c0_55 = arith.constant 0 : index
    %145 = vector.load %arg16[%c192_54, %c0_55] : memref<576x256xf32, #tpu.memory_space<vmem>>, vector<64x256xf32>
    tpu.vector_store %arg16[%c192_54, %c0_55], %144 {strides = array<i32>} : memref<576x256xf32, #tpu.memory_space<vmem>>, vector<64x256xf32>,
    %c256_56 = arith.constant 256 : index
    %c0_57 = arith.constant 0 : index
    %146 = vector.load %arg16[%c256_56, %c0_57] : memref<576x256xf32, #tpu.memory_space<vmem>>, vector<64x256xf32>
    tpu.vector_store %arg16[%c256_56, %c0_57], %117 {strides = array<i32>} : memref<576x256xf32, #tpu.memory_space<vmem>>, vector<64x256xf32>,
    %147 = vector.extract_strided_slice %117 {offsets = [0, 1], sizes = [64, 255], strides = [1, 1]} : vector<64x256xf32> to vector<64x255xf32>
    %148 = vector.extract_strided_slice %117 {offsets = [0, 0], sizes = [64, 1], strides = [1, 1]} : vector<64x256xf32> to vector<64x1xf32>
    %149 = tpu.concatenate %147, %148 in 1 : vector<64x255xf32>, vector<64x1xf32> -> vector<64x256xf32>
    %150 = vector.extract_strided_slice %0 {offsets = [5, 0], sizes = [1, 256], strides = [1, 1]} : vector<9x256xf32> to vector<1x256xf32>
    %151 = vector.broadcast %150 : vector<1x256xf32> to vector<64x256xf32>
    %152 = arith.mulf %149, %151 : vector<64x256xf32>
    %c320 = arith.constant 320 : index
    %c0_58 = arith.constant 0 : index
    %153 = vector.load %arg16[%c320, %c0_58] : memref<576x256xf32, #tpu.memory_space<vmem>>, vector<64x256xf32>
    tpu.vector_store %arg16[%c320, %c0_58], %152 {strides = array<i32>} : memref<576x256xf32, #tpu.memory_space<vmem>>, vector<64x256xf32>,
    %154 = vector.extract_strided_slice %117 {offsets = [0, 15], sizes = [64, 241], strides = [1, 1]} : vector<64x256xf32> to vector<64x241xf32>
    %155 = vector.extract_strided_slice %117 {offsets = [0, 0], sizes = [64, 15], strides = [1, 1]} : vector<64x256xf32> to vector<64x15xf32>
    %156 = tpu.concatenate %154, %155 in 1 : vector<64x241xf32>, vector<64x15xf32> -> vector<64x256xf32>
    %157 = vector.extract_strided_slice %0 {offsets = [6, 0], sizes = [1, 256], strides = [1, 1]} : vector<9x256xf32> to vector<1x256xf32>
    %158 = vector.broadcast %157 : vector<1x256xf32> to vector<64x256xf32>
    %159 = arith.mulf %156, %158 : vector<64x256xf32>
    %c384 = arith.constant 384 : index
    %c0_59 = arith.constant 0 : index
    %160 = vector.load %arg16[%c384, %c0_59] : memref<576x256xf32, #tpu.memory_space<vmem>>, vector<64x256xf32>
    tpu.vector_store %arg16[%c384, %c0_59], %159 {strides = array<i32>} : memref<576x256xf32, #tpu.memory_space<vmem>>, vector<64x256xf32>,
    %161 = vector.extract_strided_slice %117 {offsets = [0, 16], sizes = [64, 240], strides = [1, 1]} : vector<64x256xf32> to vector<64x240xf32>
    %162 = vector.extract_strided_slice %117 {offsets = [0, 0], sizes = [64, 16], strides = [1, 1]} : vector<64x256xf32> to vector<64x16xf32>
    %163 = tpu.concatenate %161, %162 in 1 : vector<64x240xf32>, vector<64x16xf32> -> vector<64x256xf32>
    %164 = vector.extract_strided_slice %0 {offsets = [7, 0], sizes = [1, 256], strides = [1, 1]} : vector<9x256xf32> to vector<1x256xf32>
    %165 = vector.broadcast %164 : vector<1x256xf32> to vector<64x256xf32>
    %166 = arith.mulf %163, %165 : vector<64x256xf32>
    %c448 = arith.constant 448 : index
    %c0_60 = arith.constant 0 : index
    %167 = vector.load %arg16[%c448, %c0_60] : memref<576x256xf32, #tpu.memory_space<vmem>>, vector<64x256xf32>
    tpu.vector_store %arg16[%c448, %c0_60], %166 {strides = array<i32>} : memref<576x256xf32, #tpu.memory_space<vmem>>, vector<64x256xf32>,
    %168 = vector.extract_strided_slice %117 {offsets = [0, 17], sizes = [64, 239], strides = [1, 1]} : vector<64x256xf32> to vector<64x239xf32>
    %169 = vector.extract_strided_slice %117 {offsets = [0, 0], sizes = [64, 17], strides = [1, 1]} : vector<64x256xf32> to vector<64x17xf32>
    %170 = tpu.concatenate %168, %169 in 1 : vector<64x239xf32>, vector<64x17xf32> -> vector<64x256xf32>
    %171 = vector.extract_strided_slice %0 {offsets = [8, 0], sizes = [1, 256], strides = [1, 1]} : vector<9x256xf32> to vector<1x256xf32>
    %172 = vector.broadcast %171 : vector<1x256xf32> to vector<64x256xf32>
    %173 = arith.mulf %170, %172 : vector<64x256xf32>
    %c512 = arith.constant 512 : index
    %c0_61 = arith.constant 0 : index
    %174 = vector.load %arg16[%c512, %c0_61] : memref<576x256xf32, #tpu.memory_space<vmem>>, vector<64x256xf32>
    tpu.vector_store %arg16[%c512, %c0_61], %173 {strides = array<i32>} : memref<576x256xf32, #tpu.memory_space<vmem>>, vector<64x256xf32>,
    %c0_62 = arith.constant 0 : index
    %c0_63 = arith.constant 0 : index
    %175 = vector.load %arg11[%c0_62, %c0_63] : memref<64x576xf32, #tpu.memory_space<vmem>>, vector<64x576xf32>
    %c0_64 = arith.constant 0 : index
    %c0_65 = arith.constant 0 : index
    %176 = vector.load %arg16[%c0_64, %c0_65] : memref<576x256xf32, #tpu.memory_space<vmem>>, vector<576x256xf32>
    %cst_66 = arith.constant dense<0.000000e+00> : vector<64x256xf32>
    %177 = tpu.matmul %175, %176, %cst_66 {dimension_numbers = #tpu.dot_dimension_numbers<[1], [0], [0], [1], [0, 0, 1, 1], [], []>} : vector<64x576xf32>, vector<576x256xf32>, vector<64x256xf32> -> vector<64x256xf32>
    %c0_67 = arith.constant 0 : index
    %c0_68 = arith.constant 0 : index
    %178 = vector.load %arg12[%c0_67, %c0_68] : memref<64x1xf32, #tpu.memory_space<vmem>>, vector<64x1xf32>
    %179 = vector.broadcast %178 : vector<64x1xf32> to vector<64x256xf32>
    %180 = arith.addf %177, %179 : vector<64x256xf32>
    %c0_69 = arith.constant 0 : index
    %c0_70 = arith.constant 0 : index
    %181 = vector.load %arg13[%c0_69, %c0_70] : memref<64x32xf32, #tpu.memory_space<vmem>>, vector<64x32xf32>
    %c0_71 = arith.constant 0 : index
    %c0_72 = arith.constant 0 : index
    %c0_73 = arith.constant 0 : index
    %182 = vector.load %arg1[%c0_71, %c0_72, %c0_73] : memref<1x32x256xf32, #tpu.memory_space<vmem>>, vector<1x32x256xf32>
    %183 = vector.shape_cast %182 : vector<1x32x256xf32> to vector<32x256xf32>
    %cst_74 = arith.constant dense<0.000000e+00> : vector<64x256xf32>
    %184 = tpu.matmul %181, %183, %cst_74 {dimension_numbers = #tpu.dot_dimension_numbers<[1], [0], [0], [1], [0, 0, 1, 1], [], []>} : vector<64x32xf32>, vector<32x256xf32>, vector<64x256xf32> -> vector<64x256xf32>
    %c0_75 = arith.constant 0 : index
    %c0_76 = arith.constant 0 : index
    %185 = vector.load %arg14[%c0_75, %c0_76] : memref<64x1xf32, #tpu.memory_space<vmem>>, vector<64x1xf32>
    %186 = vector.broadcast %185 : vector<64x1xf32> to vector<64x256xf32>
    %187 = arith.addf %184, %186 : vector<64x256xf32>
    %188 = arith.addf %180, %187 : vector<64x256xf32>
    %c0_77 = arith.constant 0 : index
    %c0_78 = arith.constant 0 : index
    %c0_79 = arith.constant 0 : index
    %189 = vector.load %arg15[%c0_77, %c0_78, %c0_79] : memref<1x64x256xf32, #tpu.memory_space<vmem>>, vector<1x64x256xf32>
    %190 = vector.shape_cast %189 : vector<1x64x256xf32> to vector<64x256xf32>
    %191 = vector.shape_cast %188 : vector<64x256xf32> to vector<1x64x256xf32>
    tpu.vector_store %arg15[%c0_77, %c0_78, %c0_79], %191 {strides = array<i32>} : memref<1x64x256xf32, #tpu.memory_space<vmem>>, vector<1x64x256xf32>,
    return
  }
  func.func @transform_0(%arg0: i32) -> (i32, i32, i32) {
    %c0_i32 = arith.constant 0 : i32
    %c0_i32_0 = arith.constant 0 : i32
    %c0_i32_1 = arith.constant 0 : i32
    return %arg0, %c0_i32, %c0_i32_0 : i32, i32, i32
  }
  func.func @transform_1(%arg0: i32) -> (i32, i32) {
    %c0_i32 = arith.constant 0 : i32
    %c0_i32_0 = arith.constant 0 : i32
    %c0_i32_1 = arith.constant 0 : i32
    return %c0_i32, %c0_i32_0 : i32, i32
  }
  func.func @transform_2(%arg0: i32) -> (i32, i32) {
    %c0_i32 = arith.constant 0 : i32
    %c0_i32_0 = arith.constant 0 : i32
    %c0_i32_1 = arith.constant 0 : i32
    return %c0_i32, %c0_i32_0 : i32, i32
  }
  func.func @transform_3(%arg0: i32) -> (i32, i32) {
    %c0_i32 = arith.constant 0 : i32
    %c0_i32_0 = arith.constant 0 : i32
    %c0_i32_1 = arith.constant 0 : i32
    return %c0_i32, %c0_i32_0 : i32, i32
  }
  func.func @transform_4(%arg0: i32) -> (i32, i32) {
    %c0_i32 = arith.constant 0 : i32
    %c0_i32_0 = arith.constant 0 : i32
    %c0_i32_1 = arith.constant 0 : i32
    return %c0_i32, %c0_i32_0 : i32, i32
  }
  func.func @transform_5(%arg0: i32) -> (i32, i32) {
    %c0_i32 = arith.constant 0 : i32
    %c0_i32_0 = arith.constant 0 : i32
    %c0_i32_1 = arith.constant 0 : i32
    return %c0_i32, %c0_i32_0 : i32, i32
  }
  func.func @transform_6(%arg0: i32) -> (i32, i32) {
    %c0_i32 = arith.constant 0 : i32
    %c0_i32_0 = arith.constant 0 : i32
    %c0_i32_1 = arith.constant 0 : i32
    return %c0_i32, %c0_i32_0 : i32, i32
  }
  func.func @transform_7(%arg0: i32) -> (i32, i32) {
    %c0_i32 = arith.constant 0 : i32
    %c0_i32_0 = arith.constant 0 : i32
    %c0_i32_1 = arith.constant 0 : i32
    return %c0_i32, %c0_i32_0 : i32, i32
  }
  func.func @transform_8(%arg0: i32) -> (i32, i32) {
    %c0_i32 = arith.constant 0 : i32
    %c0_i32_0 = arith.constant 0 : i32
    %c0_i32_1 = arith.constant 0 : i32
    return %c0_i32, %c0_i32_0 : i32, i32
  }
  func.func @transform_9(%arg0: i32) -> (i32, i32) {
    %c0_i32 = arith.constant 0 : i32
    %c0_i32_0 = arith.constant 0 : i32
    %c0_i32_1 = arith.constant 0 : i32
    return %c0_i32, %c0_i32_0 : i32, i32
  }
  func.func @transform_10(%arg0: i32) -> (i32, i32) {
    %c0_i32 = arith.constant 0 : i32
    %c0_i32_0 = arith.constant 0 : i32
    %c0_i32_1 = arith.constant 0 : i32
    return %c0_i32, %c0_i32_0 : i32, i32
  }
  func.func @transform_11(%arg0: i32) -> (i32, i32) {
    %c0_i32 = arith.constant 0 : i32
    %c0_i32_0 = arith.constant 0 : i32
    %c0_i32_1 = arith.constant 0 : i32
    return %c0_i32, %c0_i32_0 : i32, i32
  }
  func.func @transform_12(%arg0: i32) -> (i32, i32) {
    %c0_i32 = arith.constant 0 : i32
    %c0_i32_0 = arith.constant 0 : i32
    %c0_i32_1 = arith.constant 0 : i32
    return %c0_i32, %c0_i32_0 : i32, i32
  }
  func.func @transform_13(%arg0: i32) -> (i32, i32) {
    %c0_i32 = arith.constant 0 : i32
    %c0_i32_0 = arith.constant 0 : i32
    %c0_i32_1 = arith.constant 0 : i32
    return %c0_i32, %c0_i32_0 : i32, i32
  }
  func.func @transform_14(%arg0: i32) -> (i32, i32, i32) {
    %c0_i32 = arith.constant 0 : i32
    %c0_i32_0 = arith.constant 0 : i32
    %c0_i32_1 = arith.constant 0 : i32
    return %arg0, %c0_i32, %c0_i32_0 : i32, i32, i32
  }
}

module attributes {stable_mosaic.version = 11 : i64} {
  func.func @kernel(%arg0: i32, %arg1: memref<1x32x256xf32, #tpu.memory_space<vmem>>, %arg2: memref<9x256xf32, #tpu.memory_space<vmem>>, %arg3: memref<32x32xf32, #tpu.memory_space<vmem>>, %arg4: memref<64x64xf32, #tpu.memory_space<vmem>>, %arg5: memref<32x1xf32, #tpu.memory_space<vmem>>, %arg6: memref<32x1xf32, #tpu.memory_space<vmem>>, %arg7: memref<64x288xf32, #tpu.memory_space<vmem>>, %arg8: memref<64x1xf32, #tpu.memory_space<vmem>>, %arg9: memref<64x1xf32, #tpu.memory_space<vmem>>, %arg10: memref<64x1xf32, #tpu.memory_space<vmem>>, %arg11: memref<64x576xf32, #tpu.memory_space<vmem>>, %arg12: memref<64x1xf32, #tpu.memory_space<vmem>>, %arg13: memref<64x32xf32, #tpu.memory_space<vmem>>, %arg14: memref<64x1xf32, #tpu.memory_space<vmem>>, %arg15: memref<1x64x256xf32, #tpu.memory_space<vmem>>, %arg16: memref<576x256xf32, #tpu.memory_space<vmem>>) attributes {dimension_semantics = [#tpu.dimension_semantics<parallel>], iteration_bounds = array<i64: 2>, scalar_prefetch = 0 : i64, scratch_operands = 1 : i64, tpu.core_type = #tpu.core_type<tc>, window_params = [{transform_indices = @transform_0, window_bounds = array<i64: 1, 32, 256>}, {pipeline_mode = #tpu.pipeline_mode<synchronous>, transform_indices = @transform_1, window_bounds = array<i64: 9, 256>}, {pipeline_mode = #tpu.pipeline_mode<synchronous>, transform_indices = @transform_2, window_bounds = array<i64: 32, 32>}, {pipeline_mode = #tpu.pipeline_mode<synchronous>, transform_indices = @transform_3, window_bounds = array<i64: 64, 64>}, {pipeline_mode = #tpu.pipeline_mode<synchronous>, transform_indices = @transform_4, window_bounds = array<i64: 32, 1>}, {pipeline_mode = #tpu.pipeline_mode<synchronous>, transform_indices = @transform_5, window_bounds = array<i64: 32, 1>}, {pipeline_mode = #tpu.pipeline_mode<synchronous>, transform_indices = @transform_6, window_bounds = array<i64: 64, 288>}, {pipeline_mode = #tpu.pipeline_mode<synchronous>, transform_indices = @transform_7, window_bounds = array<i64: 64, 1>}, {pipeline_mode = #tpu.pipeline_mode<synchronous>, transform_indices = @transform_8, window_bounds = array<i64: 64, 1>}, {pipeline_mode = #tpu.pipeline_mode<synchronous>, transform_indices = @transform_9, window_bounds = array<i64: 64, 1>}, {pipeline_mode = #tpu.pipeline_mode<synchronous>, transform_indices = @transform_10, window_bounds = array<i64: 64, 576>}, {pipeline_mode = #tpu.pipeline_mode<synchronous>, transform_indices = @transform_11, window_bounds = array<i64: 64, 1>}, {pipeline_mode = #tpu.pipeline_mode<synchronous>, transform_indices = @transform_12, window_bounds = array<i64: 64, 32>}, {pipeline_mode = #tpu.pipeline_mode<synchronous>, transform_indices = @transform_13, window_bounds = array<i64: 64, 1>}, {transform_indices = @transform_14, window_bounds = array<i64: 1, 64, 256>}]} {
    %c0 = arith.constant 0 : index
    %c0_0 = arith.constant 0 : index
    %0 = vector.load %arg2[%c0, %c0_0] : memref<9x256xf32, #tpu.memory_space<vmem>>, vector<9x256xf32>
    %c0_1 = arith.constant 0 : index
    %c0_2 = arith.constant 0 : index
    %1 = vector.load %arg3[%c0_1, %c0_2] : memref<32x32xf32, #tpu.memory_space<vmem>>, vector<32x32xf32>
    %c0_3 = arith.constant 0 : index
    %c0_4 = arith.constant 0 : index
    %2 = vector.load %arg4[%c0_3, %c0_4] : memref<64x64xf32, #tpu.memory_space<vmem>>, vector<64x64xf32>
    %c0_5 = arith.constant 0 : index
    %c0_6 = arith.constant 0 : index
    %c0_7 = arith.constant 0 : index
    %3 = vector.load %arg1[%c0_5, %c0_6, %c0_7] : memref<1x32x256xf32, #tpu.memory_space<vmem>>, vector<1x32x256xf32>
    %4 = vector.shape_cast %3 : vector<1x32x256xf32> to vector<32x256xf32>
    %c0_8 = arith.constant 0 : index
    %c0_9 = arith.constant 0 : index
    %5 = vector.load %arg5[%c0_8, %c0_9] : memref<32x1xf32, #tpu.memory_space<vmem>>, vector<32x1xf32>
    %c0_10 = arith.constant 0 : index
    %c0_11 = arith.constant 0 : index
    %6 = vector.load %arg6[%c0_10, %c0_11] : memref<32x1xf32, #tpu.memory_space<vmem>>, vector<32x1xf32>
    %cst = arith.constant dense<0.000000e+00> : vector<32xf32>
    %7 = vector.multi_reduction <add>, %4, %cst [1] : vector<32x256xf32> to vector<32xf32>
    %8 = vector.shape_cast %7 : vector<32xf32> to vector<32x1xf32>
    %cst_12 = arith.constant dense<0.000000e+00> : vector<32x1xf32>
    %9 = tpu.matmul %1, %8, %cst_12 {dimension_numbers = #tpu.dot_dimension_numbers<[1], [0], [0], [1], [0, 0, 1, 1], [], []>} : vector<32x32xf32>, vector<32x1xf32>, vector<32x1xf32> -> vector<32x1xf32>
    %cst_13 = arith.constant 2.44140625E-4 : f32
    %10 = vector.broadcast %cst_13 : f32 to vector<32x1xf32>
    %11 = arith.mulf %9, %10 : vector<32x1xf32>
    %12 = vector.broadcast %11 : vector<32x1xf32> to vector<32x256xf32>
    %13 = arith.subf %4, %12 : vector<32x256xf32>
    %14 = arith.mulf %13, %13 : vector<32x256xf32>
    %cst_14 = arith.constant dense<0.000000e+00> : vector<32xf32>
    %15 = vector.multi_reduction <add>, %14, %cst_14 [1] : vector<32x256xf32> to vector<32xf32>
    %16 = vector.shape_cast %15 : vector<32xf32> to vector<32x1xf32>
    %cst_15 = arith.constant dense<0.000000e+00> : vector<32x1xf32>
    %17 = tpu.matmul %1, %16, %cst_15 {dimension_numbers = #tpu.dot_dimension_numbers<[1], [0], [0], [1], [0, 0, 1, 1], [], []>} : vector<32x32xf32>, vector<32x1xf32>, vector<32x1xf32> -> vector<32x1xf32>
    %cst_16 = arith.constant 2.44140625E-4 : f32
    %18 = vector.broadcast %cst_16 : f32 to vector<32x1xf32>
    %19 = arith.mulf %17, %18 : vector<32x1xf32>
    %cst_17 = arith.constant 9.99999974E-6 : f32
    %20 = vector.broadcast %cst_17 : f32 to vector<32x1xf32>
    %21 = arith.addf %19, %20 : vector<32x1xf32>
    %22 = math.rsqrt %21 : vector<32x1xf32>
    %23 = arith.mulf %22, %5 : vector<32x1xf32>
    %24 = vector.broadcast %23 : vector<32x1xf32> to vector<32x256xf32>
    %25 = arith.mulf %13, %24 : vector<32x256xf32>
    %26 = vector.broadcast %6 : vector<32x1xf32> to vector<32x256xf32>
    %27 = arith.addf %25, %26 : vector<32x256xf32>
    %cst_18 = arith.constant 0.000000e+00 : f32
    %28 = vector.broadcast %cst_18 : f32 to vector<32x256xf32>
    %29 = arith.maximumf %27, %28 : vector<32x256xf32>
    %30 = vector.extract_strided_slice %29 {offsets = [0, 239], sizes = [32, 17], strides = [1, 1]} : vector<32x256xf32> to vector<32x17xf32>
    %31 = vector.extract_strided_slice %29 {offsets = [0, 0], sizes = [32, 239], strides = [1, 1]} : vector<32x256xf32> to vector<32x239xf32>
    %32 = tpu.concatenate %30, %31 in 1 : vector<32x17xf32>, vector<32x239xf32> -> vector<32x256xf32>
    %33 = vector.extract_strided_slice %0 {offsets = [0, 0], sizes = [1, 256], strides = [1, 1]} : vector<9x256xf32> to vector<1x256xf32>
    %34 = vector.broadcast %33 : vector<1x256xf32> to vector<32x256xf32>
    %35 = arith.mulf %32, %34 : vector<32x256xf32>
    %c0_19 = arith.constant 0 : index
    %c0_20 = arith.constant 0 : index
    %36 = vector.load %arg16[%c0_19, %c0_20] : memref<576x256xf32, #tpu.memory_space<vmem>>, vector<32x256xf32>
    tpu.vector_store %arg16[%c0_19, %c0_20], %35 {strides = array<i32>} : memref<576x256xf32, #tpu.memory_space<vmem>>, vector<32x256xf32>,
    %37 = vector.extract_strided_slice %29 {offsets = [0, 240], sizes = [32, 16], strides = [1, 1]} : vector<32x256xf32> to vector<32x16xf32>
    %38 = vector.extract_strided_slice %29 {offsets = [0, 0], sizes = [32, 240], strides = [1, 1]} : vector<32x256xf32> to vector<32x240xf32>
    %39 = tpu.concatenate %37, %38 in 1 : vector<32x16xf32>, vector<32x240xf32> -> vector<32x256xf32>
    %40 = vector.extract_strided_slice %0 {offsets = [1, 0], sizes = [1, 256], strides = [1, 1]} : vector<9x256xf32> to vector<1x256xf32>
    %41 = vector.broadcast %40 : vector<1x256xf32> to vector<32x256xf32>
    %42 = arith.mulf %39, %41 : vector<32x256xf32>
    %c32 = arith.constant 32 : index
    %c0_21 = arith.constant 0 : index
    %43 = vector.load %arg16[%c32, %c0_21] : memref<576x256xf32, #tpu.memory_space<vmem>>, vector<32x256xf32>
    tpu.vector_store %arg16[%c32, %c0_21], %42 {strides = array<i32>} : memref<576x256xf32, #tpu.memory_space<vmem>>, vector<32x256xf32>,
    %44 = vector.extract_strided_slice %29 {offsets = [0, 241], sizes = [32, 15], strides = [1, 1]} : vector<32x256xf32> to vector<32x15xf32>
    %45 = vector.extract_strided_slice %29 {offsets = [0, 0], sizes = [32, 241], strides = [1, 1]} : vector<32x256xf32> to vector<32x241xf32>
    %46 = tpu.concatenate %44, %45 in 1 : vector<32x15xf32>, vector<32x241xf32> -> vector<32x256xf32>
    %47 = vector.extract_strided_slice %0 {offsets = [2, 0], sizes = [1, 256], strides = [1, 1]} : vector<9x256xf32> to vector<1x256xf32>
    %48 = vector.broadcast %47 : vector<1x256xf32> to vector<32x256xf32>
    %49 = arith.mulf %46, %48 : vector<32x256xf32>
    %c64 = arith.constant 64 : index
    %c0_22 = arith.constant 0 : index
    %50 = vector.load %arg16[%c64, %c0_22] : memref<576x256xf32, #tpu.memory_space<vmem>>, vector<32x256xf32>
    tpu.vector_store %arg16[%c64, %c0_22], %49 {strides = array<i32>} : memref<576x256xf32, #tpu.memory_space<vmem>>, vector<32x256xf32>,
    %51 = vector.extract_strided_slice %29 {offsets = [0, 255], sizes = [32, 1], strides = [1, 1]} : vector<32x256xf32> to vector<32x1xf32>
    %52 = vector.extract_strided_slice %29 {offsets = [0, 0], sizes = [32, 255], strides = [1, 1]} : vector<32x256xf32> to vector<32x255xf32>
    %53 = tpu.concatenate %51, %52 in 1 : vector<32x1xf32>, vector<32x255xf32> -> vector<32x256xf32>
    %54 = vector.extract_strided_slice %0 {offsets = [3, 0], sizes = [1, 256], strides = [1, 1]} : vector<9x256xf32> to vector<1x256xf32>
    %55 = vector.broadcast %54 : vector<1x256xf32> to vector<32x256xf32>
    %56 = arith.mulf %53, %55 : vector<32x256xf32>
    %c96 = arith.constant 96 : index
    %c0_23 = arith.constant 0 : index
    %57 = vector.load %arg16[%c96, %c0_23] : memref<576x256xf32, #tpu.memory_space<vmem>>, vector<32x256xf32>
    tpu.vector_store %arg16[%c96, %c0_23], %56 {strides = array<i32>} : memref<576x256xf32, #tpu.memory_space<vmem>>, vector<32x256xf32>,
    %c128 = arith.constant 128 : index
    %c0_24 = arith.constant 0 : index
    %58 = vector.load %arg16[%c128, %c0_24] : memref<576x256xf32, #tpu.memory_space<vmem>>, vector<32x256xf32>
    tpu.vector_store %arg16[%c128, %c0_24], %29 {strides = array<i32>} : memref<576x256xf32, #tpu.memory_space<vmem>>, vector<32x256xf32>,
    %59 = vector.extract_strided_slice %29 {offsets = [0, 1], sizes = [32, 255], strides = [1, 1]} : vector<32x256xf32> to vector<32x255xf32>
    %60 = vector.extract_strided_slice %29 {offsets = [0, 0], sizes = [32, 1], strides = [1, 1]} : vector<32x256xf32> to vector<32x1xf32>
    %61 = tpu.concatenate %59, %60 in 1 : vector<32x255xf32>, vector<32x1xf32> -> vector<32x256xf32>
    %62 = vector.extract_strided_slice %0 {offsets = [5, 0], sizes = [1, 256], strides = [1, 1]} : vector<9x256xf32> to vector<1x256xf32>
    %63 = vector.broadcast %62 : vector<1x256xf32> to vector<32x256xf32>
    %64 = arith.mulf %61, %63 : vector<32x256xf32>
    %c160 = arith.constant 160 : index
    %c0_25 = arith.constant 0 : index
    %65 = vector.load %arg16[%c160, %c0_25] : memref<576x256xf32, #tpu.memory_space<vmem>>, vector<32x256xf32>
    tpu.vector_store %arg16[%c160, %c0_25], %64 {strides = array<i32>} : memref<576x256xf32, #tpu.memory_space<vmem>>, vector<32x256xf32>,
    %66 = vector.extract_strided_slice %29 {offsets = [0, 15], sizes = [32, 241], strides = [1, 1]} : vector<32x256xf32> to vector<32x241xf32>
    %67 = vector.extract_strided_slice %29 {offsets = [0, 0], sizes = [32, 15], strides = [1, 1]} : vector<32x256xf32> to vector<32x15xf32>
    %68 = tpu.concatenate %66, %67 in 1 : vector<32x241xf32>, vector<32x15xf32> -> vector<32x256xf32>
    %69 = vector.extract_strided_slice %0 {offsets = [6, 0], sizes = [1, 256], strides = [1, 1]} : vector<9x256xf32> to vector<1x256xf32>
    %70 = vector.broadcast %69 : vector<1x256xf32> to vector<32x256xf32>
    %71 = arith.mulf %68, %70 : vector<32x256xf32>
    %c192 = arith.constant 192 : index
    %c0_26 = arith.constant 0 : index
    %72 = vector.load %arg16[%c192, %c0_26] : memref<576x256xf32, #tpu.memory_space<vmem>>, vector<32x256xf32>
    tpu.vector_store %arg16[%c192, %c0_26], %71 {strides = array<i32>} : memref<576x256xf32, #tpu.memory_space<vmem>>, vector<32x256xf32>,
    %73 = vector.extract_strided_slice %29 {offsets = [0, 16], sizes = [32, 240], strides = [1, 1]} : vector<32x256xf32> to vector<32x240xf32>
    %74 = vector.extract_strided_slice %29 {offsets = [0, 0], sizes = [32, 16], strides = [1, 1]} : vector<32x256xf32> to vector<32x16xf32>
    %75 = tpu.concatenate %73, %74 in 1 : vector<32x240xf32>, vector<32x16xf32> -> vector<32x256xf32>
    %76 = vector.extract_strided_slice %0 {offsets = [7, 0], sizes = [1, 256], strides = [1, 1]} : vector<9x256xf32> to vector<1x256xf32>
    %77 = vector.broadcast %76 : vector<1x256xf32> to vector<32x256xf32>
    %78 = arith.mulf %75, %77 : vector<32x256xf32>
    %c224 = arith.constant 224 : index
    %c0_27 = arith.constant 0 : index
    %79 = vector.load %arg16[%c224, %c0_27] : memref<576x256xf32, #tpu.memory_space<vmem>>, vector<32x256xf32>
    tpu.vector_store %arg16[%c224, %c0_27], %78 {strides = array<i32>} : memref<576x256xf32, #tpu.memory_space<vmem>>, vector<32x256xf32>,
    %80 = vector.extract_strided_slice %29 {offsets = [0, 17], sizes = [32, 239], strides = [1, 1]} : vector<32x256xf32> to vector<32x239xf32>
    %81 = vector.extract_strided_slice %29 {offsets = [0, 0], sizes = [32, 17], strides = [1, 1]} : vector<32x256xf32> to vector<32x17xf32>
    %82 = tpu.concatenate %80, %81 in 1 : vector<32x239xf32>, vector<32x17xf32> -> vector<32x256xf32>
    %83 = vector.extract_strided_slice %0 {offsets = [8, 0], sizes = [1, 256], strides = [1, 1]} : vector<9x256xf32> to vector<1x256xf32>
    %84 = vector.broadcast %83 : vector<1x256xf32> to vector<32x256xf32>
    %85 = arith.mulf %82, %84 : vector<32x256xf32>
    %c256 = arith.constant 256 : index
    %c0_28 = arith.constant 0 : index
    %86 = vector.load %arg16[%c256, %c0_28] : memref<576x256xf32, #tpu.memory_space<vmem>>, vector<32x256xf32>
    tpu.vector_store %arg16[%c256, %c0_28], %85 {strides = array<i32>} : memref<576x256xf32, #tpu.memory_space<vmem>>, vector<32x256xf32>,
    %c0_29 = arith.constant 0 : index
    %c0_30 = arith.constant 0 : index
    %87 = vector.load %arg7[%c0_29, %c0_30] : memref<64x288xf32, #tpu.memory_space<vmem>>, vector<64x288xf32>
    %c0_31 = arith.constant 0 : index
    %c0_32 = arith.constant 0 : index
    %88 = vector.load %arg16[%c0_31, %c0_32] : memref<576x256xf32, #tpu.memory_space<vmem>>, vector<288x256xf32>
    %cst_33 = arith.constant dense<0.000000e+00> : vector<64x256xf32>
    %89 = tpu.matmul %87, %88, %cst_33 {dimension_numbers = #tpu.dot_dimension_numbers<[1], [0], [0], [1], [0, 0, 1, 1], [], []>} : vector<64x288xf32>, vector<288x256xf32>, vector<64x256xf32> -> vector<64x256xf32>
    %c0_34 = arith.constant 0 : index
    %c0_35 = arith.constant 0 : index
    %90 = vector.load %arg8[%c0_34, %c0_35] : memref<64x1xf32, #tpu.memory_space<vmem>>, vector<64x1xf32>
    %91 = vector.broadcast %90 : vector<64x1xf32> to vector<64x256xf32>
    %92 = arith.addf %89, %91 : vector<64x256xf32>
    %c0_36 = arith.constant 0 : index
    %c0_37 = arith.constant 0 : index
    %93 = vector.load %arg9[%c0_36, %c0_37] : memref<64x1xf32, #tpu.memory_space<vmem>>, vector<64x1xf32>
    %c0_38 = arith.constant 0 : index
    %c0_39 = arith.constant 0 : index
    %94 = vector.load %arg10[%c0_38, %c0_39] : memref<64x1xf32, #tpu.memory_space<vmem>>, vector<64x1xf32>
    %cst_40 = arith.constant dense<0.000000e+00> : vector<64xf32>
    %95 = vector.multi_reduction <add>, %92, %cst_40 [1] : vector<64x256xf32> to vector<64xf32>
    %96 = vector.shape_cast %95 : vector<64xf32> to vector<64x1xf32>
    %cst_41 = arith.constant dense<0.000000e+00> : vector<64x1xf32>
    %97 = tpu.matmul %2, %96, %cst_41 {dimension_numbers = #tpu.dot_dimension_numbers<[1], [0], [0], [1], [0, 0, 1, 1], [], []>} : vector<64x64xf32>, vector<64x1xf32>, vector<64x1xf32> -> vector<64x1xf32>
    %cst_42 = arith.constant 2.44140625E-4 : f32
    %98 = vector.broadcast %cst_42 : f32 to vector<64x1xf32>
    %99 = arith.mulf %97, %98 : vector<64x1xf32>
    %100 = vector.broadcast %99 : vector<64x1xf32> to vector<64x256xf32>
    %101 = arith.subf %92, %100 : vector<64x256xf32>
    %102 = arith.mulf %101, %101 : vector<64x256xf32>
    %cst_43 = arith.constant dense<0.000000e+00> : vector<64xf32>
    %103 = vector.multi_reduction <add>, %102, %cst_43 [1] : vector<64x256xf32> to vector<64xf32>
    %104 = vector.shape_cast %103 : vector<64xf32> to vector<64x1xf32>
    %cst_44 = arith.constant dense<0.000000e+00> : vector<64x1xf32>
    %105 = tpu.matmul %2, %104, %cst_44 {dimension_numbers = #tpu.dot_dimension_numbers<[1], [0], [0], [1], [0, 0, 1, 1], [], []>} : vector<64x64xf32>, vector<64x1xf32>, vector<64x1xf32> -> vector<64x1xf32>
    %cst_45 = arith.constant 2.44140625E-4 : f32
    %106 = vector.broadcast %cst_45 : f32 to vector<64x1xf32>
    %107 = arith.mulf %105, %106 : vector<64x1xf32>
    %cst_46 = arith.constant 9.99999974E-6 : f32
    %108 = vector.broadcast %cst_46 : f32 to vector<64x1xf32>
    %109 = arith.addf %107, %108 : vector<64x1xf32>
    %110 = math.rsqrt %109 : vector<64x1xf32>
    %111 = arith.mulf %110, %93 : vector<64x1xf32>
    %112 = vector.broadcast %111 : vector<64x1xf32> to vector<64x256xf32>
    %113 = arith.mulf %101, %112 : vector<64x256xf32>
    %114 = vector.broadcast %94 : vector<64x1xf32> to vector<64x256xf32>
    %115 = arith.addf %113, %114 : vector<64x256xf32>
    %cst_47 = arith.constant 0.000000e+00 : f32
    %116 = vector.broadcast %cst_47 : f32 to vector<64x256xf32>
    %117 = arith.maximumf %115, %116 : vector<64x256xf32>
    %118 = vector.extract_strided_slice %117 {offsets = [0, 239], sizes = [64, 17], strides = [1, 1]} : vector<64x256xf32> to vector<64x17xf32>
    %119 = vector.extract_strided_slice %117 {offsets = [0, 0], sizes = [64, 239], strides = [1, 1]} : vector<64x256xf32> to vector<64x239xf32>
    %120 = tpu.concatenate %118, %119 in 1 : vector<64x17xf32>, vector<64x239xf32> -> vector<64x256xf32>
    %121 = vector.extract_strided_slice %0 {offsets = [0, 0], sizes = [1, 256], strides = [1, 1]} : vector<9x256xf32> to vector<1x256xf32>
    %122 = vector.broadcast %121 : vector<1x256xf32> to vector<64x256xf32>
    %123 = arith.mulf %120, %122 : vector<64x256xf32>
    %c0_48 = arith.constant 0 : index
    %c0_49 = arith.constant 0 : index
    %124 = vector.load %arg16[%c0_48, %c0_49] : memref<576x256xf32, #tpu.memory_space<vmem>>, vector<64x256xf32>
    tpu.vector_store %arg16[%c0_48, %c0_49], %123 {strides = array<i32>} : memref<576x256xf32, #tpu.memory_space<vmem>>, vector<64x256xf32>,
    %125 = vector.extract_strided_slice %117 {offsets = [0, 240], sizes = [64, 16], strides = [1, 1]} : vector<64x256xf32> to vector<64x16xf32>
    %126 = vector.extract_strided_slice %117 {offsets = [0, 0], sizes = [64, 240], strides = [1, 1]} : vector<64x256xf32> to vector<64x240xf32>
    %127 = tpu.concatenate %125, %126 in 1 : vector<64x16xf32>, vector<64x240xf32> -> vector<64x256xf32>
    %128 = vector.extract_strided_slice %0 {offsets = [1, 0], sizes = [1, 256], strides = [1, 1]} : vector<9x256xf32> to vector<1x256xf32>
    %129 = vector.broadcast %128 : vector<1x256xf32> to vector<64x256xf32>
    %130 = arith.mulf %127, %129 : vector<64x256xf32>
    %c64_50 = arith.constant 64 : index
    %c0_51 = arith.constant 0 : index
    %131 = vector.load %arg16[%c64_50, %c0_51] : memref<576x256xf32, #tpu.memory_space<vmem>>, vector<64x256xf32>
    tpu.vector_store %arg16[%c64_50, %c0_51], %130 {strides = array<i32>} : memref<576x256xf32, #tpu.memory_space<vmem>>, vector<64x256xf32>,
    %132 = vector.extract_strided_slice %117 {offsets = [0, 241], sizes = [64, 15], strides = [1, 1]} : vector<64x256xf32> to vector<64x15xf32>
    %133 = vector.extract_strided_slice %117 {offsets = [0, 0], sizes = [64, 241], strides = [1, 1]} : vector<64x256xf32> to vector<64x241xf32>
    %134 = tpu.concatenate %132, %133 in 1 : vector<64x15xf32>, vector<64x241xf32> -> vector<64x256xf32>
    %135 = vector.extract_strided_slice %0 {offsets = [2, 0], sizes = [1, 256], strides = [1, 1]} : vector<9x256xf32> to vector<1x256xf32>
    %136 = vector.broadcast %135 : vector<1x256xf32> to vector<64x256xf32>
    %137 = arith.mulf %134, %136 : vector<64x256xf32>
    %c128_52 = arith.constant 128 : index
    %c0_53 = arith.constant 0 : index
    %138 = vector.load %arg16[%c128_52, %c0_53] : memref<576x256xf32, #tpu.memory_space<vmem>>, vector<64x256xf32>
    tpu.vector_store %arg16[%c128_52, %c0_53], %137 {strides = array<i32>} : memref<576x256xf32, #tpu.memory_space<vmem>>, vector<64x256xf32>,
    %139 = vector.extract_strided_slice %117 {offsets = [0, 255], sizes = [64, 1], strides = [1, 1]} : vector<64x256xf32> to vector<64x1xf32>
    %140 = vector.extract_strided_slice %117 {offsets = [0, 0], sizes = [64, 255], strides = [1, 1]} : vector<64x256xf32> to vector<64x255xf32>
    %141 = tpu.concatenate %139, %140 in 1 : vector<64x1xf32>, vector<64x255xf32> -> vector<64x256xf32>
    %142 = vector.extract_strided_slice %0 {offsets = [3, 0], sizes = [1, 256], strides = [1, 1]} : vector<9x256xf32> to vector<1x256xf32>
    %143 = vector.broadcast %142 : vector<1x256xf32> to vector<64x256xf32>
    %144 = arith.mulf %141, %143 : vector<64x256xf32>
    %c192_54 = arith.constant 192 : index
    %c0_55 = arith.constant 0 : index
    %145 = vector.load %arg16[%c192_54, %c0_55] : memref<576x256xf32, #tpu.memory_space<vmem>>, vector<64x256xf32>
    tpu.vector_store %arg16[%c192_54, %c0_55], %144 {strides = array<i32>} : memref<576x256xf32, #tpu.memory_space<vmem>>, vector<64x256xf32>,
    %c256_56 = arith.constant 256 : index
    %c0_57 = arith.constant 0 : index
    %146 = vector.load %arg16[%c256_56, %c0_57] : memref<576x256xf32, #tpu.memory_space<vmem>>, vector<64x256xf32>
    tpu.vector_store %arg16[%c256_56, %c0_57], %117 {strides = array<i32>} : memref<576x256xf32, #tpu.memory_space<vmem>>, vector<64x256xf32>,
    %147 = vector.extract_strided_slice %117 {offsets = [0, 1], sizes = [64, 255], strides = [1, 1]} : vector<64x256xf32> to vector<64x255xf32>
    %148 = vector.extract_strided_slice %117 {offsets = [0, 0], sizes = [64, 1], strides = [1, 1]} : vector<64x256xf32> to vector<64x1xf32>
    %149 = tpu.concatenate %147, %148 in 1 : vector<64x255xf32>, vector<64x1xf32> -> vector<64x256xf32>
    %150 = vector.extract_strided_slice %0 {offsets = [5, 0], sizes = [1, 256], strides = [1, 1]} : vector<9x256xf32> to vector<1x256xf32>
    %151 = vector.broadcast %150 : vector<1x256xf32> to vector<64x256xf32>
    %152 = arith.mulf %149, %151 : vector<64x256xf32>
    %c320 = arith.constant 320 : index
    %c0_58 = arith.constant 0 : index
    %153 = vector.load %arg16[%c320, %c0_58] : memref<576x256xf32, #tpu.memory_space<vmem>>, vector<64x256xf32>
    tpu.vector_store %arg16[%c320, %c0_58], %152 {strides = array<i32>} : memref<576x256xf32, #tpu.memory_space<vmem>>, vector<64x256xf32>,
    %154 = vector.extract_strided_slice %117 {offsets = [0, 15], sizes = [64, 241], strides = [1, 1]} : vector<64x256xf32> to vector<64x241xf32>
    %155 = vector.extract_strided_slice %117 {offsets = [0, 0], sizes = [64, 15], strides = [1, 1]} : vector<64x256xf32> to vector<64x15xf32>
    %156 = tpu.concatenate %154, %155 in 1 : vector<64x241xf32>, vector<64x15xf32> -> vector<64x256xf32>
    %157 = vector.extract_strided_slice %0 {offsets = [6, 0], sizes = [1, 256], strides = [1, 1]} : vector<9x256xf32> to vector<1x256xf32>
    %158 = vector.broadcast %157 : vector<1x256xf32> to vector<64x256xf32>
    %159 = arith.mulf %156, %158 : vector<64x256xf32>
    %c384 = arith.constant 384 : index
    %c0_59 = arith.constant 0 : index
    %160 = vector.load %arg16[%c384, %c0_59] : memref<576x256xf32, #tpu.memory_space<vmem>>, vector<64x256xf32>
    tpu.vector_store %arg16[%c384, %c0_59], %159 {strides = array<i32>} : memref<576x256xf32, #tpu.memory_space<vmem>>, vector<64x256xf32>,
    %161 = vector.extract_strided_slice %117 {offsets = [0, 16], sizes = [64, 240], strides = [1, 1]} : vector<64x256xf32> to vector<64x240xf32>
    %162 = vector.extract_strided_slice %117 {offsets = [0, 0], sizes = [64, 16], strides = [1, 1]} : vector<64x256xf32> to vector<64x16xf32>
    %163 = tpu.concatenate %161, %162 in 1 : vector<64x240xf32>, vector<64x16xf32> -> vector<64x256xf32>
    %164 = vector.extract_strided_slice %0 {offsets = [7, 0], sizes = [1, 256], strides = [1, 1]} : vector<9x256xf32> to vector<1x256xf32>
    %165 = vector.broadcast %164 : vector<1x256xf32> to vector<64x256xf32>
    %166 = arith.mulf %163, %165 : vector<64x256xf32>
    %c448 = arith.constant 448 : index
    %c0_60 = arith.constant 0 : index
    %167 = vector.load %arg16[%c448, %c0_60] : memref<576x256xf32, #tpu.memory_space<vmem>>, vector<64x256xf32>
    tpu.vector_store %arg16[%c448, %c0_60], %166 {strides = array<i32>} : memref<576x256xf32, #tpu.memory_space<vmem>>, vector<64x256xf32>,
    %168 = vector.extract_strided_slice %117 {offsets = [0, 17], sizes = [64, 239], strides = [1, 1]} : vector<64x256xf32> to vector<64x239xf32>
    %169 = vector.extract_strided_slice %117 {offsets = [0, 0], sizes = [64, 17], strides = [1, 1]} : vector<64x256xf32> to vector<64x17xf32>
    %170 = tpu.concatenate %168, %169 in 1 : vector<64x239xf32>, vector<64x17xf32> -> vector<64x256xf32>
    %171 = vector.extract_strided_slice %0 {offsets = [8, 0], sizes = [1, 256], strides = [1, 1]} : vector<9x256xf32> to vector<1x256xf32>
    %172 = vector.broadcast %171 : vector<1x256xf32> to vector<64x256xf32>
    %173 = arith.mulf %170, %172 : vector<64x256xf32>
    %c512 = arith.constant 512 : index
    %c0_61 = arith.constant 0 : index
    %174 = vector.load %arg16[%c512, %c0_61] : memref<576x256xf32, #tpu.memory_space<vmem>>, vector<64x256xf32>
    tpu.vector_store %arg16[%c512, %c0_61], %173 {strides = array<i32>} : memref<576x256xf32, #tpu.memory_space<vmem>>, vector<64x256xf32>,
    %c0_62 = arith.constant 0 : index
    %c0_63 = arith.constant 0 : index
    %175 = vector.load %arg11[%c0_62, %c0_63] : memref<64x576xf32, #tpu.memory_space<vmem>>, vector<64x576xf32>
    %c0_64 = arith.constant 0 : index
    %c0_65 = arith.constant 0 : index
    %176 = vector.load %arg16[%c0_64, %c0_65] : memref<576x256xf32, #tpu.memory_space<vmem>>, vector<576x256xf32>
    %cst_66 = arith.constant dense<0.000000e+00> : vector<64x256xf32>
    %177 = tpu.matmul %175, %176, %cst_66 {dimension_numbers = #tpu.dot_dimension_numbers<[1], [0], [0], [1], [0, 0, 1, 1], [], []>} : vector<64x576xf32>, vector<576x256xf32>, vector<64x256xf32> -> vector<64x256xf32>
    %c0_67 = arith.constant 0 : index
    %c0_68 = arith.constant 0 : index
    %178 = vector.load %arg12[%c0_67, %c0_68] : memref<64x1xf32, #tpu.memory_space<vmem>>, vector<64x1xf32>
    %179 = vector.broadcast %178 : vector<64x1xf32> to vector<64x256xf32>
    %180 = arith.addf %177, %179 : vector<64x256xf32>
    %c0_69 = arith.constant 0 : index
    %c0_70 = arith.constant 0 : index
    %181 = vector.load %arg13[%c0_69, %c0_70] : memref<64x32xf32, #tpu.memory_space<vmem>>, vector<64x32xf32>
    %c0_71 = arith.constant 0 : index
    %c0_72 = arith.constant 0 : index
    %c0_73 = arith.constant 0 : index
    %182 = vector.load %arg1[%c0_71, %c0_72, %c0_73] : memref<1x32x256xf32, #tpu.memory_space<vmem>>, vector<1x32x256xf32>
    %183 = vector.shape_cast %182 : vector<1x32x256xf32> to vector<32x256xf32>
    %cst_74 = arith.constant dense<0.000000e+00> : vector<64x256xf32>
    %184 = tpu.matmul %181, %183, %cst_74 {dimension_numbers = #tpu.dot_dimension_numbers<[1], [0], [0], [1], [0, 0, 1, 1], [], []>} : vector<64x32xf32>, vector<32x256xf32>, vector<64x256xf32> -> vector<64x256xf32>
    %c0_75 = arith.constant 0 : index
    %c0_76 = arith.constant 0 : index
    %185 = vector.load %arg14[%c0_75, %c0_76] : memref<64x1xf32, #tpu.memory_space<vmem>>, vector<64x1xf32>
    %186 = vector.broadcast %185 : vector<64x1xf32> to vector<64x256xf32>
    %187 = arith.addf %184, %186 : vector<64x256xf32>
    %188 = arith.addf %180, %187 : vector<64x256xf32>
    %c0_77 = arith.constant 0 : index
    %c0_78 = arith.constant 0 : index
    %c0_79 = arith.constant 0 : index
    %189 = vector.load %arg15[%c0_77, %c0_78, %c0_79] : memref<1x64x256xf32, #tpu.memory_space<vmem>>, vector<1x64x256xf32>
    %190 = vector.shape_cast %189 : vector<1x64x256xf32> to vector<64x256xf32>
    %191 = vector.shape_cast %188 : vector<64x256xf32> to vector<1x64x256xf32>
    tpu.vector_store %arg15[%c0_77, %c0_78, %c0_79], %191 {strides = array<i32>} : memref<1x64x256xf32, #tpu.memory_space<vmem>>, vector<1x64x256xf32>,
    return
  }
  func.func @transform_0(%arg0: i32) -> (i32, i32, i32) {
    %c0_i32 = arith.constant 0 : i32
    %c0_i32_0 = arith.constant 0 : i32
    %c0_i32_1 = arith.constant 0 : i32
    return %arg0, %c0_i32, %c0_i32_0 : i32, i32, i32
  }
  func.func @transform_1(%arg0: i32) -> (i32, i32) {
    %c0_i32 = arith.constant 0 : i32
    %c0_i32_0 = arith.constant 0 : i32
    %c0_i32_1 = arith.constant 0 : i32
    return %c0_i32, %c0_i32_0 : i32, i32
  }
  func.func @transform_2(%arg0: i32) -> (i32, i32) {
    %c0_i32 = arith.constant 0 : i32
    %c0_i32_0 = arith.constant 0 : i32
    %c0_i32_1 = arith.constant 0 : i32
    return %c0_i32, %c0_i32_0 : i32, i32
  }
  func.func @transform_3(%arg0: i32) -> (i32, i32) {
    %c0_i32 = arith.constant 0 : i32
    %c0_i32_0 = arith.constant 0 : i32
    %c0_i32_1 = arith.constant 0 : i32
    return %c0_i32, %c0_i32_0 : i32, i32
  }
  func.func @transform_4(%arg0: i32) -> (i32, i32) {
    %c0_i32 = arith.constant 0 : i32
    %c0_i32_0 = arith.constant 0 : i32
    %c0_i32_1 = arith.constant 0 : i32
    return %c0_i32, %c0_i32_0 : i32, i32
  }
  func.func @transform_5(%arg0: i32) -> (i32, i32) {
    %c0_i32 = arith.constant 0 : i32
    %c0_i32_0 = arith.constant 0 : i32
    %c0_i32_1 = arith.constant 0 : i32
    return %c0_i32, %c0_i32_0 : i32, i32
  }
  func.func @transform_6(%arg0: i32) -> (i32, i32) {
    %c0_i32 = arith.constant 0 : i32
    %c0_i32_0 = arith.constant 0 : i32
    %c0_i32_1 = arith.constant 0 : i32
    return %c0_i32, %c0_i32_0 : i32, i32
  }
  func.func @transform_7(%arg0: i32) -> (i32, i32) {
    %c0_i32 = arith.constant 0 : i32
    %c0_i32_0 = arith.constant 0 : i32
    %c0_i32_1 = arith.constant 0 : i32
    return %c0_i32, %c0_i32_0 : i32, i32
  }
  func.func @transform_8(%arg0: i32) -> (i32, i32) {
    %c0_i32 = arith.constant 0 : i32
    %c0_i32_0 = arith.constant 0 : i32
    %c0_i32_1 = arith.constant 0 : i32
    return %c0_i32, %c0_i32_0 : i32, i32
  }
  func.func @transform_9(%arg0: i32) -> (i32, i32) {
    %c0_i32 = arith.constant 0 : i32
    %c0_i32_0 = arith.constant 0 : i32
    %c0_i32_1 = arith.constant 0 : i32
    return %c0_i32, %c0_i32_0 : i32, i32
  }
  func.func @transform_10(%arg0: i32) -> (i32, i32) {
    %c0_i32 = arith.constant 0 : i32
    %c0_i32_0 = arith.constant 0 : i32
    %c0_i32_1 = arith.constant 0 : i32
    return %c0_i32, %c0_i32_0 : i32, i32
  }
  func.func @transform_11(%arg0: i32) -> (i32, i32) {
    %c0_i32 = arith.constant 0 : i32
    %c0_i32_0 = arith.constant 0 : i32
    %c0_i32_1 = arith.constant 0 : i32
    return %c0_i32, %c0_i32_0 : i32, i32
  }
  func.func @transform_12(%arg0: i32) -> (i32, i32) {
    %c0_i32 = arith.constant 0 : i32
    %c0_i32_0 = arith.constant 0 : i32
    %c0_i32_1 = arith.constant 0 : i32
    return %c0_i32, %c0_i32_0 : i32, i32
  }
  func.func @transform_13(%arg0: i32) -> (i32, i32) {
    %c0_i32 = arith.constant 0 : i32
    %c0_i32_0 = arith.constant 0 : i32
    %c0_i32_1 = arith.constant 0 : i32
    return %c0_i32, %c0_i32_0 : i32, i32
  }
  func.func @transform_14(%arg0: i32) -> (i32, i32, i32) {
    %c0_i32 = arith.constant 0 : i32
    %c0_i32_0 = arith.constant 0 : i32
    %c0_i32_1 = arith.constant 0 : i32
    return %arg0, %c0_i32, %c0_i32_0 : i32, i32, i32
  }
}

</mosaic_0001>

<llo_original>
// kernel: tpu_custom_call.1
$region0: #{tpu_custom_call.1}
  #allocation0 [shape = 'u32[]', space=smem, size = 0x4, offset = 0x4, fixed_abs, tag = 'smem constant byte address 0x4 - core index']
  #allocation1 [shape = 'u32[144,128]{1,0:T(1,128)}', space=vmem, size = 0x12000, scoped, tag = 'internal scratch']
  #allocation2 [shape = 'f32[576,256]{1,0:T(8,128)}', space=vmem, size = 0x90000, scoped, tag = 'scratch operand']
  %s0 = inlined_call_operand.vmem [shape: f32[2,32,256], index: 0, kind: input, shape index: {}]
  %s1 = inlined_call_operand.hbm [shape: f32[9,256], index: 1, kind: input, shape index: {}]
  %s2 = inlined_call_operand.hbm [shape: f32[32,32], index: 2, kind: input, shape index: {}]
  %s3 = inlined_call_operand.hbm [shape: f32[64,64], index: 3, kind: input, shape index: {}]
  %s4 = inlined_call_operand.vmem [shape: f32[32,1], index: 4, kind: input, shape index: {}]
  %s5 = inlined_call_operand.vmem [shape: f32[32,1], index: 5, kind: input, shape index: {}]
  %s6 = inlined_call_operand.hbm [shape: f32[64,288], index: 6, kind: input, shape index: {}]
  %s7 = inlined_call_operand.vmem [shape: f32[64,1], index: 7, kind: input, shape index: {}]
  %s8 = inlined_call_operand.vmem [shape: f32[64,1], index: 8, kind: input, shape index: {}]
  %s9 = inlined_call_operand.vmem [shape: f32[64,1], index: 9, kind: input, shape index: {}]
  %s10 = inlined_call_operand.vmem [shape: f32[64,576], index: 10, kind: input, shape index: {}]
  %s11 = inlined_call_operand.vmem [shape: f32[64,1], index: 11, kind: input, shape index: {}]
  %s12 = inlined_call_operand.vmem [shape: f32[64,32], index: 12, kind: input, shape index: {}]
  %s13 = inlined_call_operand.vmem [shape: f32[64,1], index: 13, kind: input, shape index: {}]
  %s14 = inlined_call_operand.hbm [shape: f32[2,64,256], index: 14, kind: output, shape index: {}]
  %s15 = sld [smem:[#allocation0]]
  $region105: #{tpu_custom_call.1} parent=0
    _
  %s17 = ssub.s32 1, %s15
  %s18 = scalar_select 0, %s17, %s15
  $region1: #{tpu_custom_call.1} parent=0
    #allocation3 [shape = 'u8[16384]{0}', space=vmem, size = 0x4000, scoped, tag = 'input window, operand 1, single buffered']
    #allocation4 [shape = 's32[2]{0}', space=sflag, size = 0x8, scoped, tag = 'scoped memory for tpu_custom_call.1']
    #allocation5 [shape = 's32[2]{0}', space=sflag, size = 0x8, scoped, tag = 'scoped memory for tpu_custom_call.1']
    #allocation6 [shape = 'u8[16384]{0}', space=vmem, size = 0x4000, scoped, tag = 'input window, operand 2, single buffered']
    #allocation7 [shape = 's32[1]{0}', space=sflag, size = 0x4, scoped, tag = 'scoped memory for tpu_custom_call.1']
    #allocation8 [shape = 'u8[32768]{0}', space=vmem, size = 0x8000, scoped, tag = 'input window, operand 3, single buffered']
    #allocation9 [shape = 'u8[98304]{0}', space=vmem, size = 0x18000, scoped, tag = 'input window, operand 6, single buffered']
    #allocation10 [shape = 's32[1]{0}', space=sflag, size = 0x4, scoped, tag = 'scoped memory for tpu_custom_call.1']
    #allocation11 [shape = 'u8[131072]{0}', space=vmem, size = 0x20000, scoped, tag = 'output window, operand 0']
    %19 = vsyncpa [#allocation4], 0
    %20 = vsyncpa [#allocation7], 0
    %21 = vsyncpa [#allocation10], 0
    %22 = vsyncpa [#allocation5], 0
    %s23 = scalar_lea.sflag [#allocation5], 1
    %24 = vsyncpa %s23, 0
    loop: start=0, step=1, limit=4
    $region2: #{tpu_custom_call.1} parent=1 // loop_pre_header
      _
    $region3: #{tpu_custom_call.1} parent=1 // loop_header
      %s26 = sphi 0, %s30
      %p27 = scmp.ge.s32.totalorder %s26, 4
      %s36 = sphi 0, %s38
      %s39 = sphi 0, %s36
      %s40 = sphi 0, %s39
      %s56 = sphi 0, %s40
      %s60 = sphi 0, %s60
      %s62 = sphi 0, %s60
      %s63 = sphi 0, %s62
      %s77 = sphi 0, %s63
      %s81 = sphi 0, %s81
      %s83 = sphi 0, %s81
      %s84 = sphi 0, %s83
      %s98 = sphi 0, %s84
      %s102 = sphi 0, %s102
      %s104 = sphi 0, %s102
      %s105 = sphi 0, %s104
      %s119 = sphi 0, %s105
      %s123 = sphi 0, %s123
      %s125 = sphi 0, %s123
      %s126 = sphi 0, %s125
      %s140 = sphi 0, %s126
      %s144 = sphi 0, %s144
      %s146 = sphi 0, %s144
      %s147 = sphi 0, %s146
      %s161 = sphi 0, %s147
      %s165 = sphi 0, %s165
      %s167 = sphi 0, %s165
      %s168 = sphi 0, %s167
      %s182 = sphi 0, %s168
      %s186 = sphi 0, %s186
      %s188 = sphi 0, %s186
      %s189 = sphi 0, %s188
      %s203 = sphi 0, %s189
      %s207 = sphi 0, %s207
      %s209 = sphi 0, %s207
      %s210 = sphi 0, %s209
      %s224 = sphi 0, %s210
      %s228 = sphi 0, %s228
      %s230 = sphi 0, %s228
      %s231 = sphi 0, %s230
      %s245 = sphi 0, %s231
      %s249 = sphi 0, %s249
      %s251 = sphi 0, %s249
      %s252 = sphi 0, %s251
      %s266 = sphi 0, %s252
      %s270 = sphi 0, %s270
      %s272 = sphi 0, %s270
      %s273 = sphi 0, %s272
      %s287 = sphi 0, %s273
      %s291 = sphi 0, %s291
      %s293 = sphi 0, %s291
      %s294 = sphi 0, %s293
      %s308 = sphi 0, %s294
      %s312 = sphi 0, %s312
      %s314 = sphi 0, %s312
      %s315 = sphi 0, %s314
      %s329 = sphi 0, %s315
      %s335 = sphi 0, %s337
      %s338 = sphi 0, %s335
      %s339 = sphi 0, %s338
      %s355 = sphi 0, %s339
    $region4: #{tpu_custom_call.1} parent=1 // loop_header_branch
      %29 = sbr.rel (%p27) target = $region8
    $region5: #{tpu_custom_call.1} parent=1 // loop_body
      %s31 = ssub.s32 %s26, 1
      %s32 = ssub.s32 %s26, 2
      %s33 = sadd.s32 %s26, 1
      %s34 = ssub.s32 %s26, %s33
      %p35 = scmp.eq.s32.totalorder %s34, 0
      %s37 = sadd.s32 %s36, 1
      %s38 = scalar_select %p35, %s36, %s37
      %p41 = pneg %p35
      %p42 = scmp.eq.s32.totalorder %s26, 1
      %p43 = por %p41, %p42
      %p44 = scmp.ne.s32.totalorder %s36, %s39
      %p45 = scmp.eq.s32.totalorder %s26, 0
      %p46 = por %p44, %p45
      %p47 = scmp.ne.s32.totalorder %s36, %s39
      %p48 = scmp.eq.s32.totalorder %s31, 1
      %p49 = por %p47, %p48
      %p50 = scmp.ne.s32.totalorder %s39, %s40
      %p51 = scmp.eq.s32.totalorder %s31, 0
      %p52 = por %p50, %p51
      %p53 = scmp.ne.s32.totalorder %s39, %s40
      %p54 = scmp.eq.s32.totalorder %s32, 1
      %p55 = por %p53, %p54
      %p57 = scmp.ne.s32.totalorder %s40, %s56
      %p58 = scmp.eq.s32.totalorder %s32, 0
      %p59 = por %p57, %p58
      %s61 = sadd.s32 %s60, 1
      %p64 = scmp.eq.s32.totalorder %s26, 1
      %p65 = scmp.ne.s32.totalorder %s60, %s62
      %p66 = scmp.eq.s32.totalorder %s26, 0
      %p67 = por %p65, %p66
      %p68 = scmp.ne.s32.totalorder %s60, %s62
      %p69 = scmp.eq.s32.totalorder %s31, 1
      %p70 = por %p68, %p69
      %p71 = scmp.ne.s32.totalorder %s62, %s63
      %p72 = scmp.eq.s32.totalorder %s31, 0
      %p73 = por %p71, %p72
      %p74 = scmp.ne.s32.totalorder %s62, %s63
      %p75 = scmp.eq.s32.totalorder %s32, 1
      %p76 = por %p74, %p75
      %p78 = scmp.ne.s32.totalorder %s63, %s77
      %p79 = scmp.eq.s32.totalorder %s32, 0
      %p80 = por %p78, %p79
      %s82 = sadd.s32 %s81, 1
      %p85 = scmp.eq.s32.totalorder %s26, 1
      %p86 = scmp.ne.s32.totalorder %s81, %s83
      %p87 = scmp.eq.s32.totalorder %s26, 0
      %p88 = por %p86, %p87
      %p89 = scmp.ne.s32.totalorder %s81, %s83
      %p90 = scmp.eq.s32.totalorder %s31, 1
      %p91 = por %p89, %p90
      %p92 = scmp.ne.s32.totalorder %s83, %s84
      %p93 = scmp.eq.s32.totalorder %s31, 0
      %p94 = por %p92, %p93
      %p95 = scmp.ne.s32.totalorder %s83, %s84
      %p96 = scmp.eq.s32.totalorder %s32, 1
      %p97 = por %p95, %p96
      %p99 = scmp.ne.s32.totalorder %s84, %s98
      %p100 = scmp.eq.s32.totalorder %s32, 0
      %p101 = por %p99, %p100
      %s103 = sadd.s32 %s102, 1
      %p106 = scmp.eq.s32.totalorder %s26, 1
      %p107 = scmp.ne.s32.totalorder %s102, %s104
      %p108 = scmp.eq.s32.totalorder %s26, 0
      %p109 = por %p107, %p108
      %p110 = scmp.ne.s32.totalorder %s102, %s104
      %p111 = scmp.eq.s32.totalorder %s31, 1
      %p112 = por %p110, %p111
      %p113 = scmp.ne.s32.totalorder %s104, %s105
      %p114 = scmp.eq.s32.totalorder %s31, 0
      %p115 = por %p113, %p114
      %p116 = scmp.ne.s32.totalorder %s104, %s105
      %p117 = scmp.eq.s32.totalorder %s32, 1
      %p118 = por %p116, %p117
      %p120 = scmp.ne.s32.totalorder %s105, %s119
      %p121 = scmp.eq.s32.totalorder %s32, 0
      %p122 = por %p120, %p121
      %s124 = sadd.s32 %s123, 1
      %p127 = scmp.eq.s32.totalorder %s26, 1
      %p128 = scmp.ne.s32.totalorder %s123, %s125
      %p129 = scmp.eq.s32.totalorder %s26, 0
      %p130 = por %p128, %p129
      %p131 = scmp.ne.s32.totalorder %s123, %s125
      %p132 = scmp.eq.s32.totalorder %s31, 1
      %p133 = por %p131, %p132
      %p134 = scmp.ne.s32.totalorder %s125, %s126
      %p135 = scmp.eq.s32.totalorder %s31, 0
      %p136 = por %p134, %p135
      %p137 = scmp.ne.s32.totalorder %s125, %s126
      %p138 = scmp.eq.s32.totalorder %s32, 1
      %p139 = por %p137, %p138
      %p141 = scmp.ne.s32.totalorder %s126, %s140
      %p142 = scmp.eq.s32.totalorder %s32, 0
      %p143 = por %p141, %p142
      %s145 = sadd.s32 %s144, 1
      %p148 = scmp.eq.s32.totalorder %s26, 1
      %p149 = scmp.ne.s32.totalorder %s144, %s146
      %p150 = scmp.eq.s32.totalorder %s26, 0
      %p151 = por %p149, %p150
      %p152 = scmp.ne.s32.totalorder %s144, %s146
      %p153 = scmp.eq.s32.totalorder %s31, 1
      %p154 = por %p152, %p153
      %p155 = scmp.ne.s32.totalorder %s146, %s147
      %p156 = scmp.eq.s32.totalorder %s31, 0
      %p157 = por %p155, %p156
      %p158 = scmp.ne.s32.totalorder %s146, %s147
      %p159 = scmp.eq.s32.totalorder %s32, 1
      %p160 = por %p158, %p159
      %p162 = scmp.ne.s32.totalorder %s147, %s161
      %p163 = scmp.eq.s32.totalorder %s32, 0
      %p164 = por %p162, %p163
      %s166 = sadd.s32 %s165, 1
      %p169 = scmp.eq.s32.totalorder %s26, 1
      %p170 = scmp.ne.s32.totalorder %s165, %s167
      %p171 = scmp.eq.s32.totalorder %s26, 0
      %p172 = por %p170, %p171
      %p173 = scmp.ne.s32.totalorder %s165, %s167
      %p174 = scmp.eq.s32.totalorder %s31, 1
      %p175 = por %p173, %p174
      %p176 = scmp.ne.s32.totalorder %s167, %s168
      %p177 = scmp.eq.s32.totalorder %s31, 0
      %p178 = por %p176, %p177
      %p179 = scmp.ne.s32.totalorder %s167, %s168
      %p180 = scmp.eq.s32.totalorder %s32, 1
      %p181 = por %p179, %p180
      %p183 = scmp.ne.s32.totalorder %s168, %s182
      %p184 = scmp.eq.s32.totalorder %s32, 0
      %p185 = por %p183, %p184
      %s187 = sadd.s32 %s186, 1
      %p190 = scmp.eq.s32.totalorder %s26, 1
      %p191 = scmp.ne.s32.totalorder %s186, %s188
      %p192 = scmp.eq.s32.totalorder %s26, 0
      %p193 = por %p191, %p192
      %p194 = scmp.ne.s32.totalorder %s186, %s188
      %p195 = scmp.eq.s32.totalorder %s31, 1
      %p196 = por %p194, %p195
      %p197 = scmp.ne.s32.totalorder %s188, %s189
      %p198 = scmp.eq.s32.totalorder %s31, 0
      %p199 = por %p197, %p198
      %p200 = scmp.ne.s32.totalorder %s188, %s189
      %p201 = scmp.eq.s32.totalorder %s32, 1
      %p202 = por %p200, %p201
      %p204 = scmp.ne.s32.totalorder %s189, %s203
      %p205 = scmp.eq.s32.totalorder %s32, 0
      %p206 = por %p204, %p205
      %s208 = sadd.s32 %s207, 1
      %p211 = scmp.eq.s32.totalorder %s26, 1
      %p212 = scmp.ne.s32.totalorder %s207, %s209
      %p213 = scmp.eq.s32.totalorder %s26, 0
      %p214 = por %p212, %p213
      %p215 = scmp.ne.s32.totalorder %s207, %s209
      %p216 = scmp.eq.s32.totalorder %s31, 1
      %p217 = por %p215, %p216
      %p218 = scmp.ne.s32.totalorder %s209, %s210
      %p219 = scmp.eq.s32.totalorder %s31, 0
      %p220 = por %p218, %p219
      %p221 = scmp.ne.s32.totalorder %s209, %s210
      %p222 = scmp.eq.s32.totalorder %s32, 1
      %p223 = por %p221, %p222
      %p225 = scmp.ne.s32.totalorder %s210, %s224
      %p226 = scmp.eq.s32.totalorder %s32, 0
      %p227 = por %p225, %p226
      %s229 = sadd.s32 %s228, 1
      %p232 = scmp.eq.s32.totalorder %s26, 1
      %p233 = scmp.ne.s32.totalorder %s228, %s230
      %p234 = scmp.eq.s32.totalorder %s26, 0
      %p235 = por %p233, %p234
      %p236 = scmp.ne.s32.totalorder %s228, %s230
      %p237 = scmp.eq.s32.totalorder %s31, 1
      %p238 = por %p236, %p237
      %p239 = scmp.ne.s32.totalorder %s230, %s231
      %p240 = scmp.eq.s32.totalorder %s31, 0
      %p241 = por %p239, %p240
      %p242 = scmp.ne.s32.totalorder %s230, %s231
      %p243 = scmp.eq.s32.totalorder %s32, 1
      %p244 = por %p242, %p243
      %p246 = scmp.ne.s32.totalorder %s231, %s245
      %p247 = scmp.eq.s32.totalorder %s32, 0
      %p248 = por %p246, %p247
      %s250 = sadd.s32 %s249, 1
      %p253 = scmp.eq.s32.totalorder %s26, 1
      %p254 = scmp.ne.s32.totalorder %s249, %s251
      %p255 = scmp.eq.s32.totalorder %s26, 0
      %p256 = por %p254, %p255
      %p257 = scmp.ne.s32.totalorder %s249, %s251
      %p258 = scmp.eq.s32.totalorder %s31, 1
      %p259 = por %p257, %p258
      %p260 = scmp.ne.s32.totalorder %s251, %s252
      %p261 = scmp.eq.s32.totalorder %s31, 0
      %p262 = por %p260, %p261
      %p263 = scmp.ne.s32.totalorder %s251, %s252
      %p264 = scmp.eq.s32.totalorder %s32, 1
      %p265 = por %p263, %p264
      %p267 = scmp.ne.s32.totalorder %s252, %s266
      %p268 = scmp.eq.s32.totalorder %s32, 0
      %p269 = por %p267, %p268
      %s271 = sadd.s32 %s270, 1
      %p274 = scmp.eq.s32.totalorder %s26, 1
      %p275 = scmp.ne.s32.totalorder %s270, %s272
      %p276 = scmp.eq.s32.totalorder %s26, 0
      %p277 = por %p275, %p276
      %p278 = scmp.ne.s32.totalorder %s270, %s272
      %p279 = scmp.eq.s32.totalorder %s31, 1
      %p280 = por %p278, %p279
      %p281 = scmp.ne.s32.totalorder %s272, %s273
      %p282 = scmp.eq.s32.totalorder %s31, 0
      %p283 = por %p281, %p282
      %p284 = scmp.ne.s32.totalorder %s272, %s273
      %p285 = scmp.eq.s32.totalorder %s32, 1
      %p286 = por %p284, %p285
      %p288 = scmp.ne.s32.totalorder %s273, %s287
      %p289 = scmp.eq.s32.totalorder %s32, 0
      %p290 = por %p288, %p289
      %s292 = sadd.s32 %s291, 1
      %p295 = scmp.eq.s32.totalorder %s26, 1
      %p296 = scmp.ne.s32.totalorder %s291, %s293
      %p297 = scmp.eq.s32.totalorder %s26, 0
      %p298 = por %p296, %p297
      %p299 = scmp.ne.s32.totalorder %s291, %s293
      %p300 = scmp.eq.s32.totalorder %s31, 1
      %p301 = por %p299, %p300
      %p302 = scmp.ne.s32.totalorder %s293, %s294
      %p303 = scmp.eq.s32.totalorder %s31, 0
      %p304 = por %p302, %p303
      %p305 = scmp.ne.s32.totalorder %s293, %s294
      %p306 = scmp.eq.s32.totalorder %s32, 1
      %p307 = por %p305, %p306
      %p309 = scmp.ne.s32.totalorder %s294, %s308
      %p310 = scmp.eq.s32.totalorder %s32, 0
      %p311 = por %p309, %p310
      %s313 = sadd.s32 %s312, 1
      %p316 = scmp.eq.s32.totalorder %s26, 1
      %p317 = scmp.ne.s32.totalorder %s312, %s314
      %p318 = scmp.eq.s32.totalorder %s26, 0
      %p319 = por %p317, %p318
      %p320 = scmp.ne.s32.totalorder %s312, %s314
      %p321 = scmp.eq.s32.totalorder %s31, 1
      %p322 = por %p320, %p321
      %p323 = scmp.ne.s32.totalorder %s314, %s315
      %p324 = scmp.eq.s32.totalorder %s31, 0
      %p325 = por %p323, %p324
      %p326 = scmp.ne.s32.totalorder %s314, %s315
      %p327 = scmp.eq.s32.totalorder %s32, 1
      %p328 = por %p326, %p327
      %p330 = scmp.ne.s32.totalorder %s315, %s329
      %p331 = scmp.eq.s32.totalorder %s32, 0
      %p332 = por %p330, %p331
      %s333 = ssub.s32 %s26, %s33
      %p334 = scmp.eq.s32.totalorder %s333, 0
      %s336 = sadd.s32 %s335, 1
      %s337 = scalar_select %p334, %s335, %s336
      %p340 = pneg %p334
      %p341 = scmp.eq.s32.totalorder %s26, 1
      %p342 = por %p340, %p341
      %p343 = scmp.ne.s32.totalorder %s335, %s338
      %p344 = scmp.eq.s32.totalorder %s26, 0
      %p345 = por %p343, %p344
      %p346 = scmp.ne.s32.totalorder %s335, %s338
      %p347 = scmp.eq.s32.totalorder %s31, 1
      %p348 = por %p346, %p347
      %p349 = scmp.ne.s32.totalorder %s338, %s339
      %p350 = scmp.eq.s32.totalorder %s31, 0
      %p351 = por %p349, %p350
      %p352 = scmp.ne.s32.totalorder %s338, %s339
      %p353 = scmp.eq.s32.totalorder %s32, 1
      %p354 = por %p352, %p353
      %p356 = scmp.ne.s32.totalorder %s339, %s355
      %p357 = scmp.eq.s32.totalorder %s32, 0
      %p358 = por %p356, %p357
      %p359 = scmp.le.s32.totalorder 1, %s26
      %p360 = scmp.lt.s32.totalorder %s26, 3
      %p361 = pnand %p359, %p360
      %p362 = pneg %p361
      // Predicated region
      $region9: #{tpu_custom_call.1} parent=5 // pred_check
        _
      $region10: #{tpu_custom_call.1} parent=5 // pred_check_branch
        %364 = sbr.rel (%p361) target = $region12
      $region11: #{tpu_custom_call.1} parent=5 // pred_region
        %s365 = ssub.s32 %s26, 1
        // Predicated region
        $region13: #{tpu_custom_call.1} parent=11 // pred_check
          %p366 = pneg %p73
        $region14: #{tpu_custom_call.1} parent=11 // pred_check_branch
          %368 = sbr.rel (%p366) target = $region16
        $region15: #{tpu_custom_call.1} parent=11 // pred_region
          %s370 = ssub.s32 512, 512
          %371 = vsyncadd [#allocation4], %s370
          %s372 = sshll.u32 [#allocation3], 4
          %s373 = int_to_ptr.vmem [resolvable:$true] %s372
          %378 = dma.hbm_to_vmem [thread:$0]  %s1, 512, %s373, [#allocation4], 256, 256, 16
        $region16: #{tpu_custom_call.1} parent=11 // pred_fallthru
          _
        // Predicated region
        $region17: #{tpu_custom_call.1} parent=11 // pred_check
          %p379 = pneg %p94
        $region18: #{tpu_custom_call.1} parent=11 // pred_check_branch
          %381 = sbr.rel (%p379) target = $region20
        $region19: #{tpu_custom_call.1} parent=11 // pred_region
          %s383 = ssub.s32 512, 512
          %384 = vsyncadd [#allocation7], %s383
          %s385 = sshll.u32 [#allocation6], 4
          %s386 = int_to_ptr.vmem [resolvable:$true] %s385
          %391 = dma.hbm_to_vmem [thread:$0]  %s2, 512, %s386, [#allocation7], 128, 128, 8
        $region20: #{tpu_custom_call.1} parent=11 // pred_fallthru
          _
        // Predicated region
        $region21: #{tpu_custom_call.1} parent=11 // pred_check
          %p392 = pneg %p115
        $region22: #{tpu_custom_call.1} parent=11 // pred_check_branch
          %394 = sbr.rel (%p392) target = $region24
        $region23: #{tpu_custom_call.1} parent=11 // pred_region
          %s396 = ssub.s32 1024, 1024
          %397 = vsyncadd [#allocation7], %s396
          %s398 = sshll.u32 [#allocation8], 4
          %s399 = int_to_ptr.vmem [resolvable:$true] %s398
          %404 = dma.hbm_to_vmem [thread:$0]  %s3, 1024, %s399, [#allocation7], 128, 128, 8
        $region24: #{tpu_custom_call.1} parent=11 // pred_fallthru
          _
        // Predicated region
        $region25: #{tpu_custom_call.1} parent=11 // pred_check
          %p405 = pneg %p136
        $region26: #{tpu_custom_call.1} parent=11 // pred_check_branch
          %407 = sbr.rel (%p405) target = $region28
        $region27: #{tpu_custom_call.1} parent=11 // pred_region
          _
        $region28: #{tpu_custom_call.1} parent=11 // pred_fallthru
          _
        // Predicated region
        $region29: #{tpu_custom_call.1} parent=11 // pred_check
          %p408 = pneg %p157
        $region30: #{tpu_custom_call.1} parent=11 // pred_check_branch
          %410 = sbr.rel (%p408) target = $region32
        $region31: #{tpu_custom_call.1} parent=11 // pred_region
          _
        $region32: #{tpu_custom_call.1} parent=11 // pred_fallthru
          _
        // Predicated region
        $region33: #{tpu_custom_call.1} parent=11 // pred_check
          %p411 = pneg %p178
        $region34: #{tpu_custom_call.1} parent=11 // pred_check_branch
          %413 = sbr.rel (%p411) target = $region36
        $region35: #{tpu_custom_call.1} parent=11 // pred_region
          %s415 = ssub.s32 3072, 3072
          %416 = vsyncadd [#allocation10], %s415
          %s417 = sshll.u32 [#allocation9], 4
          %s418 = int_to_ptr.vmem [resolvable:$true] %s417
          %423 = dma.hbm_to_vmem [thread:$0]  %s6, 3072, %s418, [#allocation10], 384, 384, 24
        $region36: #{tpu_custom_call.1} parent=11 // pred_fallthru
          _
        // Predicated region
        $region37: #{tpu_custom_call.1} parent=11 // pred_check
          %p424 = pneg %p199
        $region38: #{tpu_custom_call.1} parent=11 // pred_check_branch
          %426 = sbr.rel (%p424) target = $region40
        $region39: #{tpu_custom_call.1} parent=11 // pred_region
          _
        $region40: #{tpu_custom_call.1} parent=11 // pred_fallthru
          _
        // Predicated region
        $region41: #{tpu_custom_call.1} parent=11 // pred_check
          %p427 = pneg %p220
        $region42: #{tpu_custom_call.1} parent=11 // pred_check_branch
          %429 = sbr.rel (%p427) target = $region44
        $region43: #{tpu_custom_call.1} parent=11 // pred_region
          _
        $region44: #{tpu_custom_call.1} parent=11 // pred_fallthru
          _
        // Predicated region
        $region45: #{tpu_custom_call.1} parent=11 // pred_check
          %p430 = pneg %p241
        $region46: #{tpu_custom_call.1} parent=11 // pred_check_branch
          %432 = sbr.rel (%p430) target = $region48
        $region47: #{tpu_custom_call.1} parent=11 // pred_region
          _
        $region48: #{tpu_custom_call.1} parent=11 // pred_fallthru
          _
        // Predicated region
        $region49: #{tpu_custom_call.1} parent=11 // pred_check
          %p433 = pneg %p262
        $region50: #{tpu_custom_call.1} parent=11 // pred_check_branch
          %435 = sbr.rel (%p433) target = $region52
        $region51: #{tpu_custom_call.1} parent=11 // pred_region
          _
        $region52: #{tpu_custom_call.1} parent=11 // pred_fallthru
          _
        // Predicated region
        $region53: #{tpu_custom_call.1} parent=11 // pred_check
          %p436 = pneg %p283
        $region54: #{tpu_custom_call.1} parent=11 // pred_check_branch
          %438 = sbr.rel (%p436) target = $region56
        $region55: #{tpu_custom_call.1} parent=11 // pred_region
          _
        $region56: #{tpu_custom_call.1} parent=11 // pred_fallthru
          _
        // Predicated region
        $region57: #{tpu_custom_call.1} parent=11 // pred_check
          %p439 = pneg %p304
        $region58: #{tpu_custom_call.1} parent=11 // pred_check_branch
          %441 = sbr.rel (%p439) target = $region60
        $region59: #{tpu_custom_call.1} parent=11 // pred_region
          _
        $region60: #{tpu_custom_call.1} parent=11 // pred_fallthru
          _
        // Predicated region
        $region61: #{tpu_custom_call.1} parent=11 // pred_check
          %p442 = pneg %p325
        $region62: #{tpu_custom_call.1} parent=11 // pred_check_branch
          %444 = sbr.rel (%p442) target = $region64
        $region63: #{tpu_custom_call.1} parent=11 // pred_region
          _
        $region64: #{tpu_custom_call.1} parent=11 // pred_fallthru
          _
      $region12: #{tpu_custom_call.1} parent=5 // pred_fallthru
        _
      %p445 = scmp.lt.s32.totalorder %s26, 2
      // Predicated region
      $region65: #{tpu_custom_call.1} parent=5 // pred_check
        %p446 = pneg %p445
      $region66: #{tpu_custom_call.1} parent=5 // pred_check_branch
        %448 = sbr.rel (%p446) target = $region68
      $region67: #{tpu_custom_call.1} parent=5 // pred_region
        // Predicated region
        $region69: #{tpu_custom_call.1} parent=67 // pred_check
          %p449 = pneg %p46
        $region70: #{tpu_custom_call.1} parent=67 // pred_check_branch
          %451 = sbr.rel (%p449) target = $region72
        $region71: #{tpu_custom_call.1} parent=67 // pred_region
          %p452 = scmp.lt.s32.totalorder %s26, 1
          %s453 = scalar_select %p452, %s26, 1
          %s454 = smul.addr %s453, 8
          %s455 = smul.addr %s454, 8
          %s456 = scalar_lea.vmem %s0, %s455
        $region72: #{tpu_custom_call.1} parent=67 // pred_fallthru
          _
      $region68: #{tpu_custom_call.1} parent=5 // pred_fallthru
        _
      %p457 = scmp.le.s32.totalorder 1, %s26
      %p458 = scmp.lt.s32.totalorder %s26, 3
      %p459 = pnand %p457, %p458
      %p460 = pneg %p459
      // Predicated region
      $region73: #{tpu_custom_call.1} parent=5 // pred_check
        _
      $region74: #{tpu_custom_call.1} parent=5 // pred_check_branch
        %462 = sbr.rel (%p459) target = $region76
      $region75: #{tpu_custom_call.1} parent=5 // pred_region
        %s463 = ssub.s32 %s26, 1
        // Predicated region
        $region77: #{tpu_custom_call.1} parent=75 // pred_check
          %p464 = pneg %p73
        $region78: #{tpu_custom_call.1} parent=75 // pred_check_branch
          %466 = sbr.rel (%p464) target = $region80
        $region79: #{tpu_custom_call.1} parent=75 // pred_region
          %467 = dma.done [#allocation4], 512
        $region80: #{tpu_custom_call.1} parent=75 // pred_fallthru
          _
        // Predicated region
        $region81: #{tpu_custom_call.1} parent=75 // pred_check
          %p468 = pneg %p94
        $region82: #{tpu_custom_call.1} parent=75 // pred_check_branch
          %470 = sbr.rel (%p468) target = $region84
        $region83: #{tpu_custom_call.1} parent=75 // pred_region
          %471 = dma.done [#allocation7], 512
        $region84: #{tpu_custom_call.1} parent=75 // pred_fallthru
          _
        // Predicated region
        $region85: #{tpu_custom_call.1} parent=75 // pred_check
          %p472 = pneg %p115
        $region86: #{tpu_custom_call.1} parent=75 // pred_check_branch
          %474 = sbr.rel (%p472) target = $region88
        $region87: #{tpu_custom_call.1} parent=75 // pred_region
          %475 = dma.done [#allocation7], 1024
        $region88: #{tpu_custom_call.1} parent=75 // pred_fallthru
          _
        // Predicated region
        $region89: #{tpu_custom_call.1} parent=75 // pred_check
          %p476 = pneg %p178
        $region90: #{tpu_custom_call.1} parent=75 // pred_check_branch
          %478 = sbr.rel (%p476) target = $region92
        $region91: #{tpu_custom_call.1} parent=75 // pred_region
          %479 = dma.done [#allocation10], 3072
        $region92: #{tpu_custom_call.1} parent=75 // pred_fallthru
          _
        %p480 = scmp.lt.s32.totalorder %s31, 1
        %s481 = scalar_select %p480, %s31, 1
        %s482 = smul.addr %s481, 8
        %s483 = smul.addr %s482, 8
        %s484 = scalar_lea.vmem %s0, %s483
        %p485 = pneg %p52
        %p486 = pneg %p49
        %p487 = pneg %p73
        %p488 = pneg %p70
        %p489 = pneg %p94
        %p490 = pneg %p91
        %p491 = pneg %p115
        %p492 = pneg %p112
        %p493 = pneg %p136
        %p494 = pneg %p133
        %p495 = pneg %p157
        %p496 = pneg %p154
        %p497 = pneg %p178
        %p498 = pneg %p175
        %p499 = pneg %p199
        %p500 = pneg %p196
        %p501 = pneg %p220
        %p502 = pneg %p217
        %p503 = pneg %p241
        %p504 = pneg %p238
        %p505 = pneg %p262
        %p506 = pneg %p259
        %p507 = pneg %p283
        %p508 = pneg %p280
        %p509 = pneg %p304
        %p510 = pneg %p301
        %p511 = pneg %p325
        %p512 = pneg %p322
        %p513 = pneg %p351
        %p514 = pneg %p348
        %s515 = sand.u32 %s338, 1
        %s516 = scalar_lea.sflag [#allocation5], %s515
        %s517 = sand.u32 %s338, 1
        %s518 = smul.addr %s517, 128
        %s519 = scalar_lea.vmem [#allocation11], %s518
        %p520 = scmp.lt.s32.totalorder %s31, 1
        %s521 = scalar_select %p520, %s31, 1
        %s522 = smul.addr %s521, 8
        %s523 = smul.addr %s522, 8
        %s524 = scalar_lea.vmem %s0, %s523
        %v525 = vld [vmem:[#allocation3] sm:$0xff]
        %v526 = vld [vmem:[#allocation3 + $0x8] sm:$0xff]
        %v527 = vld [vmem:[#allocation3 + $0x10] sm:$0x1]
        %v528 = vld [vmem:[#allocation3 + $0x18] sm:$0x1]
        %v529 = vld [vmem:[#allocation6] sm:$0xff]
        %v530 = vld [vmem:[#allocation6 + $0x8] sm:$0xff]
        %v531 = vld [vmem:[#allocation6 + $0x10] sm:$0xff]
        %v532 = vld [vmem:[#allocation6 + $0x18] sm:$0xff]
        %v533 = vld [vmem:[#allocation8] sm:$0xff]
        %v534 = vld [vmem:[#allocation8 + $0x8] sm:$0xff]
        %v535 = vld [vmem:[#allocation8 + $0x10] sm:$0xff]
        %v536 = vld [vmem:[#allocation8 + $0x18] sm:$0xff]
        %v537 = vld [vmem:[#allocation8 + $0x20] sm:$0xff]
        %v538 = vld [vmem:[#allocation8 + $0x28] sm:$0xff]
        %v539 = vld [vmem:[#allocation8 + $0x30] sm:$0xff]
        %v540 = vld [vmem:[#allocation8 + $0x38] sm:$0xff]
        %v541 = vld [vmem:[%s524] sm:$0xff]
        %v542 = vld [vmem:[%s524 + $0x8] sm:$0xff]
        %v543 = vld [vmem:[%s524 + $0x10] sm:$0xff]
        %v544 = vld [vmem:[%s524 + $0x18] sm:$0xff]
        %v545 = vld [vmem:[%s524 + $0x20] sm:$0xff]
        %v546 = vld [vmem:[%s524 + $0x28] sm:$0xff]
        %v547 = vld [vmem:[%s524 + $0x30] sm:$0xff]
        %v548 = vld [vmem:[%s524 + $0x38] sm:$0xff]
        %v549 = vld [vmem:[%s4] sm:$0xff]
        %v550 = vld [vmem:[%s4 + $0x8] sm:$0xff]
        %v551 = vld [vmem:[%s4 + $0x10] sm:$0xff]
        %v552 = vld [vmem:[%s4 + $0x18] sm:$0xff]
        %v553 = vld [vmem:[%s5] sm:$0xff]
        %v554 = vld [vmem:[%s5 + $0x8] sm:$0xff]
        %v555 = vld [vmem:[%s5 + $0x10] sm:$0xff]
        %v556 = vld [vmem:[%s5 + $0x18] sm:$0xff]
        %v557 = vadd.f32 %v541, %v542
        %558 = vadd.xlane.f32.xlu0 %v557
        %v559 = vpop.xlane.xlu0 %558
        %v560 = vadd.f32 %v543, %v544
        %561 = vadd.xlane.f32.xlu0 %v560
        %v562 = vpop.xlane.xlu0 %561
        %v563 = vadd.f32 %v545, %v546
        %564 = vadd.xlane.f32.xlu0 %v563
        %v565 = vpop.xlane.xlu0 %564
        %v566 = vadd.f32 %v547, %v548
        %567 = vadd.xlane.f32.xlu0 %v566
        %v568 = vpop.xlane.xlu0 %567
        %vm569 = vcmask 261120
        %v571 = vsel %vm569, %v529, 0
        %v574 = vsel %vm569, %v530, 0
        %v577 = vsel %vm569, %v531, 0
        %v580 = vsel %vm569, %v532, 0
        %582 = vmatprep.subr.mxu0 0.0
        %583 = vmatpush1.msra.mxu0 0.0
        %584 = vmatprep.subr.mxu0 0.0
        %585 = vmatpush1.msra.mxu0 0.0
        %586 = vmatprep.subr.mxu0 0.0
        %587 = vmatpush1.msra.mxu0 0.0
        %588 = vmatprep.subr.mxu0 0.0
        %589 = vmatpush1.msra.mxu0 0.0
        %590 = vmatprep.subr.mxu0 0.0
        %591 = vmatpush1.msra.mxu0 0.0
        %592 = vmatprep.subr.mxu0 0.0
        %593 = vmatpush1.msra.mxu0 0.0
        %594 = vmatprep.subr.mxu0 0.0
        %595 = vmatpush1.msra.mxu0 0.0
        %596 = vmatprep.subr.mxu0 0.0
        %597 = vmatpush1.msra.mxu0 0.0
        %598 = vmatprep.subr.mxu0 0.0
        %599 = vmatpush1.msra.mxu0 0.0
        %600 = vmatprep.subr.mxu0 0.0
        %601 = vmatpush1.msra.mxu0 0.0
        %602 = vmatprep.subr.mxu0 0.0
        %603 = vmatpush1.msra.mxu0 0.0
        %604 = vmatprep.subr.mxu0 0.0
        %605 = vmatpush1.msra.mxu0 0.0
        %606 = vmatprep.subr.mxu0 0.0
        %607 = vmatpush1.msra.mxu0 %v568
        %608 = vmatprep.subr.mxu0 0.0
        %609 = vmatpush1.msra.mxu0 %v565
        %610 = vmatprep.subr.mxu0 0.0
        %611 = vmatpush1.msra.mxu0 %v562
        %612 = vmatprep.subr.mxu0 0.0
        %613 = vmatpush1.msra.mxu0 %v559
        %614 = vmatprep.subr.mxu0 0.0
        %615 = vmatpush2.msra.mxu0 0.0
        %616 = vmatprep.subr.mxu0 0.0
        %617 = vmatpush2.msra.mxu0 0.0
        %618 = vmatprep.subr.mxu0 0.0
        %619 = vmatpush2.msra.mxu0 0.0
        %620 = vmatprep.subr.mxu0 0.0
        %621 = vmatpush2.msra.mxu0 0.0
        %622 = vmatprep.subr.mxu0 0.0
        %623 = vmatpush2.msra.mxu0 0.0
        %624 = vmatprep.subr.mxu0 0.0
        %625 = vmatpush2.msra.mxu0 0.0
        %626 = vmatprep.subr.mxu0 0.0
        %627 = vmatpush2.msra.mxu0 0.0
        %628 = vmatprep.subr.mxu0 0.0
        %629 = vmatpush2.msra.mxu0 0.0
        %630 = vmatprep.subr.mxu0 0.0
        %631 = vmatpush2.msra.mxu0 0.0
        %632 = vmatprep.subr.mxu0 0.0
        %633 = vmatpush2.msra.mxu0 0.0
        %634 = vmatprep.subr.mxu0 0.0
        %635 = vmatpush2.msra.mxu0 0.0
        %636 = vmatprep.subr.mxu0 0.0
        %637 = vmatpush2.msra.mxu0 0.0
        %638 = vmatprep.subr.mxu0 0.0
        %639 = vmatpush2.msra.mxu0 0.0
        %640 = vmatprep.subr.mxu0 0.0
        %641 = vmatpush2.msra.mxu0 0.0
        %642 = vmatprep.subr.mxu0 0.0
        %643 = vmatpush2.msra.mxu0 0.0
        %644 = vmatprep.subr.mxu0 0.0
        %645 = vmatpush2.msra.mxu0 0.0
        %646 = vmatprep.mubr.f32.mxu0 0.0
        %647 = vmatmul.mubr.f32.gmra.mxu0 %v571
        %v648 = vpop.f32.mrf.mxu0
        %v649 = vadd.f32 0.0, %v648
        %v650 = vpop.f32.mrf.mxu0
        %651 = vmatprep.mubr.f32.mxu0 0.0
        %652 = vmatmul.mubr.f32.gmra.mxu0 %v574
        %v653 = vpop.f32.mrf.mxu0
        %v654 = vadd.f32 0.0, %v653
        %v655 = vpop.f32.mrf.mxu0
        %656 = vmatprep.mubr.f32.mxu0 0.0
        %657 = vmatmul.mubr.f32.gmra.mxu0 %v577
        %v658 = vpop.f32.mrf.mxu0
        %v659 = vadd.f32 0.0, %v658
        %v660 = vpop.f32.mrf.mxu0
        %661 = vmatprep.mubr.f32.mxu0 0.0
        %662 = vmatmul.mubr.f32.gmra.mxu0 %v580
        %v663 = vpop.f32.mrf.mxu0
        %v664 = vadd.f32 0.0, %v663
        %v665 = vpop.f32.mrf.mxu0
        %666 = vdwg.mxu0
        %v667 = vmul.f32 %v649, 0.00024414063
        %v668 = vmul.f32 %v654, 0.00024414063
        %v669 = vmul.f32 %v659, 0.00024414063
        %v670 = vmul.f32 %v664, 0.00024414063
        %672 = vset.pattern.permute.xlu0 0
        %673 = vperm.xlu0 %672, %v667
        %v674 = vpop.permute.xlu0 %673
        %677 = vset.pattern.permute.xlu0 0
        %678 = vperm.xlu0 %677, %v668
        %v679 = vpop.permute.xlu0 %678
        %682 = vset.pattern.permute.xlu0 0
        %683 = vperm.xlu0 %682, %v669
        %v684 = vpop.permute.xlu0 %683
        %687 = vset.pattern.permute.xlu0 0
        %688 = vperm.xlu0 %687, %v670
        %v689 = vpop.permute.xlu0 %688
        %v691 = vsub.f32 %v541, %v674
        %v692 = vsub.f32 %v542, %v674
        %v693 = vsub.f32 %v543, %v679
        %v694 = vsub.f32 %v544, %v679
        %v695 = vsub.f32 %v545, %v684
        %v696 = vsub.f32 %v546, %v684
        %v697 = vsub.f32 %v547, %v689
        %v698 = vsub.f32 %v548, %v689
        %v699 = vmul.f32 %v691, %v691
        %v700 = vmul.f32 %v692, %v692
        %v701 = vmul.f32 %v693, %v693
        %v702 = vmul.f32 %v694, %v694
        %v703 = vmul.f32 %v695, %v695
        %v704 = vmul.f32 %v696, %v696
        %v705 = vmul.f32 %v697, %v697
        %v706 = vmul.f32 %v698, %v698
        %v707 = vadd.f32 %v699, %v700
        %708 = vadd.xlane.f32.xlu0 %v707
        %v709 = vpop.xlane.xlu0 %708
        %v710 = vadd.f32 %v701, %v702
        %711 = vadd.xlane.f32.xlu0 %v710
        %v712 = vpop.xlane.xlu0 %711
        %v713 = vadd.f32 %v703, %v704
        %714 = vadd.xlane.f32.xlu0 %v713
        %v715 = vpop.xlane.xlu0 %714
        %v716 = vadd.f32 %v705, %v706
        %717 = vadd.xlane.f32.xlu0 %v716
        %v718 = vpop.xlane.xlu0 %717
        %719 = vmatprep.subr.mxu0 0.0
        %720 = vmatpush1.msra.mxu0 0.0
        %721 = vmatprep.subr.mxu0 0.0
        %722 = vmatpush1.msra.mxu0 0.0
        %723 = vmatprep.subr.mxu0 0.0
        %724 = vmatpush1.msra.mxu0 0.0
        %725 = vmatprep.subr.mxu0 0.0
        %726 = vmatpush1.msra.mxu0 0.0
        %727 = vmatprep.subr.mxu0 0.0
        %728 = vmatpush1.msra.mxu0 0.0
        %729 = vmatprep.subr.mxu0 0.0
        %730 = vmatpush1.msra.mxu0 0.0
        %731 = vmatprep.subr.mxu0 0.0
        %732 = vmatpush1.msra.mxu0 0.0
        %733 = vmatprep.subr.mxu0 0.0
        %734 = vmatpush1.msra.mxu0 0.0
        %735 = vmatprep.subr.mxu0 0.0
        %736 = vmatpush1.msra.mxu0 0.0
        %737 = vmatprep.subr.mxu0 0.0
        %738 = vmatpush1.msra.mxu0 0.0
        %739 = vmatprep.subr.mxu0 0.0
        %740 = vmatpush1.msra.mxu0 0.0
        %741 = vmatprep.subr.mxu0 0.0
        %742 = vmatpush1.msra.mxu0 0.0
        %743 = vmatprep.subr.mxu0 0.0
        %744 = vmatpush1.msra.mxu0 %v718
        %745 = vmatprep.subr.mxu0 0.0
        %746 = vmatpush1.msra.mxu0 %v715
        %747 = vmatprep.subr.mxu0 0.0
        %748 = vmatpush1.msra.mxu0 %v712
        %749 = vmatprep.subr.mxu0 0.0
        %750 = vmatpush1.msra.mxu0 %v709
        %751 = vmatprep.subr.mxu0 0.0
        %752 = vmatpush2.msra.mxu0 0.0
        %753 = vmatprep.subr.mxu0 0.0
        %754 = vmatpush2.msra.mxu0 0.0
        %755 = vmatprep.subr.mxu0 0.0
        %756 = vmatpush2.msra.mxu0 0.0
        %757 = vmatprep.subr.mxu0 0.0
        %758 = vmatpush2.msra.mxu0 0.0
        %759 = vmatprep.subr.mxu0 0.0
        %760 = vmatpush2.msra.mxu0 0.0
        %761 = vmatprep.subr.mxu0 0.0
        %762 = vmatpush2.msra.mxu0 0.0
        %763 = vmatprep.subr.mxu0 0.0
        %764 = vmatpush2.msra.mxu0 0.0
        %765 = vmatprep.subr.mxu0 0.0
        %766 = vmatpush2.msra.mxu0 0.0
        %767 = vmatprep.subr.mxu0 0.0
        %768 = vmatpush2.msra.mxu0 0.0
        %769 = vmatprep.subr.mxu0 0.0
        %770 = vmatpush2.msra.mxu0 0.0
        %771 = vmatprep.subr.mxu0 0.0
        %772 = vmatpush2.msra.mxu0 0.0
        %773 = vmatprep.subr.mxu0 0.0
        %774 = vmatpush2.msra.mxu0 0.0
        %775 = vmatprep.subr.mxu0 0.0
        %776 = vmatpush2.msra.mxu0 0.0
        %777 = vmatprep.subr.mxu0 0.0
        %778 = vmatpush2.msra.mxu0 0.0
        %779 = vmatprep.subr.mxu0 0.0
        %780 = vmatpush2.msra.mxu0 0.0
        %781 = vmatprep.subr.mxu0 0.0
        %782 = vmatpush2.msra.mxu0 0.0
        %783 = vmatprep.mubr.f32.mxu0 0.0
        %784 = vmatmul.mubr.f32.gmra.mxu0 %v571
        %v785 = vpop.f32.mrf.mxu0
        %v786 = vadd.f32 0.0, %v785
        %v787 = vpop.f32.mrf.mxu0
        %788 = vmatprep.mubr.f32.mxu0 0.0
        %789 = vmatmul.mubr.f32.gmra.mxu0 %v574
        %v790 = vpop.f32.mrf.mxu0
        %v791 = vadd.f32 0.0, %v790
        %v792 = vpop.f32.mrf.mxu0
        %793 = vmatprep.mubr.f32.mxu0 0.0
        %794 = vmatmul.mubr.f32.gmra.mxu0 %v577
        %v795 = vpop.f32.mrf.mxu0
        %v796 = vadd.f32 0.0, %v795
        %v797 = vpop.f32.mrf.mxu0
        %798 = vmatprep.mubr.f32.mxu0 0.0
        %799 = vmatmul.mubr.f32.gmra.mxu0 %v580
        %v800 = vpop.f32.mrf.mxu0
        %v801 = vadd.f32 0.0, %v800
        %v802 = vpop.f32.mrf.mxu0
        %803 = vdwg.mxu0
        %v804 = vmul.f32 %v786, 0.00024414063
        %v805 = vmul.f32 %v791, 0.00024414063
        %v806 = vmul.f32 %v796, 0.00024414063
        %v807 = vmul.f32 %v801, 0.00024414063
        %v808 = vadd.f32 %v804, 1e-05
        %v809 = vadd.f32 %v805, 1e-05
        %v810 = vadd.f32 %v806, 1e-05
        %v811 = vadd.f32 %v807, 1e-05
        %v812 = vrsqrt.pop %v808
        %v813 = vrsqrt.pop %v809
        %v814 = vrsqrt.pop %v810
        %v815 = vrsqrt.pop %v811
        %v816 = vmul.f32 %v812, %v549
        %v817 = vmul.f32 %v813, %v550
        %v818 = vmul.f32 %v814, %v551
        %v819 = vmul.f32 %v815, %v552
        %821 = vset.pattern.permute.xlu0 0
        %822 = vperm.xlu0 %821, %v816
        %v823 = vpop.permute.xlu0 %822
        %826 = vset.pattern.permute.xlu0 0
        %827 = vperm.xlu0 %826, %v817
        %v828 = vpop.permute.xlu0 %827
        %831 = vset.pattern.permute.xlu0 0
        %832 = vperm.xlu0 %831, %v818
        %v833 = vpop.permute.xlu0 %832
        %836 = vset.pattern.permute.xlu0 0
        %837 = vperm.xlu0 %836, %v819
        %v838 = vpop.permute.xlu0 %837
        %v840 = vmul.f32 %v691, %v823
        %v841 = vmul.f32 %v692, %v823
        %v842 = vmul.f32 %v693, %v828
        %v843 = vmul.f32 %v694, %v828
        %v844 = vmul.f32 %v695, %v833
        %v845 = vmul.f32 %v696, %v833
        %v846 = vmul.f32 %v697, %v838
        %v847 = vmul.f32 %v698, %v838
        %849 = vset.pattern.permute.xlu0 0
        %850 = vperm.xlu0 %849, %v553
        %v851 = vpop.permute.xlu0 %850
        %854 = vset.pattern.permute.xlu0 0
        %855 = vperm.xlu0 %854, %v554
        %v856 = vpop.permute.xlu0 %855
        %859 = vset.pattern.permute.xlu0 0
        %860 = vperm.xlu0 %859, %v555
        %v861 = vpop.permute.xlu0 %860
        %864 = vset.pattern.permute.xlu0 0
        %865 = vperm.xlu0 %864, %v556
        %v866 = vpop.permute.xlu0 %865
        %v868 = vadd.f32 %v840, %v851
        %v869 = vadd.f32 %v841, %v851
        %v870 = vadd.f32 %v842, %v856
        %v871 = vadd.f32 %v843, %v856
        %v872 = vadd.f32 %v844, %v861
        %v873 = vadd.f32 %v845, %v861
        %v874 = vadd.f32 %v846, %v866
        %v875 = vadd.f32 %v847, %v866
        %v876 = vmax.f32 %v868, 0.0
        %v877 = vmax.f32 %v869, 0.0
        %v878 = vmax.f32 %v870, 0.0
        %v879 = vmax.f32 %v871, 0.0
        %v880 = vmax.f32 %v872, 0.0
        %v881 = vmax.f32 %v873, 0.0
        %v882 = vmax.f32 %v874, 0.0
        %v883 = vmax.f32 %v875, 0.0
        %888 = vrot.lane.b32.xlu0 %v877, 17
        %v889 = vpop.permute.xlu0 %888
        %890 = vrot.lane.b32.xlu0 %v879, 17
        %v891 = vpop.permute.xlu0 %890
        %892 = vrot.lane.b32.xlu0 %v881, 17
        %v893 = vpop.permute.xlu0 %892
        %894 = vrot.lane.b32.xlu0 %v883, 17
        %v895 = vpop.permute.xlu0 %894
        %904 = vrot.lane.b32.xlu0 %v876, 17
        %v905 = vpop.permute.xlu0 %904
        %906 = vrot.lane.b32.xlu0 %v878, 17
        %v907 = vpop.permute.xlu0 %906
        %908 = vrot.lane.b32.xlu0 %v880, 17
        %v909 = vpop.permute.xlu0 %908
        %910 = vrot.lane.b32.xlu0 %v882, 17
        %v911 = vpop.permute.xlu0 %910
        %vm912 = vcmask 138240
        %v913 = vsel %vm912, %v905, %v889
        %v914 = vsel %vm912, %v907, %v891
        %v915 = vsel %vm912, %v909, %v893
        %v916 = vsel %vm912, %v911, %v895
        %v925 = vsel %vm912, %v889, %v905
        %v926 = vsel %vm912, %v891, %v907
        %v927 = vsel %vm912, %v893, %v909
        %v928 = vsel %vm912, %v895, %v911
        %v929 = vlaneseq
        %v930 = vshrl.u32 %v929, 7
        %v931 = vsub.s32 0, %v930
        %v932 = vrot.slane %v525, %v931
        %v933 = vlaneseq
        %v934 = vshrl.u32 %v933, 7
        %v935 = vsub.s32 0, %v934
        %v936 = vrot.slane %v526, %v935
        %v937 = vmul.f32 %v925, %v932
        %v938 = vmul.f32 %v913, %v936
        %v939 = vmul.f32 %v926, %v932
        %v940 = vmul.f32 %v914, %v936
        %v941 = vmul.f32 %v927, %v932
        %v942 = vmul.f32 %v915, %v936
        %v943 = vmul.f32 %v928, %v932
        %v944 = vmul.f32 %v916, %v936
        %945 = vst [vmem:[#allocation2] sm:$0xff] %v937
        %946 = vst [vmem:[#allocation2 + $0x8] sm:$0xff] %v938
        %947 = vst [vmem:[#allocation2 + $0x10] sm:$0xff] %v939
        %948 = vst [vmem:[#allocation2 + $0x18] sm:$0xff] %v940
        %949 = vst [vmem:[#allocation2 + $0x20] sm:$0xff] %v941
        %950 = vst [vmem:[#allocation2 + $0x28] sm:$0xff] %v942
        %951 = vst [vmem:[#allocation2 + $0x30] sm:$0xff] %v943
        %952 = vst [vmem:[#allocation2 + $0x38] sm:$0xff] %v944
        %953 = vrot.lane.b32.xlu0 %v877, 16
        %v954 = vpop.permute.xlu0 %953
        %955 = vrot.lane.b32.xlu0 %v879, 16
        %v956 = vpop.permute.xlu0 %955
        %957 = vrot.lane.b32.xlu0 %v881, 16
        %v958 = vpop.permute.xlu0 %957
        %959 = vrot.lane.b32.xlu0 %v883, 16
        %v960 = vpop.permute.xlu0 %959
        %965 = vrot.lane.b32.xlu0 %v876, 16
        %v966 = vpop.permute.xlu0 %965
        %967 = vrot.lane.b32.xlu0 %v878, 16
        %v968 = vpop.permute.xlu0 %967
        %969 = vrot.lane.b32.xlu0 %v880, 16
        %v970 = vpop.permute.xlu0 %969
        %971 = vrot.lane.b32.xlu0 %v882, 16
        %v972 = vpop.permute.xlu0 %971
        %vm973 = vcmask 130048
        %v974 = vsel %vm973, %v966, %v954
        %v975 = vsel %vm973, %v968, %v956
        %v976 = vsel %vm973, %v970, %v958
        %v977 = vsel %vm973, %v972, %v960
        %v986 = vsel %vm973, %v954, %v966
        %v987 = vsel %vm973, %v956, %v968
        %v988 = vsel %vm973, %v958, %v970
        %v989 = vsel %vm973, %v960, %v972
        %v990 = vlaneseq
        %v991 = vshrl.u32 %v990, 7
        %v992 = vsub.s32 1, %v991
        %v993 = vrot.slane %v525, %v992
        %v994 = vlaneseq
        %v995 = vshrl.u32 %v994, 7
        %v996 = vsub.s32 1, %v995
        %v997 = vrot.slane %v526, %v996
        %v998 = vmul.f32 %v986, %v993
        %v999 = vmul.f32 %v974, %v997
        %v1000 = vmul.f32 %v987, %v993
        %v1001 = vmul.f32 %v975, %v997
        %v1002 = vmul.f32 %v988, %v993
        %v1003 = vmul.f32 %v976, %v997
        %v1004 = vmul.f32 %v989, %v993
        %v1005 = vmul.f32 %v977, %v997
        %1006 = vst [vmem:[#allocation2 + $0x40] sm:$0xff] %v998
        %1007 = vst [vmem:[#allocation2 + $0x48] sm:$0xff] %v999
        %1008 = vst [vmem:[#allocation2 + $0x50] sm:$0xff] %v1000
        %1009 = vst [vmem:[#allocation2 + $0x58] sm:$0xff] %v1001
        %1010 = vst [vmem:[#allocation2 + $0x60] sm:$0xff] %v1002
        %1011 = vst [vmem:[#allocation2 + $0x68] sm:$0xff] %v1003
        %1012 = vst [vmem:[#allocation2 + $0x70] sm:$0xff] %v1004
        %1013 = vst [vmem:[#allocation2 + $0x78] sm:$0xff] %v1005
        %1014 = vrot.lane.b32.xlu0 %v877, 15
        %v1015 = vpop.permute.xlu0 %1014
        %1016 = vrot.lane.b32.xlu0 %v879, 15
        %v1017 = vpop.permute.xlu0 %1016
        %1018 = vrot.lane.b32.xlu0 %v881, 15
        %v1019 = vpop.permute.xlu0 %1018
        %1020 = vrot.lane.b32.xlu0 %v883, 15
        %v1021 = vpop.permute.xlu0 %1020
        %1026 = vrot.lane.b32.xlu0 %v876, 15
        %v1027 = vpop.permute.xlu0 %1026
        %1028 = vrot.lane.b32.xlu0 %v878, 15
        %v1029 = vpop.permute.xlu0 %1028
        %1030 = vrot.lane.b32.xlu0 %v880, 15
        %v1031 = vpop.permute.xlu0 %1030
        %1032 = vrot.lane.b32.xlu0 %v882, 15
        %v1033 = vpop.permute.xlu0 %1032
        %vm1034 = vcmask 121856
        %v1035 = vsel %vm1034, %v1027, %v1015
        %v1036 = vsel %vm1034, %v1029, %v1017
        %v1037 = vsel %vm1034, %v1031, %v1019
        %v1038 = vsel %vm1034, %v1033, %v1021
        %v1047 = vsel %vm1034, %v1015, %v1027
        %v1048 = vsel %vm1034, %v1017, %v1029
        %v1049 = vsel %vm1034, %v1019, %v1031
        %v1050 = vsel %vm1034, %v1021, %v1033
        %v1051 = vlaneseq
        %v1052 = vshrl.u32 %v1051, 7
        %v1053 = vsub.s32 2, %v1052
        %v1054 = vrot.slane %v525, %v1053
        %v1055 = vlaneseq
        %v1056 = vshrl.u32 %v1055, 7
        %v1057 = vsub.s32 2, %v1056
        %v1058 = vrot.slane %v526, %v1057
        %v1059 = vmul.f32 %v1047, %v1054
        %v1060 = vmul.f32 %v1035, %v1058
        %v1061 = vmul.f32 %v1048, %v1054
        %v1062 = vmul.f32 %v1036, %v1058
        %v1063 = vmul.f32 %v1049, %v1054
        %v1064 = vmul.f32 %v1037, %v1058
        %v1065 = vmul.f32 %v1050, %v1054
        %v1066 = vmul.f32 %v1038, %v1058
        %1067 = vst [vmem:[#allocation2 + $0x80] sm:$0xff] %v1059
        %1068 = vst [vmem:[#allocation2 + $0x88] sm:$0xff] %v1060
        %1069 = vst [vmem:[#allocation2 + $0x90] sm:$0xff] %v1061
        %1070 = vst [vmem:[#allocation2 + $0x98] sm:$0xff] %v1062
        %1071 = vst [vmem:[#allocation2 + $0xa0] sm:$0xff] %v1063
        %1072 = vst [vmem:[#allocation2 + $0xa8] sm:$0xff] %v1064
        %1073 = vst [vmem:[#allocation2 + $0xb0] sm:$0xff] %v1065
        %1074 = vst [vmem:[#allocation2 + $0xb8] sm:$0xff] %v1066
        %1075 = vrot.lane.b32.xlu0 %v877, 1
        %v1076 = vpop.permute.xlu0 %1075
        %1077 = vrot.lane.b32.xlu0 %v879, 1
        %v1078 = vpop.permute.xlu0 %1077
        %1079 = vrot.lane.b32.xlu0 %v881, 1
        %v1080 = vpop.permute.xlu0 %1079
        %1081 = vrot.lane.b32.xlu0 %v883, 1
        %v1082 = vpop.permute.xlu0 %1081
        %1087 = vrot.lane.b32.xlu0 %v876, 1
        %v1088 = vpop.permute.xlu0 %1087
        %1089 = vrot.lane.b32.xlu0 %v878, 1
        %v1090 = vpop.permute.xlu0 %1089
        %1091 = vrot.lane.b32.xlu0 %v880, 1
        %v1092 = vpop.permute.xlu0 %1091
        %1093 = vrot.lane.b32.xlu0 %v882, 1
        %v1094 = vpop.permute.xlu0 %1093
        %vm1095 = vcmask 7168
        %v1096 = vsel %vm1095, %v1088, %v1076
        %v1097 = vsel %vm1095, %v1090, %v1078
        %v1098 = vsel %vm1095, %v1092, %v1080
        %v1099 = vsel %vm1095, %v1094, %v1082
        %v1108 = vsel %vm1095, %v1076, %v1088
        %v1109 = vsel %vm1095, %v1078, %v1090
        %v1110 = vsel %vm1095, %v1080, %v1092
        %v1111 = vsel %vm1095, %v1082, %v1094
        %v1112 = vlaneseq
        %v1113 = vshrl.u32 %v1112, 7
        %v1114 = vsub.s32 3, %v1113
        %v1115 = vrot.slane %v525, %v1114
        %v1116 = vlaneseq
        %v1117 = vshrl.u32 %v1116, 7
        %v1118 = vsub.s32 3, %v1117
        %v1119 = vrot.slane %v526, %v1118
        %v1120 = vmul.f32 %v1108, %v1115
        %v1121 = vmul.f32 %v1096, %v1119
        %v1122 = vmul.f32 %v1109, %v1115
        %v1123 = vmul.f32 %v1097, %v1119
        %v1124 = vmul.f32 %v1110, %v1115
        %v1125 = vmul.f32 %v1098, %v1119
        %v1126 = vmul.f32 %v1111, %v1115
        %v1127 = vmul.f32 %v1099, %v1119
        %1128 = vst [vmem:[#allocation2 + $0xc0] sm:$0xff] %v1120
        %1129 = vst [vmem:[#allocation2 + $0xc8] sm:$0xff] %v1121
        %1130 = vst [vmem:[#allocation2 + $0xd0] sm:$0xff] %v1122
        %1131 = vst [vmem:[#allocation2 + $0xd8] sm:$0xff] %v1123
        %1132 = vst [vmem:[#allocation2 + $0xe0] sm:$0xff] %v1124
        %1133 = vst [vmem:[#allocation2 + $0xe8] sm:$0xff] %v1125
        %1134 = vst [vmem:[#allocation2 + $0xf0] sm:$0xff] %v1126
        %1135 = vst [vmem:[#allocation2 + $0xf8] sm:$0xff] %v1127
        %1136 = vst [vmem:[#allocation2 + $0x100] sm:$0xff] %v876
        %1137 = vst [vmem:[#allocation2 + $0x108] sm:$0xff] %v877
        %1138 = vst [vmem:[#allocation2 + $0x110] sm:$0xff] %v878
        %1139 = vst [vmem:[#allocation2 + $0x118] sm:$0xff] %v879
        %1140 = vst [vmem:[#allocation2 + $0x120] sm:$0xff] %v880
        %1141 = vst [vmem:[#allocation2 + $0x128] sm:$0xff] %v881
        %1142 = vst [vmem:[#allocation2 + $0x130] sm:$0xff] %v882
        %1143 = vst [vmem:[#allocation2 + $0x138] sm:$0xff] %v883
        %1144 = vrot.lane.b32.xlu0 %v876, 127
        %v1145 = vpop.permute.xlu0 %1144
        %1146 = vrot.lane.b32.xlu0 %v877, 127
        %v1147 = vpop.permute.xlu0 %1146
        %1148 = vrot.lane.b32.xlu0 %v878, 127
        %v1149 = vpop.permute.xlu0 %1148
        %1150 = vrot.lane.b32.xlu0 %v879, 127
        %v1151 = vpop.permute.xlu0 %1150
        %1152 = vrot.lane.b32.xlu0 %v880, 127
        %v1153 = vpop.permute.xlu0 %1152
        %1154 = vrot.lane.b32.xlu0 %v881, 127
        %v1155 = vpop.permute.xlu0 %1154
        %1156 = vrot.lane.b32.xlu0 %v882, 127
        %v1157 = vpop.permute.xlu0 %1156
        %1158 = vrot.lane.b32.xlu0 %v883, 127
        %v1159 = vpop.permute.xlu0 %1158
        %vm1160 = vcmask 1039360
        %v1161 = vsel %vm1160, %v1145, %v1147
        %v1162 = vsel %vm1160, %v1149, %v1151
        %v1163 = vsel %vm1160, %v1153, %v1155
        %v1164 = vsel %vm1160, %v1157, %v1159
        %v1177 = vsel %vm1160, %v1147, %v1145
        %v1178 = vsel %vm1160, %v1151, %v1149
        %v1179 = vsel %vm1160, %v1155, %v1153
        %v1180 = vsel %vm1160, %v1159, %v1157
        %v1181 = vlaneseq
        %v1182 = vshrl.u32 %v1181, 7
        %v1183 = vsub.s32 5, %v1182
        %v1184 = vrot.slane %v525, %v1183
        %v1185 = vlaneseq
        %v1186 = vshrl.u32 %v1185, 7
        %v1187 = vsub.s32 5, %v1186
        %v1188 = vrot.slane %v526, %v1187
        %v1189 = vmul.f32 %v1161, %v1184
        %v1190 = vmul.f32 %v1177, %v1188
        %v1191 = vmul.f32 %v1162, %v1184
        %v1192 = vmul.f32 %v1178, %v1188
        %v1193 = vmul.f32 %v1163, %v1184
        %v1194 = vmul.f32 %v1179, %v1188
        %v1195 = vmul.f32 %v1164, %v1184
        %v1196 = vmul.f32 %v1180, %v1188
        %1197 = vst [vmem:[#allocation2 + $0x140] sm:$0xff] %v1189
        %1198 = vst [vmem:[#allocation2 + $0x148] sm:$0xff] %v1190
        %1199 = vst [vmem:[#allocation2 + $0x150] sm:$0xff] %v1191
        %1200 = vst [vmem:[#allocation2 + $0x158] sm:$0xff] %v1192
        %1201 = vst [vmem:[#allocation2 + $0x160] sm:$0xff] %v1193
        %1202 = vst [vmem:[#allocation2 + $0x168] sm:$0xff] %v1194
        %1203 = vst [vmem:[#allocation2 + $0x170] sm:$0xff] %v1195
        %1204 = vst [vmem:[#allocation2 + $0x178] sm:$0xff] %v1196
        %1205 = vrot.lane.b32.xlu0 %v876, 113
        %v1206 = vpop.permute.xlu0 %1205
        %1207 = vrot.lane.b32.xlu0 %v877, 113
        %v1208 = vpop.permute.xlu0 %1207
        %1209 = vrot.lane.b32.xlu0 %v878, 113
        %v1210 = vpop.permute.xlu0 %1209
        %1211 = vrot.lane.b32.xlu0 %v879, 113
        %v1212 = vpop.permute.xlu0 %1211
        %1213 = vrot.lane.b32.xlu0 %v880, 113
        %v1214 = vpop.permute.xlu0 %1213
        %1215 = vrot.lane.b32.xlu0 %v881, 113
        %v1216 = vpop.permute.xlu0 %1215
        %1217 = vrot.lane.b32.xlu0 %v882, 113
        %v1218 = vpop.permute.xlu0 %1217
        %1219 = vrot.lane.b32.xlu0 %v883, 113
        %v1220 = vpop.permute.xlu0 %1219
        %vm1221 = vcmask 924672
        %v1222 = vsel %vm1221, %v1206, %v1208
        %v1223 = vsel %vm1221, %v1210, %v1212
        %v1224 = vsel %vm1221, %v1214, %v1216
        %v1225 = vsel %vm1221, %v1218, %v1220
        %v1238 = vsel %vm1221, %v1208, %v1206
        %v1239 = vsel %vm1221, %v1212, %v1210
        %v1240 = vsel %vm1221, %v1216, %v1214
        %v1241 = vsel %vm1221, %v1220, %v1218
        %v1242 = vlaneseq
        %v1243 = vshrl.u32 %v1242, 7
        %v1244 = vsub.s32 6, %v1243
        %v1245 = vrot.slane %v525, %v1244
        %v1246 = vlaneseq
        %v1247 = vshrl.u32 %v1246, 7
        %v1248 = vsub.s32 6, %v1247
        %v1249 = vrot.slane %v526, %v1248
        %v1250 = vmul.f32 %v1222, %v1245
        %v1251 = vmul.f32 %v1238, %v1249
        %v1252 = vmul.f32 %v1223, %v1245
        %v1253 = vmul.f32 %v1239, %v1249
        %v1254 = vmul.f32 %v1224, %v1245
        %v1255 = vmul.f32 %v1240, %v1249
        %v1256 = vmul.f32 %v1225, %v1245
        %v1257 = vmul.f32 %v1241, %v1249
        %1258 = vst [vmem:[#allocation2 + $0x180] sm:$0xff] %v1250
        %1259 = vst [vmem:[#allocation2 + $0x188] sm:$0xff] %v1251
        %1260 = vst [vmem:[#allocation2 + $0x190] sm:$0xff] %v1252
        %1261 = vst [vmem:[#allocation2 + $0x198] sm:$0xff] %v1253
        %1262 = vst [vmem:[#allocation2 + $0x1a0] sm:$0xff] %v1254
        %1263 = vst [vmem:[#allocation2 + $0x1a8] sm:$0xff] %v1255
        %1264 = vst [vmem:[#allocation2 + $0x1b0] sm:$0xff] %v1256
        %1265 = vst [vmem:[#allocation2 + $0x1b8] sm:$0xff] %v1257
        %1266 = vrot.lane.b32.xlu0 %v876, 112
        %v1267 = vpop.permute.xlu0 %1266
        %1268 = vrot.lane.b32.xlu0 %v877, 112
        %v1269 = vpop.permute.xlu0 %1268
        %1270 = vrot.lane.b32.xlu0 %v878, 112
        %v1271 = vpop.permute.xlu0 %1270
        %1272 = vrot.lane.b32.xlu0 %v879, 112
        %v1273 = vpop.permute.xlu0 %1272
        %1274 = vrot.lane.b32.xlu0 %v880, 112
        %v1275 = vpop.permute.xlu0 %1274
        %1276 = vrot.lane.b32.xlu0 %v881, 112
        %v1277 = vpop.permute.xlu0 %1276
        %1278 = vrot.lane.b32.xlu0 %v882, 112
        %v1279 = vpop.permute.xlu0 %1278
        %1280 = vrot.lane.b32.xlu0 %v883, 112
        %v1281 = vpop.permute.xlu0 %1280
        %vm1282 = vcmask 916480
        %v1283 = vsel %vm1282, %v1267, %v1269
        %v1284 = vsel %vm1282, %v1271, %v1273
        %v1285 = vsel %vm1282, %v1275, %v1277
        %v1286 = vsel %vm1282, %v1279, %v1281
        %v1299 = vsel %vm1282, %v1269, %v1267
        %v1300 = vsel %vm1282, %v1273, %v1271
        %v1301 = vsel %vm1282, %v1277, %v1275
        %v1302 = vsel %vm1282, %v1281, %v1279
        %v1303 = vlaneseq
        %v1304 = vshrl.u32 %v1303, 7
        %v1305 = vsub.s32 7, %v1304
        %v1306 = vrot.slane %v525, %v1305
        %v1307 = vlaneseq
        %v1308 = vshrl.u32 %v1307, 7
        %v1309 = vsub.s32 7, %v1308
        %v1310 = vrot.slane %v526, %v1309
        %v1311 = vmul.f32 %v1283, %v1306
        %v1312 = vmul.f32 %v1299, %v1310
        %v1313 = vmul.f32 %v1284, %v1306
        %v1314 = vmul.f32 %v1300, %v1310
        %v1315 = vmul.f32 %v1285, %v1306
        %v1316 = vmul.f32 %v1301, %v1310
        %v1317 = vmul.f32 %v1286, %v1306
        %v1318 = vmul.f32 %v1302, %v1310
        %1319 = vst [vmem:[#allocation2 + $0x1c0] sm:$0xff] %v1311
        %1320 = vst [vmem:[#allocation2 + $0x1c8] sm:$0xff] %v1312
        %1321 = vst [vmem:[#allocation2 + $0x1d0] sm:$0xff] %v1313
        %1322 = vst [vmem:[#allocation2 + $0x1d8] sm:$0xff] %v1314
        %1323 = vst [vmem:[#allocation2 + $0x1e0] sm:$0xff] %v1315
        %1324 = vst [vmem:[#allocation2 + $0x1e8] sm:$0xff] %v1316
        %1325 = vst [vmem:[#allocation2 + $0x1f0] sm:$0xff] %v1317
        %1326 = vst [vmem:[#allocation2 + $0x1f8] sm:$0xff] %v1318
        %1327 = vrot.lane.b32.xlu0 %v876, 111
        %v1328 = vpop.permute.xlu0 %1327
        %1329 = vrot.lane.b32.xlu0 %v877, 111
        %v1330 = vpop.permute.xlu0 %1329
        %1331 = vrot.lane.b32.xlu0 %v878, 111
        %v1332 = vpop.permute.xlu0 %1331
        %1333 = vrot.lane.b32.xlu0 %v879, 111
        %v1334 = vpop.permute.xlu0 %1333
        %1335 = vrot.lane.b32.xlu0 %v880, 111
        %v1336 = vpop.permute.xlu0 %1335
        %1337 = vrot.lane.b32.xlu0 %v881, 111
        %v1338 = vpop.permute.xlu0 %1337
        %1339 = vrot.lane.b32.xlu0 %v882, 111
        %v1340 = vpop.permute.xlu0 %1339
        %1341 = vrot.lane.b32.xlu0 %v883, 111
        %v1342 = vpop.permute.xlu0 %1341
        %vm1343 = vcmask 908288
        %v1344 = vsel %vm1343, %v1328, %v1330
        %v1345 = vsel %vm1343, %v1332, %v1334
        %v1346 = vsel %vm1343, %v1336, %v1338
        %v1347 = vsel %vm1343, %v1340, %v1342
        %v1360 = vsel %vm1343, %v1330, %v1328
        %v1361 = vsel %vm1343, %v1334, %v1332
        %v1362 = vsel %vm1343, %v1338, %v1336
        %v1363 = vsel %vm1343, %v1342, %v1340
        %v1364 = vlaneseq
        %v1365 = vshrl.u32 %v1364, 7
        %v1366 = vsub.s32 0, %v1365
        %v1367 = vrot.slane %v527, %v1366
        %v1368 = vlaneseq
        %v1369 = vshrl.u32 %v1368, 7
        %v1370 = vsub.s32 0, %v1369
        %v1371 = vrot.slane %v528, %v1370
        %v1372 = vmul.f32 %v1344, %v1367
        %v1373 = vmul.f32 %v1360, %v1371
        %v1374 = vmul.f32 %v1345, %v1367
        %v1375 = vmul.f32 %v1361, %v1371
        %v1376 = vmul.f32 %v1346, %v1367
        %v1377 = vmul.f32 %v1362, %v1371
        %v1378 = vmul.f32 %v1347, %v1367
        %v1379 = vmul.f32 %v1363, %v1371
        %1380 = vst [vmem:[#allocation2 + $0x200] sm:$0xff] %v1372
        %1381 = vst [vmem:[#allocation2 + $0x208] sm:$0xff] %v1373
        %1382 = vst [vmem:[#allocation2 + $0x210] sm:$0xff] %v1374
        %1383 = vst [vmem:[#allocation2 + $0x218] sm:$0xff] %v1375
        %1384 = vst [vmem:[#allocation2 + $0x220] sm:$0xff] %v1376
        %1385 = vst [vmem:[#allocation2 + $0x228] sm:$0xff] %v1377
        %1386 = vst [vmem:[#allocation2 + $0x230] sm:$0xff] %v1378
        %1387 = vst [vmem:[#allocation2 + $0x238] sm:$0xff] %v1379
        %v1388 = vld [vmem:[#allocation9] sm:$0xff]
        %v1389 = vld [vmem:[#allocation9 + $0x8] sm:$0xff]
        %v1390 = vld [vmem:[#allocation9 + $0x10] sm:$0xff]
        %v1391 = vld [vmem:[#allocation9 + $0x18] sm:$0xff]
        %v1392 = vld [vmem:[#allocation9 + $0x20] sm:$0xff]
        %v1393 = vld [vmem:[#allocation9 + $0x28] sm:$0xff]
        %v1394 = vld [vmem:[#allocation9 + $0x30] sm:$0xff]
        %v1395 = vld [vmem:[#allocation9 + $0x38] sm:$0xff]
        %v1396 = vld [vmem:[#allocation9 + $0x40] sm:$0xff]
        %v1397 = vld [vmem:[#allocation9 + $0x48] sm:$0xff]
        %v1398 = vld [vmem:[#allocation9 + $0x50] sm:$0xff]
        %v1399 = vld [vmem:[#allocation9 + $0x58] sm:$0xff]
        %v1400 = vld [vmem:[#allocation9 + $0x60] sm:$0xff]
        %v1401 = vld [vmem:[#allocation9 + $0x68] sm:$0xff]
        %v1402 = vld [vmem:[#allocation9 + $0x70] sm:$0xff]
        %v1403 = vld [vmem:[#allocation9 + $0x78] sm:$0xff]
        %v1404 = vld [vmem:[#allocation9 + $0x80] sm:$0xff]
        %v1405 = vld [vmem:[#allocation9 + $0x88] sm:$0xff]
        %v1406 = vld [vmem:[#allocation9 + $0x90] sm:$0xff]
        %v1407 = vld [vmem:[#allocation9 + $0x98] sm:$0xff]
        %v1408 = vld [vmem:[#allocation9 + $0xa0] sm:$0xff]
        %v1409 = vld [vmem:[#allocation9 + $0xa8] sm:$0xff]
        %v1410 = vld [vmem:[#allocation9 + $0xb0] sm:$0xff]
        %v1411 = vld [vmem:[#allocation9 + $0xb8] sm:$0xff]
        %v1412 = vld [vmem:[#allocation2] sm:$0xff]
        %v1413 = vld [vmem:[#allocation2 + $0x8] sm:$0xff]
        %v1414 = vld [vmem:[#allocation2 + $0x10] sm:$0xff]
        %v1415 = vld [vmem:[#allocation2 + $0x18] sm:$0xff]
        %v1416 = vld [vmem:[#allocation2 + $0x20] sm:$0xff]
        %v1417 = vld [vmem:[#allocation2 + $0x28] sm:$0xff]
        %v1418 = vld [vmem:[#allocation2 + $0x30] sm:$0xff]
        %v1419 = vld [vmem:[#allocation2 + $0x38] sm:$0xff]
        %v1420 = vld [vmem:[#allocation2 + $0x40] sm:$0xff]
        %v1421 = vld [vmem:[#allocation2 + $0x48] sm:$0xff]
        %v1422 = vld [vmem:[#allocation2 + $0x50] sm:$0xff]
        %v1423 = vld [vmem:[#allocation2 + $0x58] sm:$0xff]
        %v1424 = vld [vmem:[#allocation2 + $0x60] sm:$0xff]
        %v1425 = vld [vmem:[#allocation2 + $0x68] sm:$0xff]
        %v1426 = vld [vmem:[#allocation2 + $0x70] sm:$0xff]
        %v1427 = vld [vmem:[#allocation2 + $0x78] sm:$0xff]
        %v1428 = vld [vmem:[#allocation2 + $0x80] sm:$0xff]
        %v1429 = vld [vmem:[#allocation2 + $0x88] sm:$0xff]
        %v1430 = vld [vmem:[#allocation2 + $0x90] sm:$0xff]
        %v1431 = vld [vmem:[#allocation2 + $0x98] sm:$0xff]
        %v1432 = vld [vmem:[#allocation2 + $0xa0] sm:$0xff]
        %v1433 = vld [vmem:[#allocation2 + $0xa8] sm:$0xff]
        %v1434 = vld [vmem:[#allocation2 + $0xb0] sm:$0xff]
        %v1435 = vld [vmem:[#allocation2 + $0xb8] sm:$0xff]
        %v1436 = vld [vmem:[#allocation2 + $0xc0] sm:$0xff]
        %v1437 = vld [vmem:[#allocation2 + $0xc8] sm:$0xff]
        %v1438 = vld [vmem:[#allocation2 + $0xd0] sm:$0xff]
        %v1439 = vld [vmem:[#allocation2 + $0xd8] sm:$0xff]
        %v1440 = vld [vmem:[#allocation2 + $0xe0] sm:$0xff]
        %v1441 = vld [vmem:[#allocation2 + $0xe8] sm:$0xff]
        %v1442 = vld [vmem:[#allocation2 + $0xf0] sm:$0xff]
        %v1443 = vld [vmem:[#allocation2 + $0xf8] sm:$0xff]
        %v1444 = vld [vmem:[#allocation2 + $0x100] sm:$0xff]
        %v1445 = vld [vmem:[#allocation2 + $0x108] sm:$0xff]
        %v1446 = vld [vmem:[#allocation2 + $0x110] sm:$0xff]
        %v1447 = vld [vmem:[#allocation2 + $0x118] sm:$0xff]
        %v1448 = vld [vmem:[#allocation2 + $0x120] sm:$0xff]
        %v1449 = vld [vmem:[#allocation2 + $0x128] sm:$0xff]
        %v1450 = vld [vmem:[#allocation2 + $0x130] sm:$0xff]
        %v1451 = vld [vmem:[#allocation2 + $0x138] sm:$0xff]
        %v1452 = vld [vmem:[#allocation2 + $0x140] sm:$0xff]
        %v1453 = vld [vmem:[#allocation2 + $0x148] sm:$0xff]
        %v1454 = vld [vmem:[#allocation2 + $0x150] sm:$0xff]
        %v1455 = vld [vmem:[#allocation2 + $0x158] sm:$0xff]
        %v1456 = vld [vmem:[#allocation2 + $0x160] sm:$0xff]
        %v1457 = vld [vmem:[#allocation2 + $0x168] sm:$0xff]
        %v1458 = vld [vmem:[#allocation2 + $0x170] sm:$0xff]
        %v1459 = vld [vmem:[#allocation2 + $0x178] sm:$0xff]
        %v1460 = vld [vmem:[#allocation2 + $0x180] sm:$0xff]
        %v1461 = vld [vmem:[#allocation2 + $0x188] sm:$0xff]
        %v1462 = vld [vmem:[#allocation2 + $0x190] sm:$0xff]
        %v1463 = vld [vmem:[#allocation2 + $0x198] sm:$0xff]
        %v1464 = vld [vmem:[#allocation2 + $0x1a0] sm:$0xff]
        %v1465 = vld [vmem:[#allocation2 + $0x1a8] sm:$0xff]
        %v1466 = vld [vmem:[#allocation2 + $0x1b0] sm:$0xff]
        %v1467 = vld [vmem:[#allocation2 + $0x1b8] sm:$0xff]
        %v1468 = vld [vmem:[#allocation2 + $0x1c0] sm:$0xff]
        %v1469 = vld [vmem:[#allocation2 + $0x1c8] sm:$0xff]
        %v1470 = vld [vmem:[#allocation2 + $0x1d0] sm:$0xff]
        %v1471 = vld [vmem:[#allocation2 + $0x1d8] sm:$0xff]
        %v1472 = vld [vmem:[#allocation2 + $0x1e0] sm:$0xff]
        %v1473 = vld [vmem:[#allocation2 + $0x1e8] sm:$0xff]
        %v1474 = vld [vmem:[#allocation2 + $0x1f0] sm:$0xff]
        %v1475 = vld [vmem:[#allocation2 + $0x1f8] sm:$0xff]
        %v1476 = vld [vmem:[#allocation2 + $0x200] sm:$0xff]
        %v1477 = vld [vmem:[#allocation2 + $0x208] sm:$0xff]
        %v1478 = vld [vmem:[#allocation2 + $0x210] sm:$0xff]
        %v1479 = vld [vmem:[#allocation2 + $0x218] sm:$0xff]
        %v1480 = vld [vmem:[#allocation2 + $0x220] sm:$0xff]
        %v1481 = vld [vmem:[#allocation2 + $0x228] sm:$0xff]
        %v1482 = vld [vmem:[#allocation2 + $0x230] sm:$0xff]
        %v1483 = vld [vmem:[#allocation2 + $0x238] sm:$0xff]
        %v1484 = vld [vmem:[%s7] sm:$0xff]
        %v1485 = vld [vmem:[%s7 + $0x8] sm:$0xff]
        %v1486 = vld [vmem:[%s7 + $0x10] sm:$0xff]
        %v1487 = vld [vmem:[%s7 + $0x18] sm:$0xff]
        %v1488 = vld [vmem:[%s7 + $0x20] sm:$0xff]
        %v1489 = vld [vmem:[%s7 + $0x28] sm:$0xff]
        %v1490 = vld [vmem:[%s7 + $0x30] sm:$0xff]
        %v1491 = vld [vmem:[%s7 + $0x38] sm:$0xff]
        %1493 = vset.pattern.permute.xlu0 0
        %1494 = vperm.xlu0 %1493, %v1484
        %v1495 = vpop.permute.xlu0 %1494
        %1498 = vset.pattern.permute.xlu0 0
        %1499 = vperm.xlu0 %1498, %v1485
        %v1500 = vpop.permute.xlu0 %1499
        %1503 = vset.pattern.permute.xlu0 0
        %1504 = vperm.xlu0 %1503, %v1486
        %v1505 = vpop.permute.xlu0 %1504
        %1508 = vset.pattern.permute.xlu0 0
        %1509 = vperm.xlu0 %1508, %v1487
        %v1510 = vpop.permute.xlu0 %1509
        %1513 = vset.pattern.permute.xlu0 0
        %1514 = vperm.xlu0 %1513, %v1488
        %v1515 = vpop.permute.xlu0 %1514
        %1518 = vset.pattern.permute.xlu0 0
        %1519 = vperm.xlu0 %1518, %v1489
        %v1520 = vpop.permute.xlu0 %1519
        %1523 = vset.pattern.permute.xlu0 0
        %1524 = vperm.xlu0 %1523, %v1490
        %v1525 = vpop.permute.xlu0 %1524
        %1528 = vset.pattern.permute.xlu0 0
        %1529 = vperm.xlu0 %1528, %v1491
        %v1530 = vpop.permute.xlu0 %1529
        %v1533 = vsel %vm569, %v1390, 0
        %v1536 = vsel %vm569, %v1393, 0
        %v1539 = vsel %vm569, %v1396, 0
        %v1542 = vsel %vm569, %v1399, 0
        %v1545 = vsel %vm569, %v1402, 0
        %v1548 = vsel %vm569, %v1405, 0
        %v1551 = vsel %vm569, %v1408, 0
        %v1554 = vsel %vm569, %v1411, 0
        %1556 = vmatprep.subr.mxu0 %v1443
        %1557 = vmatpush1.msra.mxu0 %v1442
        %1558 = vmatprep.subr.mxu0 %v1441
        %1559 = vmatpush1.msra.mxu0 %v1440
        %1560 = vmatprep.subr.mxu0 %v1439
        %1561 = vmatpush1.msra.mxu0 %v1438
        %1562 = vmatprep.subr.mxu0 %v1437
        %1563 = vmatpush1.msra.mxu0 %v1436
        %1564 = vmatprep.subr.mxu0 %v1435
        %1565 = vmatpush1.msra.mxu0 %v1434
        %1566 = vmatprep.subr.mxu0 %v1433
        %1567 = vmatpush1.msra.mxu0 %v1432
        %1568 = vmatprep.subr.mxu0 %v1431
        %1569 = vmatpush1.msra.mxu0 %v1430
        %1570 = vmatprep.subr.mxu0 %v1429
        %1571 = vmatpush1.msra.mxu0 %v1428
        %1572 = vmatprep.subr.mxu0 %v1427
        %1573 = vmatpush1.msra.mxu0 %v1426
        %1574 = vmatprep.subr.mxu0 %v1425
        %1575 = vmatpush1.msra.mxu0 %v1424
        %1576 = vmatprep.subr.mxu0 %v1423
        %1577 = vmatpush1.msra.mxu0 %v1422
        %1578 = vmatprep.subr.mxu0 %v1421
        %1579 = vmatpush1.msra.mxu0 %v1420
        %1580 = vmatprep.subr.mxu0 %v1419
        %1581 = vmatpush1.msra.mxu0 %v1418
        %1582 = vmatprep.subr.mxu0 %v1417
        %1583 = vmatpush1.msra.mxu0 %v1416
        %1584 = vmatprep.subr.mxu0 %v1415
        %1585 = vmatpush1.msra.mxu0 %v1414
        %1586 = vmatprep.subr.mxu0 %v1413
        %1587 = vmatpush1.msra.mxu0 %v1412
        %1588 = vmatprep.subr.mxu0 %v1475
        %1589 = vmatpush2.msra.mxu0 %v1474
        %1590 = vmatprep.subr.mxu0 %v1473
        %1591 = vmatpush2.msra.mxu0 %v1472
        %1592 = vmatprep.subr.mxu0 %v1471
        %1593 = vmatpush2.msra.mxu0 %v1470
        %1594 = vmatprep.subr.mxu0 %v1469
        %1595 = vmatpush2.msra.mxu0 %v1468
        %1596 = vmatprep.subr.mxu0 %v1467
        %1597 = vmatpush2.msra.mxu0 %v1466
        %1598 = vmatprep.subr.mxu0 %v1465
        %1599 = vmatpush2.msra.mxu0 %v1464
        %1600 = vmatprep.subr.mxu0 %v1463
        %1601 = vmatpush2.msra.mxu0 %v1462
        %1602 = vmatprep.subr.mxu0 %v1461
        %1603 = vmatpush2.msra.mxu0 %v1460
        %1604 = vmatprep.subr.mxu0 %v1459
        %1605 = vmatpush2.msra.mxu0 %v1458
        %1606 = vmatprep.subr.mxu0 %v1457
        %1607 = vmatpush2.msra.mxu0 %v1456
        %1608 = vmatprep.subr.mxu0 %v1455
        %1609 = vmatpush2.msra.mxu0 %v1454
        %1610 = vmatprep.subr.mxu0 %v1453
        %1611 = vmatpush2.msra.mxu0 %v1452
        %1612 = vmatprep.subr.mxu0 %v1451
        %1613 = vmatpush2.msra.mxu0 %v1450
        %1614 = vmatprep.subr.mxu0 %v1449
        %1615 = vmatpush2.msra.mxu0 %v1448
        %1616 = vmatprep.subr.mxu0 %v1447
        %1617 = vmatpush2.msra.mxu0 %v1446
        %1618 = vmatprep.subr.mxu0 %v1445
        %1619 = vmatpush2.msra.mxu0 %v1444
        %1620 = vmatprep.mubr.f32.mxu0 %v1389
        %1621 = vmatmul.mubr.f32.gmra.mxu0 %v1388
        %v1622 = vpop.f32.mrf.mxu0
        %v1623 = vadd.f32 %v1495, %v1622
        %v1624 = vpop.f32.mrf.mxu0
        %v1625 = vadd.f32 %v1495, %v1624
        %1626 = vmatprep.mubr.f32.mxu0 %v1392
        %1627 = vmatmul.mubr.f32.gmra.mxu0 %v1391
        %v1628 = vpop.f32.mrf.mxu0
        %v1629 = vadd.f32 %v1500, %v1628
        %v1630 = vpop.f32.mrf.mxu0
        %v1631 = vadd.f32 %v1500, %v1630
        %1632 = vmatprep.mubr.f32.mxu0 %v1395
        %1633 = vmatmul.mubr.f32.gmra.mxu0 %v1394
        %v1634 = vpop.f32.mrf.mxu0
        %v1635 = vadd.f32 %v1505, %v1634
        %v1636 = vpop.f32.mrf.mxu0
        %v1637 = vadd.f32 %v1505, %v1636
        %1638 = vmatprep.mubr.f32.mxu0 %v1398
        %1639 = vmatmul.mubr.f32.gmra.mxu0 %v1397
        %v1640 = vpop.f32.mrf.mxu0
        %v1641 = vadd.f32 %v1510, %v1640
        %v1642 = vpop.f32.mrf.mxu0
        %v1643 = vadd.f32 %v1510, %v1642
        %1644 = vmatprep.mubr.f32.mxu0 %v1401
        %1645 = vmatmul.mubr.f32.gmra.mxu0 %v1400
        %v1646 = vpop.f32.mrf.mxu0
        %v1647 = vadd.f32 %v1515, %v1646
        %v1648 = vpop.f32.mrf.mxu0
        %v1649 = vadd.f32 %v1515, %v1648
        %1650 = vmatprep.mubr.f32.mxu0 %v1404
        %1651 = vmatmul.mubr.f32.gmra.mxu0 %v1403
        %v1652 = vpop.f32.mrf.mxu0
        %v1653 = vadd.f32 %v1520, %v1652
        %v1654 = vpop.f32.mrf.mxu0
        %v1655 = vadd.f32 %v1520, %v1654
        %1656 = vmatprep.mubr.f32.mxu0 %v1407
        %1657 = vmatmul.mubr.f32.gmra.mxu0 %v1406
        %v1658 = vpop.f32.mrf.mxu0
        %v1659 = vadd.f32 %v1525, %v1658
        %v1660 = vpop.f32.mrf.mxu0
        %v1661 = vadd.f32 %v1525, %v1660
        %1662 = vmatprep.mubr.f32.mxu0 %v1410
        %1663 = vmatmul.mubr.f32.gmra.mxu0 %v1409
        %v1664 = vpop.f32.mrf.mxu0
        %v1665 = vadd.f32 %v1530, %v1664
        %v1666 = vpop.f32.mrf.mxu0
        %v1667 = vadd.f32 %v1530, %v1666
        %1668 = vdwg.mxu0
        %1669 = vmatprep.subr.mxu0 0.0
        %1670 = vmatpush1.msra.mxu0 0.0
        %1671 = vmatprep.subr.mxu0 0.0
        %1672 = vmatpush1.msra.mxu0 0.0
        %1673 = vmatprep.subr.mxu0 0.0
        %1674 = vmatpush1.msra.mxu0 0.0
        %1675 = vmatprep.subr.mxu0 0.0
        %1676 = vmatpush1.msra.mxu0 0.0
        %1677 = vmatprep.subr.mxu0 0.0
        %1678 = vmatpush1.msra.mxu0 0.0
        %1679 = vmatprep.subr.mxu0 0.0
        %1680 = vmatpush1.msra.mxu0 0.0
        %1681 = vmatprep.subr.mxu0 0.0
        %1682 = vmatpush1.msra.mxu0 0.0
        %1683 = vmatprep.subr.mxu0 0.0
        %1684 = vmatpush1.msra.mxu0 0.0
        %1685 = vmatprep.subr.mxu0 0.0
        %1686 = vmatpush1.msra.mxu0 0.0
        %1687 = vmatprep.subr.mxu0 0.0
        %1688 = vmatpush1.msra.mxu0 0.0
        %1689 = vmatprep.subr.mxu0 0.0
        %1690 = vmatpush1.msra.mxu0 0.0
        %1691 = vmatprep.subr.mxu0 0.0
        %1692 = vmatpush1.msra.mxu0 0.0
        %1693 = vmatprep.subr.mxu0 %v1483
        %1694 = vmatpush1.msra.mxu0 %v1482
        %1695 = vmatprep.subr.mxu0 %v1481
        %1696 = vmatpush1.msra.mxu0 %v1480
        %1697 = vmatprep.subr.mxu0 %v1479
        %1698 = vmatpush1.msra.mxu0 %v1478
        %1699 = vmatprep.subr.mxu0 %v1477
        %1700 = vmatpush1.msra.mxu0 %v1476
        %1701 = vmatprep.subr.mxu0 0.0
        %1702 = vmatpush2.msra.mxu0 0.0
        %1703 = vmatprep.subr.mxu0 0.0
        %1704 = vmatpush2.msra.mxu0 0.0
        %1705 = vmatprep.subr.mxu0 0.0
        %1706 = vmatpush2.msra.mxu0 0.0
        %1707 = vmatprep.subr.mxu0 0.0
        %1708 = vmatpush2.msra.mxu0 0.0
        %1709 = vmatprep.subr.mxu0 0.0
        %1710 = vmatpush2.msra.mxu0 0.0
        %1711 = vmatprep.subr.mxu0 0.0
        %1712 = vmatpush2.msra.mxu0 0.0
        %1713 = vmatprep.subr.mxu0 0.0
        %1714 = vmatpush2.msra.mxu0 0.0
        %1715 = vmatprep.subr.mxu0 0.0
        %1716 = vmatpush2.msra.mxu0 0.0
        %1717 = vmatprep.subr.mxu0 0.0
        %1718 = vmatpush2.msra.mxu0 0.0
        %1719 = vmatprep.subr.mxu0 0.0
        %1720 = vmatpush2.msra.mxu0 0.0
        %1721 = vmatprep.subr.mxu0 0.0
        %1722 = vmatpush2.msra.mxu0 0.0
        %1723 = vmatprep.subr.mxu0 0.0
        %1724 = vmatpush2.msra.mxu0 0.0
        %1725 = vmatprep.subr.mxu0 0.0
        %1726 = vmatpush2.msra.mxu0 0.0
        %1727 = vmatprep.subr.mxu0 0.0
        %1728 = vmatpush2.msra.mxu0 0.0
        %1729 = vmatprep.subr.mxu0 0.0
        %1730 = vmatpush2.msra.mxu0 0.0
        %1731 = vmatprep.subr.mxu0 0.0
        %1732 = vmatpush2.msra.mxu0 0.0
        %1733 = vmatprep.mubr.f32.mxu0 0.0
        %1734 = vmatmul.mubr.f32.gmra.mxu0 %v1533
        %v1735 = vpop.f32.mrf.mxu0
        %v1736 = vadd.f32 %v1623, %v1735
        %v1737 = vpop.f32.mrf.mxu0
        %v1738 = vadd.f32 %v1625, %v1737
        %1739 = vmatprep.mubr.f32.mxu0 0.0
        %1740 = vmatmul.mubr.f32.gmra.mxu0 %v1536
        %v1741 = vpop.f32.mrf.mxu0
        %v1742 = vadd.f32 %v1629, %v1741
        %v1743 = vpop.f32.mrf.mxu0
        %v1744 = vadd.f32 %v1631, %v1743
        %1745 = vmatprep.mubr.f32.mxu0 0.0
        %1746 = vmatmul.mubr.f32.gmra.mxu0 %v1539
        %v1747 = vpop.f32.mrf.mxu0
        %v1748 = vadd.f32 %v1635, %v1747
        %v1749 = vpop.f32.mrf.mxu0
        %v1750 = vadd.f32 %v1637, %v1749
        %1751 = vmatprep.mubr.f32.mxu0 0.0
        %1752 = vmatmul.mubr.f32.gmra.mxu0 %v1542
        %v1753 = vpop.f32.mrf.mxu0
        %v1754 = vadd.f32 %v1641, %v1753
        %v1755 = vpop.f32.mrf.mxu0
        %v1756 = vadd.f32 %v1643, %v1755
        %1757 = vmatprep.mubr.f32.mxu0 0.0
        %1758 = vmatmul.mubr.f32.gmra.mxu0 %v1545
        %v1759 = vpop.f32.mrf.mxu0
        %v1760 = vadd.f32 %v1647, %v1759
        %v1761 = vpop.f32.mrf.mxu0
        %v1762 = vadd.f32 %v1649, %v1761
        %1763 = vmatprep.mubr.f32.mxu0 0.0
        %1764 = vmatmul.mubr.f32.gmra.mxu0 %v1548
        %v1765 = vpop.f32.mrf.mxu0
        %v1766 = vadd.f32 %v1653, %v1765
        %v1767 = vpop.f32.mrf.mxu0
        %v1768 = vadd.f32 %v1655, %v1767
        %1769 = vmatprep.mubr.f32.mxu0 0.0
        %1770 = vmatmul.mubr.f32.gmra.mxu0 %v1551
        %v1771 = vpop.f32.mrf.mxu0
        %v1772 = vadd.f32 %v1659, %v1771
        %v1773 = vpop.f32.mrf.mxu0
        %v1774 = vadd.f32 %v1661, %v1773
        %1775 = vmatprep.mubr.f32.mxu0 0.0
        %1776 = vmatmul.mubr.f32.gmra.mxu0 %v1554
        %v1777 = vpop.f32.mrf.mxu0
        %v1778 = vadd.f32 %v1665, %v1777
        %v1779 = vpop.f32.mrf.mxu0
        %v1780 = vadd.f32 %v1667, %v1779
        %1781 = vdwg.mxu0
        %v1782 = vld [vmem:[%s8] sm:$0xff]
        %v1783 = vld [vmem:[%s8 + $0x8] sm:$0xff]
        %v1784 = vld [vmem:[%s8 + $0x10] sm:$0xff]
        %v1785 = vld [vmem:[%s8 + $0x18] sm:$0xff]
        %v1786 = vld [vmem:[%s8 + $0x20] sm:$0xff]
        %v1787 = vld [vmem:[%s8 + $0x28] sm:$0xff]
        %v1788 = vld [vmem:[%s8 + $0x30] sm:$0xff]
        %v1789 = vld [vmem:[%s8 + $0x38] sm:$0xff]
        %v1790 = vld [vmem:[%s9] sm:$0xff]
        %v1791 = vld [vmem:[%s9 + $0x8] sm:$0xff]
        %v1792 = vld [vmem:[%s9 + $0x10] sm:$0xff]
        %v1793 = vld [vmem:[%s9 + $0x18] sm:$0xff]
        %v1794 = vld [vmem:[%s9 + $0x20] sm:$0xff]
        %v1795 = vld [vmem:[%s9 + $0x28] sm:$0xff]
        %v1796 = vld [vmem:[%s9 + $0x30] sm:$0xff]
        %v1797 = vld [vmem:[%s9 + $0x38] sm:$0xff]
        %v1798 = vadd.f32 %v1736, %v1738
        %1799 = vadd.xlane.f32.xlu0 %v1798
        %v1800 = vpop.xlane.xlu0 %1799
        %v1801 = vadd.f32 %v1742, %v1744
        %1802 = vadd.xlane.f32.xlu0 %v1801
        %v1803 = vpop.xlane.xlu0 %1802
        %v1804 = vadd.f32 %v1748, %v1750
        %1805 = vadd.xlane.f32.xlu0 %v1804
        %v1806 = vpop.xlane.xlu0 %1805
        %v1807 = vadd.f32 %v1754, %v1756
        %1808 = vadd.xlane.f32.xlu0 %v1807
        %v1809 = vpop.xlane.xlu0 %1808
        %v1810 = vadd.f32 %v1760, %v1762
        %1811 = vadd.xlane.f32.xlu0 %v1810
        %v1812 = vpop.xlane.xlu0 %1811
        %v1813 = vadd.f32 %v1766, %v1768
        %1814 = vadd.xlane.f32.xlu0 %v1813
        %v1815 = vpop.xlane.xlu0 %1814
        %v1816 = vadd.f32 %v1772, %v1774
        %1817 = vadd.xlane.f32.xlu0 %v1816
        %v1818 = vpop.xlane.xlu0 %1817
        %v1819 = vadd.f32 %v1778, %v1780
        %1820 = vadd.xlane.f32.xlu0 %v1819
        %v1821 = vpop.xlane.xlu0 %1820
        %vm1822 = vcmask 523264
        %v1824 = vsel %vm1822, %v533, 0
        %v1827 = vsel %vm1822, %v534, 0
        %v1830 = vsel %vm1822, %v535, 0
        %v1833 = vsel %vm1822, %v536, 0
        %v1836 = vsel %vm1822, %v537, 0
        %v1839 = vsel %vm1822, %v538, 0
        %v1842 = vsel %vm1822, %v539, 0
        %v1845 = vsel %vm1822, %v540, 0
        %1847 = vmatprep.subr.mxu0 0.0
        %1848 = vmatpush1.msra.mxu0 0.0
        %1849 = vmatprep.subr.mxu0 0.0
        %1850 = vmatpush1.msra.mxu0 0.0
        %1851 = vmatprep.subr.mxu0 0.0
        %1852 = vmatpush1.msra.mxu0 0.0
        %1853 = vmatprep.subr.mxu0 0.0
        %1854 = vmatpush1.msra.mxu0 0.0
        %1855 = vmatprep.subr.mxu0 0.0
        %1856 = vmatpush1.msra.mxu0 0.0
        %1857 = vmatprep.subr.mxu0 0.0
        %1858 = vmatpush1.msra.mxu0 0.0
        %1859 = vmatprep.subr.mxu0 0.0
        %1860 = vmatpush1.msra.mxu0 0.0
        %1861 = vmatprep.subr.mxu0 0.0
        %1862 = vmatpush1.msra.mxu0 0.0
        %1863 = vmatprep.subr.mxu0 0.0
        %1864 = vmatpush1.msra.mxu0 %v1821
        %1865 = vmatprep.subr.mxu0 0.0
        %1866 = vmatpush1.msra.mxu0 %v1818
        %1867 = vmatprep.subr.mxu0 0.0
        %1868 = vmatpush1.msra.mxu0 %v1815
        %1869 = vmatprep.subr.mxu0 0.0
        %1870 = vmatpush1.msra.mxu0 %v1812
        %1871 = vmatprep.subr.mxu0 0.0
        %1872 = vmatpush1.msra.mxu0 %v1809
        %1873 = vmatprep.subr.mxu0 0.0
        %1874 = vmatpush1.msra.mxu0 %v1806
        %1875 = vmatprep.subr.mxu0 0.0
        %1876 = vmatpush1.msra.mxu0 %v1803
        %1877 = vmatprep.subr.mxu0 0.0
        %1878 = vmatpush1.msra.mxu0 %v1800
        %1879 = vmatprep.subr.mxu0 0.0
        %1880 = vmatpush2.msra.mxu0 0.0
        %1881 = vmatprep.subr.mxu0 0.0
        %1882 = vmatpush2.msra.mxu0 0.0
        %1883 = vmatprep.subr.mxu0 0.0
        %1884 = vmatpush2.msra.mxu0 0.0
        %1885 = vmatprep.subr.mxu0 0.0
        %1886 = vmatpush2.msra.mxu0 0.0
        %1887 = vmatprep.subr.mxu0 0.0
        %1888 = vmatpush2.msra.mxu0 0.0
        %1889 = vmatprep.subr.mxu0 0.0
        %1890 = vmatpush2.msra.mxu0 0.0
        %1891 = vmatprep.subr.mxu0 0.0
        %1892 = vmatpush2.msra.mxu0 0.0
        %1893 = vmatprep.subr.mxu0 0.0
        %1894 = vmatpush2.msra.mxu0 0.0
        %1895 = vmatprep.subr.mxu0 0.0
        %1896 = vmatpush2.msra.mxu0 0.0
        %1897 = vmatprep.subr.mxu0 0.0
        %1898 = vmatpush2.msra.mxu0 0.0
        %1899 = vmatprep.subr.mxu0 0.0
        %1900 = vmatpush2.msra.mxu0 0.0
        %1901 = vmatprep.subr.mxu0 0.0
        %1902 = vmatpush2.msra.mxu0 0.0
        %1903 = vmatprep.subr.mxu0 0.0
        %1904 = vmatpush2.msra.mxu0 0.0
        %1905 = vmatprep.subr.mxu0 0.0
        %1906 = vmatpush2.msra.mxu0 0.0
        %1907 = vmatprep.subr.mxu0 0.0
        %1908 = vmatpush2.msra.mxu0 0.0
        %1909 = vmatprep.subr.mxu0 0.0
        %1910 = vmatpush2.msra.mxu0 0.0
        %1911 = vmatprep.mubr.f32.mxu0 0.0
        %1912 = vmatmul.mubr.f32.gmra.mxu0 %v1824
        %v1913 = vpop.f32.mrf.mxu0
        %v1914 = vadd.f32 0.0, %v1913
        %v1915 = vpop.f32.mrf.mxu0
        %1916 = vmatprep.mubr.f32.mxu0 0.0
        %1917 = vmatmul.mubr.f32.gmra.mxu0 %v1827
        %v1918 = vpop.f32.mrf.mxu0
        %v1919 = vadd.f32 0.0, %v1918
        %v1920 = vpop.f32.mrf.mxu0
        %1921 = vmatprep.mubr.f32.mxu0 0.0
        %1922 = vmatmul.mubr.f32.gmra.mxu0 %v1830
        %v1923 = vpop.f32.mrf.mxu0
        %v1924 = vadd.f32 0.0, %v1923
        %v1925 = vpop.f32.mrf.mxu0
        %1926 = vmatprep.mubr.f32.mxu0 0.0
        %1927 = vmatmul.mubr.f32.gmra.mxu0 %v1833
        %v1928 = vpop.f32.mrf.mxu0
        %v1929 = vadd.f32 0.0, %v1928
        %v1930 = vpop.f32.mrf.mxu0
        %1931 = vmatprep.mubr.f32.mxu0 0.0
        %1932 = vmatmul.mubr.f32.gmra.mxu0 %v1836
        %v1933 = vpop.f32.mrf.mxu0
        %v1934 = vadd.f32 0.0, %v1933
        %v1935 = vpop.f32.mrf.mxu0
        %1936 = vmatprep.mubr.f32.mxu0 0.0
        %1937 = vmatmul.mubr.f32.gmra.mxu0 %v1839
        %v1938 = vpop.f32.mrf.mxu0
        %v1939 = vadd.f32 0.0, %v1938
        %v1940 = vpop.f32.mrf.mxu0
        %1941 = vmatprep.mubr.f32.mxu0 0.0
        %1942 = vmatmul.mubr.f32.gmra.mxu0 %v1842
        %v1943 = vpop.f32.mrf.mxu0
        %v1944 = vadd.f32 0.0, %v1943
        %v1945 = vpop.f32.mrf.mxu0
        %1946 = vmatprep.mubr.f32.mxu0 0.0
        %1947 = vmatmul.mubr.f32.gmra.mxu0 %v1845
        %v1948 = vpop.f32.mrf.mxu0
        %v1949 = vadd.f32 0.0, %v1948
        %v1950 = vpop.f32.mrf.mxu0
        %1951 = vdwg.mxu0
        %v1952 = vmul.f32 %v1914, 0.00024414063
        %v1953 = vmul.f32 %v1919, 0.00024414063
        %v1954 = vmul.f32 %v1924, 0.00024414063
        %v1955 = vmul.f32 %v1929, 0.00024414063
        %v1956 = vmul.f32 %v1934, 0.00024414063
        %v1957 = vmul.f32 %v1939, 0.00024414063
        %v1958 = vmul.f32 %v1944, 0.00024414063
        %v1959 = vmul.f32 %v1949, 0.00024414063
        %1961 = vset.pattern.permute.xlu0 0
        %1962 = vperm.xlu0 %1961, %v1952
        %v1963 = vpop.permute.xlu0 %1962
        %1966 = vset.pattern.permute.xlu0 0
        %1967 = vperm.xlu0 %1966, %v1953
        %v1968 = vpop.permute.xlu0 %1967
        %1971 = vset.pattern.permute.xlu0 0
        %1972 = vperm.xlu0 %1971, %v1954
        %v1973 = vpop.permute.xlu0 %1972
        %1976 = vset.pattern.permute.xlu0 0
        %1977 = vperm.xlu0 %1976, %v1955
        %v1978 = vpop.permute.xlu0 %1977
        %1981 = vset.pattern.permute.xlu0 0
        %1982 = vperm.xlu0 %1981, %v1956
        %v1983 = vpop.permute.xlu0 %1982
        %1986 = vset.pattern.permute.xlu0 0
        %1987 = vperm.xlu0 %1986, %v1957
        %v1988 = vpop.permute.xlu0 %1987
        %1991 = vset.pattern.permute.xlu0 0
        %1992 = vperm.xlu0 %1991, %v1958
        %v1993 = vpop.permute.xlu0 %1992
        %1996 = vset.pattern.permute.xlu0 0
        %1997 = vperm.xlu0 %1996, %v1959
        %v1998 = vpop.permute.xlu0 %1997
        %v2000 = vsub.f32 %v1736, %v1963
        %v2001 = vsub.f32 %v1738, %v1963
        %v2002 = vsub.f32 %v1742, %v1968
        %v2003 = vsub.f32 %v1744, %v1968
        %v2004 = vsub.f32 %v1748, %v1973
        %v2005 = vsub.f32 %v1750, %v1973
        %v2006 = vsub.f32 %v1754, %v1978
        %v2007 = vsub.f32 %v1756, %v1978
        %v2008 = vsub.f32 %v1760, %v1983
        %v2009 = vsub.f32 %v1762, %v1983
        %v2010 = vsub.f32 %v1766, %v1988
        %v2011 = vsub.f32 %v1768, %v1988
        %v2012 = vsub.f32 %v1772, %v1993
        %v2013 = vsub.f32 %v1774, %v1993
        %v2014 = vsub.f32 %v1778, %v1998
        %v2015 = vsub.f32 %v1780, %v1998
        %v2016 = vmul.f32 %v2000, %v2000
        %v2017 = vmul.f32 %v2001, %v2001
        %v2018 = vmul.f32 %v2002, %v2002
        %v2019 = vmul.f32 %v2003, %v2003
        %v2020 = vmul.f32 %v2004, %v2004
        %v2021 = vmul.f32 %v2005, %v2005
        %v2022 = vmul.f32 %v2006, %v2006
        %v2023 = vmul.f32 %v2007, %v2007
        %v2024 = vmul.f32 %v2008, %v2008
        %v2025 = vmul.f32 %v2009, %v2009
        %v2026 = vmul.f32 %v2010, %v2010
        %v2027 = vmul.f32 %v2011, %v2011
        %v2028 = vmul.f32 %v2012, %v2012
        %v2029 = vmul.f32 %v2013, %v2013
        %v2030 = vmul.f32 %v2014, %v2014
        %v2031 = vmul.f32 %v2015, %v2015
        %v2032 = vadd.f32 %v2016, %v2017
        %2033 = vadd.xlane.f32.xlu0 %v2032
        %v2034 = vpop.xlane.xlu0 %2033
        %v2035 = vadd.f32 %v2018, %v2019
        %2036 = vadd.xlane.f32.xlu0 %v2035
        %v2037 = vpop.xlane.xlu0 %2036
        %v2038 = vadd.f32 %v2020, %v2021
        %2039 = vadd.xlane.f32.xlu0 %v2038
        %v2040 = vpop.xlane.xlu0 %2039
        %v2041 = vadd.f32 %v2022, %v2023
        %2042 = vadd.xlane.f32.xlu0 %v2041
        %v2043 = vpop.xlane.xlu0 %2042
        %v2044 = vadd.f32 %v2024, %v2025
        %2045 = vadd.xlane.f32.xlu0 %v2044
        %v2046 = vpop.xlane.xlu0 %2045
        %v2047 = vadd.f32 %v2026, %v2027
        %2048 = vadd.xlane.f32.xlu0 %v2047
        %v2049 = vpop.xlane.xlu0 %2048
        %v2050 = vadd.f32 %v2028, %v2029
        %2051 = vadd.xlane.f32.xlu0 %v2050
        %v2052 = vpop.xlane.xlu0 %2051
        %v2053 = vadd.f32 %v2030, %v2031
        %2054 = vadd.xlane.f32.xlu0 %v2053
        %v2055 = vpop.xlane.xlu0 %2054
        %2056 = vmatprep.subr.mxu0 0.0
        %2057 = vmatpush1.msra.mxu0 0.0
        %2058 = vmatprep.subr.mxu0 0.0
        %2059 = vmatpush1.msra.mxu0 0.0
        %2060 = vmatprep.subr.mxu0 0.0
        %2061 = vmatpush1.msra.mxu0 0.0
        %2062 = vmatprep.subr.mxu0 0.0
        %2063 = vmatpush1.msra.mxu0 0.0
        %2064 = vmatprep.subr.mxu0 0.0
        %2065 = vmatpush1.msra.mxu0 0.0
        %2066 = vmatprep.subr.mxu0 0.0
        %2067 = vmatpush1.msra.mxu0 0.0
        %2068 = vmatprep.subr.mxu0 0.0
        %2069 = vmatpush1.msra.mxu0 0.0
        %2070 = vmatprep.subr.mxu0 0.0
        %2071 = vmatpush1.msra.mxu0 0.0
        %2072 = vmatprep.subr.mxu0 0.0
        %2073 = vmatpush1.msra.mxu0 %v2055
        %2074 = vmatprep.subr.mxu0 0.0
        %2075 = vmatpush1.msra.mxu0 %v2052
        %2076 = vmatprep.subr.mxu0 0.0
        %2077 = vmatpush1.msra.mxu0 %v2049
        %2078 = vmatprep.subr.mxu0 0.0
        %2079 = vmatpush1.msra.mxu0 %v2046
        %2080 = vmatprep.subr.mxu0 0.0
        %2081 = vmatpush1.msra.mxu0 %v2043
        %2082 = vmatprep.subr.mxu0 0.0
        %2083 = vmatpush1.msra.mxu0 %v2040
        %2084 = vmatprep.subr.mxu0 0.0
        %2085 = vmatpush1.msra.mxu0 %v2037
        %2086 = vmatprep.subr.mxu0 0.0
        %2087 = vmatpush1.msra.mxu0 %v2034
        %2088 = vmatprep.subr.mxu0 0.0
        %2089 = vmatpush2.msra.mxu0 0.0
        %2090 = vmatprep.subr.mxu0 0.0
        %2091 = vmatpush2.msra.mxu0 0.0
        %2092 = vmatprep.subr.mxu0 0.0
        %2093 = vmatpush2.msra.mxu0 0.0
        %2094 = vmatprep.subr.mxu0 0.0
        %2095 = vmatpush2.msra.mxu0 0.0
        %2096 = vmatprep.subr.mxu0 0.0
        %2097 = vmatpush2.msra.mxu0 0.0
        %2098 = vmatprep.subr.mxu0 0.0
        %2099 = vmatpush2.msra.mxu0 0.0
        %2100 = vmatprep.subr.mxu0 0.0
        %2101 = vmatpush2.msra.mxu0 0.0
        %2102 = vmatprep.subr.mxu0 0.0
        %2103 = vmatpush2.msra.mxu0 0.0
        %2104 = vmatprep.subr.mxu0 0.0
        %2105 = vmatpush2.msra.mxu0 0.0
        %2106 = vmatprep.subr.mxu0 0.0
        %2107 = vmatpush2.msra.mxu0 0.0
        %2108 = vmatprep.subr.mxu0 0.0
        %2109 = vmatpush2.msra.mxu0 0.0
        %2110 = vmatprep.subr.mxu0 0.0
        %2111 = vmatpush2.msra.mxu0 0.0
        %2112 = vmatprep.subr.mxu0 0.0
        %2113 = vmatpush2.msra.mxu0 0.0
        %2114 = vmatprep.subr.mxu0 0.0
        %2115 = vmatpush2.msra.mxu0 0.0
        %2116 = vmatprep.subr.mxu0 0.0
        %2117 = vmatpush2.msra.mxu0 0.0
        %2118 = vmatprep.subr.mxu0 0.0
        %2119 = vmatpush2.msra.mxu0 0.0
        %2120 = vmatprep.mubr.f32.mxu0 0.0
        %2121 = vmatmul.mubr.f32.gmra.mxu0 %v1824
        %v2122 = vpop.f32.mrf.mxu0
        %v2123 = vadd.f32 0.0, %v2122
        %v2124 = vpop.f32.mrf.mxu0
        %2125 = vmatprep.mubr.f32.mxu0 0.0
        %2126 = vmatmul.mubr.f32.gmra.mxu0 %v1827
        %v2127 = vpop.f32.mrf.mxu0
        %v2128 = vadd.f32 0.0, %v2127
        %v2129 = vpop.f32.mrf.mxu0
        %2130 = vmatprep.mubr.f32.mxu0 0.0
        %2131 = vmatmul.mubr.f32.gmra.mxu0 %v1830
        %v2132 = vpop.f32.mrf.mxu0
        %v2133 = vadd.f32 0.0, %v2132
        %v2134 = vpop.f32.mrf.mxu0
        %2135 = vmatprep.mubr.f32.mxu0 0.0
        %2136 = vmatmul.mubr.f32.gmra.mxu0 %v1833
        %v2137 = vpop.f32.mrf.mxu0
        %v2138 = vadd.f32 0.0, %v2137
        %v2139 = vpop.f32.mrf.mxu0
        %2140 = vmatprep.mubr.f32.mxu0 0.0
        %2141 = vmatmul.mubr.f32.gmra.mxu0 %v1836
        %v2142 = vpop.f32.mrf.mxu0
        %v2143 = vadd.f32 0.0, %v2142
        %v2144 = vpop.f32.mrf.mxu0
        %2145 = vmatprep.mubr.f32.mxu0 0.0
        %2146 = vmatmul.mubr.f32.gmra.mxu0 %v1839
        %v2147 = vpop.f32.mrf.mxu0
        %v2148 = vadd.f32 0.0, %v2147
        %v2149 = vpop.f32.mrf.mxu0
        %2150 = vmatprep.mubr.f32.mxu0 0.0
        %2151 = vmatmul.mubr.f32.gmra.mxu0 %v1842
        %v2152 = vpop.f32.mrf.mxu0
        %v2153 = vadd.f32 0.0, %v2152
        %v2154 = vpop.f32.mrf.mxu0
        %2155 = vmatprep.mubr.f32.mxu0 0.0
        %2156 = vmatmul.mubr.f32.gmra.mxu0 %v1845
        %v2157 = vpop.f32.mrf.mxu0
        %v2158 = vadd.f32 0.0, %v2157
        %v2159 = vpop.f32.mrf.mxu0
        %2160 = vdwg.mxu0
        %v2161 = vmul.f32 %v2123, 0.00024414063
        %v2162 = vmul.f32 %v2128, 0.00024414063
        %v2163 = vmul.f32 %v2133, 0.00024414063
        %v2164 = vmul.f32 %v2138, 0.00024414063
        %v2165 = vmul.f32 %v2143, 0.00024414063
        %v2166 = vmul.f32 %v2148, 0.00024414063
        %v2167 = vmul.f32 %v2153, 0.00024414063
        %v2168 = vmul.f32 %v2158, 0.00024414063
        %v2169 = vadd.f32 %v2161, 1e-05
        %v2170 = vadd.f32 %v2162, 1e-05
        %v2171 = vadd.f32 %v2163, 1e-05
        %v2172 = vadd.f32 %v2164, 1e-05
        %v2173 = vadd.f32 %v2165, 1e-05
        %v2174 = vadd.f32 %v2166, 1e-05
        %v2175 = vadd.f32 %v2167, 1e-05
        %v2176 = vadd.f32 %v2168, 1e-05
        %v2177 = vrsqrt.pop %v2169
        %v2178 = vrsqrt.pop %v2170
        %v2179 = vrsqrt.pop %v2171
        %v2180 = vrsqrt.pop %v2172
        %v2181 = vrsqrt.pop %v2173
        %v2182 = vrsqrt.pop %v2174
        %v2183 = vrsqrt.pop %v2175
        %v2184 = vrsqrt.pop %v2176
        %v2185 = vmul.f32 %v2177, %v1782
        %v2186 = vmul.f32 %v2178, %v1783
        %v2187 = vmul.f32 %v2179, %v1784
        %v2188 = vmul.f32 %v2180, %v1785
        %v2189 = vmul.f32 %v2181, %v1786
        %v2190 = vmul.f32 %v2182, %v1787
        %v2191 = vmul.f32 %v2183, %v1788
        %v2192 = vmul.f32 %v2184, %v1789
        %2194 = vset.pattern.permute.xlu0 0
        %2195 = vperm.xlu0 %2194, %v2185
        %v2196 = vpop.permute.xlu0 %2195
        %2199 = vset.pattern.permute.xlu0 0
        %2200 = vperm.xlu0 %2199, %v2186
        %v2201 = vpop.permute.xlu0 %2200
        %2204 = vset.pattern.permute.xlu0 0
        %2205 = vperm.xlu0 %2204, %v2187
        %v2206 = vpop.permute.xlu0 %2205
        %2209 = vset.pattern.permute.xlu0 0
        %2210 = vperm.xlu0 %2209, %v2188
        %v2211 = vpop.permute.xlu0 %2210
        %2214 = vset.pattern.permute.xlu0 0
        %2215 = vperm.xlu0 %2214, %v2189
        %v2216 = vpop.permute.xlu0 %2215
        %2219 = vset.pattern.permute.xlu0 0
        %2220 = vperm.xlu0 %2219, %v2190
        %v2221 = vpop.permute.xlu0 %2220
        %2224 = vset.pattern.permute.xlu0 0
        %2225 = vperm.xlu0 %2224, %v2191
        %v2226 = vpop.permute.xlu0 %2225
        %2229 = vset.pattern.permute.xlu0 0
        %2230 = vperm.xlu0 %2229, %v2192
        %v2231 = vpop.permute.xlu0 %2230
        %v2233 = vmul.f32 %v2000, %v2196
        %v2234 = vmul.f32 %v2001, %v2196
        %v2235 = vmul.f32 %v2002, %v2201
        %v2236 = vmul.f32 %v2003, %v2201
        %v2237 = vmul.f32 %v2004, %v2206
        %v2238 = vmul.f32 %v2005, %v2206
        %v2239 = vmul.f32 %v2006, %v2211
        %v2240 = vmul.f32 %v2007, %v2211
        %v2241 = vmul.f32 %v2008, %v2216
        %v2242 = vmul.f32 %v2009, %v2216
        %v2243 = vmul.f32 %v2010, %v2221
        %v2244 = vmul.f32 %v2011, %v2221
        %v2245 = vmul.f32 %v2012, %v2226
        %v2246 = vmul.f32 %v2013, %v2226
        %v2247 = vmul.f32 %v2014, %v2231
        %v2248 = vmul.f32 %v2015, %v2231
        %2250 = vset.pattern.permute.xlu0 0
        %2251 = vperm.xlu0 %2250, %v1790
        %v2252 = vpop.permute.xlu0 %2251
        %2255 = vset.pattern.permute.xlu0 0
        %2256 = vperm.xlu0 %2255, %v1791
        %v2257 = vpop.permute.xlu0 %2256
        %2260 = vset.pattern.permute.xlu0 0
        %2261 = vperm.xlu0 %2260, %v1792
        %v2262 = vpop.permute.xlu0 %2261
        %2265 = vset.pattern.permute.xlu0 0
        %2266 = vperm.xlu0 %2265, %v1793
        %v2267 = vpop.permute.xlu0 %2266
        %2270 = vset.pattern.permute.xlu0 0
        %2271 = vperm.xlu0 %2270, %v1794
        %v2272 = vpop.permute.xlu0 %2271
        %2275 = vset.pattern.permute.xlu0 0
        %2276 = vperm.xlu0 %2275, %v1795
        %v2277 = vpop.permute.xlu0 %2276
        %2280 = vset.pattern.permute.xlu0 0
        %2281 = vperm.xlu0 %2280, %v1796
        %v2282 = vpop.permute.xlu0 %2281
        %2285 = vset.pattern.permute.xlu0 0
        %2286 = vperm.xlu0 %2285, %v1797
        %v2287 = vpop.permute.xlu0 %2286
        %v2289 = vadd.f32 %v2233, %v2252
        %v2290 = vadd.f32 %v2234, %v2252
        %v2291 = vadd.f32 %v2235, %v2257
        %v2292 = vadd.f32 %v2236, %v2257
        %v2293 = vadd.f32 %v2237, %v2262
        %v2294 = vadd.f32 %v2238, %v2262
        %v2295 = vadd.f32 %v2239, %v2267
        %v2296 = vadd.f32 %v2240, %v2267
        %v2297 = vadd.f32 %v2241, %v2272
        %v2298 = vadd.f32 %v2242, %v2272
        %v2299 = vadd.f32 %v2243, %v2277
        %v2300 = vadd.f32 %v2244, %v2277
        %v2301 = vadd.f32 %v2245, %v2282
        %v2302 = vadd.f32 %v2246, %v2282
        %v2303 = vadd.f32 %v2247, %v2287
        %v2304 = vadd.f32 %v2248, %v2287
        %v2305 = vmax.f32 %v2289, 0.0
        %v2306 = vmax.f32 %v2290, 0.0
        %v2307 = vmax.f32 %v2291, 0.0
        %v2308 = vmax.f32 %v2292, 0.0
        %v2309 = vmax.f32 %v2293, 0.0
        %v2310 = vmax.f32 %v2294, 0.0
        %v2311 = vmax.f32 %v2295, 0.0
        %v2312 = vmax.f32 %v2296, 0.0
        %v2313 = vmax.f32 %v2297, 0.0
        %v2314 = vmax.f32 %v2298, 0.0
        %v2315 = vmax.f32 %v2299, 0.0
        %v2316 = vmax.f32 %v2300, 0.0
        %v2317 = vmax.f32 %v2301, 0.0
        %v2318 = vmax.f32 %v2302, 0.0
        %v2319 = vmax.f32 %v2303, 0.0
        %v2320 = vmax.f32 %v2304, 0.0
        %2329 = vrot.lane.b32.xlu0 %v2306, 17
        %v2330 = vpop.permute.xlu0 %2329
        %2331 = vrot.lane.b32.xlu0 %v2308, 17
        %v2332 = vpop.permute.xlu0 %2331
        %2333 = vrot.lane.b32.xlu0 %v2310, 17
        %v2334 = vpop.permute.xlu0 %2333
        %2335 = vrot.lane.b32.xlu0 %v2312, 17
        %v2336 = vpop.permute.xlu0 %2335
        %2337 = vrot.lane.b32.xlu0 %v2314, 17
        %v2338 = vpop.permute.xlu0 %2337
        %2339 = vrot.lane.b32.xlu0 %v2316, 17
        %v2340 = vpop.permute.xlu0 %2339
        %2341 = vrot.lane.b32.xlu0 %v2318, 17
        %v2342 = vpop.permute.xlu0 %2341
        %2343 = vrot.lane.b32.xlu0 %v2320, 17
        %v2344 = vpop.permute.xlu0 %2343
        %2361 = vrot.lane.b32.xlu0 %v2305, 17
        %v2362 = vpop.permute.xlu0 %2361
        %2363 = vrot.lane.b32.xlu0 %v2307, 17
        %v2364 = vpop.permute.xlu0 %2363
        %2365 = vrot.lane.b32.xlu0 %v2309, 17
        %v2366 = vpop.permute.xlu0 %2365
        %2367 = vrot.lane.b32.xlu0 %v2311, 17
        %v2368 = vpop.permute.xlu0 %2367
        %2369 = vrot.lane.b32.xlu0 %v2313, 17
        %v2370 = vpop.permute.xlu0 %2369
        %2371 = vrot.lane.b32.xlu0 %v2315, 17
        %v2372 = vpop.permute.xlu0 %2371
        %2373 = vrot.lane.b32.xlu0 %v2317, 17
        %v2374 = vpop.permute.xlu0 %2373
        %2375 = vrot.lane.b32.xlu0 %v2319, 17
        %v2376 = vpop.permute.xlu0 %2375
        %v2377 = vsel %vm912, %v2362, %v2330
        %v2378 = vsel %vm912, %v2364, %v2332
        %v2379 = vsel %vm912, %v2366, %v2334
        %v2380 = vsel %vm912, %v2368, %v2336
        %v2381 = vsel %vm912, %v2370, %v2338
        %v2382 = vsel %vm912, %v2372, %v2340
        %v2383 = vsel %vm912, %v2374, %v2342
        %v2384 = vsel %vm912, %v2376, %v2344
        %v2401 = vsel %vm912, %v2330, %v2362
        %v2402 = vsel %vm912, %v2332, %v2364
        %v2403 = vsel %vm912, %v2334, %v2366
        %v2404 = vsel %vm912, %v2336, %v2368
        %v2405 = vsel %vm912, %v2338, %v2370
        %v2406 = vsel %vm912, %v2340, %v2372
        %v2407 = vsel %vm912, %v2342, %v2374
        %v2408 = vsel %vm912, %v2344, %v2376
        %v2409 = vmul.f32 %v2401, %v932
        %v2410 = vmul.f32 %v2377, %v936
        %v2411 = vmul.f32 %v2402, %v932
        %v2412 = vmul.f32 %v2378, %v936
        %v2413 = vmul.f32 %v2403, %v932
        %v2414 = vmul.f32 %v2379, %v936
        %v2415 = vmul.f32 %v2404, %v932
        %v2416 = vmul.f32 %v2380, %v936
        %v2417 = vmul.f32 %v2405, %v932
        %v2418 = vmul.f32 %v2381, %v936
        %v2419 = vmul.f32 %v2406, %v932
        %v2420 = vmul.f32 %v2382, %v936
        %v2421 = vmul.f32 %v2407, %v932
        %v2422 = vmul.f32 %v2383, %v936
        %v2423 = vmul.f32 %v2408, %v932
        %v2424 = vmul.f32 %v2384, %v936
        %2425 = vst [vmem:[#allocation2] sm:$0xff] %v2409
        %2426 = vst [vmem:[#allocation2 + $0x8] sm:$0xff] %v2410
        %2427 = vst [vmem:[#allocation2 + $0x10] sm:$0xff] %v2411
        %2428 = vst [vmem:[#allocation2 + $0x18] sm:$0xff] %v2412
        %2429 = vst [vmem:[#allocation2 + $0x20] sm:$0xff] %v2413
        %2430 = vst [vmem:[#allocation2 + $0x28] sm:$0xff] %v2414
        %2431 = vst [vmem:[#allocation2 + $0x30] sm:$0xff] %v2415
        %2432 = vst [vmem:[#allocation2 + $0x38] sm:$0xff] %v2416
        %2433 = vst [vmem:[#allocation2 + $0x40] sm:$0xff] %v2417
        %2434 = vst [vmem:[#allocation2 + $0x48] sm:$0xff] %v2418
        %2435 = vst [vmem:[#allocation2 + $0x50] sm:$0xff] %v2419
        %2436 = vst [vmem:[#allocation2 + $0x58] sm:$0xff] %v2420
        %2437 = vst [vmem:[#allocation2 + $0x60] sm:$0xff] %v2421
        %2438 = vst [vmem:[#allocation2 + $0x68] sm:$0xff] %v2422
        %2439 = vst [vmem:[#allocation2 + $0x70] sm:$0xff] %v2423
        %2440 = vst [vmem:[#allocation2 + $0x78] sm:$0xff] %v2424
        %2441 = vrot.lane.b32.xlu0 %v2306, 16
        %v2442 = vpop.permute.xlu0 %2441
        %2443 = vrot.lane.b32.xlu0 %v2308, 16
        %v2444 = vpop.permute.xlu0 %2443
        %2445 = vrot.lane.b32.xlu0 %v2310, 16
        %v2446 = vpop.permute.xlu0 %2445
        %2447 = vrot.lane.b32.xlu0 %v2312, 16
        %v2448 = vpop.permute.xlu0 %2447
        %2449 = vrot.lane.b32.xlu0 %v2314, 16
        %v2450 = vpop.permute.xlu0 %2449
        %2451 = vrot.lane.b32.xlu0 %v2316, 16
        %v2452 = vpop.permute.xlu0 %2451
        %2453 = vrot.lane.b32.xlu0 %v2318, 16
        %v2454 = vpop.permute.xlu0 %2453
        %2455 = vrot.lane.b32.xlu0 %v2320, 16
        %v2456 = vpop.permute.xlu0 %2455
        %2465 = vrot.lane.b32.xlu0 %v2305, 16
        %v2466 = vpop.permute.xlu0 %2465
        %2467 = vrot.lane.b32.xlu0 %v2307, 16
        %v2468 = vpop.permute.xlu0 %2467
        %2469 = vrot.lane.b32.xlu0 %v2309, 16
        %v2470 = vpop.permute.xlu0 %2469
        %2471 = vrot.lane.b32.xlu0 %v2311, 16
        %v2472 = vpop.permute.xlu0 %2471
        %2473 = vrot.lane.b32.xlu0 %v2313, 16
        %v2474 = vpop.permute.xlu0 %2473
        %2475 = vrot.lane.b32.xlu0 %v2315, 16
        %v2476 = vpop.permute.xlu0 %2475
        %2477 = vrot.lane.b32.xlu0 %v2317, 16
        %v2478 = vpop.permute.xlu0 %2477
        %2479 = vrot.lane.b32.xlu0 %v2319, 16
        %v2480 = vpop.permute.xlu0 %2479
        %v2481 = vsel %vm973, %v2466, %v2442
        %v2482 = vsel %vm973, %v2468, %v2444
        %v2483 = vsel %vm973, %v2470, %v2446
        %v2484 = vsel %vm973, %v2472, %v2448
        %v2485 = vsel %vm973, %v2474, %v2450
        %v2486 = vsel %vm973, %v2476, %v2452
        %v2487 = vsel %vm973, %v2478, %v2454
        %v2488 = vsel %vm973, %v2480, %v2456
        %v2505 = vsel %vm973, %v2442, %v2466
        %v2506 = vsel %vm973, %v2444, %v2468
        %v2507 = vsel %vm973, %v2446, %v2470
        %v2508 = vsel %vm973, %v2448, %v2472
        %v2509 = vsel %vm973, %v2450, %v2474
        %v2510 = vsel %vm973, %v2452, %v2476
        %v2511 = vsel %vm973, %v2454, %v2478
        %v2512 = vsel %vm973, %v2456, %v2480
        %v2513 = vmul.f32 %v2505, %v993
        %v2514 = vmul.f32 %v2481, %v997
        %v2515 = vmul.f32 %v2506, %v993
        %v2516 = vmul.f32 %v2482, %v997
        %v2517 = vmul.f32 %v2507, %v993
        %v2518 = vmul.f32 %v2483, %v997
        %v2519 = vmul.f32 %v2508, %v993
        %v2520 = vmul.f32 %v2484, %v997
        %v2521 = vmul.f32 %v2509, %v993
        %v2522 = vmul.f32 %v2485, %v997
        %v2523 = vmul.f32 %v2510, %v993
        %v2524 = vmul.f32 %v2486, %v997
        %v2525 = vmul.f32 %v2511, %v993
        %v2526 = vmul.f32 %v2487, %v997
        %v2527 = vmul.f32 %v2512, %v993
        %v2528 = vmul.f32 %v2488, %v997
        %2529 = vst [vmem:[#allocation2 + $0x80] sm:$0xff] %v2513
        %2530 = vst [vmem:[#allocation2 + $0x88] sm:$0xff] %v2514
        %2531 = vst [vmem:[#allocation2 + $0x90] sm:$0xff] %v2515
        %2532 = vst [vmem:[#allocation2 + $0x98] sm:$0xff] %v2516
        %2533 = vst [vmem:[#allocation2 + $0xa0] sm:$0xff] %v2517
        %2534 = vst [vmem:[#allocation2 + $0xa8] sm:$0xff] %v2518
        %2535 = vst [vmem:[#allocation2 + $0xb0] sm:$0xff] %v2519
        %2536 = vst [vmem:[#allocation2 + $0xb8] sm:$0xff] %v2520
        %2537 = vst [vmem:[#allocation2 + $0xc0] sm:$0xff] %v2521
        %2538 = vst [vmem:[#allocation2 + $0xc8] sm:$0xff] %v2522
        %2539 = vst [vmem:[#allocation2 + $0xd0] sm:$0xff] %v2523
        %2540 = vst [vmem:[#allocation2 + $0xd8] sm:$0xff] %v2524
        %2541 = vst [vmem:[#allocation2 + $0xe0] sm:$0xff] %v2525
        %2542 = vst [vmem:[#allocation2 + $0xe8] sm:$0xff] %v2526
        %2543 = vst [vmem:[#allocation2 + $0xf0] sm:$0xff] %v2527
        %2544 = vst [vmem:[#allocation2 + $0xf8] sm:$0xff] %v2528
        %2545 = vrot.lane.b32.xlu0 %v2306, 15
        %v2546 = vpop.permute.xlu0 %2545
        %2547 = vrot.lane.b32.xlu0 %v2308, 15
        %v2548 = vpop.permute.xlu0 %2547
        %2549 = vrot.lane.b32.xlu0 %v2310, 15
        %v2550 = vpop.permute.xlu0 %2549
        %2551 = vrot.lane.b32.xlu0 %v2312, 15
        %v2552 = vpop.permute.xlu0 %2551
        %2553 = vrot.lane.b32.xlu0 %v2314, 15
        %v2554 = vpop.permute.xlu0 %2553
        %2555 = vrot.lane.b32.xlu0 %v2316, 15
        %v2556 = vpop.permute.xlu0 %2555
        %2557 = vrot.lane.b32.xlu0 %v2318, 15
        %v2558 = vpop.permute.xlu0 %2557
        %2559 = vrot.lane.b32.xlu0 %v2320, 15
        %v2560 = vpop.permute.xlu0 %2559
        %2569 = vrot.lane.b32.xlu0 %v2305, 15
        %v2570 = vpop.permute.xlu0 %2569
        %2571 = vrot.lane.b32.xlu0 %v2307, 15
        %v2572 = vpop.permute.xlu0 %2571
        %2573 = vrot.lane.b32.xlu0 %v2309, 15
        %v2574 = vpop.permute.xlu0 %2573
        %2575 = vrot.lane.b32.xlu0 %v2311, 15
        %v2576 = vpop.permute.xlu0 %2575
        %2577 = vrot.lane.b32.xlu0 %v2313, 15
        %v2578 = vpop.permute.xlu0 %2577
        %2579 = vrot.lane.b32.xlu0 %v2315, 15
        %v2580 = vpop.permute.xlu0 %2579
        %2581 = vrot.lane.b32.xlu0 %v2317, 15
        %v2582 = vpop.permute.xlu0 %2581
        %2583 = vrot.lane.b32.xlu0 %v2319, 15
        %v2584 = vpop.permute.xlu0 %2583
        %v2585 = vsel %vm1034, %v2570, %v2546
        %v2586 = vsel %vm1034, %v2572, %v2548
        %v2587 = vsel %vm1034, %v2574, %v2550
        %v2588 = vsel %vm1034, %v2576, %v2552
        %v2589 = vsel %vm1034, %v2578, %v2554
        %v2590 = vsel %vm1034, %v2580, %v2556
        %v2591 = vsel %vm1034, %v2582, %v2558
        %v2592 = vsel %vm1034, %v2584, %v2560
        %v2609 = vsel %vm1034, %v2546, %v2570
        %v2610 = vsel %vm1034, %v2548, %v2572
        %v2611 = vsel %vm1034, %v2550, %v2574
        %v2612 = vsel %vm1034, %v2552, %v2576
        %v2613 = vsel %vm1034, %v2554, %v2578
        %v2614 = vsel %vm1034, %v2556, %v2580
        %v2615 = vsel %vm1034, %v2558, %v2582
        %v2616 = vsel %vm1034, %v2560, %v2584
        %v2617 = vmul.f32 %v2609, %v1054
        %v2618 = vmul.f32 %v2585, %v1058
        %v2619 = vmul.f32 %v2610, %v1054
        %v2620 = vmul.f32 %v2586, %v1058
        %v2621 = vmul.f32 %v2611, %v1054
        %v2622 = vmul.f32 %v2587, %v1058
        %v2623 = vmul.f32 %v2612, %v1054
        %v2624 = vmul.f32 %v2588, %v1058
        %v2625 = vmul.f32 %v2613, %v1054
        %v2626 = vmul.f32 %v2589, %v1058
        %v2627 = vmul.f32 %v2614, %v1054
        %v2628 = vmul.f32 %v2590, %v1058
        %v2629 = vmul.f32 %v2615, %v1054
        %v2630 = vmul.f32 %v2591, %v1058
        %v2631 = vmul.f32 %v2616, %v1054
        %v2632 = vmul.f32 %v2592, %v1058
        %2633 = vst [vmem:[#allocation2 + $0x100] sm:$0xff] %v2617
        %2634 = vst [vmem:[#allocation2 + $0x108] sm:$0xff] %v2618
        %2635 = vst [vmem:[#allocation2 + $0x110] sm:$0xff] %v2619
        %2636 = vst [vmem:[#allocation2 + $0x118] sm:$0xff] %v2620
        %2637 = vst [vmem:[#allocation2 + $0x120] sm:$0xff] %v2621
        %2638 = vst [vmem:[#allocation2 + $0x128] sm:$0xff] %v2622
        %2639 = vst [vmem:[#allocation2 + $0x130] sm:$0xff] %v2623
        %2640 = vst [vmem:[#allocation2 + $0x138] sm:$0xff] %v2624
        %2641 = vst [vmem:[#allocation2 + $0x140] sm:$0xff] %v2625
        %2642 = vst [vmem:[#allocation2 + $0x148] sm:$0xff] %v2626
        %2643 = vst [vmem:[#allocation2 + $0x150] sm:$0xff] %v2627
        %2644 = vst [vmem:[#allocation2 + $0x158] sm:$0xff] %v2628
        %2645 = vst [vmem:[#allocation2 + $0x160] sm:$0xff] %v2629
        %2646 = vst [vmem:[#allocation2 + $0x168] sm:$0xff] %v2630
        %2647 = vst [vmem:[#allocation2 + $0x170] sm:$0xff] %v2631
        %2648 = vst [vmem:[#allocation2 + $0x178] sm:$0xff] %v2632
        %2649 = vrot.lane.b32.xlu0 %v2306, 1
        %v2650 = vpop.permute.xlu0 %2649
        %2651 = vrot.lane.b32.xlu0 %v2308, 1
        %v2652 = vpop.permute.xlu0 %2651
        %2653 = vrot.lane.b32.xlu0 %v2310, 1
        %v2654 = vpop.permute.xlu0 %2653
        %2655 = vrot.lane.b32.xlu0 %v2312, 1
        %v2656 = vpop.permute.xlu0 %2655
        %2657 = vrot.lane.b32.xlu0 %v2314, 1
        %v2658 = vpop.permute.xlu0 %2657
        %2659 = vrot.lane.b32.xlu0 %v2316, 1
        %v2660 = vpop.permute.xlu0 %2659
        %2661 = vrot.lane.b32.xlu0 %v2318, 1
        %v2662 = vpop.permute.xlu0 %2661
        %2663 = vrot.lane.b32.xlu0 %v2320, 1
        %v2664 = vpop.permute.xlu0 %2663
        %2673 = vrot.lane.b32.xlu0 %v2305, 1
        %v2674 = vpop.permute.xlu0 %2673
        %2675 = vrot.lane.b32.xlu0 %v2307, 1
        %v2676 = vpop.permute.xlu0 %2675
        %2677 = vrot.lane.b32.xlu0 %v2309, 1
        %v2678 = vpop.permute.xlu0 %2677
        %2679 = vrot.lane.b32.xlu0 %v2311, 1
        %v2680 = vpop.permute.xlu0 %2679
        %2681 = vrot.lane.b32.xlu0 %v2313, 1
        %v2682 = vpop.permute.xlu0 %2681
        %2683 = vrot.lane.b32.xlu0 %v2315, 1
        %v2684 = vpop.permute.xlu0 %2683
        %2685 = vrot.lane.b32.xlu0 %v2317, 1
        %v2686 = vpop.permute.xlu0 %2685
        %2687 = vrot.lane.b32.xlu0 %v2319, 1
        %v2688 = vpop.permute.xlu0 %2687
        %v2689 = vsel %vm1095, %v2674, %v2650
        %v2690 = vsel %vm1095, %v2676, %v2652
        %v2691 = vsel %vm1095, %v2678, %v2654
        %v2692 = vsel %vm1095, %v2680, %v2656
        %v2693 = vsel %vm1095, %v2682, %v2658
        %v2694 = vsel %vm1095, %v2684, %v2660
        %v2695 = vsel %vm1095, %v2686, %v2662
        %v2696 = vsel %vm1095, %v2688, %v2664
        %v2713 = vsel %vm1095, %v2650, %v2674
        %v2714 = vsel %vm1095, %v2652, %v2676
        %v2715 = vsel %vm1095, %v2654, %v2678
        %v2716 = vsel %vm1095, %v2656, %v2680
        %v2717 = vsel %vm1095, %v2658, %v2682
        %v2718 = vsel %vm1095, %v2660, %v2684
        %v2719 = vsel %vm1095, %v2662, %v2686
        %v2720 = vsel %vm1095, %v2664, %v2688
        %v2721 = vmul.f32 %v2713, %v1115
        %v2722 = vmul.f32 %v2689, %v1119
        %v2723 = vmul.f32 %v2714, %v1115
        %v2724 = vmul.f32 %v2690, %v1119
        %v2725 = vmul.f32 %v2715, %v1115
        %v2726 = vmul.f32 %v2691, %v1119
        %v2727 = vmul.f32 %v2716, %v1115
        %v2728 = vmul.f32 %v2692, %v1119
        %v2729 = vmul.f32 %v2717, %v1115
        %v2730 = vmul.f32 %v2693, %v1119
        %v2731 = vmul.f32 %v2718, %v1115
        %v2732 = vmul.f32 %v2694, %v1119
        %v2733 = vmul.f32 %v2719, %v1115
        %v2734 = vmul.f32 %v2695, %v1119
        %v2735 = vmul.f32 %v2720, %v1115
        %v2736 = vmul.f32 %v2696, %v1119
        %2737 = vst [vmem:[#allocation2 + $0x180] sm:$0xff] %v2721
        %2738 = vst [vmem:[#allocation2 + $0x188] sm:$0xff] %v2722
        %2739 = vst [vmem:[#allocation2 + $0x190] sm:$0xff] %v2723
        %2740 = vst [vmem:[#allocation2 + $0x198] sm:$0xff] %v2724
        %2741 = vst [vmem:[#allocation2 + $0x1a0] sm:$0xff] %v2725
        %2742 = vst [vmem:[#allocation2 + $0x1a8] sm:$0xff] %v2726
        %2743 = vst [vmem:[#allocation2 + $0x1b0] sm:$0xff] %v2727
        %2744 = vst [vmem:[#allocation2 + $0x1b8] sm:$0xff] %v2728
        %2745 = vst [vmem:[#allocation2 + $0x1c0] sm:$0xff] %v2729
        %2746 = vst [vmem:[#allocation2 + $0x1c8] sm:$0xff] %v2730
        %2747 = vst [vmem:[#allocation2 + $0x1d0] sm:$0xff] %v2731
        %2748 = vst [vmem:[#allocation2 + $0x1d8] sm:$0xff] %v2732
        %2749 = vst [vmem:[#allocation2 + $0x1e0] sm:$0xff] %v2733
        %2750 = vst [vmem:[#allocation2 + $0x1e8] sm:$0xff] %v2734
        %2751 = vst [vmem:[#allocation2 + $0x1f0] sm:$0xff] %v2735
        %2752 = vst [vmem:[#allocation2 + $0x1f8] sm:$0xff] %v2736
        %2753 = vst [vmem:[#allocation2 + $0x200] sm:$0xff] %v2305
        %2754 = vst [vmem:[#allocation2 + $0x208] sm:$0xff] %v2306
        %2755 = vst [vmem:[#allocation2 + $0x210] sm:$0xff] %v2307
        %2756 = vst [vmem:[#allocation2 + $0x218] sm:$0xff] %v2308
        %2757 = vst [vmem:[#allocation2 + $0x220] sm:$0xff] %v2309
        %2758 = vst [vmem:[#allocation2 + $0x228] sm:$0xff] %v2310
        %2759 = vst [vmem:[#allocation2 + $0x230] sm:$0xff] %v2311
        %2760 = vst [vmem:[#allocation2 + $0x238] sm:$0xff] %v2312
        %2761 = vst [vmem:[#allocation2 + $0x240] sm:$0xff] %v2313
        %2762 = vst [vmem:[#allocation2 + $0x248] sm:$0xff] %v2314
        %2763 = vst [vmem:[#allocation2 + $0x250] sm:$0xff] %v2315
        %2764 = vst [vmem:[#allocation2 + $0x258] sm:$0xff] %v2316
        %2765 = vst [vmem:[#allocation2 + $0x260] sm:$0xff] %v2317
        %2766 = vst [vmem:[#allocation2 + $0x268] sm:$0xff] %v2318
        %2767 = vst [vmem:[#allocation2 + $0x270] sm:$0xff] %v2319
        %2768 = vst [vmem:[#allocation2 + $0x278] sm:$0xff] %v2320
        %2769 = vrot.lane.b32.xlu0 %v2305, 127
        %v2770 = vpop.permute.xlu0 %2769
        %2771 = vrot.lane.b32.xlu0 %v2306, 127
        %v2772 = vpop.permute.xlu0 %2771
        %2773 = vrot.lane.b32.xlu0 %v2307, 127
        %v2774 = vpop.permute.xlu0 %2773
        %2775 = vrot.lane.b32.xlu0 %v2308, 127
        %v2776 = vpop.permute.xlu0 %2775
        %2777 = vrot.lane.b32.xlu0 %v2309, 127
        %v2778 = vpop.permute.xlu0 %2777
        %2779 = vrot.lane.b32.xlu0 %v2310, 127
        %v2780 = vpop.permute.xlu0 %2779
        %2781 = vrot.lane.b32.xlu0 %v2311, 127
        %v2782 = vpop.permute.xlu0 %2781
        %2783 = vrot.lane.b32.xlu0 %v2312, 127
        %v2784 = vpop.permute.xlu0 %2783
        %2785 = vrot.lane.b32.xlu0 %v2313, 127
        %v2786 = vpop.permute.xlu0 %2785
        %2787 = vrot.lane.b32.xlu0 %v2314, 127
        %v2788 = vpop.permute.xlu0 %2787
        %2789 = vrot.lane.b32.xlu0 %v2315, 127
        %v2790 = vpop.permute.xlu0 %2789
        %2791 = vrot.lane.b32.xlu0 %v2316, 127
        %v2792 = vpop.permute.xlu0 %2791
        %2793 = vrot.lane.b32.xlu0 %v2317, 127
        %v2794 = vpop.permute.xlu0 %2793
        %2795 = vrot.lane.b32.xlu0 %v2318, 127
        %v2796 = vpop.permute.xlu0 %2795
        %2797 = vrot.lane.b32.xlu0 %v2319, 127
        %v2798 = vpop.permute.xlu0 %2797
        %2799 = vrot.lane.b32.xlu0 %v2320, 127
        %v2800 = vpop.permute.xlu0 %2799
        %v2801 = vsel %vm1160, %v2770, %v2772
        %v2802 = vsel %vm1160, %v2774, %v2776
        %v2803 = vsel %vm1160, %v2778, %v2780
        %v2804 = vsel %vm1160, %v2782, %v2784
        %v2805 = vsel %vm1160, %v2786, %v2788
        %v2806 = vsel %vm1160, %v2790, %v2792
        %v2807 = vsel %vm1160, %v2794, %v2796
        %v2808 = vsel %vm1160, %v2798, %v2800
        %v2833 = vsel %vm1160, %v2772, %v2770
        %v2834 = vsel %vm1160, %v2776, %v2774
        %v2835 = vsel %vm1160, %v2780, %v2778
        %v2836 = vsel %vm1160, %v2784, %v2782
        %v2837 = vsel %vm1160, %v2788, %v2786
        %v2838 = vsel %vm1160, %v2792, %v2790
        %v2839 = vsel %vm1160, %v2796, %v2794
        %v2840 = vsel %vm1160, %v2800, %v2798
        %v2841 = vmul.f32 %v2801, %v1184
        %v2842 = vmul.f32 %v2833, %v1188
        %v2843 = vmul.f32 %v2802, %v1184
        %v2844 = vmul.f32 %v2834, %v1188
        %v2845 = vmul.f32 %v2803, %v1184
        %v2846 = vmul.f32 %v2835, %v1188
        %v2847 = vmul.f32 %v2804, %v1184
        %v2848 = vmul.f32 %v2836, %v1188
        %v2849 = vmul.f32 %v2805, %v1184
        %v2850 = vmul.f32 %v2837, %v1188
        %v2851 = vmul.f32 %v2806, %v1184
        %v2852 = vmul.f32 %v2838, %v1188
        %v2853 = vmul.f32 %v2807, %v1184
        %v2854 = vmul.f32 %v2839, %v1188
        %v2855 = vmul.f32 %v2808, %v1184
        %v2856 = vmul.f32 %v2840, %v1188
        %2857 = vst [vmem:[#allocation2 + $0x280] sm:$0xff] %v2841
        %2858 = vst [vmem:[#allocation2 + $0x288] sm:$0xff] %v2842
        %2859 = vst [vmem:[#allocation2 + $0x290] sm:$0xff] %v2843
        %2860 = vst [vmem:[#allocation2 + $0x298] sm:$0xff] %v2844
        %2861 = vst [vmem:[#allocation2 + $0x2a0] sm:$0xff] %v2845
        %2862 = vst [vmem:[#allocation2 + $0x2a8] sm:$0xff] %v2846
        %2863 = vst [vmem:[#allocation2 + $0x2b0] sm:$0xff] %v2847
        %2864 = vst [vmem:[#allocation2 + $0x2b8] sm:$0xff] %v2848
        %2865 = vst [vmem:[#allocation2 + $0x2c0] sm:$0xff] %v2849
        %2866 = vst [vmem:[#allocation2 + $0x2c8] sm:$0xff] %v2850
        %2867 = vst [vmem:[#allocation2 + $0x2d0] sm:$0xff] %v2851
        %2868 = vst [vmem:[#allocation2 + $0x2d8] sm:$0xff] %v2852
        %2869 = vst [vmem:[#allocation2 + $0x2e0] sm:$0xff] %v2853
        %2870 = vst [vmem:[#allocation2 + $0x2e8] sm:$0xff] %v2854
        %2871 = vst [vmem:[#allocation2 + $0x2f0] sm:$0xff] %v2855
        %2872 = vst [vmem:[#allocation2 + $0x2f8] sm:$0xff] %v2856
        %2873 = vrot.lane.b32.xlu0 %v2305, 113
        %v2874 = vpop.permute.xlu0 %2873
        %2875 = vrot.lane.b32.xlu0 %v2306, 113
        %v2876 = vpop.permute.xlu0 %2875
        %2877 = vrot.lane.b32.xlu0 %v2307, 113
        %v2878 = vpop.permute.xlu0 %2877
        %2879 = vrot.lane.b32.xlu0 %v2308, 113
        %v2880 = vpop.permute.xlu0 %2879
        %2881 = vrot.lane.b32.xlu0 %v2309, 113
        %v2882 = vpop.permute.xlu0 %2881
        %2883 = vrot.lane.b32.xlu0 %v2310, 113
        %v2884 = vpop.permute.xlu0 %2883
        %2885 = vrot.lane.b32.xlu0 %v2311, 113
        %v2886 = vpop.permute.xlu0 %2885
        %2887 = vrot.lane.b32.xlu0 %v2312, 113
        %v2888 = vpop.permute.xlu0 %2887
        %2889 = vrot.lane.b32.xlu0 %v2313, 113
        %v2890 = vpop.permute.xlu0 %2889
        %2891 = vrot.lane.b32.xlu0 %v2314, 113
        %v2892 = vpop.permute.xlu0 %2891
        %2893 = vrot.lane.b32.xlu0 %v2315, 113
        %v2894 = vpop.permute.xlu0 %2893
        %2895 = vrot.lane.b32.xlu0 %v2316, 113
        %v2896 = vpop.permute.xlu0 %2895
        %2897 = vrot.lane.b32.xlu0 %v2317, 113
        %v2898 = vpop.permute.xlu0 %2897
        %2899 = vrot.lane.b32.xlu0 %v2318, 113
        %v2900 = vpop.permute.xlu0 %2899
        %2901 = vrot.lane.b32.xlu0 %v2319, 113
        %v2902 = vpop.permute.xlu0 %2901
        %2903 = vrot.lane.b32.xlu0 %v2320, 113
        %v2904 = vpop.permute.xlu0 %2903
        %v2905 = vsel %vm1221, %v2874, %v2876
        %v2906 = vsel %vm1221, %v2878, %v2880
        %v2907 = vsel %vm1221, %v2882, %v2884
        %v2908 = vsel %vm1221, %v2886, %v2888
        %v2909 = vsel %vm1221, %v2890, %v2892
        %v2910 = vsel %vm1221, %v2894, %v2896
        %v2911 = vsel %vm1221, %v2898, %v2900
        %v2912 = vsel %vm1221, %v2902, %v2904
        %v2937 = vsel %vm1221, %v2876, %v2874
        %v2938 = vsel %vm1221, %v2880, %v2878
        %v2939 = vsel %vm1221, %v2884, %v2882
        %v2940 = vsel %vm1221, %v2888, %v2886
        %v2941 = vsel %vm1221, %v2892, %v2890
        %v2942 = vsel %vm1221, %v2896, %v2894
        %v2943 = vsel %vm1221, %v2900, %v2898
        %v2944 = vsel %vm1221, %v2904, %v2902
        %v2945 = vmul.f32 %v2905, %v1245
        %v2946 = vmul.f32 %v2937, %v1249
        %v2947 = vmul.f32 %v2906, %v1245
        %v2948 = vmul.f32 %v2938, %v1249
        %v2949 = vmul.f32 %v2907, %v1245
        %v2950 = vmul.f32 %v2939, %v1249
        %v2951 = vmul.f32 %v2908, %v1245
        %v2952 = vmul.f32 %v2940, %v1249
        %v2953 = vmul.f32 %v2909, %v1245
        %v2954 = vmul.f32 %v2941, %v1249
        %v2955 = vmul.f32 %v2910, %v1245
        %v2956 = vmul.f32 %v2942, %v1249
        %v2957 = vmul.f32 %v2911, %v1245
        %v2958 = vmul.f32 %v2943, %v1249
        %v2959 = vmul.f32 %v2912, %v1245
        %v2960 = vmul.f32 %v2944, %v1249
        %2961 = vst [vmem:[#allocation2 + $0x300] sm:$0xff] %v2945
        %2962 = vst [vmem:[#allocation2 + $0x308] sm:$0xff] %v2946
        %2963 = vst [vmem:[#allocation2 + $0x310] sm:$0xff] %v2947
        %2964 = vst [vmem:[#allocation2 + $0x318] sm:$0xff] %v2948
        %2965 = vst [vmem:[#allocation2 + $0x320] sm:$0xff] %v2949
        %2966 = vst [vmem:[#allocation2 + $0x328] sm:$0xff] %v2950
        %2967 = vst [vmem:[#allocation2 + $0x330] sm:$0xff] %v2951
        %2968 = vst [vmem:[#allocation2 + $0x338] sm:$0xff] %v2952
        %2969 = vst [vmem:[#allocation2 + $0x340] sm:$0xff] %v2953
        %2970 = vst [vmem:[#allocation2 + $0x348] sm:$0xff] %v2954
        %2971 = vst [vmem:[#allocation2 + $0x350] sm:$0xff] %v2955
        %2972 = vst [vmem:[#allocation2 + $0x358] sm:$0xff] %v2956
        %2973 = vst [vmem:[#allocation2 + $0x360] sm:$0xff] %v2957
        %2974 = vst [vmem:[#allocation2 + $0x368] sm:$0xff] %v2958
        %2975 = vst [vmem:[#allocation2 + $0x370] sm:$0xff] %v2959
        %2976 = vst [vmem:[#allocation2 + $0x378] sm:$0xff] %v2960
        %2977 = vrot.lane.b32.xlu0 %v2305, 112
        %v2978 = vpop.permute.xlu0 %2977
        %2979 = vrot.lane.b32.xlu0 %v2306, 112
        %v2980 = vpop.permute.xlu0 %2979
        %2981 = vrot.lane.b32.xlu0 %v2307, 112
        %v2982 = vpop.permute.xlu0 %2981
        %2983 = vrot.lane.b32.xlu0 %v2308, 112
        %v2984 = vpop.permute.xlu0 %2983
        %2985 = vrot.lane.b32.xlu0 %v2309, 112
        %v2986 = vpop.permute.xlu0 %2985
        %2987 = vrot.lane.b32.xlu0 %v2310, 112
        %v2988 = vpop.permute.xlu0 %2987
        %2989 = vrot.lane.b32.xlu0 %v2311, 112
        %v2990 = vpop.permute.xlu0 %2989
        %2991 = vrot.lane.b32.xlu0 %v2312, 112
        %v2992 = vpop.permute.xlu0 %2991
        %2993 = vrot.lane.b32.xlu0 %v2313, 112
        %v2994 = vpop.permute.xlu0 %2993
        %2995 = vrot.lane.b32.xlu0 %v2314, 112
        %v2996 = vpop.permute.xlu0 %2995
        %2997 = vrot.lane.b32.xlu0 %v2315, 112
        %v2998 = vpop.permute.xlu0 %2997
        %2999 = vrot.lane.b32.xlu0 %v2316, 112
        %v3000 = vpop.permute.xlu0 %2999
        %3001 = vrot.lane.b32.xlu0 %v2317, 112
        %v3002 = vpop.permute.xlu0 %3001
        %3003 = vrot.lane.b32.xlu0 %v2318, 112
        %v3004 = vpop.permute.xlu0 %3003
        %3005 = vrot.lane.b32.xlu0 %v2319, 112
        %v3006 = vpop.permute.xlu0 %3005
        %3007 = vrot.lane.b32.xlu0 %v2320, 112
        %v3008 = vpop.permute.xlu0 %3007
        %v3009 = vsel %vm1282, %v2978, %v2980
        %v3010 = vsel %vm1282, %v2982, %v2984
        %v3011 = vsel %vm1282, %v2986, %v2988
        %v3012 = vsel %vm1282, %v2990, %v2992
        %v3013 = vsel %vm1282, %v2994, %v2996
        %v3014 = vsel %vm1282, %v2998, %v3000
        %v3015 = vsel %vm1282, %v3002, %v3004
        %v3016 = vsel %vm1282, %v3006, %v3008
        %v3041 = vsel %vm1282, %v2980, %v2978
        %v3042 = vsel %vm1282, %v2984, %v2982
        %v3043 = vsel %vm1282, %v2988, %v2986
        %v3044 = vsel %vm1282, %v2992, %v2990
        %v3045 = vsel %vm1282, %v2996, %v2994
        %v3046 = vsel %vm1282, %v3000, %v2998
        %v3047 = vsel %vm1282, %v3004, %v3002
        %v3048 = vsel %vm1282, %v3008, %v3006
        %v3049 = vmul.f32 %v3009, %v1306
        %v3050 = vmul.f32 %v3041, %v1310
        %v3051 = vmul.f32 %v3010, %v1306
        %v3052 = vmul.f32 %v3042, %v1310
        %v3053 = vmul.f32 %v3011, %v1306
        %v3054 = vmul.f32 %v3043, %v1310
        %v3055 = vmul.f32 %v3012, %v1306
        %v3056 = vmul.f32 %v3044, %v1310
        %v3057 = vmul.f32 %v3013, %v1306
        %v3058 = vmul.f32 %v3045, %v1310
        %v3059 = vmul.f32 %v3014, %v1306
        %v3060 = vmul.f32 %v3046, %v1310
        %v3061 = vmul.f32 %v3015, %v1306
        %v3062 = vmul.f32 %v3047, %v1310
        %v3063 = vmul.f32 %v3016, %v1306
        %v3064 = vmul.f32 %v3048, %v1310
        %3065 = vst [vmem:[#allocation2 + $0x380] sm:$0xff] %v3049
        %3066 = vst [vmem:[#allocation2 + $0x388] sm:$0xff] %v3050
        %3067 = vst [vmem:[#allocation2 + $0x390] sm:$0xff] %v3051
        %3068 = vst [vmem:[#allocation2 + $0x398] sm:$0xff] %v3052
        %3069 = vst [vmem:[#allocation2 + $0x3a0] sm:$0xff] %v3053
        %3070 = vst [vmem:[#allocation2 + $0x3a8] sm:$0xff] %v3054
        %3071 = vst [vmem:[#allocation2 + $0x3b0] sm:$0xff] %v3055
        %3072 = vst [vmem:[#allocation2 + $0x3b8] sm:$0xff] %v3056
        %3073 = vst [vmem:[#allocation2 + $0x3c0] sm:$0xff] %v3057
        %3074 = vst [vmem:[#allocation2 + $0x3c8] sm:$0xff] %v3058
        %3075 = vst [vmem:[#allocation2 + $0x3d0] sm:$0xff] %v3059
        %3076 = vst [vmem:[#allocation2 + $0x3d8] sm:$0xff] %v3060
        %3077 = vst [vmem:[#allocation2 + $0x3e0] sm:$0xff] %v3061
        %3078 = vst [vmem:[#allocation2 + $0x3e8] sm:$0xff] %v3062
        %3079 = vst [vmem:[#allocation2 + $0x3f0] sm:$0xff] %v3063
        %3080 = vst [vmem:[#allocation2 + $0x3f8] sm:$0xff] %v3064
        %3081 = vrot.lane.b32.xlu0 %v2305, 111
        %v3082 = vpop.permute.xlu0 %3081
        %3083 = vrot.lane.b32.xlu0 %v2306, 111
        %v3084 = vpop.permute.xlu0 %3083
        %3085 = vrot.lane.b32.xlu0 %v2307, 111
        %v3086 = vpop.permute.xlu0 %3085
        %3087 = vrot.lane.b32.xlu0 %v2308, 111
        %v3088 = vpop.permute.xlu0 %3087
        %3089 = vrot.lane.b32.xlu0 %v2309, 111
        %v3090 = vpop.permute.xlu0 %3089
        %3091 = vrot.lane.b32.xlu0 %v2310, 111
        %v3092 = vpop.permute.xlu0 %3091
        %3093 = vrot.lane.b32.xlu0 %v2311, 111
        %v3094 = vpop.permute.xlu0 %3093
        %3095 = vrot.lane.b32.xlu0 %v2312, 111
        %v3096 = vpop.permute.xlu0 %3095
        %3097 = vrot.lane.b32.xlu0 %v2313, 111
        %v3098 = vpop.permute.xlu0 %3097
        %3099 = vrot.lane.b32.xlu0 %v2314, 111
        %v3100 = vpop.permute.xlu0 %3099
        %3101 = vrot.lane.b32.xlu0 %v2315, 111
        %v3102 = vpop.permute.xlu0 %3101
        %3103 = vrot.lane.b32.xlu0 %v2316, 111
        %v3104 = vpop.permute.xlu0 %3103
        %3105 = vrot.lane.b32.xlu0 %v2317, 111
        %v3106 = vpop.permute.xlu0 %3105
        %3107 = vrot.lane.b32.xlu0 %v2318, 111
        %v3108 = vpop.permute.xlu0 %3107
        %3109 = vrot.lane.b32.xlu0 %v2319, 111
        %v3110 = vpop.permute.xlu0 %3109
        %3111 = vrot.lane.b32.xlu0 %v2320, 111
        %v3112 = vpop.permute.xlu0 %3111
        %v3113 = vsel %vm1343, %v3082, %v3084
        %v3114 = vsel %vm1343, %v3086, %v3088
        %v3115 = vsel %vm1343, %v3090, %v3092
        %v3116 = vsel %vm1343, %v3094, %v3096
        %v3117 = vsel %vm1343, %v3098, %v3100
        %v3118 = vsel %vm1343, %v3102, %v3104
        %v3119 = vsel %vm1343, %v3106, %v3108
        %v3120 = vsel %vm1343, %v3110, %v3112
        %v3145 = vsel %vm1343, %v3084, %v3082
        %v3146 = vsel %vm1343, %v3088, %v3086
        %v3147 = vsel %vm1343, %v3092, %v3090
        %v3148 = vsel %vm1343, %v3096, %v3094
        %v3149 = vsel %vm1343, %v3100, %v3098
        %v3150 = vsel %vm1343, %v3104, %v3102
        %v3151 = vsel %vm1343, %v3108, %v3106
        %v3152 = vsel %vm1343, %v3112, %v3110
        %v3153 = vmul.f32 %v3113, %v1367
        %v3154 = vmul.f32 %v3145, %v1371
        %v3155 = vmul.f32 %v3114, %v1367
        %v3156 = vmul.f32 %v3146, %v1371
        %v3157 = vmul.f32 %v3115, %v1367
        %v3158 = vmul.f32 %v3147, %v1371
        %v3159 = vmul.f32 %v3116, %v1367
        %v3160 = vmul.f32 %v3148, %v1371
        %v3161 = vmul.f32 %v3117, %v1367
        %v3162 = vmul.f32 %v3149, %v1371
        %v3163 = vmul.f32 %v3118, %v1367
        %v3164 = vmul.f32 %v3150, %v1371
        %v3165 = vmul.f32 %v3119, %v1367
        %v3166 = vmul.f32 %v3151, %v1371
        %v3167 = vmul.f32 %v3120, %v1367
        %v3168 = vmul.f32 %v3152, %v1371
        %3169 = vst [vmem:[#allocation2 + $0x400] sm:$0xff] %v3153
        %3170 = vst [vmem:[#allocation2 + $0x408] sm:$0xff] %v3154
        %3171 = vst [vmem:[#allocation2 + $0x410] sm:$0xff] %v3155
        %3172 = vst [vmem:[#allocation2 + $0x418] sm:$0xff] %v3156
        %3173 = vst [vmem:[#allocation2 + $0x420] sm:$0xff] %v3157
        %3174 = vst [vmem:[#allocation2 + $0x428] sm:$0xff] %v3158
        %3175 = vst [vmem:[#allocation2 + $0x430] sm:$0xff] %v3159
        %3176 = vst [vmem:[#allocation2 + $0x438] sm:$0xff] %v3160
        %3177 = vst [vmem:[#allocation2 + $0x440] sm:$0xff] %v3161
        %3178 = vst [vmem:[#allocation2 + $0x448] sm:$0xff] %v3162
        %3179 = vst [vmem:[#allocation2 + $0x450] sm:$0xff] %v3163
        %3180 = vst [vmem:[#allocation2 + $0x458] sm:$0xff] %v3164
        %3181 = vst [vmem:[#allocation2 + $0x460] sm:$0xff] %v3165
        %3182 = vst [vmem:[#allocation2 + $0x468] sm:$0xff] %v3166
        %3183 = vst [vmem:[#allocation2 + $0x470] sm:$0xff] %v3167
        %3184 = vst [vmem:[#allocation2 + $0x478] sm:$0xff] %v3168
        %v3185 = vld [vmem:[%s10] sm:$0xff]
        %v3186 = vld [vmem:[%s10 + $0x8] sm:$0xff]
        %v3187 = vld [vmem:[%s10 + $0x10] sm:$0xff]
        %v3188 = vld [vmem:[%s10 + $0x18] sm:$0xff]
        %v3189 = vld [vmem:[%s10 + $0x20] sm:$0xff]
        %v3190 = vld [vmem:[%s10 + $0x28] sm:$0xff]
        %v3191 = vld [vmem:[%s10 + $0x30] sm:$0xff]
        %v3192 = vld [vmem:[%s10 + $0x38] sm:$0xff]
        %v3193 = vld [vmem:[%s10 + $0x40] sm:$0xff]
        %v3194 = vld [vmem:[%s10 + $0x48] sm:$0xff]
        %v3195 = vld [vmem:[%s10 + $0x50] sm:$0xff]
        %v3196 = vld [vmem:[%s10 + $0x58] sm:$0xff]
        %v3197 = vld [vmem:[%s10 + $0x60] sm:$0xff]
        %v3198 = vld [vmem:[%s10 + $0x68] sm:$0xff]
        %v3199 = vld [vmem:[%s10 + $0x70] sm:$0xff]
        %v3200 = vld [vmem:[%s10 + $0x78] sm:$0xff]
        %v3201 = vld [vmem:[%s10 + $0x80] sm:$0xff]
        %v3202 = vld [vmem:[%s10 + $0x88] sm:$0xff]
        %v3203 = vld [vmem:[%s10 + $0x90] sm:$0xff]
        %v3204 = vld [vmem:[%s10 + $0x98] sm:$0xff]
        %v3205 = vld [vmem:[%s10 + $0xa0] sm:$0xff]
        %v3206 = vld [vmem:[%s10 + $0xa8] sm:$0xff]
        %v3207 = vld [vmem:[%s10 + $0xb0] sm:$0xff]
        %v3208 = vld [vmem:[%s10 + $0xb8] sm:$0xff]
        %v3209 = vld [vmem:[%s10 + $0xc0] sm:$0xff]
        %v3210 = vld [vmem:[%s10 + $0xc8] sm:$0xff]
        %v3211 = vld [vmem:[%s10 + $0xd0] sm:$0xff]
        %v3212 = vld [vmem:[%s10 + $0xd8] sm:$0xff]
        %v3213 = vld [vmem:[%s10 + $0xe0] sm:$0xff]
        %v3214 = vld [vmem:[%s10 + $0xe8] sm:$0xff]
        %v3215 = vld [vmem:[%s10 + $0xf0] sm:$0xff]
        %v3216 = vld [vmem:[%s10 + $0xf8] sm:$0xff]
        %v3217 = vld [vmem:[%s10 + $0x100] sm:$0xff]
        %v3218 = vld [vmem:[%s10 + $0x108] sm:$0xff]
        %v3219 = vld [vmem:[%s10 + $0x110] sm:$0xff]
        %v3220 = vld [vmem:[%s10 + $0x118] sm:$0xff]
        %v3221 = vld [vmem:[%s10 + $0x120] sm:$0xff]
        %v3222 = vld [vmem:[%s10 + $0x128] sm:$0xff]
        %v3223 = vld [vmem:[%s10 + $0x130] sm:$0xff]
        %v3224 = vld [vmem:[%s10 + $0x138] sm:$0xff]
        %v3225 = vld [vmem:[#allocation2] sm:$0xff]
        %v3226 = vld [vmem:[#allocation2 + $0x8] sm:$0xff]
        %v3227 = vld [vmem:[#allocation2 + $0x10] sm:$0xff]
        %v3228 = vld [vmem:[#allocation2 + $0x18] sm:$0xff]
        %v3229 = vld [vmem:[#allocation2 + $0x20] sm:$0xff]
        %v3230 = vld [vmem:[#allocation2 + $0x28] sm:$0xff]
        %v3231 = vld [vmem:[#allocation2 + $0x30] sm:$0xff]
        %v3232 = vld [vmem:[#allocation2 + $0x38] sm:$0xff]
        %v3233 = vld [vmem:[#allocation2 + $0x40] sm:$0xff]
        %v3234 = vld [vmem:[#allocation2 + $0x48] sm:$0xff]
        %v3235 = vld [vmem:[#allocation2 + $0x50] sm:$0xff]
        %v3236 = vld [vmem:[#allocation2 + $0x58] sm:$0xff]
        %v3237 = vld [vmem:[#allocation2 + $0x60] sm:$0xff]
        %v3238 = vld [vmem:[#allocation2 + $0x68] sm:$0xff]
        %v3239 = vld [vmem:[#allocation2 + $0x70] sm:$0xff]
        %v3240 = vld [vmem:[#allocation2 + $0x78] sm:$0xff]
        %v3241 = vld [vmem:[#allocation2 + $0x80] sm:$0xff]
        %v3242 = vld [vmem:[#allocation2 + $0x88] sm:$0xff]
        %v3243 = vld [vmem:[#allocation2 + $0x90] sm:$0xff]
        %v3244 = vld [vmem:[#allocation2 + $0x98] sm:$0xff]
        %v3245 = vld [vmem:[#allocation2 + $0xa0] sm:$0xff]
        %v3246 = vld [vmem:[#allocation2 + $0xa8] sm:$0xff]
        %v3247 = vld [vmem:[#allocation2 + $0xb0] sm:$0xff]
        %v3248 = vld [vmem:[#allocation2 + $0xb8] sm:$0xff]
        %v3249 = vld [vmem:[#allocation2 + $0xc0] sm:$0xff]
        %v3250 = vld [vmem:[#allocation2 + $0xc8] sm:$0xff]
        %v3251 = vld [vmem:[#allocation2 + $0xd0] sm:$0xff]
        %v3252 = vld [vmem:[#allocation2 + $0xd8] sm:$0xff]
        %v3253 = vld [vmem:[#allocation2 + $0xe0] sm:$0xff]
        %v3254 = vld [vmem:[#allocation2 + $0xe8] sm:$0xff]
        %v3255 = vld [vmem:[#allocation2 + $0xf0] sm:$0xff]
        %v3256 = vld [vmem:[#allocation2 + $0xf8] sm:$0xff]
        %v3257 = vld [vmem:[#allocation2 + $0x100] sm:$0xff]
        %v3258 = vld [vmem:[#allocation2 + $0x108] sm:$0xff]
        %v3259 = vld [vmem:[#allocation2 + $0x110] sm:$0xff]
        %v3260 = vld [vmem:[#allocation2 + $0x118] sm:$0xff]
        %v3261 = vld [vmem:[#allocation2 + $0x120] sm:$0xff]
        %v3262 = vld [vmem:[#allocation2 + $0x128] sm:$0xff]
        %v3263 = vld [vmem:[#allocation2 + $0x130] sm:$0xff]
        %v3264 = vld [vmem:[#allocation2 + $0x138] sm:$0xff]
        %v3265 = vld [vmem:[#allocation2 + $0x140] sm:$0xff]
        %v3266 = vld [vmem:[#allocation2 + $0x148] sm:$0xff]
        %v3267 = vld [vmem:[#allocation2 + $0x150] sm:$0xff]
        %v3268 = vld [vmem:[#allocation2 + $0x158] sm:$0xff]
        %v3269 = vld [vmem:[#allocation2 + $0x160] sm:$0xff]
        %v3270 = vld [vmem:[#allocation2 + $0x168] sm:$0xff]
        %v3271 = vld [vmem:[#allocation2 + $0x170] sm:$0xff]
        %v3272 = vld [vmem:[#allocation2 + $0x178] sm:$0xff]
        %v3273 = vld [vmem:[#allocation2 + $0x180] sm:$0xff]
        %v3274 = vld [vmem:[#allocation2 + $0x188] sm:$0xff]
        %v3275 = vld [vmem:[#allocation2 + $0x190] sm:$0xff]
        %v3276 = vld [vmem:[#allocation2 + $0x198] sm:$0xff]
        %v3277 = vld [vmem:[#allocation2 + $0x1a0] sm:$0xff]
        %v3278 = vld [vmem:[#allocation2 + $0x1a8] sm:$0xff]
        %v3279 = vld [vmem:[#allocation2 + $0x1b0] sm:$0xff]
        %v3280 = vld [vmem:[#allocation2 + $0x1b8] sm:$0xff]
        %v3281 = vld [vmem:[#allocation2 + $0x1c0] sm:$0xff]
        %v3282 = vld [vmem:[#allocation2 + $0x1c8] sm:$0xff]
        %v3283 = vld [vmem:[#allocation2 + $0x1d0] sm:$0xff]
        %v3284 = vld [vmem:[#allocation2 + $0x1d8] sm:$0xff]
        %v3285 = vld [vmem:[#allocation2 + $0x1e0] sm:$0xff]
        %v3286 = vld [vmem:[#allocation2 + $0x1e8] sm:$0xff]
        %v3287 = vld [vmem:[#allocation2 + $0x1f0] sm:$0xff]
        %v3288 = vld [vmem:[#allocation2 + $0x1f8] sm:$0xff]
        %v3289 = vld [vmem:[#allocation2 + $0x200] sm:$0xff]
        %v3290 = vld [vmem:[#allocation2 + $0x208] sm:$0xff]
        %v3291 = vld [vmem:[#allocation2 + $0x210] sm:$0xff]
        %v3292 = vld [vmem:[#allocation2 + $0x218] sm:$0xff]
        %v3293 = vld [vmem:[#allocation2 + $0x220] sm:$0xff]
        %v3294 = vld [vmem:[#allocation2 + $0x228] sm:$0xff]
        %v3295 = vld [vmem:[#allocation2 + $0x230] sm:$0xff]
        %v3296 = vld [vmem:[#allocation2 + $0x238] sm:$0xff]
        %v3297 = vld [vmem:[#allocation2 + $0x240] sm:$0xff]
        %v3298 = vld [vmem:[#allocation2 + $0x248] sm:$0xff]
        %v3299 = vld [vmem:[#allocation2 + $0x250] sm:$0xff]
        %v3300 = vld [vmem:[#allocation2 + $0x258] sm:$0xff]
        %v3301 = vld [vmem:[#allocation2 + $0x260] sm:$0xff]
        %v3302 = vld [vmem:[#allocation2 + $0x268] sm:$0xff]
        %v3303 = vld [vmem:[#allocation2 + $0x270] sm:$0xff]
        %v3304 = vld [vmem:[#allocation2 + $0x278] sm:$0xff]
        %v3305 = vld [vmem:[#allocation2 + $0x280] sm:$0xff]
        %v3306 = vld [vmem:[#allocation2 + $0x288] sm:$0xff]
        %v3307 = vld [vmem:[#allocation2 + $0x290] sm:$0xff]
        %v3308 = vld [vmem:[#allocation2 + $0x298] sm:$0xff]
        %v3309 = vld [vmem:[#allocation2 + $0x2a0] sm:$0xff]
        %v3310 = vld [vmem:[#allocation2 + $0x2a8] sm:$0xff]
        %v3311 = vld [vmem:[#allocation2 + $0x2b0] sm:$0xff]
        %v3312 = vld [vmem:[#allocation2 + $0x2b8] sm:$0xff]
        %v3313 = vld [vmem:[#allocation2 + $0x2c0] sm:$0xff]
        %v3314 = vld [vmem:[#allocation2 + $0x2c8] sm:$0xff]
        %v3315 = vld [vmem:[#allocation2 + $0x2d0] sm:$0xff]
        %v3316 = vld [vmem:[#allocation2 + $0x2d8] sm:$0xff]
        %v3317 = vld [vmem:[#allocation2 + $0x2e0] sm:$0xff]
        %v3318 = vld [vmem:[#allocation2 + $0x2e8] sm:$0xff]
        %v3319 = vld [vmem:[#allocation2 + $0x2f0] sm:$0xff]
        %v3320 = vld [vmem:[#allocation2 + $0x2f8] sm:$0xff]
        %v3321 = vld [vmem:[#allocation2 + $0x300] sm:$0xff]
        %v3322 = vld [vmem:[#allocation2 + $0x308] sm:$0xff]
        %v3323 = vld [vmem:[#allocation2 + $0x310] sm:$0xff]
        %v3324 = vld [vmem:[#allocation2 + $0x318] sm:$0xff]
        %v3325 = vld [vmem:[#allocation2 + $0x320] sm:$0xff]
        %v3326 = vld [vmem:[#allocation2 + $0x328] sm:$0xff]
        %v3327 = vld [vmem:[#allocation2 + $0x330] sm:$0xff]
        %v3328 = vld [vmem:[#allocation2 + $0x338] sm:$0xff]
        %v3329 = vld [vmem:[#allocation2 + $0x340] sm:$0xff]
        %v3330 = vld [vmem:[#allocation2 + $0x348] sm:$0xff]
        %v3331 = vld [vmem:[#allocation2 + $0x350] sm:$0xff]
        %v3332 = vld [vmem:[#allocation2 + $0x358] sm:$0xff]
        %v3333 = vld [vmem:[#allocation2 + $0x360] sm:$0xff]
        %v3334 = vld [vmem:[#allocation2 + $0x368] sm:$0xff]
        %v3335 = vld [vmem:[#allocation2 + $0x370] sm:$0xff]
        %v3336 = vld [vmem:[#allocation2 + $0x378] sm:$0xff]
        %v3337 = vld [vmem:[#allocation2 + $0x380] sm:$0xff]
        %v3338 = vld [vmem:[#allocation2 + $0x388] sm:$0xff]
        %v3339 = vld [vmem:[#allocation2 + $0x390] sm:$0xff]
        %v3340 = vld [vmem:[#allocation2 + $0x398] sm:$0xff]
        %v3341 = vld [vmem:[#allocation2 + $0x3a0] sm:$0xff]
        %v3342 = vld [vmem:[#allocation2 + $0x3a8] sm:$0xff]
        %v3343 = vld [vmem:[#allocation2 + $0x3b0] sm:$0xff]
        %v3344 = vld [vmem:[#allocation2 + $0x3b8] sm:$0xff]
        %v3345 = vld [vmem:[#allocation2 + $0x3c0] sm:$0xff]
        %v3346 = vld [vmem:[#allocation2 + $0x3c8] sm:$0xff]
        %v3347 = vld [vmem:[#allocation2 + $0x3d0] sm:$0xff]
        %v3348 = vld [vmem:[#allocation2 + $0x3d8] sm:$0xff]
        %v3349 = vld [vmem:[#allocation2 + $0x3e0] sm:$0xff]
        %v3350 = vld [vmem:[#allocation2 + $0x3e8] sm:$0xff]
        %v3351 = vld [vmem:[#allocation2 + $0x3f0] sm:$0xff]
        %v3352 = vld [vmem:[#allocation2 + $0x3f8] sm:$0xff]
        %v3353 = vld [vmem:[#allocation2 + $0x400] sm:$0xff]
        %v3354 = vld [vmem:[#allocation2 + $0x408] sm:$0xff]
        %v3355 = vld [vmem:[#allocation2 + $0x410] sm:$0xff]
        %v3356 = vld [vmem:[#allocation2 + $0x418] sm:$0xff]
        %v3357 = vld [vmem:[#allocation2 + $0x420] sm:$0xff]
        %v3358 = vld [vmem:[#allocation2 + $0x428] sm:$0xff]
        %v3359 = vld [vmem:[#allocation2 + $0x430] sm:$0xff]
        %v3360 = vld [vmem:[#allocation2 + $0x438] sm:$0xff]
        %v3361 = vld [vmem:[#allocation2 + $0x440] sm:$0xff]
        %v3362 = vld [vmem:[#allocation2 + $0x448] sm:$0xff]
        %v3363 = vld [vmem:[#allocation2 + $0x450] sm:$0xff]
        %v3364 = vld [vmem:[#allocation2 + $0x458] sm:$0xff]
        %v3365 = vld [vmem:[#allocation2 + $0x460] sm:$0xff]
        %v3366 = vld [vmem:[#allocation2 + $0x468] sm:$0xff]
        %v3367 = vld [vmem:[#allocation2 + $0x470] sm:$0xff]
        %v3368 = vld [vmem:[#allocation2 + $0x478] sm:$0xff]
        %v3369 = vld [vmem:[%s11] sm:$0xff]
        %v3370 = vld [vmem:[%s11 + $0x8] sm:$0xff]
        %v3371 = vld [vmem:[%s11 + $0x10] sm:$0xff]
        %v3372 = vld [vmem:[%s11 + $0x18] sm:$0xff]
        %v3373 = vld [vmem:[%s11 + $0x20] sm:$0xff]
        %v3374 = vld [vmem:[%s11 + $0x28] sm:$0xff]
        %v3375 = vld [vmem:[%s11 + $0x30] sm:$0xff]
        %v3376 = vld [vmem:[%s11 + $0x38] sm:$0xff]
        %3378 = vset.pattern.permute.xlu0 0
        %3379 = vperm.xlu0 %3378, %v3369
        %v3380 = vpop.permute.xlu0 %3379
        %3383 = vset.pattern.permute.xlu0 0
        %3384 = vperm.xlu0 %3383, %v3370
        %v3385 = vpop.permute.xlu0 %3384
        %3388 = vset.pattern.permute.xlu0 0
        %3389 = vperm.xlu0 %3388, %v3371
        %v3390 = vpop.permute.xlu0 %3389
        %3393 = vset.pattern.permute.xlu0 0
        %3394 = vperm.xlu0 %3393, %v3372
        %v3395 = vpop.permute.xlu0 %3394
        %3398 = vset.pattern.permute.xlu0 0
        %3399 = vperm.xlu0 %3398, %v3373
        %v3400 = vpop.permute.xlu0 %3399
        %3403 = vset.pattern.permute.xlu0 0
        %3404 = vperm.xlu0 %3403, %v3374
        %v3405 = vpop.permute.xlu0 %3404
        %3408 = vset.pattern.permute.xlu0 0
        %3409 = vperm.xlu0 %3408, %v3375
        %v3410 = vpop.permute.xlu0 %3409
        %3413 = vset.pattern.permute.xlu0 0
        %3414 = vperm.xlu0 %3413, %v3376
        %v3415 = vpop.permute.xlu0 %3414
        %v3418 = vsel %vm1822, %v3189, 0
        %v3421 = vsel %vm1822, %v3194, 0
        %v3424 = vsel %vm1822, %v3199, 0
        %v3427 = vsel %vm1822, %v3204, 0
        %v3430 = vsel %vm1822, %v3209, 0
        %v3433 = vsel %vm1822, %v3214, 0
        %v3436 = vsel %vm1822, %v3219, 0
        %v3439 = vsel %vm1822, %v3224, 0
        %3441 = vmatprep.subr.mxu0 %v3256
        %3442 = vmatpush1.msra.mxu0 %v3255
        %3443 = vmatprep.subr.mxu0 %v3254
        %3444 = vmatpush1.msra.mxu0 %v3253
        %3445 = vmatprep.subr.mxu0 %v3252
        %3446 = vmatpush1.msra.mxu0 %v3251
        %3447 = vmatprep.subr.mxu0 %v3250
        %3448 = vmatpush1.msra.mxu0 %v3249
        %3449 = vmatprep.subr.mxu0 %v3248
        %3450 = vmatpush1.msra.mxu0 %v3247
        %3451 = vmatprep.subr.mxu0 %v3246
        %3452 = vmatpush1.msra.mxu0 %v3245
        %3453 = vmatprep.subr.mxu0 %v3244
        %3454 = vmatpush1.msra.mxu0 %v3243
        %3455 = vmatprep.subr.mxu0 %v3242
        %3456 = vmatpush1.msra.mxu0 %v3241
        %3457 = vmatprep.subr.mxu0 %v3240
        %3458 = vmatpush1.msra.mxu0 %v3239
        %3459 = vmatprep.subr.mxu0 %v3238
        %3460 = vmatpush1.msra.mxu0 %v3237
        %3461 = vmatprep.subr.mxu0 %v3236
        %3462 = vmatpush1.msra.mxu0 %v3235
        %3463 = vmatprep.subr.mxu0 %v3234
        %3464 = vmatpush1.msra.mxu0 %v3233
        %3465 = vmatprep.subr.mxu0 %v3232
        %3466 = vmatpush1.msra.mxu0 %v3231
        %3467 = vmatprep.subr.mxu0 %v3230
        %3468 = vmatpush1.msra.mxu0 %v3229
        %3469 = vmatprep.subr.mxu0 %v3228
        %3470 = vmatpush1.msra.mxu0 %v3227
        %3471 = vmatprep.subr.mxu0 %v3226
        %3472 = vmatpush1.msra.mxu0 %v3225
        %3473 = vmatprep.subr.mxu0 %v3288
        %3474 = vmatpush2.msra.mxu0 %v3287
        %3475 = vmatprep.subr.mxu0 %v3286
        %3476 = vmatpush2.msra.mxu0 %v3285
        %3477 = vmatprep.subr.mxu0 %v3284
        %3478 = vmatpush2.msra.mxu0 %v3283
        %3479 = vmatprep.subr.mxu0 %v3282
        %3480 = vmatpush2.msra.mxu0 %v3281
        %3481 = vmatprep.subr.mxu0 %v3280
        %3482 = vmatpush2.msra.mxu0 %v3279
        %3483 = vmatprep.subr.mxu0 %v3278
        %3484 = vmatpush2.msra.mxu0 %v3277
        %3485 = vmatprep.subr.mxu0 %v3276
        %3486 = vmatpush2.msra.mxu0 %v3275
        %3487 = vmatprep.subr.mxu0 %v3274
        %3488 = vmatpush2.msra.mxu0 %v3273
        %3489 = vmatprep.subr.mxu0 %v3272
        %3490 = vmatpush2.msra.mxu0 %v3271
        %3491 = vmatprep.subr.mxu0 %v3270
        %3492 = vmatpush2.msra.mxu0 %v3269
        %3493 = vmatprep.subr.mxu0 %v3268
        %3494 = vmatpush2.msra.mxu0 %v3267
        %3495 = vmatprep.subr.mxu0 %v3266
        %3496 = vmatpush2.msra.mxu0 %v3265
        %3497 = vmatprep.subr.mxu0 %v3264
        %3498 = vmatpush2.msra.mxu0 %v3263
        %3499 = vmatprep.subr.mxu0 %v3262
        %3500 = vmatpush2.msra.mxu0 %v3261
        %3501 = vmatprep.subr.mxu0 %v3260
        %3502 = vmatpush2.msra.mxu0 %v3259
        %3503 = vmatprep.subr.mxu0 %v3258
        %3504 = vmatpush2.msra.mxu0 %v3257
        %3505 = vmatprep.mubr.f32.mxu0 %v3186
        %3506 = vmatmul.mubr.f32.gmra.mxu0 %v3185
        %v3507 = vpop.f32.mrf.mxu0
        %v3508 = vadd.f32 %v3380, %v3507
        %v3509 = vpop.f32.mrf.mxu0
        %v3510 = vadd.f32 %v3380, %v3509
        %3511 = vmatprep.mubr.f32.mxu0 %v3191
        %3512 = vmatmul.mubr.f32.gmra.mxu0 %v3190
        %v3513 = vpop.f32.mrf.mxu0
        %v3514 = vadd.f32 %v3385, %v3513
        %v3515 = vpop.f32.mrf.mxu0
        %v3516 = vadd.f32 %v3385, %v3515
        %3517 = vmatprep.mubr.f32.mxu0 %v3196
        %3518 = vmatmul.mubr.f32.gmra.mxu0 %v3195
        %v3519 = vpop.f32.mrf.mxu0
        %v3520 = vadd.f32 %v3390, %v3519
        %v3521 = vpop.f32.mrf.mxu0
        %v3522 = vadd.f32 %v3390, %v3521
        %3523 = vmatprep.mubr.f32.mxu0 %v3201
        %3524 = vmatmul.mubr.f32.gmra.mxu0 %v3200
        %v3525 = vpop.f32.mrf.mxu0
        %v3526 = vadd.f32 %v3395, %v3525
        %v3527 = vpop.f32.mrf.mxu0
        %v3528 = vadd.f32 %v3395, %v3527
        %3529 = vmatprep.mubr.f32.mxu0 %v3206
        %3530 = vmatmul.mubr.f32.gmra.mxu0 %v3205
        %v3531 = vpop.f32.mrf.mxu0
        %v3532 = vadd.f32 %v3400, %v3531
        %v3533 = vpop.f32.mrf.mxu0
        %v3534 = vadd.f32 %v3400, %v3533
        %3535 = vmatprep.mubr.f32.mxu0 %v3211
        %3536 = vmatmul.mubr.f32.gmra.mxu0 %v3210
        %v3537 = vpop.f32.mrf.mxu0
        %v3538 = vadd.f32 %v3405, %v3537
        %v3539 = vpop.f32.mrf.mxu0
        %v3540 = vadd.f32 %v3405, %v3539
        %3541 = vmatprep.mubr.f32.mxu0 %v3216
        %3542 = vmatmul.mubr.f32.gmra.mxu0 %v3215
        %v3543 = vpop.f32.mrf.mxu0
        %v3544 = vadd.f32 %v3410, %v3543
        %v3545 = vpop.f32.mrf.mxu0
        %v3546 = vadd.f32 %v3410, %v3545
        %3547 = vmatprep.mubr.f32.mxu0 %v3221
        %3548 = vmatmul.mubr.f32.gmra.mxu0 %v3220
        %v3549 = vpop.f32.mrf.mxu0
        %v3550 = vadd.f32 %v3415, %v3549
        %v3551 = vpop.f32.mrf.mxu0
        %v3552 = vadd.f32 %v3415, %v3551
        %3553 = vdwg.mxu0
        %3554 = vmatprep.subr.mxu0 %v3320
        %3555 = vmatpush1.msra.mxu0 %v3319
        %3556 = vmatprep.subr.mxu0 %v3318
        %3557 = vmatpush1.msra.mxu0 %v3317
        %3558 = vmatprep.subr.mxu0 %v3316
        %3559 = vmatpush1.msra.mxu0 %v3315
        %3560 = vmatprep.subr.mxu0 %v3314
        %3561 = vmatpush1.msra.mxu0 %v3313
        %3562 = vmatprep.subr.mxu0 %v3312
        %3563 = vmatpush1.msra.mxu0 %v3311
        %3564 = vmatprep.subr.mxu0 %v3310
        %3565 = vmatpush1.msra.mxu0 %v3309
        %3566 = vmatprep.subr.mxu0 %v3308
        %3567 = vmatpush1.msra.mxu0 %v3307
        %3568 = vmatprep.subr.mxu0 %v3306
        %3569 = vmatpush1.msra.mxu0 %v3305
        %3570 = vmatprep.subr.mxu0 %v3304
        %3571 = vmatpush1.msra.mxu0 %v3303
        %3572 = vmatprep.subr.mxu0 %v3302
        %3573 = vmatpush1.msra.mxu0 %v3301
        %3574 = vmatprep.subr.mxu0 %v3300
        %3575 = vmatpush1.msra.mxu0 %v3299
        %3576 = vmatprep.subr.mxu0 %v3298
        %3577 = vmatpush1.msra.mxu0 %v3297
        %3578 = vmatprep.subr.mxu0 %v3296
        %3579 = vmatpush1.msra.mxu0 %v3295
        %3580 = vmatprep.subr.mxu0 %v3294
        %3581 = vmatpush1.msra.mxu0 %v3293
        %3582 = vmatprep.subr.mxu0 %v3292
        %3583 = vmatpush1.msra.mxu0 %v3291
        %3584 = vmatprep.subr.mxu0 %v3290
        %3585 = vmatpush1.msra.mxu0 %v3289
        %3586 = vmatprep.subr.mxu0 %v3352
        %3587 = vmatpush2.msra.mxu0 %v3351
        %3588 = vmatprep.subr.mxu0 %v3350
        %3589 = vmatpush2.msra.mxu0 %v3349
        %3590 = vmatprep.subr.mxu0 %v3348
        %3591 = vmatpush2.msra.mxu0 %v3347
        %3592 = vmatprep.subr.mxu0 %v3346
        %3593 = vmatpush2.msra.mxu0 %v3345
        %3594 = vmatprep.subr.mxu0 %v3344
        %3595 = vmatpush2.msra.mxu0 %v3343
        %3596 = vmatprep.subr.mxu0 %v3342
        %3597 = vmatpush2.msra.mxu0 %v3341
        %3598 = vmatprep.subr.mxu0 %v3340
        %3599 = vmatpush2.msra.mxu0 %v3339
        %3600 = vmatprep.subr.mxu0 %v3338
        %3601 = vmatpush2.msra.mxu0 %v3337
        %3602 = vmatprep.subr.mxu0 %v3336
        %3603 = vmatpush2.msra.mxu0 %v3335
        %3604 = vmatprep.subr.mxu0 %v3334
        %3605 = vmatpush2.msra.mxu0 %v3333
        %3606 = vmatprep.subr.mxu0 %v3332
        %3607 = vmatpush2.msra.mxu0 %v3331
        %3608 = vmatprep.subr.mxu0 %v3330
        %3609 = vmatpush2.msra.mxu0 %v3329
        %3610 = vmatprep.subr.mxu0 %v3328
        %3611 = vmatpush2.msra.mxu0 %v3327
        %3612 = vmatprep.subr.mxu0 %v3326
        %3613 = vmatpush2.msra.mxu0 %v3325
        %3614 = vmatprep.subr.mxu0 %v3324
        %3615 = vmatpush2.msra.mxu0 %v3323
        %3616 = vmatprep.subr.mxu0 %v3322
        %3617 = vmatpush2.msra.mxu0 %v3321
        %3618 = vmatprep.mubr.f32.mxu0 %v3188
        %3619 = vmatmul.mubr.f32.gmra.mxu0 %v3187
        %v3620 = vpop.f32.mrf.mxu0
        %v3621 = vadd.f32 %v3508, %v3620
        %v3622 = vpop.f32.mrf.mxu0
        %v3623 = vadd.f32 %v3510, %v3622
        %3624 = vmatprep.mubr.f32.mxu0 %v3193
        %3625 = vmatmul.mubr.f32.gmra.mxu0 %v3192
        %v3626 = vpop.f32.mrf.mxu0
        %v3627 = vadd.f32 %v3514, %v3626
        %v3628 = vpop.f32.mrf.mxu0
        %v3629 = vadd.f32 %v3516, %v3628
        %3630 = vmatprep.mubr.f32.mxu0 %v3198
        %3631 = vmatmul.mubr.f32.gmra.mxu0 %v3197
        %v3632 = vpop.f32.mrf.mxu0
        %v3633 = vadd.f32 %v3520, %v3632
        %v3634 = vpop.f32.mrf.mxu0
        %v3635 = vadd.f32 %v3522, %v3634
        %3636 = vmatprep.mubr.f32.mxu0 %v3203
        %3637 = vmatmul.mubr.f32.gmra.mxu0 %v3202
        %v3638 = vpop.f32.mrf.mxu0
        %v3639 = vadd.f32 %v3526, %v3638
        %v3640 = vpop.f32.mrf.mxu0
        %v3641 = vadd.f32 %v3528, %v3640
        %3642 = vmatprep.mubr.f32.mxu0 %v3208
        %3643 = vmatmul.mubr.f32.gmra.mxu0 %v3207
        %v3644 = vpop.f32.mrf.mxu0
        %v3645 = vadd.f32 %v3532, %v3644
        %v3646 = vpop.f32.mrf.mxu0
        %v3647 = vadd.f32 %v3534, %v3646
        %3648 = vmatprep.mubr.f32.mxu0 %v3213
        %3649 = vmatmul.mubr.f32.gmra.mxu0 %v3212
        %v3650 = vpop.f32.mrf.mxu0
        %v3651 = vadd.f32 %v3538, %v3650
        %v3652 = vpop.f32.mrf.mxu0
        %v3653 = vadd.f32 %v3540, %v3652
        %3654 = vmatprep.mubr.f32.mxu0 %v3218
        %3655 = vmatmul.mubr.f32.gmra.mxu0 %v3217
        %v3656 = vpop.f32.mrf.mxu0
        %v3657 = vadd.f32 %v3544, %v3656
        %v3658 = vpop.f32.mrf.mxu0
        %v3659 = vadd.f32 %v3546, %v3658
        %3660 = vmatprep.mubr.f32.mxu0 %v3223
        %3661 = vmatmul.mubr.f32.gmra.mxu0 %v3222
        %v3662 = vpop.f32.mrf.mxu0
        %v3663 = vadd.f32 %v3550, %v3662
        %v3664 = vpop.f32.mrf.mxu0
        %v3665 = vadd.f32 %v3552, %v3664
        %3666 = vdwg.mxu0
        %3667 = vmatprep.subr.mxu0 0.0
        %3668 = vmatpush1.msra.mxu0 0.0
        %3669 = vmatprep.subr.mxu0 0.0
        %3670 = vmatpush1.msra.mxu0 0.0
        %3671 = vmatprep.subr.mxu0 0.0
        %3672 = vmatpush1.msra.mxu0 0.0
        %3673 = vmatprep.subr.mxu0 0.0
        %3674 = vmatpush1.msra.mxu0 0.0
        %3675 = vmatprep.subr.mxu0 0.0
        %3676 = vmatpush1.msra.mxu0 0.0
        %3677 = vmatprep.subr.mxu0 0.0
        %3678 = vmatpush1.msra.mxu0 0.0
        %3679 = vmatprep.subr.mxu0 0.0
        %3680 = vmatpush1.msra.mxu0 0.0
        %3681 = vmatprep.subr.mxu0 0.0
        %3682 = vmatpush1.msra.mxu0 0.0
        %3683 = vmatprep.subr.mxu0 %v3368
        %3684 = vmatpush1.msra.mxu0 %v3367
        %3685 = vmatprep.subr.mxu0 %v3366
        %3686 = vmatpush1.msra.mxu0 %v3365
        %3687 = vmatprep.subr.mxu0 %v3364
        %3688 = vmatpush1.msra.mxu0 %v3363
        %3689 = vmatprep.subr.mxu0 %v3362
        %3690 = vmatpush1.msra.mxu0 %v3361
        %3691 = vmatprep.subr.mxu0 %v3360
        %3692 = vmatpush1.msra.mxu0 %v3359
        %3693 = vmatprep.subr.mxu0 %v3358
        %3694 = vmatpush1.msra.mxu0 %v3357
        %3695 = vmatprep.subr.mxu0 %v3356
        %3696 = vmatpush1.msra.mxu0 %v3355
        %3697 = vmatprep.subr.mxu0 %v3354
        %3698 = vmatpush1.msra.mxu0 %v3353
        %3699 = vmatprep.subr.mxu0 0.0
        %3700 = vmatpush2.msra.mxu0 0.0
        %3701 = vmatprep.subr.mxu0 0.0
        %3702 = vmatpush2.msra.mxu0 0.0
        %3703 = vmatprep.subr.mxu0 0.0
        %3704 = vmatpush2.msra.mxu0 0.0
        %3705 = vmatprep.subr.mxu0 0.0
        %3706 = vmatpush2.msra.mxu0 0.0
        %3707 = vmatprep.subr.mxu0 0.0
        %3708 = vmatpush2.msra.mxu0 0.0
        %3709 = vmatprep.subr.mxu0 0.0
        %3710 = vmatpush2.msra.mxu0 0.0
        %3711 = vmatprep.subr.mxu0 0.0
        %3712 = vmatpush2.msra.mxu0 0.0
        %3713 = vmatprep.subr.mxu0 0.0
        %3714 = vmatpush2.msra.mxu0 0.0
        %3715 = vmatprep.subr.mxu0 0.0
        %3716 = vmatpush2.msra.mxu0 0.0
        %3717 = vmatprep.subr.mxu0 0.0
        %3718 = vmatpush2.msra.mxu0 0.0
        %3719 = vmatprep.subr.mxu0 0.0
        %3720 = vmatpush2.msra.mxu0 0.0
        %3721 = vmatprep.subr.mxu0 0.0
        %3722 = vmatpush2.msra.mxu0 0.0
        %3723 = vmatprep.subr.mxu0 0.0
        %3724 = vmatpush2.msra.mxu0 0.0
        %3725 = vmatprep.subr.mxu0 0.0
        %3726 = vmatpush2.msra.mxu0 0.0
        %3727 = vmatprep.subr.mxu0 0.0
        %3728 = vmatpush2.msra.mxu0 0.0
        %3729 = vmatprep.subr.mxu0 0.0
        %3730 = vmatpush2.msra.mxu0 0.0
        %3731 = vmatprep.mubr.f32.mxu0 0.0
        %3732 = vmatmul.mubr.f32.gmra.mxu0 %v3418
        %v3733 = vpop.f32.mrf.mxu0
        %v3734 = vadd.f32 %v3621, %v3733
        %v3735 = vpop.f32.mrf.mxu0
        %v3736 = vadd.f32 %v3623, %v3735
        %3737 = vmatprep.mubr.f32.mxu0 0.0
        %3738 = vmatmul.mubr.f32.gmra.mxu0 %v3421
        %v3739 = vpop.f32.mrf.mxu0
        %v3740 = vadd.f32 %v3627, %v3739
        %v3741 = vpop.f32.mrf.mxu0
        %v3742 = vadd.f32 %v3629, %v3741
        %3743 = vmatprep.mubr.f32.mxu0 0.0
        %3744 = vmatmul.mubr.f32.gmra.mxu0 %v3424
        %v3745 = vpop.f32.mrf.mxu0
        %v3746 = vadd.f32 %v3633, %v3745
        %v3747 = vpop.f32.mrf.mxu0
        %v3748 = vadd.f32 %v3635, %v3747
        %3749 = vmatprep.mubr.f32.mxu0 0.0
        %3750 = vmatmul.mubr.f32.gmra.mxu0 %v3427
        %v3751 = vpop.f32.mrf.mxu0
        %v3752 = vadd.f32 %v3639, %v3751
        %v3753 = vpop.f32.mrf.mxu0
        %v3754 = vadd.f32 %v3641, %v3753
        %3755 = vmatprep.mubr.f32.mxu0 0.0
        %3756 = vmatmul.mubr.f32.gmra.mxu0 %v3430
        %v3757 = vpop.f32.mrf.mxu0
        %v3758 = vadd.f32 %v3645, %v3757
        %v3759 = vpop.f32.mrf.mxu0
        %v3760 = vadd.f32 %v3647, %v3759
        %3761 = vmatprep.mubr.f32.mxu0 0.0
        %3762 = vmatmul.mubr.f32.gmra.mxu0 %v3433
        %v3763 = vpop.f32.mrf.mxu0
        %v3764 = vadd.f32 %v3651, %v3763
        %v3765 = vpop.f32.mrf.mxu0
        %v3766 = vadd.f32 %v3653, %v3765
        %3767 = vmatprep.mubr.f32.mxu0 0.0
        %3768 = vmatmul.mubr.f32.gmra.mxu0 %v3436
        %v3769 = vpop.f32.mrf.mxu0
        %v3770 = vadd.f32 %v3657, %v3769
        %v3771 = vpop.f32.mrf.mxu0
        %v3772 = vadd.f32 %v3659, %v3771
        %3773 = vmatprep.mubr.f32.mxu0 0.0
        %3774 = vmatmul.mubr.f32.gmra.mxu0 %v3439
        %v3775 = vpop.f32.mrf.mxu0
        %v3776 = vadd.f32 %v3663, %v3775
        %v3777 = vpop.f32.mrf.mxu0
        %v3778 = vadd.f32 %v3665, %v3777
        %3779 = vdwg.mxu0
        %v3780 = vld [vmem:[%s12] sm:$0xff]
        %v3781 = vld [vmem:[%s12 + $0x8] sm:$0xff]
        %v3782 = vld [vmem:[%s12 + $0x10] sm:$0xff]
        %v3783 = vld [vmem:[%s12 + $0x18] sm:$0xff]
        %v3784 = vld [vmem:[%s12 + $0x20] sm:$0xff]
        %v3785 = vld [vmem:[%s12 + $0x28] sm:$0xff]
        %v3786 = vld [vmem:[%s12 + $0x30] sm:$0xff]
        %v3787 = vld [vmem:[%s12 + $0x38] sm:$0xff]
        %v3788 = vld [vmem:[%s524] sm:$0xff]
        %v3789 = vld [vmem:[%s524 + $0x8] sm:$0xff]
        %v3790 = vld [vmem:[%s524 + $0x10] sm:$0xff]
        %v3791 = vld [vmem:[%s524 + $0x18] sm:$0xff]
        %v3792 = vld [vmem:[%s524 + $0x20] sm:$0xff]
        %v3793 = vld [vmem:[%s524 + $0x28] sm:$0xff]
        %v3794 = vld [vmem:[%s524 + $0x30] sm:$0xff]
        %v3795 = vld [vmem:[%s524 + $0x38] sm:$0xff]
        %v3796 = vld [vmem:[%s13] sm:$0xff]
        %v3797 = vld [vmem:[%s13 + $0x8] sm:$0xff]
        %v3798 = vld [vmem:[%s13 + $0x10] sm:$0xff]
        %v3799 = vld [vmem:[%s13 + $0x18] sm:$0xff]
        %v3800 = vld [vmem:[%s13 + $0x20] sm:$0xff]
        %v3801 = vld [vmem:[%s13 + $0x28] sm:$0xff]
        %v3802 = vld [vmem:[%s13 + $0x30] sm:$0xff]
        %v3803 = vld [vmem:[%s13 + $0x38] sm:$0xff]
        %3805 = vset.pattern.permute.xlu0 0
        %3806 = vperm.xlu0 %3805, %v3796
        %v3807 = vpop.permute.xlu0 %3806
        %3810 = vset.pattern.permute.xlu0 0
        %3811 = vperm.xlu0 %3810, %v3797
        %v3812 = vpop.permute.xlu0 %3811
        %3815 = vset.pattern.permute.xlu0 0
        %3816 = vperm.xlu0 %3815, %v3798
        %v3817 = vpop.permute.xlu0 %3816
        %3820 = vset.pattern.permute.xlu0 0
        %3821 = vperm.xlu0 %3820, %v3799
        %v3822 = vpop.permute.xlu0 %3821
        %3825 = vset.pattern.permute.xlu0 0
        %3826 = vperm.xlu0 %3825, %v3800
        %v3827 = vpop.permute.xlu0 %3826
        %3830 = vset.pattern.permute.xlu0 0
        %3831 = vperm.xlu0 %3830, %v3801
        %v3832 = vpop.permute.xlu0 %3831
        %3835 = vset.pattern.permute.xlu0 0
        %3836 = vperm.xlu0 %3835, %v3802
        %v3837 = vpop.permute.xlu0 %3836
        %3840 = vset.pattern.permute.xlu0 0
        %3841 = vperm.xlu0 %3840, %v3803
        %v3842 = vpop.permute.xlu0 %3841
        %v3845 = vsel %vm569, %v3780, 0
        %v3848 = vsel %vm569, %v3781, 0
        %v3851 = vsel %vm569, %v3782, 0
        %v3854 = vsel %vm569, %v3783, 0
        %v3857 = vsel %vm569, %v3784, 0
        %v3860 = vsel %vm569, %v3785, 0
        %v3863 = vsel %vm569, %v3786, 0
        %v3866 = vsel %vm569, %v3787, 0
        %3868 = vmatprep.subr.mxu0 0.0
        %3869 = vmatpush1.msra.mxu0 0.0
        %3870 = vmatprep.subr.mxu0 0.0
        %3871 = vmatpush1.msra.mxu0 0.0
        %3872 = vmatprep.subr.mxu0 0.0
        %3873 = vmatpush1.msra.mxu0 0.0
        %3874 = vmatprep.subr.mxu0 0.0
        %3875 = vmatpush1.msra.mxu0 0.0
        %3876 = vmatprep.subr.mxu0 0.0
        %3877 = vmatpush1.msra.mxu0 0.0
        %3878 = vmatprep.subr.mxu0 0.0
        %3879 = vmatpush1.msra.mxu0 0.0
        %3880 = vmatprep.subr.mxu0 0.0
        %3881 = vmatpush1.msra.mxu0 0.0
        %3882 = vmatprep.subr.mxu0 0.0
        %3883 = vmatpush1.msra.mxu0 0.0
        %3884 = vmatprep.subr.mxu0 0.0
        %3885 = vmatpush1.msra.mxu0 0.0
        %3886 = vmatprep.subr.mxu0 0.0
        %3887 = vmatpush1.msra.mxu0 0.0
        %3888 = vmatprep.subr.mxu0 0.0
        %3889 = vmatpush1.msra.mxu0 0.0
        %3890 = vmatprep.subr.mxu0 0.0
        %3891 = vmatpush1.msra.mxu0 0.0
        %3892 = vmatprep.subr.mxu0 %v3795
        %3893 = vmatpush1.msra.mxu0 %v3794
        %3894 = vmatprep.subr.mxu0 %v3793
        %3895 = vmatpush1.msra.mxu0 %v3792
        %3896 = vmatprep.subr.mxu0 %v3791
        %3897 = vmatpush1.msra.mxu0 %v3790
        %3898 = vmatprep.subr.mxu0 %v3789
        %3899 = vmatpush1.msra.mxu0 %v3788
        %3900 = vmatprep.subr.mxu0 0.0
        %3901 = vmatpush2.msra.mxu0 0.0
        %3902 = vmatprep.subr.mxu0 0.0
        %3903 = vmatpush2.msra.mxu0 0.0
        %3904 = vmatprep.subr.mxu0 0.0
        %3905 = vmatpush2.msra.mxu0 0.0
        %3906 = vmatprep.subr.mxu0 0.0
        %3907 = vmatpush2.msra.mxu0 0.0
        %3908 = vmatprep.subr.mxu0 0.0
        %3909 = vmatpush2.msra.mxu0 0.0
        %3910 = vmatprep.subr.mxu0 0.0
        %3911 = vmatpush2.msra.mxu0 0.0
        %3912 = vmatprep.subr.mxu0 0.0
        %3913 = vmatpush2.msra.mxu0 0.0
        %3914 = vmatprep.subr.mxu0 0.0
        %3915 = vmatpush2.msra.mxu0 0.0
        %3916 = vmatprep.subr.mxu0 0.0
        %3917 = vmatpush2.msra.mxu0 0.0
        %3918 = vmatprep.subr.mxu0 0.0
        %3919 = vmatpush2.msra.mxu0 0.0
        %3920 = vmatprep.subr.mxu0 0.0
        %3921 = vmatpush2.msra.mxu0 0.0
        %3922 = vmatprep.subr.mxu0 0.0
        %3923 = vmatpush2.msra.mxu0 0.0
        %3924 = vmatprep.subr.mxu0 0.0
        %3925 = vmatpush2.msra.mxu0 0.0
        %3926 = vmatprep.subr.mxu0 0.0
        %3927 = vmatpush2.msra.mxu0 0.0
        %3928 = vmatprep.subr.mxu0 0.0
        %3929 = vmatpush2.msra.mxu0 0.0
        %3930 = vmatprep.subr.mxu0 0.0
        %3931 = vmatpush2.msra.mxu0 0.0
        %3932 = vmatprep.mubr.f32.mxu0 0.0
        %3933 = vmatmul.mubr.f32.gmra.mxu0 %v3845
        %v3934 = vpop.f32.mrf.mxu0
        %v3935 = vadd.f32 %v3807, %v3934
        %v3936 = vpop.f32.mrf.mxu0
        %v3937 = vadd.f32 %v3807, %v3936
        %3938 = vmatprep.mubr.f32.mxu0 0.0
        %3939 = vmatmul.mubr.f32.gmra.mxu0 %v3848
        %v3940 = vpop.f32.mrf.mxu0
        %v3941 = vadd.f32 %v3812, %v3940
        %v3942 = vpop.f32.mrf.mxu0
        %v3943 = vadd.f32 %v3812, %v3942
        %3944 = vmatprep.mubr.f32.mxu0 0.0
        %3945 = vmatmul.mubr.f32.gmra.mxu0 %v3851
        %v3946 = vpop.f32.mrf.mxu0
        %v3947 = vadd.f32 %v3817, %v3946
        %v3948 = vpop.f32.mrf.mxu0
        %v3949 = vadd.f32 %v3817, %v3948
        %3950 = vmatprep.mubr.f32.mxu0 0.0
        %3951 = vmatmul.mubr.f32.gmra.mxu0 %v3854
        %v3952 = vpop.f32.mrf.mxu0
        %v3953 = vadd.f32 %v3822, %v3952
        %v3954 = vpop.f32.mrf.mxu0
        %v3955 = vadd.f32 %v3822, %v3954
        %3956 = vmatprep.mubr.f32.mxu0 0.0
        %3957 = vmatmul.mubr.f32.gmra.mxu0 %v3857
        %v3958 = vpop.f32.mrf.mxu0
        %v3959 = vadd.f32 %v3827, %v3958
        %v3960 = vpop.f32.mrf.mxu0
        %v3961 = vadd.f32 %v3827, %v3960
        %3962 = vmatprep.mubr.f32.mxu0 0.0
        %3963 = vmatmul.mubr.f32.gmra.mxu0 %v3860
        %v3964 = vpop.f32.mrf.mxu0
        %v3965 = vadd.f32 %v3832, %v3964
        %v3966 = vpop.f32.mrf.mxu0
        %v3967 = vadd.f32 %v3832, %v3966
        %3968 = vmatprep.mubr.f32.mxu0 0.0
        %3969 = vmatmul.mubr.f32.gmra.mxu0 %v3863
        %v3970 = vpop.f32.mrf.mxu0
        %v3971 = vadd.f32 %v3837, %v3970
        %v3972 = vpop.f32.mrf.mxu0
        %v3973 = vadd.f32 %v3837, %v3972
        %3974 = vmatprep.mubr.f32.mxu0 0.0
        %3975 = vmatmul.mubr.f32.gmra.mxu0 %v3866
        %v3976 = vpop.f32.mrf.mxu0
        %v3977 = vadd.f32 %v3842, %v3976
        %v3978 = vpop.f32.mrf.mxu0
        %v3979 = vadd.f32 %v3842, %v3978
        %3980 = vdwg.mxu0
        %v3981 = vadd.f32 %v3734, %v3935
        %v3982 = vadd.f32 %v3736, %v3937
        %v3983 = vadd.f32 %v3740, %v3941
        %v3984 = vadd.f32 %v3742, %v3943
        %v3985 = vadd.f32 %v3746, %v3947
        %v3986 = vadd.f32 %v3748, %v3949
        %v3987 = vadd.f32 %v3752, %v3953
        %v3988 = vadd.f32 %v3754, %v3955
        %v3989 = vadd.f32 %v3758, %v3959
        %v3990 = vadd.f32 %v3760, %v3961
        %v3991 = vadd.f32 %v3764, %v3965
        %v3992 = vadd.f32 %v3766, %v3967
        %v3993 = vadd.f32 %v3770, %v3971
        %v3994 = vadd.f32 %v3772, %v3973
        %v3995 = vadd.f32 %v3776, %v3977
        %v3996 = vadd.f32 %v3778, %v3979
        %3997 = vst [vmem:[%s519] sm:$0xff] %v3981
        %3998 = vst [vmem:[%s519 + $0x8] sm:$0xff] %v3982
        %3999 = vst [vmem:[%s519 + $0x10] sm:$0xff] %v3983
        %4000 = vst [vmem:[%s519 + $0x18] sm:$0xff] %v3984
        %4001 = vst [vmem:[%s519 + $0x20] sm:$0xff] %v3985
        %4002 = vst [vmem:[%s519 + $0x28] sm:$0xff] %v3986
        %4003 = vst [vmem:[%s519 + $0x30] sm:$0xff] %v3987
        %4004 = vst [vmem:[%s519 + $0x38] sm:$0xff] %v3988
        %4005 = vst [vmem:[%s519 + $0x40] sm:$0xff] %v3989
        %4006 = vst [vmem:[%s519 + $0x48] sm:$0xff] %v3990
        %4007 = vst [vmem:[%s519 + $0x50] sm:$0xff] %v3991
        %4008 = vst [vmem:[%s519 + $0x58] sm:$0xff] %v3992
        %4009 = vst [vmem:[%s519 + $0x60] sm:$0xff] %v3993
        %4010 = vst [vmem:[%s519 + $0x68] sm:$0xff] %v3994
        %4011 = vst [vmem:[%s519 + $0x70] sm:$0xff] %v3995
        %4012 = vst [vmem:[%s519 + $0x78] sm:$0xff] %v3996
        %s4013 = sand.u32 %s338, 1
        %s4014 = scalar_lea.sflag [#allocation5], %s4013
        %s4015 = sand.u32 %s338, 1
        %s4016 = smul.addr %s4015, 128
        %s4017 = scalar_lea.vmem [#allocation11], %s4016
        // Predicated region
        $region93: #{tpu_custom_call.1} parent=75 // pred_check
          %p4018 = pneg %p348
        $region94: #{tpu_custom_call.1} parent=75 // pred_check_branch
          %4020 = sbr.rel (%p4018) target = $region96
        $region95: #{tpu_custom_call.1} parent=75 // pred_region
          %s4022 = ssub.s32 2048, 2048
          %4023 = vsyncadd %s4014, %s4022
          %s4024 = smul.addr %s31, 16
          %s4025 = smul.addr %s4024, 128
          %s4026 = scalar_lea.hbm %s14, %s4025
          %s4027 = sshll.u32 %s4017, 4
          %s4028 = int_to_ptr.vmem [resolvable:$true] %s4027
          %4033 = dma.vmem_to_hbm [thread:$0]  %s4028, 2048, %s4026, %s4014, 256, 256, 16
        $region96: #{tpu_custom_call.1} parent=75 // pred_fallthru
          _
      $region76: #{tpu_custom_call.1} parent=5 // pred_fallthru
        _
      %p4034 = scmp.le.s32.totalorder 2, %s26
      // Predicated region
      $region97: #{tpu_custom_call.1} parent=5 // pred_check
        %p4035 = pneg %p4034
      $region98: #{tpu_custom_call.1} parent=5 // pred_check_branch
        %4037 = sbr.rel (%p4035) target = $region100
      $region99: #{tpu_custom_call.1} parent=5 // pred_region
        %s4038 = ssub.s32 %s26, 2
        // Predicated region
        $region101: #{tpu_custom_call.1} parent=99 // pred_check
          %p4039 = pneg %p354
        $region102: #{tpu_custom_call.1} parent=99 // pred_check_branch
          %4041 = sbr.rel (%p4039) target = $region104
        $region103: #{tpu_custom_call.1} parent=99 // pred_region
          %s4042 = sand.u32 %s339, 1
          %s4043 = scalar_lea.sflag [#allocation5], %s4042
          %s4044 = sand.u32 %s339, 1
          %s4045 = smul.addr %s4044, 128
          %s4046 = scalar_lea.vmem [#allocation11], %s4045
          %4047 = dma.done %s4043, 2048
        $region104: #{tpu_custom_call.1} parent=99 // pred_fallthru
          _
      $region100: #{tpu_custom_call.1} parent=5 // pred_fallthru
        _
    $region6: #{tpu_custom_call.1} parent=1 // loop_footer
      %s30 = sadd.s32 1, %s26
    $region7: #{tpu_custom_call.1} parent=1 // loop_footer_branch
      %25 = sbr.rel target = $region3
    $region8: #{tpu_custom_call.1} parent=1 // loop_exit
      _
    %4048 = vsyncpa [#allocation4], 1
    %s4049 = scalar_lea.sflag [#allocation4], 1
    %4050 = vsyncpa %s4049, 1
    %4051 = vsyncpa [#allocation7], 1
    %4052 = vsyncpa [#allocation10], 1
    %4053 = vsyncpa [#allocation5], 1
    %s4054 = scalar_lea.sflag [#allocation5], 1
    %4055 = vsyncpa %s4054, 1

// kernel: tpu_custom_call.1
$region0: #{tpu_custom_call.1}
  #allocation0 [shape = 'u32[]', space=smem, size = 0x4, offset = 0x4, fixed_abs, tag = 'smem constant byte address 0x4 - core index']
  #allocation1 [shape = 'u32[144,128]{1,0:T(1,128)}', space=vmem, size = 0x12000, scoped, tag = 'internal scratch']
  #allocation2 [shape = 'f32[576,256]{1,0:T(8,128)}', space=vmem, size = 0x90000, scoped, tag = 'scratch operand']
  %s0 = inlined_call_operand.vmem [shape: f32[2,32,256], index: 0, kind: input, shape index: {}]
  %s1 = inlined_call_operand.hbm [shape: f32[9,256], index: 1, kind: input, shape index: {}]
  %s2 = inlined_call_operand.hbm [shape: f32[32,32], index: 2, kind: input, shape index: {}]
  %s3 = inlined_call_operand.hbm [shape: f32[64,64], index: 3, kind: input, shape index: {}]
  %s4 = inlined_call_operand.vmem [shape: f32[32,1], index: 4, kind: input, shape index: {}]
  %s5 = inlined_call_operand.vmem [shape: f32[32,1], index: 5, kind: input, shape index: {}]
  %s6 = inlined_call_operand.hbm [shape: f32[64,288], index: 6, kind: input, shape index: {}]
  %s7 = inlined_call_operand.vmem [shape: f32[64,1], index: 7, kind: input, shape index: {}]
  %s8 = inlined_call_operand.vmem [shape: f32[64,1], index: 8, kind: input, shape index: {}]
  %s9 = inlined_call_operand.vmem [shape: f32[64,1], index: 9, kind: input, shape index: {}]
  %s10 = inlined_call_operand.vmem [shape: f32[64,576], index: 10, kind: input, shape index: {}]
  %s11 = inlined_call_operand.vmem [shape: f32[64,1], index: 11, kind: input, shape index: {}]
  %s12 = inlined_call_operand.vmem [shape: f32[64,32], index: 12, kind: input, shape index: {}]
  %s13 = inlined_call_operand.vmem [shape: f32[64,1], index: 13, kind: input, shape index: {}]
  %s14 = inlined_call_operand.hbm [shape: f32[2,64,256], index: 14, kind: output, shape index: {}]
  %s15 = sld [smem:[#allocation0]]
  $region105: #{tpu_custom_call.1} parent=0
    _
  %s17 = ssub.s32 1, %s15
  %s18 = scalar_select 0, %s17, %s15
  $region1: #{tpu_custom_call.1} parent=0
    #allocation3 [shape = 'u8[16384]{0}', space=vmem, size = 0x4000, scoped, tag = 'input window, operand 1, single buffered']
    #allocation4 [shape = 's32[2]{0}', space=sflag, size = 0x8, scoped, tag = 'scoped memory for tpu_custom_call.1']
    #allocation5 [shape = 's32[2]{0}', space=sflag, size = 0x8, scoped, tag = 'scoped memory for tpu_custom_call.1']
    #allocation6 [shape = 'u8[16384]{0}', space=vmem, size = 0x4000, scoped, tag = 'input window, operand 2, single buffered']
    #allocation7 [shape = 's32[1]{0}', space=sflag, size = 0x4, scoped, tag = 'scoped memory for tpu_custom_call.1']
    #allocation8 [shape = 'u8[32768]{0}', space=vmem, size = 0x8000, scoped, tag = 'input window, operand 3, single buffered']
    #allocation9 [shape = 'u8[98304]{0}', space=vmem, size = 0x18000, scoped, tag = 'input window, operand 6, single buffered']
    #allocation10 [shape = 's32[1]{0}', space=sflag, size = 0x4, scoped, tag = 'scoped memory for tpu_custom_call.1']
    #allocation11 [shape = 'u8[131072]{0}', space=vmem, size = 0x20000, scoped, tag = 'output window, operand 0']
    %19 = vsyncpa [#allocation4], 0
    %20 = vsyncpa [#allocation7], 0
    %21 = vsyncpa [#allocation10], 0
    %22 = vsyncpa [#allocation5], 0
    %s23 = scalar_lea.sflag [#allocation5], 1
    %24 = vsyncpa %s23, 0
    loop: start=0, step=1, limit=4
    $region2: #{tpu_custom_call.1} parent=1 // loop_pre_header
      _
    $region3: #{tpu_custom_call.1} parent=1 // loop_header
      %s26 = sphi 0, %s30
      %p27 = scmp.ge.s32.totalorder %s26, 4
      %s36 = sphi 0, %s38
      %s39 = sphi 0, %s36
      %s40 = sphi 0, %s39
      %s56 = sphi 0, %s40
      %s60 = sphi 0, %s60
      %s62 = sphi 0, %s60
      %s63 = sphi 0, %s62
      %s77 = sphi 0, %s63
      %s81 = sphi 0, %s81
      %s83 = sphi 0, %s81
      %s84 = sphi 0, %s83
      %s98 = sphi 0, %s84
      %s102 = sphi 0, %s102
      %s104 = sphi 0, %s102
      %s105 = sphi 0, %s104
      %s119 = sphi 0, %s105
      %s123 = sphi 0, %s123
      %s125 = sphi 0, %s123
      %s126 = sphi 0, %s125
      %s140 = sphi 0, %s126
      %s144 = sphi 0, %s144
      %s146 = sphi 0, %s144
      %s147 = sphi 0, %s146
      %s161 = sphi 0, %s147
      %s165 = sphi 0, %s165
      %s167 = sphi 0, %s165
      %s168 = sphi 0, %s167
      %s182 = sphi 0, %s168
      %s186 = sphi 0, %s186
      %s188 = sphi 0, %s186
      %s189 = sphi 0, %s188
      %s203 = sphi 0, %s189
      %s207 = sphi 0, %s207
      %s209 = sphi 0, %s207
      %s210 = sphi 0, %s209
      %s224 = sphi 0, %s210
      %s228 = sphi 0, %s228
      %s230 = sphi 0, %s228
      %s231 = sphi 0, %s230
      %s245 = sphi 0, %s231
      %s249 = sphi 0, %s249
      %s251 = sphi 0, %s249
      %s252 = sphi 0, %s251
      %s266 = sphi 0, %s252
      %s270 = sphi 0, %s270
      %s272 = sphi 0, %s270
      %s273 = sphi 0, %s272
      %s287 = sphi 0, %s273
      %s291 = sphi 0, %s291
      %s293 = sphi 0, %s291
      %s294 = sphi 0, %s293
      %s308 = sphi 0, %s294
      %s312 = sphi 0, %s312
      %s314 = sphi 0, %s312
      %s315 = sphi 0, %s314
      %s329 = sphi 0, %s315
      %s335 = sphi 0, %s337
      %s338 = sphi 0, %s335
      %s339 = sphi 0, %s338
      %s355 = sphi 0, %s339
    $region4: #{tpu_custom_call.1} parent=1 // loop_header_branch
      %29 = sbr.rel (%p27) target = $region8
    $region5: #{tpu_custom_call.1} parent=1 // loop_body
      %s31 = ssub.s32 %s26, 1
      %s32 = ssub.s32 %s26, 2
      %s33 = sadd.s32 %s26, 1
      %s34 = ssub.s32 %s26, %s33
      %p35 = scmp.eq.s32.totalorder %s34, 0
      %s37 = sadd.s32 %s36, 1
      %s38 = scalar_select %p35, %s36, %s37
      %p41 = pneg %p35
      %p42 = scmp.eq.s32.totalorder %s26, 1
      %p43 = por %p41, %p42
      %p44 = scmp.ne.s32.totalorder %s36, %s39
      %p45 = scmp.eq.s32.totalorder %s26, 0
      %p46 = por %p44, %p45
      %p47 = scmp.ne.s32.totalorder %s36, %s39
      %p48 = scmp.eq.s32.totalorder %s31, 1
      %p49 = por %p47, %p48
      %p50 = scmp.ne.s32.totalorder %s39, %s40
      %p51 = scmp.eq.s32.totalorder %s31, 0
      %p52 = por %p50, %p51
      %p53 = scmp.ne.s32.totalorder %s39, %s40
      %p54 = scmp.eq.s32.totalorder %s32, 1
      %p55 = por %p53, %p54
      %p57 = scmp.ne.s32.totalorder %s40, %s56
      %p58 = scmp.eq.s32.totalorder %s32, 0
      %p59 = por %p57, %p58
      %s61 = sadd.s32 %s60, 1
      %p64 = scmp.eq.s32.totalorder %s26, 1
      %p65 = scmp.ne.s32.totalorder %s60, %s62
      %p66 = scmp.eq.s32.totalorder %s26, 0
      %p67 = por %p65, %p66
      %p68 = scmp.ne.s32.totalorder %s60, %s62
      %p69 = scmp.eq.s32.totalorder %s31, 1
      %p70 = por %p68, %p69
      %p71 = scmp.ne.s32.totalorder %s62, %s63
      %p72 = scmp.eq.s32.totalorder %s31, 0
      %p73 = por %p71, %p72
      %p74 = scmp.ne.s32.totalorder %s62, %s63
      %p75 = scmp.eq.s32.totalorder %s32, 1
      %p76 = por %p74, %p75
      %p78 = scmp.ne.s32.totalorder %s63, %s77
      %p79 = scmp.eq.s32.totalorder %s32, 0
      %p80 = por %p78, %p79
      %s82 = sadd.s32 %s81, 1
      %p85 = scmp.eq.s32.totalorder %s26, 1
      %p86 = scmp.ne.s32.totalorder %s81, %s83
      %p87 = scmp.eq.s32.totalorder %s26, 0
      %p88 = por %p86, %p87
      %p89 = scmp.ne.s32.totalorder %s81, %s83
      %p90 = scmp.eq.s32.totalorder %s31, 1
      %p91 = por %p89, %p90
      %p92 = scmp.ne.s32.totalorder %s83, %s84
      %p93 = scmp.eq.s32.totalorder %s31, 0
      %p94 = por %p92, %p93
      %p95 = scmp.ne.s32.totalorder %s83, %s84
      %p96 = scmp.eq.s32.totalorder %s32, 1
      %p97 = por %p95, %p96
      %p99 = scmp.ne.s32.totalorder %s84, %s98
      %p100 = scmp.eq.s32.totalorder %s32, 0
      %p101 = por %p99, %p100
      %s103 = sadd.s32 %s102, 1
      %p106 = scmp.eq.s32.totalorder %s26, 1
      %p107 = scmp.ne.s32.totalorder %s102, %s104
      %p108 = scmp.eq.s32.totalorder %s26, 0
      %p109 = por %p107, %p108
      %p110 = scmp.ne.s32.totalorder %s102, %s104
      %p111 = scmp.eq.s32.totalorder %s31, 1
      %p112 = por %p110, %p111
      %p113 = scmp.ne.s32.totalorder %s104, %s105
      %p114 = scmp.eq.s32.totalorder %s31, 0
      %p115 = por %p113, %p114
      %p116 = scmp.ne.s32.totalorder %s104, %s105
      %p117 = scmp.eq.s32.totalorder %s32, 1
      %p118 = por %p116, %p117
      %p120 = scmp.ne.s32.totalorder %s105, %s119
      %p121 = scmp.eq.s32.totalorder %s32, 0
      %p122 = por %p120, %p121
      %s124 = sadd.s32 %s123, 1
      %p127 = scmp.eq.s32.totalorder %s26, 1
      %p128 = scmp.ne.s32.totalorder %s123, %s125
      %p129 = scmp.eq.s32.totalorder %s26, 0
      %p130 = por %p128, %p129
      %p131 = scmp.ne.s32.totalorder %s123, %s125
      %p132 = scmp.eq.s32.totalorder %s31, 1
      %p133 = por %p131, %p132
      %p134 = scmp.ne.s32.totalorder %s125, %s126
      %p135 = scmp.eq.s32.totalorder %s31, 0
      %p136 = por %p134, %p135
      %p137 = scmp.ne.s32.totalorder %s125, %s126
      %p138 = scmp.eq.s32.totalorder %s32, 1
      %p139 = por %p137, %p138
      %p141 = scmp.ne.s32.totalorder %s126, %s140
      %p142 = scmp.eq.s32.totalorder %s32, 0
      %p143 = por %p141, %p142
      %s145 = sadd.s32 %s144, 1
      %p148 = scmp.eq.s32.totalorder %s26, 1
      %p149 = scmp.ne.s32.totalorder %s144, %s146
      %p150 = scmp.eq.s32.totalorder %s26, 0
      %p151 = por %p149, %p150
      %p152 = scmp.ne.s32.totalorder %s144, %s146
      %p153 = scmp.eq.s32.totalorder %s31, 1
      %p154 = por %p152, %p153
      %p155 = scmp.ne.s32.totalorder %s146, %s147
      %p156 = scmp.eq.s32.totalorder %s31, 0
      %p157 = por %p155, %p156
      %p158 = scmp.ne.s32.totalorder %s146, %s147
      %p159 = scmp.eq.s32.totalorder %s32, 1
      %p160 = por %p158, %p159
      %p162 = scmp.ne.s32.totalorder %s147, %s161
      %p163 = scmp.eq.s32.totalorder %s32, 0
      %p164 = por %p162, %p163
      %s166 = sadd.s32 %s165, 1
      %p169 = scmp.eq.s32.totalorder %s26, 1
      %p170 = scmp.ne.s32.totalorder %s165, %s167
      %p171 = scmp.eq.s32.totalorder %s26, 0
      %p172 = por %p170, %p171
      %p173 = scmp.ne.s32.totalorder %s165, %s167
      %p174 = scmp.eq.s32.totalorder %s31, 1
      %p175 = por %p173, %p174
      %p176 = scmp.ne.s32.totalorder %s167, %s168
      %p177 = scmp.eq.s32.totalorder %s31, 0
      %p178 = por %p176, %p177
      %p179 = scmp.ne.s32.totalorder %s167, %s168
      %p180 = scmp.eq.s32.totalorder %s32, 1
      %p181 = por %p179, %p180
      %p183 = scmp.ne.s32.totalorder %s168, %s182
      %p184 = scmp.eq.s32.totalorder %s32, 0
      %p185 = por %p183, %p184
      %s187 = sadd.s32 %s186, 1
      %p190 = scmp.eq.s32.totalorder %s26, 1
      %p191 = scmp.ne.s32.totalorder %s186, %s188
      %p192 = scmp.eq.s32.totalorder %s26, 0
      %p193 = por %p191, %p192
      %p194 = scmp.ne.s32.totalorder %s186, %s188
      %p195 = scmp.eq.s32.totalorder %s31, 1
      %p196 = por %p194, %p195
      %p197 = scmp.ne.s32.totalorder %s188, %s189
      %p198 = scmp.eq.s32.totalorder %s31, 0
      %p199 = por %p197, %p198
      %p200 = scmp.ne.s32.totalorder %s188, %s189
      %p201 = scmp.eq.s32.totalorder %s32, 1
      %p202 = por %p200, %p201
      %p204 = scmp.ne.s32.totalorder %s189, %s203
      %p205 = scmp.eq.s32.totalorder %s32, 0
      %p206 = por %p204, %p205
      %s208 = sadd.s32 %s207, 1
      %p211 = scmp.eq.s32.totalorder %s26, 1
      %p212 = scmp.ne.s32.totalorder %s207, %s209
      %p213 = scmp.eq.s32.totalorder %s26, 0
      %p214 = por %p212, %p213
      %p215 = scmp.ne.s32.totalorder %s207, %s209
      %p216 = scmp.eq.s32.totalorder %s31, 1
      %p217 = por %p215, %p216
      %p218 = scmp.ne.s32.totalorder %s209, %s210
      %p219 = scmp.eq.s32.totalorder %s31, 0
      %p220 = por %p218, %p219
      %p221 = scmp.ne.s32.totalorder %s209, %s210
      %p222 = scmp.eq.s32.totalorder %s32, 1
      %p223 = por %p221, %p222
      %p225 = scmp.ne.s32.totalorder %s210, %s224
      %p226 = scmp.eq.s32.totalorder %s32, 0
      %p227 = por %p225, %p226
      %s229 = sadd.s32 %s228, 1
      %p232 = scmp.eq.s32.totalorder %s26, 1
      %p233 = scmp.ne.s32.totalorder %s228, %s230
      %p234 = scmp.eq.s32.totalorder %s26, 0
      %p235 = por %p233, %p234
      %p236 = scmp.ne.s32.totalorder %s228, %s230
      %p237 = scmp.eq.s32.totalorder %s31, 1
      %p238 = por %p236, %p237
      %p239 = scmp.ne.s32.totalorder %s230, %s231
      %p240 = scmp.eq.s32.totalorder %s31, 0
      %p241 = por %p239, %p240
      %p242 = scmp.ne.s32.totalorder %s230, %s231
      %p243 = scmp.eq.s32.totalorder %s32, 1
      %p244 = por %p242, %p243
      %p246 = scmp.ne.s32.totalorder %s231, %s245
      %p247 = scmp.eq.s32.totalorder %s32, 0
      %p248 = por %p246, %p247
      %s250 = sadd.s32 %s249, 1
      %p253 = scmp.eq.s32.totalorder %s26, 1
      %p254 = scmp.ne.s32.totalorder %s249, %s251
      %p255 = scmp.eq.s32.totalorder %s26, 0
      %p256 = por %p254, %p255
      %p257 = scmp.ne.s32.totalorder %s249, %s251
      %p258 = scmp.eq.s32.totalorder %s31, 1
      %p259 = por %p257, %p258
      %p260 = scmp.ne.s32.totalorder %s251, %s252
      %p261 = scmp.eq.s32.totalorder %s31, 0
      %p262 = por %p260, %p261
      %p263 = scmp.ne.s32.totalorder %s251, %s252
      %p264 = scmp.eq.s32.totalorder %s32, 1
      %p265 = por %p263, %p264
      %p267 = scmp.ne.s32.totalorder %s252, %s266
      %p268 = scmp.eq.s32.totalorder %s32, 0
      %p269 = por %p267, %p268
      %s271 = sadd.s32 %s270, 1
      %p274 = scmp.eq.s32.totalorder %s26, 1
      %p275 = scmp.ne.s32.totalorder %s270, %s272
      %p276 = scmp.eq.s32.totalorder %s26, 0
      %p277 = por %p275, %p276
      %p278 = scmp.ne.s32.totalorder %s270, %s272
      %p279 = scmp.eq.s32.totalorder %s31, 1
      %p280 = por %p278, %p279
      %p281 = scmp.ne.s32.totalorder %s272, %s273
      %p282 = scmp.eq.s32.totalorder %s31, 0
      %p283 = por %p281, %p282
      %p284 = scmp.ne.s32.totalorder %s272, %s273
      %p285 = scmp.eq.s32.totalorder %s32, 1
      %p286 = por %p284, %p285
      %p288 = scmp.ne.s32.totalorder %s273, %s287
      %p289 = scmp.eq.s32.totalorder %s32, 0
      %p290 = por %p288, %p289
      %s292 = sadd.s32 %s291, 1
      %p295 = scmp.eq.s32.totalorder %s26, 1
      %p296 = scmp.ne.s32.totalorder %s291, %s293
      %p297 = scmp.eq.s32.totalorder %s26, 0
      %p298 = por %p296, %p297
      %p299 = scmp.ne.s32.totalorder %s291, %s293
      %p300 = scmp.eq.s32.totalorder %s31, 1
      %p301 = por %p299, %p300
      %p302 = scmp.ne.s32.totalorder %s293, %s294
      %p303 = scmp.eq.s32.totalorder %s31, 0
      %p304 = por %p302, %p303
      %p305 = scmp.ne.s32.totalorder %s293, %s294
      %p306 = scmp.eq.s32.totalorder %s32, 1
      %p307 = por %p305, %p306
      %p309 = scmp.ne.s32.totalorder %s294, %s308
      %p310 = scmp.eq.s32.totalorder %s32, 0
      %p311 = por %p309, %p310
      %s313 = sadd.s32 %s312, 1
      %p316 = scmp.eq.s32.totalorder %s26, 1
      %p317 = scmp.ne.s32.totalorder %s312, %s314
      %p318 = scmp.eq.s32.totalorder %s26, 0
      %p319 = por %p317, %p318
      %p320 = scmp.ne.s32.totalorder %s312, %s314
      %p321 = scmp.eq.s32.totalorder %s31, 1
      %p322 = por %p320, %p321
      %p323 = scmp.ne.s32.totalorder %s314, %s315
      %p324 = scmp.eq.s32.totalorder %s31, 0
      %p325 = por %p323, %p324
      %p326 = scmp.ne.s32.totalorder %s314, %s315
      %p327 = scmp.eq.s32.totalorder %s32, 1
      %p328 = por %p326, %p327
      %p330 = scmp.ne.s32.totalorder %s315, %s329
      %p331 = scmp.eq.s32.totalorder %s32, 0
      %p332 = por %p330, %p331
      %s333 = ssub.s32 %s26, %s33
      %p334 = scmp.eq.s32.totalorder %s333, 0
      %s336 = sadd.s32 %s335, 1
      %s337 = scalar_select %p334, %s335, %s336
      %p340 = pneg %p334
      %p341 = scmp.eq.s32.totalorder %s26, 1
      %p342 = por %p340, %p341
      %p343 = scmp.ne.s32.totalorder %s335, %s338
      %p344 = scmp.eq.s32.totalorder %s26, 0
      %p345 = por %p343, %p344
      %p346 = scmp.ne.s32.totalorder %s335, %s338
      %p347 = scmp.eq.s32.totalorder %s31, 1
      %p348 = por %p346, %p347
      %p349 = scmp.ne.s32.totalorder %s338, %s339
      %p350 = scmp.eq.s32.totalorder %s31, 0
      %p351 = por %p349, %p350
      %p352 = scmp.ne.s32.totalorder %s338, %s339
      %p353 = scmp.eq.s32.totalorder %s32, 1
      %p354 = por %p352, %p353
      %p356 = scmp.ne.s32.totalorder %s339, %s355
      %p357 = scmp.eq.s32.totalorder %s32, 0
      %p358 = por %p356, %p357
      %p359 = scmp.le.s32.totalorder 1, %s26
      %p360 = scmp.lt.s32.totalorder %s26, 3
      %p361 = pnand %p359, %p360
      %p362 = pneg %p361
      // Predicated region
      $region9: #{tpu_custom_call.1} parent=5 // pred_check
        _
      $region10: #{tpu_custom_call.1} parent=5 // pred_check_branch
        %364 = sbr.rel (%p361) target = $region12
      $region11: #{tpu_custom_call.1} parent=5 // pred_region
        %s365 = ssub.s32 %s26, 1
        // Predicated region
        $region13: #{tpu_custom_call.1} parent=11 // pred_check
          %p366 = pneg %p73
        $region14: #{tpu_custom_call.1} parent=11 // pred_check_branch
          %368 = sbr.rel (%p366) target = $region16
        $region15: #{tpu_custom_call.1} parent=11 // pred_region
          %s370 = ssub.s32 512, 512
          %371 = vsyncadd [#allocation4], %s370
          %s372 = sshll.u32 [#allocation3], 4
          %s373 = int_to_ptr.vmem [resolvable:$true] %s372
          %378 = dma.hbm_to_vmem [thread:$0]  %s1, 512, %s373, [#allocation4], 256, 256, 16
        $region16: #{tpu_custom_call.1} parent=11 // pred_fallthru
          _
        // Predicated region
        $region17: #{tpu_custom_call.1} parent=11 // pred_check
          %p379 = pneg %p94
        $region18: #{tpu_custom_call.1} parent=11 // pred_check_branch
          %381 = sbr.rel (%p379) target = $region20
        $region19: #{tpu_custom_call.1} parent=11 // pred_region
          %s383 = ssub.s32 512, 512
          %384 = vsyncadd [#allocation7], %s383
          %s385 = sshll.u32 [#allocation6], 4
          %s386 = int_to_ptr.vmem [resolvable:$true] %s385
          %391 = dma.hbm_to_vmem [thread:$0]  %s2, 512, %s386, [#allocation7], 128, 128, 8
        $region20: #{tpu_custom_call.1} parent=11 // pred_fallthru
          _
        // Predicated region
        $region21: #{tpu_custom_call.1} parent=11 // pred_check
          %p392 = pneg %p115
        $region22: #{tpu_custom_call.1} parent=11 // pred_check_branch
          %394 = sbr.rel (%p392) target = $region24
        $region23: #{tpu_custom_call.1} parent=11 // pred_region
          %s396 = ssub.s32 1024, 1024
          %397 = vsyncadd [#allocation7], %s396
          %s398 = sshll.u32 [#allocation8], 4
          %s399 = int_to_ptr.vmem [resolvable:$true] %s398
          %404 = dma.hbm_to_vmem [thread:$0]  %s3, 1024, %s399, [#allocation7], 128, 128, 8
        $region24: #{tpu_custom_call.1} parent=11 // pred_fallthru
          _
        // Predicated region
        $region25: #{tpu_custom_call.1} parent=11 // pred_check
          %p405 = pneg %p136
        $region26: #{tpu_custom_call.1} parent=11 // pred_check_branch
          %407 = sbr.rel (%p405) target = $region28
        $region27: #{tpu_custom_call.1} parent=11 // pred_region
          _
        $region28: #{tpu_custom_call.1} parent=11 // pred_fallthru
          _
        // Predicated region
        $region29: #{tpu_custom_call.1} parent=11 // pred_check
          %p408 = pneg %p157
        $region30: #{tpu_custom_call.1} parent=11 // pred_check_branch
          %410 = sbr.rel (%p408) target = $region32
        $region31: #{tpu_custom_call.1} parent=11 // pred_region
          _
        $region32: #{tpu_custom_call.1} parent=11 // pred_fallthru
          _
        // Predicated region
        $region33: #{tpu_custom_call.1} parent=11 // pred_check
          %p411 = pneg %p178
        $region34: #{tpu_custom_call.1} parent=11 // pred_check_branch
          %413 = sbr.rel (%p411) target = $region36
        $region35: #{tpu_custom_call.1} parent=11 // pred_region
          %s415 = ssub.s32 3072, 3072
          %416 = vsyncadd [#allocation10], %s415
          %s417 = sshll.u32 [#allocation9], 4
          %s418 = int_to_ptr.vmem [resolvable:$true] %s417
          %423 = dma.hbm_to_vmem [thread:$0]  %s6, 3072, %s418, [#allocation10], 384, 384, 24
        $region36: #{tpu_custom_call.1} parent=11 // pred_fallthru
          _
        // Predicated region
        $region37: #{tpu_custom_call.1} parent=11 // pred_check
          %p424 = pneg %p199
        $region38: #{tpu_custom_call.1} parent=11 // pred_check_branch
          %426 = sbr.rel (%p424) target = $region40
        $region39: #{tpu_custom_call.1} parent=11 // pred_region
          _
        $region40: #{tpu_custom_call.1} parent=11 // pred_fallthru
          _
        // Predicated region
        $region41: #{tpu_custom_call.1} parent=11 // pred_check
          %p427 = pneg %p220
        $region42: #{tpu_custom_call.1} parent=11 // pred_check_branch
          %429 = sbr.rel (%p427) target = $region44
        $region43: #{tpu_custom_call.1} parent=11 // pred_region
          _
        $region44: #{tpu_custom_call.1} parent=11 // pred_fallthru
          _
        // Predicated region
        $region45: #{tpu_custom_call.1} parent=11 // pred_check
          %p430 = pneg %p241
        $region46: #{tpu_custom_call.1} parent=11 // pred_check_branch
          %432 = sbr.rel (%p430) target = $region48
        $region47: #{tpu_custom_call.1} parent=11 // pred_region
          _
        $region48: #{tpu_custom_call.1} parent=11 // pred_fallthru
          _
        // Predicated region
        $region49: #{tpu_custom_call.1} parent=11 // pred_check
          %p433 = pneg %p262
        $region50: #{tpu_custom_call.1} parent=11 // pred_check_branch
          %435 = sbr.rel (%p433) target = $region52
        $region51: #{tpu_custom_call.1} parent=11 // pred_region
          _
        $region52: #{tpu_custom_call.1} parent=11 // pred_fallthru
          _
        // Predicated region
        $region53: #{tpu_custom_call.1} parent=11 // pred_check
          %p436 = pneg %p283
        $region54: #{tpu_custom_call.1} parent=11 // pred_check_branch
          %438 = sbr.rel (%p436) target = $region56
        $region55: #{tpu_custom_call.1} parent=11 // pred_region
          _
        $region56: #{tpu_custom_call.1} parent=11 // pred_fallthru
          _
        // Predicated region
        $region57: #{tpu_custom_call.1} parent=11 // pred_check
          %p439 = pneg %p304
        $region58: #{tpu_custom_call.1} parent=11 // pred_check_branch
          %441 = sbr.rel (%p439) target = $region60
        $region59: #{tpu_custom_call.1} parent=11 // pred_region
          _
        $region60: #{tpu_custom_call.1} parent=11 // pred_fallthru
          _
        // Predicated region
        $region61: #{tpu_custom_call.1} parent=11 // pred_check
          %p442 = pneg %p325
        $region62: #{tpu_custom_call.1} parent=11 // pred_check_branch
          %444 = sbr.rel (%p442) target = $region64
        $region63: #{tpu_custom_call.1} parent=11 // pred_region
          _
        $region64: #{tpu_custom_call.1} parent=11 // pred_fallthru
          _
      $region12: #{tpu_custom_call.1} parent=5 // pred_fallthru
        _
      %p445 = scmp.lt.s32.totalorder %s26, 2
      // Predicated region
      $region65: #{tpu_custom_call.1} parent=5 // pred_check
        %p446 = pneg %p445
      $region66: #{tpu_custom_call.1} parent=5 // pred_check_branch
        %448 = sbr.rel (%p446) target = $region68
      $region67: #{tpu_custom_call.1} parent=5 // pred_region
        // Predicated region
        $region69: #{tpu_custom_call.1} parent=67 // pred_check
          %p449 = pneg %p46
        $region70: #{tpu_custom_call.1} parent=67 // pred_check_branch
          %451 = sbr.rel (%p449) target = $region72
        $region71: #{tpu_custom_call.1} parent=67 // pred_region
          %p452 = scmp.lt.s32.totalorder %s26, 1
          %s453 = scalar_select %p452, %s26, 1
          %s454 = smul.addr %s453, 8
          %s455 = smul.addr %s454, 8
          %s456 = scalar_lea.vmem %s0, %s455
        $region72: #{tpu_custom_call.1} parent=67 // pred_fallthru
          _
      $region68: #{tpu_custom_call.1} parent=5 // pred_fallthru
        _
      %p457 = scmp.le.s32.totalorder 1, %s26
      %p458 = scmp.lt.s32.totalorder %s26, 3
      %p459 = pnand %p457, %p458
      %p460 = pneg %p459
      // Predicated region
      $region73: #{tpu_custom_call.1} parent=5 // pred_check
        _
      $region74: #{tpu_custom_call.1} parent=5 // pred_check_branch
        %462 = sbr.rel (%p459) target = $region76
      $region75: #{tpu_custom_call.1} parent=5 // pred_region
        %s463 = ssub.s32 %s26, 1
        // Predicated region
        $region77: #{tpu_custom_call.1} parent=75 // pred_check
          %p464 = pneg %p73
        $region78: #{tpu_custom_call.1} parent=75 // pred_check_branch
          %466 = sbr.rel (%p464) target = $region80
        $region79: #{tpu_custom_call.1} parent=75 // pred_region
          %467 = dma.done [#allocation4], 512
        $region80: #{tpu_custom_call.1} parent=75 // pred_fallthru
          _
        // Predicated region
        $region81: #{tpu_custom_call.1} parent=75 // pred_check
          %p468 = pneg %p94
        $region82: #{tpu_custom_call.1} parent=75 // pred_check_branch
          %470 = sbr.rel (%p468) target = $region84
        $region83: #{tpu_custom_call.1} parent=75 // pred_region
          %471 = dma.done [#allocation7], 512
        $region84: #{tpu_custom_call.1} parent=75 // pred_fallthru
          _
        // Predicated region
        $region85: #{tpu_custom_call.1} parent=75 // pred_check
          %p472 = pneg %p115
        $region86: #{tpu_custom_call.1} parent=75 // pred_check_branch
          %474 = sbr.rel (%p472) target = $region88
        $region87: #{tpu_custom_call.1} parent=75 // pred_region
          %475 = dma.done [#allocation7], 1024
        $region88: #{tpu_custom_call.1} parent=75 // pred_fallthru
          _
        // Predicated region
        $region89: #{tpu_custom_call.1} parent=75 // pred_check
          %p476 = pneg %p178
        $region90: #{tpu_custom_call.1} parent=75 // pred_check_branch
          %478 = sbr.rel (%p476) target = $region92
        $region91: #{tpu_custom_call.1} parent=75 // pred_region
          %479 = dma.done [#allocation10], 3072
        $region92: #{tpu_custom_call.1} parent=75 // pred_fallthru
          _
        %p480 = scmp.lt.s32.totalorder %s31, 1
        %s481 = scalar_select %p480, %s31, 1
        %s482 = smul.addr %s481, 8
        %s483 = smul.addr %s482, 8
        %s484 = scalar_lea.vmem %s0, %s483
        %p485 = pneg %p52
        %p486 = pneg %p49
        %p487 = pneg %p73
        %p488 = pneg %p70
        %p489 = pneg %p94
        %p490 = pneg %p91
        %p491 = pneg %p115
        %p492 = pneg %p112
        %p493 = pneg %p136
        %p494 = pneg %p133
        %p495 = pneg %p157
        %p496 = pneg %p154
        %p497 = pneg %p178
        %p498 = pneg %p175
        %p499 = pneg %p199
        %p500 = pneg %p196
        %p501 = pneg %p220
        %p502 = pneg %p217
        %p503 = pneg %p241
        %p504 = pneg %p238
        %p505 = pneg %p262
        %p506 = pneg %p259
        %p507 = pneg %p283
        %p508 = pneg %p280
        %p509 = pneg %p304
        %p510 = pneg %p301
        %p511 = pneg %p325
        %p512 = pneg %p322
        %p513 = pneg %p351
        %p514 = pneg %p348
        %s515 = sand.u32 %s338, 1
        %s516 = scalar_lea.sflag [#allocation5], %s515
        %s517 = sand.u32 %s338, 1
        %s518 = smul.addr %s517, 128
        %s519 = scalar_lea.vmem [#allocation11], %s518
        %p520 = scmp.lt.s32.totalorder %s31, 1
        %s521 = scalar_select %p520, %s31, 1
        %s522 = smul.addr %s521, 8
        %s523 = smul.addr %s522, 8
        %s524 = scalar_lea.vmem %s0, %s523
        %v525 = vld [vmem:[#allocation3] sm:$0xff]
        %v526 = vld [vmem:[#allocation3 + $0x8] sm:$0xff]
        %v527 = vld [vmem:[#allocation3 + $0x10] sm:$0x1]
        %v528 = vld [vmem:[#allocation3 + $0x18] sm:$0x1]
        %v529 = vld [vmem:[#allocation6] sm:$0xff]
        %v530 = vld [vmem:[#allocation6 + $0x8] sm:$0xff]
        %v531 = vld [vmem:[#allocation6 + $0x10] sm:$0xff]
        %v532 = vld [vmem:[#allocation6 + $0x18] sm:$0xff]
        %v533 = vld [vmem:[#allocation8] sm:$0xff]
        %v534 = vld [vmem:[#allocation8 + $0x8] sm:$0xff]
        %v535 = vld [vmem:[#allocation8 + $0x10] sm:$0xff]
        %v536 = vld [vmem:[#allocation8 + $0x18] sm:$0xff]
        %v537 = vld [vmem:[#allocation8 + $0x20] sm:$0xff]
        %v538 = vld [vmem:[#allocation8 + $0x28] sm:$0xff]
        %v539 = vld [vmem:[#allocation8 + $0x30] sm:$0xff]
        %v540 = vld [vmem:[#allocation8 + $0x38] sm:$0xff]
        %v541 = vld [vmem:[%s524] sm:$0xff]
        %v542 = vld [vmem:[%s524 + $0x8] sm:$0xff]
        %v543 = vld [vmem:[%s524 + $0x10] sm:$0xff]
        %v544 = vld [vmem:[%s524 + $0x18] sm:$0xff]
        %v545 = vld [vmem:[%s524 + $0x20] sm:$0xff]
        %v546 = vld [vmem:[%s524 + $0x28] sm:$0xff]
        %v547 = vld [vmem:[%s524 + $0x30] sm:$0xff]
        %v548 = vld [vmem:[%s524 + $0x38] sm:$0xff]
        %v549 = vld [vmem:[%s4] sm:$0xff]
        %v550 = vld [vmem:[%s4 + $0x8] sm:$0xff]
        %v551 = vld [vmem:[%s4 + $0x10] sm:$0xff]
        %v552 = vld [vmem:[%s4 + $0x18] sm:$0xff]
        %v553 = vld [vmem:[%s5] sm:$0xff]
        %v554 = vld [vmem:[%s5 + $0x8] sm:$0xff]
        %v555 = vld [vmem:[%s5 + $0x10] sm:$0xff]
        %v556 = vld [vmem:[%s5 + $0x18] sm:$0xff]
        %v557 = vadd.f32 %v541, %v542
        %558 = vadd.xlane.f32.xlu0 %v557
        %v559 = vpop.xlane.xlu0 %558
        %v560 = vadd.f32 %v543, %v544
        %561 = vadd.xlane.f32.xlu0 %v560
        %v562 = vpop.xlane.xlu0 %561
        %v563 = vadd.f32 %v545, %v546
        %564 = vadd.xlane.f32.xlu0 %v563
        %v565 = vpop.xlane.xlu0 %564
        %v566 = vadd.f32 %v547, %v548
        %567 = vadd.xlane.f32.xlu0 %v566
        %v568 = vpop.xlane.xlu0 %567
        %vm569 = vcmask 261120
        %v571 = vsel %vm569, %v529, 0
        %v574 = vsel %vm569, %v530, 0
        %v577 = vsel %vm569, %v531, 0
        %v580 = vsel %vm569, %v532, 0
        %582 = vmatprep.subr.mxu0 0.0
        %583 = vmatpush1.msra.mxu0 0.0
        %584 = vmatprep.subr.mxu0 0.0
        %585 = vmatpush1.msra.mxu0 0.0
        %586 = vmatprep.subr.mxu0 0.0
        %587 = vmatpush1.msra.mxu0 0.0
        %588 = vmatprep.subr.mxu0 0.0
        %589 = vmatpush1.msra.mxu0 0.0
        %590 = vmatprep.subr.mxu0 0.0
        %591 = vmatpush1.msra.mxu0 0.0
        %592 = vmatprep.subr.mxu0 0.0
        %593 = vmatpush1.msra.mxu0 0.0
        %594 = vmatprep.subr.mxu0 0.0
        %595 = vmatpush1.msra.mxu0 0.0
        %596 = vmatprep.subr.mxu0 0.0
        %597 = vmatpush1.msra.mxu0 0.0
        %598 = vmatprep.subr.mxu0 0.0
        %599 = vmatpush1.msra.mxu0 0.0
        %600 = vmatprep.subr.mxu0 0.0
        %601 = vmatpush1.msra.mxu0 0.0
        %602 = vmatprep.subr.mxu0 0.0
        %603 = vmatpush1.msra.mxu0 0.0
        %604 = vmatprep.subr.mxu0 0.0
        %605 = vmatpush1.msra.mxu0 0.0
        %606 = vmatprep.subr.mxu0 0.0
        %607 = vmatpush1.msra.mxu0 %v568
        %608 = vmatprep.subr.mxu0 0.0
        %609 = vmatpush1.msra.mxu0 %v565
        %610 = vmatprep.subr.mxu0 0.0
        %611 = vmatpush1.msra.mxu0 %v562
        %612 = vmatprep.subr.mxu0 0.0
        %613 = vmatpush1.msra.mxu0 %v559
        %614 = vmatprep.subr.mxu0 0.0
        %615 = vmatpush2.msra.mxu0 0.0
        %616 = vmatprep.subr.mxu0 0.0
        %617 = vmatpush2.msra.mxu0 0.0
        %618 = vmatprep.subr.mxu0 0.0
        %619 = vmatpush2.msra.mxu0 0.0
        %620 = vmatprep.subr.mxu0 0.0
        %621 = vmatpush2.msra.mxu0 0.0
        %622 = vmatprep.subr.mxu0 0.0
        %623 = vmatpush2.msra.mxu0 0.0
        %624 = vmatprep.subr.mxu0 0.0
        %625 = vmatpush2.msra.mxu0 0.0
        %626 = vmatprep.subr.mxu0 0.0
        %627 = vmatpush2.msra.mxu0 0.0
        %628 = vmatprep.subr.mxu0 0.0
        %629 = vmatpush2.msra.mxu0 0.0
        %630 = vmatprep.subr.mxu0 0.0
        %631 = vmatpush2.msra.mxu0 0.0
        %632 = vmatprep.subr.mxu0 0.0
        %633 = vmatpush2.msra.mxu0 0.0
        %634 = vmatprep.subr.mxu0 0.0
        %635 = vmatpush2.msra.mxu0 0.0
        %636 = vmatprep.subr.mxu0 0.0
        %637 = vmatpush2.msra.mxu0 0.0
        %638 = vmatprep.subr.mxu0 0.0
        %639 = vmatpush2.msra.mxu0 0.0
        %640 = vmatprep.subr.mxu0 0.0
        %641 = vmatpush2.msra.mxu0 0.0
        %642 = vmatprep.subr.mxu0 0.0
        %643 = vmatpush2.msra.mxu0 0.0
        %644 = vmatprep.subr.mxu0 0.0
        %645 = vmatpush2.msra.mxu0 0.0
        %646 = vmatprep.mubr.f32.mxu0 0.0
        %647 = vmatmul.mubr.f32.gmra.mxu0 %v571
        %v648 = vpop.f32.mrf.mxu0
        %v649 = vadd.f32 0.0, %v648
        %v650 = vpop.f32.mrf.mxu0
        %651 = vmatprep.mubr.f32.mxu0 0.0
        %652 = vmatmul.mubr.f32.gmra.mxu0 %v574
        %v653 = vpop.f32.mrf.mxu0
        %v654 = vadd.f32 0.0, %v653
        %v655 = vpop.f32.mrf.mxu0
        %656 = vmatprep.mubr.f32.mxu0 0.0
        %657 = vmatmul.mubr.f32.gmra.mxu0 %v577
        %v658 = vpop.f32.mrf.mxu0
        %v659 = vadd.f32 0.0, %v658
        %v660 = vpop.f32.mrf.mxu0
        %661 = vmatprep.mubr.f32.mxu0 0.0
        %662 = vmatmul.mubr.f32.gmra.mxu0 %v580
        %v663 = vpop.f32.mrf.mxu0
        %v664 = vadd.f32 0.0, %v663
        %v665 = vpop.f32.mrf.mxu0
        %666 = vdwg.mxu0
        %v667 = vmul.f32 %v649, 0.00024414063
        %v668 = vmul.f32 %v654, 0.00024414063
        %v669 = vmul.f32 %v659, 0.00024414063
        %v670 = vmul.f32 %v664, 0.00024414063
        %672 = vset.pattern.permute.xlu0 0
        %673 = vperm.xlu0 %672, %v667
        %v674 = vpop.permute.xlu0 %673
        %677 = vset.pattern.permute.xlu0 0
        %678 = vperm.xlu0 %677, %v668
        %v679 = vpop.permute.xlu0 %678
        %682 = vset.pattern.permute.xlu0 0
        %683 = vperm.xlu0 %682, %v669
        %v684 = vpop.permute.xlu0 %683
        %687 = vset.pattern.permute.xlu0 0
        %688 = vperm.xlu0 %687, %v670
        %v689 = vpop.permute.xlu0 %688
        %v691 = vsub.f32 %v541, %v674
        %v692 = vsub.f32 %v542, %v674
        %v693 = vsub.f32 %v543, %v679
        %v694 = vsub.f32 %v544, %v679
        %v695 = vsub.f32 %v545, %v684
        %v696 = vsub.f32 %v546, %v684
        %v697 = vsub.f32 %v547, %v689
        %v698 = vsub.f32 %v548, %v689
        %v699 = vmul.f32 %v691, %v691
        %v700 = vmul.f32 %v692, %v692
        %v701 = vmul.f32 %v693, %v693
        %v702 = vmul.f32 %v694, %v694
        %v703 = vmul.f32 %v695, %v695
        %v704 = vmul.f32 %v696, %v696
        %v705 = vmul.f32 %v697, %v697
        %v706 = vmul.f32 %v698, %v698
        %v707 = vadd.f32 %v699, %v700
        %708 = vadd.xlane.f32.xlu0 %v707
        %v709 = vpop.xlane.xlu0 %708
        %v710 = vadd.f32 %v701, %v702
        %711 = vadd.xlane.f32.xlu0 %v710
        %v712 = vpop.xlane.xlu0 %711
        %v713 = vadd.f32 %v703, %v704
        %714 = vadd.xlane.f32.xlu0 %v713
        %v715 = vpop.xlane.xlu0 %714
        %v716 = vadd.f32 %v705, %v706
        %717 = vadd.xlane.f32.xlu0 %v716
        %v718 = vpop.xlane.xlu0 %717
        %719 = vmatprep.subr.mxu0 0.0
        %720 = vmatpush1.msra.mxu0 0.0
        %721 = vmatprep.subr.mxu0 0.0
        %722 = vmatpush1.msra.mxu0 0.0
        %723 = vmatprep.subr.mxu0 0.0
        %724 = vmatpush1.msra.mxu0 0.0
        %725 = vmatprep.subr.mxu0 0.0
        %726 = vmatpush1.msra.mxu0 0.0
        %727 = vmatprep.subr.mxu0 0.0
        %728 = vmatpush1.msra.mxu0 0.0
        %729 = vmatprep.subr.mxu0 0.0
        %730 = vmatpush1.msra.mxu0 0.0
        %731 = vmatprep.subr.mxu0 0.0
        %732 = vmatpush1.msra.mxu0 0.0
        %733 = vmatprep.subr.mxu0 0.0
        %734 = vmatpush1.msra.mxu0 0.0
        %735 = vmatprep.subr.mxu0 0.0
        %736 = vmatpush1.msra.mxu0 0.0
        %737 = vmatprep.subr.mxu0 0.0
        %738 = vmatpush1.msra.mxu0 0.0
        %739 = vmatprep.subr.mxu0 0.0
        %740 = vmatpush1.msra.mxu0 0.0
        %741 = vmatprep.subr.mxu0 0.0
        %742 = vmatpush1.msra.mxu0 0.0
        %743 = vmatprep.subr.mxu0 0.0
        %744 = vmatpush1.msra.mxu0 %v718
        %745 = vmatprep.subr.mxu0 0.0
        %746 = vmatpush1.msra.mxu0 %v715
        %747 = vmatprep.subr.mxu0 0.0
        %748 = vmatpush1.msra.mxu0 %v712
        %749 = vmatprep.subr.mxu0 0.0
        %750 = vmatpush1.msra.mxu0 %v709
        %751 = vmatprep.subr.mxu0 0.0
        %752 = vmatpush2.msra.mxu0 0.0
        %753 = vmatprep.subr.mxu0 0.0
        %754 = vmatpush2.msra.mxu0 0.0
        %755 = vmatprep.subr.mxu0 0.0
        %756 = vmatpush2.msra.mxu0 0.0
        %757 = vmatprep.subr.mxu0 0.0
        %758 = vmatpush2.msra.mxu0 0.0
        %759 = vmatprep.subr.mxu0 0.0
        %760 = vmatpush2.msra.mxu0 0.0
        %761 = vmatprep.subr.mxu0 0.0
        %762 = vmatpush2.msra.mxu0 0.0
        %763 = vmatprep.subr.mxu0 0.0
        %764 = vmatpush2.msra.mxu0 0.0
        %765 = vmatprep.subr.mxu0 0.0
        %766 = vmatpush2.msra.mxu0 0.0
        %767 = vmatprep.subr.mxu0 0.0
        %768 = vmatpush2.msra.mxu0 0.0
        %769 = vmatprep.subr.mxu0 0.0
        %770 = vmatpush2.msra.mxu0 0.0
        %771 = vmatprep.subr.mxu0 0.0
        %772 = vmatpush2.msra.mxu0 0.0
        %773 = vmatprep.subr.mxu0 0.0
        %774 = vmatpush2.msra.mxu0 0.0
        %775 = vmatprep.subr.mxu0 0.0
        %776 = vmatpush2.msra.mxu0 0.0
        %777 = vmatprep.subr.mxu0 0.0
        %778 = vmatpush2.msra.mxu0 0.0
        %779 = vmatprep.subr.mxu0 0.0
        %780 = vmatpush2.msra.mxu0 0.0
        %781 = vmatprep.subr.mxu0 0.0
        %782 = vmatpush2.msra.mxu0 0.0
        %783 = vmatprep.mubr.f32.mxu0 0.0
        %784 = vmatmul.mubr.f32.gmra.mxu0 %v571
        %v785 = vpop.f32.mrf.mxu0
        %v786 = vadd.f32 0.0, %v785
        %v787 = vpop.f32.mrf.mxu0
        %788 = vmatprep.mubr.f32.mxu0 0.0
        %789 = vmatmul.mubr.f32.gmra.mxu0 %v574
        %v790 = vpop.f32.mrf.mxu0
        %v791 = vadd.f32 0.0, %v790
        %v792 = vpop.f32.mrf.mxu0
        %793 = vmatprep.mubr.f32.mxu0 0.0
        %794 = vmatmul.mubr.f32.gmra.mxu0 %v577
        %v795 = vpop.f32.mrf.mxu0
        %v796 = vadd.f32 0.0, %v795
        %v797 = vpop.f32.mrf.mxu0
        %798 = vmatprep.mubr.f32.mxu0 0.0
        %799 = vmatmul.mubr.f32.gmra.mxu0 %v580
        %v800 = vpop.f32.mrf.mxu0
        %v801 = vadd.f32 0.0, %v800
        %v802 = vpop.f32.mrf.mxu0
        %803 = vdwg.mxu0
        %v804 = vmul.f32 %v786, 0.00024414063
        %v805 = vmul.f32 %v791, 0.00024414063
        %v806 = vmul.f32 %v796, 0.00024414063
        %v807 = vmul.f32 %v801, 0.00024414063
        %v808 = vadd.f32 %v804, 1e-05
        %v809 = vadd.f32 %v805, 1e-05
        %v810 = vadd.f32 %v806, 1e-05
        %v811 = vadd.f32 %v807, 1e-05
        %v812 = vrsqrt.pop %v808
        %v813 = vrsqrt.pop %v809
        %v814 = vrsqrt.pop %v810
        %v815 = vrsqrt.pop %v811
        %v816 = vmul.f32 %v812, %v549
        %v817 = vmul.f32 %v813, %v550
        %v818 = vmul.f32 %v814, %v551
        %v819 = vmul.f32 %v815, %v552
        %821 = vset.pattern.permute.xlu0 0
        %822 = vperm.xlu0 %821, %v816
        %v823 = vpop.permute.xlu0 %822
        %826 = vset.pattern.permute.xlu0 0
        %827 = vperm.xlu0 %826, %v817
        %v828 = vpop.permute.xlu0 %827
        %831 = vset.pattern.permute.xlu0 0
        %832 = vperm.xlu0 %831, %v818
        %v833 = vpop.permute.xlu0 %832
        %836 = vset.pattern.permute.xlu0 0
        %837 = vperm.xlu0 %836, %v819
        %v838 = vpop.permute.xlu0 %837
        %v840 = vmul.f32 %v691, %v823
        %v841 = vmul.f32 %v692, %v823
        %v842 = vmul.f32 %v693, %v828
        %v843 = vmul.f32 %v694, %v828
        %v844 = vmul.f32 %v695, %v833
        %v845 = vmul.f32 %v696, %v833
        %v846 = vmul.f32 %v697, %v838
        %v847 = vmul.f32 %v698, %v838
        %849 = vset.pattern.permute.xlu0 0
        %850 = vperm.xlu0 %849, %v553
        %v851 = vpop.permute.xlu0 %850
        %854 = vset.pattern.permute.xlu0 0
        %855 = vperm.xlu0 %854, %v554
        %v856 = vpop.permute.xlu0 %855
        %859 = vset.pattern.permute.xlu0 0
        %860 = vperm.xlu0 %859, %v555
        %v861 = vpop.permute.xlu0 %860
        %864 = vset.pattern.permute.xlu0 0
        %865 = vperm.xlu0 %864, %v556
        %v866 = vpop.permute.xlu0 %865
        %v868 = vadd.f32 %v840, %v851
        %v869 = vadd.f32 %v841, %v851
        %v870 = vadd.f32 %v842, %v856
        %v871 = vadd.f32 %v843, %v856
        %v872 = vadd.f32 %v844, %v861
        %v873 = vadd.f32 %v845, %v861
        %v874 = vadd.f32 %v846, %v866
        %v875 = vadd.f32 %v847, %v866
        %v876 = vmax.f32 %v868, 0.0
        %v877 = vmax.f32 %v869, 0.0
        %v878 = vmax.f32 %v870, 0.0
        %v879 = vmax.f32 %v871, 0.0
        %v880 = vmax.f32 %v872, 0.0
        %v881 = vmax.f32 %v873, 0.0
        %v882 = vmax.f32 %v874, 0.0
        %v883 = vmax.f32 %v875, 0.0
        %888 = vrot.lane.b32.xlu0 %v877, 17
        %v889 = vpop.permute.xlu0 %888
        %890 = vrot.lane.b32.xlu0 %v879, 17
        %v891 = vpop.permute.xlu0 %890
        %892 = vrot.lane.b32.xlu0 %v881, 17
        %v893 = vpop.permute.xlu0 %892
        %894 = vrot.lane.b32.xlu0 %v883, 17
        %v895 = vpop.permute.xlu0 %894
        %904 = vrot.lane.b32.xlu0 %v876, 17
        %v905 = vpop.permute.xlu0 %904
        %906 = vrot.lane.b32.xlu0 %v878, 17
        %v907 = vpop.permute.xlu0 %906
        %908 = vrot.lane.b32.xlu0 %v880, 17
        %v909 = vpop.permute.xlu0 %908
        %910 = vrot.lane.b32.xlu0 %v882, 17
        %v911 = vpop.permute.xlu0 %910
        %vm912 = vcmask 138240
        %v913 = vsel %vm912, %v905, %v889
        %v914 = vsel %vm912, %v907, %v891
        %v915 = vsel %vm912, %v909, %v893
        %v916 = vsel %vm912, %v911, %v895
        %v925 = vsel %vm912, %v889, %v905
        %v926 = vsel %vm912, %v891, %v907
        %v927 = vsel %vm912, %v893, %v909
        %v928 = vsel %vm912, %v895, %v911
        %v929 = vlaneseq
        %v930 = vshrl.u32 %v929, 7
        %v931 = vsub.s32 0, %v930
        %v932 = vrot.slane %v525, %v931
        %v933 = vlaneseq
        %v934 = vshrl.u32 %v933, 7
        %v935 = vsub.s32 0, %v934
        %v936 = vrot.slane %v526, %v935
        %v937 = vmul.f32 %v925, %v932
        %v938 = vmul.f32 %v913, %v936
        %v939 = vmul.f32 %v926, %v932
        %v940 = vmul.f32 %v914, %v936
        %v941 = vmul.f32 %v927, %v932
        %v942 = vmul.f32 %v915, %v936
        %v943 = vmul.f32 %v928, %v932
        %v944 = vmul.f32 %v916, %v936
        %945 = vst [vmem:[#allocation2] sm:$0xff] %v937
        %946 = vst [vmem:[#allocation2 + $0x8] sm:$0xff] %v938
        %947 = vst [vmem:[#allocation2 + $0x10] sm:$0xff] %v939
        %948 = vst [vmem:[#allocation2 + $0x18] sm:$0xff] %v940
        %949 = vst [vmem:[#allocation2 + $0x20] sm:$0xff] %v941
        %950 = vst [vmem:[#allocation2 + $0x28] sm:$0xff] %v942
        %951 = vst [vmem:[#allocation2 + $0x30] sm:$0xff] %v943
        %952 = vst [vmem:[#allocation2 + $0x38] sm:$0xff] %v944
        %953 = vrot.lane.b32.xlu0 %v877, 16
        %v954 = vpop.permute.xlu0 %953
        %955 = vrot.lane.b32.xlu0 %v879, 16
        %v956 = vpop.permute.xlu0 %955
        %957 = vrot.lane.b32.xlu0 %v881, 16
        %v958 = vpop.permute.xlu0 %957
        %959 = vrot.lane.b32.xlu0 %v883, 16
        %v960 = vpop.permute.xlu0 %959
        %965 = vrot.lane.b32.xlu0 %v876, 16
        %v966 = vpop.permute.xlu0 %965
        %967 = vrot.lane.b32.xlu0 %v878, 16
        %v968 = vpop.permute.xlu0 %967
        %969 = vrot.lane.b32.xlu0 %v880, 16
        %v970 = vpop.permute.xlu0 %969
        %971 = vrot.lane.b32.xlu0 %v882, 16
        %v972 = vpop.permute.xlu0 %971
        %vm973 = vcmask 130048
        %v974 = vsel %vm973, %v966, %v954
        %v975 = vsel %vm973, %v968, %v956
        %v976 = vsel %vm973, %v970, %v958
        %v977 = vsel %vm973, %v972, %v960
        %v986 = vsel %vm973, %v954, %v966
        %v987 = vsel %vm973, %v956, %v968
        %v988 = vsel %vm973, %v958, %v970
        %v989 = vsel %vm973, %v960, %v972
        %v990 = vlaneseq
        %v991 = vshrl.u32 %v990, 7
        %v992 = vsub.s32 1, %v991
        %v993 = vrot.slane %v525, %v992
        %v994 = vlaneseq
        %v995 = vshrl.u32 %v994, 7
        %v996 = vsub.s32 1, %v995
        %v997 = vrot.slane %v526, %v996
        %v998 = vmul.f32 %v986, %v993
        %v999 = vmul.f32 %v974, %v997
        %v1000 = vmul.f32 %v987, %v993
        %v1001 = vmul.f32 %v975, %v997
        %v1002 = vmul.f32 %v988, %v993
        %v1003 = vmul.f32 %v976, %v997
        %v1004 = vmul.f32 %v989, %v993
        %v1005 = vmul.f32 %v977, %v997
        %1006 = vst [vmem:[#allocation2 + $0x40] sm:$0xff] %v998
        %1007 = vst [vmem:[#allocation2 + $0x48] sm:$0xff] %v999
        %1008 = vst [vmem:[#allocation2 + $0x50] sm:$0xff] %v1000
        %1009 = vst [vmem:[#allocation2 + $0x58] sm:$0xff] %v1001
        %1010 = vst [vmem:[#allocation2 + $0x60] sm:$0xff] %v1002
        %1011 = vst [vmem:[#allocation2 + $0x68] sm:$0xff] %v1003
        %1012 = vst [vmem:[#allocation2 + $0x70] sm:$0xff] %v1004
        %1013 = vst [vmem:[#allocation2 + $0x78] sm:$0xff] %v1005
        %1014 = vrot.lane.b32.xlu0 %v877, 15
        %v1015 = vpop.permute.xlu0 %1014
        %1016 = vrot.lane.b32.xlu0 %v879, 15
        %v1017 = vpop.permute.xlu0 %1016
        %1018 = vrot.lane.b32.xlu0 %v881, 15
        %v1019 = vpop.permute.xlu0 %1018
        %1020 = vrot.lane.b32.xlu0 %v883, 15
        %v1021 = vpop.permute.xlu0 %1020
        %1026 = vrot.lane.b32.xlu0 %v876, 15
        %v1027 = vpop.permute.xlu0 %1026
        %1028 = vrot.lane.b32.xlu0 %v878, 15
        %v1029 = vpop.permute.xlu0 %1028
        %1030 = vrot.lane.b32.xlu0 %v880, 15
        %v1031 = vpop.permute.xlu0 %1030
        %1032 = vrot.lane.b32.xlu0 %v882, 15
        %v1033 = vpop.permute.xlu0 %1032
        %vm1034 = vcmask 121856
        %v1035 = vsel %vm1034, %v1027, %v1015
        %v1036 = vsel %vm1034, %v1029, %v1017
        %v1037 = vsel %vm1034, %v1031, %v1019
        %v1038 = vsel %vm1034, %v1033, %v1021
        %v1047 = vsel %vm1034, %v1015, %v1027
        %v1048 = vsel %vm1034, %v1017, %v1029
        %v1049 = vsel %vm1034, %v1019, %v1031
        %v1050 = vsel %vm1034, %v1021, %v1033
        %v1051 = vlaneseq
        %v1052 = vshrl.u32 %v1051, 7
        %v1053 = vsub.s32 2, %v1052
        %v1054 = vrot.slane %v525, %v1053
        %v1055 = vlaneseq
        %v1056 = vshrl.u32 %v1055, 7
        %v1057 = vsub.s32 2, %v1056
        %v1058 = vrot.slane %v526, %v1057
        %v1059 = vmul.f32 %v1047, %v1054
        %v1060 = vmul.f32 %v1035, %v1058
        %v1061 = vmul.f32 %v1048, %v1054
        %v1062 = vmul.f32 %v1036, %v1058
        %v1063 = vmul.f32 %v1049, %v1054
        %v1064 = vmul.f32 %v1037, %v1058
        %v1065 = vmul.f32 %v1050, %v1054
        %v1066 = vmul.f32 %v1038, %v1058
        %1067 = vst [vmem:[#allocation2 + $0x80] sm:$0xff] %v1059
        %1068 = vst [vmem:[#allocation2 + $0x88] sm:$0xff] %v1060
        %1069 = vst [vmem:[#allocation2 + $0x90] sm:$0xff] %v1061
        %1070 = vst [vmem:[#allocation2 + $0x98] sm:$0xff] %v1062
        %1071 = vst [vmem:[#allocation2 + $0xa0] sm:$0xff] %v1063
        %1072 = vst [vmem:[#allocation2 + $0xa8] sm:$0xff] %v1064
        %1073 = vst [vmem:[#allocation2 + $0xb0] sm:$0xff] %v1065
        %1074 = vst [vmem:[#allocation2 + $0xb8] sm:$0xff] %v1066
        %1075 = vrot.lane.b32.xlu0 %v877, 1
        %v1076 = vpop.permute.xlu0 %1075
        %1077 = vrot.lane.b32.xlu0 %v879, 1
        %v1078 = vpop.permute.xlu0 %1077
        %1079 = vrot.lane.b32.xlu0 %v881, 1
        %v1080 = vpop.permute.xlu0 %1079
        %1081 = vrot.lane.b32.xlu0 %v883, 1
        %v1082 = vpop.permute.xlu0 %1081
        %1087 = vrot.lane.b32.xlu0 %v876, 1
        %v1088 = vpop.permute.xlu0 %1087
        %1089 = vrot.lane.b32.xlu0 %v878, 1
        %v1090 = vpop.permute.xlu0 %1089
        %1091 = vrot.lane.b32.xlu0 %v880, 1
        %v1092 = vpop.permute.xlu0 %1091
        %1093 = vrot.lane.b32.xlu0 %v882, 1
        %v1094 = vpop.permute.xlu0 %1093
        %vm1095 = vcmask 7168
        %v1096 = vsel %vm1095, %v1088, %v1076
        %v1097 = vsel %vm1095, %v1090, %v1078
        %v1098 = vsel %vm1095, %v1092, %v1080
        %v1099 = vsel %vm1095, %v1094, %v1082
        %v1108 = vsel %vm1095, %v1076, %v1088
        %v1109 = vsel %vm1095, %v1078, %v1090
        %v1110 = vsel %vm1095, %v1080, %v1092
        %v1111 = vsel %vm1095, %v1082, %v1094
        %v1112 = vlaneseq
        %v1113 = vshrl.u32 %v1112, 7
        %v1114 = vsub.s32 3, %v1113
        %v1115 = vrot.slane %v525, %v1114
        %v1116 = vlaneseq
        %v1117 = vshrl.u32 %v1116, 7
        %v1118 = vsub.s32 3, %v1117
        %v1119 = vrot.slane %v526, %v1118
        %v1120 = vmul.f32 %v1108, %v1115
        %v1121 = vmul.f32 %v1096, %v1119
        %v1122 = vmul.f32 %v1109, %v1115
        %v1123 = vmul.f32 %v1097, %v1119
        %v1124 = vmul.f32 %v1110, %v1115
        %v1125 = vmul.f32 %v1098, %v1119
        %v1126 = vmul.f32 %v1111, %v1115
        %v1127 = vmul.f32 %v1099, %v1119
        %1128 = vst [vmem:[#allocation2 + $0xc0] sm:$0xff] %v1120
        %1129 = vst [vmem:[#allocation2 + $0xc8] sm:$0xff] %v1121
        %1130 = vst [vmem:[#allocation2 + $0xd0] sm:$0xff] %v1122
        %1131 = vst [vmem:[#allocation2 + $0xd8] sm:$0xff] %v1123
        %1132 = vst [vmem:[#allocation2 + $0xe0] sm:$0xff] %v1124
        %1133 = vst [vmem:[#allocation2 + $0xe8] sm:$0xff] %v1125
        %1134 = vst [vmem:[#allocation2 + $0xf0] sm:$0xff] %v1126
        %1135 = vst [vmem:[#allocation2 + $0xf8] sm:$0xff] %v1127
        %1136 = vst [vmem:[#allocation2 + $0x100] sm:$0xff] %v876
        %1137 = vst [vmem:[#allocation2 + $0x108] sm:$0xff] %v877
        %1138 = vst [vmem:[#allocation2 + $0x110] sm:$0xff] %v878
        %1139 = vst [vmem:[#allocation2 + $0x118] sm:$0xff] %v879
        %1140 = vst [vmem:[#allocation2 + $0x120] sm:$0xff] %v880
        %1141 = vst [vmem:[#allocation2 + $0x128] sm:$0xff] %v881
        %1142 = vst [vmem:[#allocation2 + $0x130] sm:$0xff] %v882
        %1143 = vst [vmem:[#allocation2 + $0x138] sm:$0xff] %v883
        %1144 = vrot.lane.b32.xlu0 %v876, 127
        %v1145 = vpop.permute.xlu0 %1144
        %1146 = vrot.lane.b32.xlu0 %v877, 127
        %v1147 = vpop.permute.xlu0 %1146
        %1148 = vrot.lane.b32.xlu0 %v878, 127
        %v1149 = vpop.permute.xlu0 %1148
        %1150 = vrot.lane.b32.xlu0 %v879, 127
        %v1151 = vpop.permute.xlu0 %1150
        %1152 = vrot.lane.b32.xlu0 %v880, 127
        %v1153 = vpop.permute.xlu0 %1152
        %1154 = vrot.lane.b32.xlu0 %v881, 127
        %v1155 = vpop.permute.xlu0 %1154
        %1156 = vrot.lane.b32.xlu0 %v882, 127
        %v1157 = vpop.permute.xlu0 %1156
        %1158 = vrot.lane.b32.xlu0 %v883, 127
        %v1159 = vpop.permute.xlu0 %1158
        %vm1160 = vcmask 1039360
        %v1161 = vsel %vm1160, %v1145, %v1147
        %v1162 = vsel %vm1160, %v1149, %v1151
        %v1163 = vsel %vm1160, %v1153, %v1155
        %v1164 = vsel %vm1160, %v1157, %v1159
        %v1177 = vsel %vm1160, %v1147, %v1145
        %v1178 = vsel %vm1160, %v1151, %v1149
        %v1179 = vsel %vm1160, %v1155, %v1153
        %v1180 = vsel %vm1160, %v1159, %v1157
        %v1181 = vlaneseq
        %v1182 = vshrl.u32 %v1181, 7
        %v1183 = vsub.s32 5, %v1182
        %v1184 = vrot.slane %v525, %v1183
        %v1185 = vlaneseq
        %v1186 = vshrl.u32 %v1185, 7
        %v1187 = vsub.s32 5, %v1186
        %v1188 = vrot.slane %v526, %v1187
        %v1189 = vmul.f32 %v1161, %v1184
        %v1190 = vmul.f32 %v1177, %v1188
        %v1191 = vmul.f32 %v1162, %v1184
        %v1192 = vmul.f32 %v1178, %v1188
        %v1193 = vmul.f32 %v1163, %v1184
        %v1194 = vmul.f32 %v1179, %v1188
        %v1195 = vmul.f32 %v1164, %v1184
        %v1196 = vmul.f32 %v1180, %v1188
        %1197 = vst [vmem:[#allocation2 + $0x140] sm:$0xff] %v1189
        %1198 = vst [vmem:[#allocation2 + $0x148] sm:$0xff] %v1190
        %1199 = vst [vmem:[#allocation2 + $0x150] sm:$0xff] %v1191
        %1200 = vst [vmem:[#allocation2 + $0x158] sm:$0xff] %v1192
        %1201 = vst [vmem:[#allocation2 + $0x160] sm:$0xff] %v1193
        %1202 = vst [vmem:[#allocation2 + $0x168] sm:$0xff] %v1194
        %1203 = vst [vmem:[#allocation2 + $0x170] sm:$0xff] %v1195
        %1204 = vst [vmem:[#allocation2 + $0x178] sm:$0xff] %v1196
        %1205 = vrot.lane.b32.xlu0 %v876, 113
        %v1206 = vpop.permute.xlu0 %1205
        %1207 = vrot.lane.b32.xlu0 %v877, 113
        %v1208 = vpop.permute.xlu0 %1207
        %1209 = vrot.lane.b32.xlu0 %v878, 113
        %v1210 = vpop.permute.xlu0 %1209
        %1211 = vrot.lane.b32.xlu0 %v879, 113
        %v1212 = vpop.permute.xlu0 %1211
        %1213 = vrot.lane.b32.xlu0 %v880, 113
        %v1214 = vpop.permute.xlu0 %1213
        %1215 = vrot.lane.b32.xlu0 %v881, 113
        %v1216 = vpop.permute.xlu0 %1215
        %1217 = vrot.lane.b32.xlu0 %v882, 113
        %v1218 = vpop.permute.xlu0 %1217
        %1219 = vrot.lane.b32.xlu0 %v883, 113
        %v1220 = vpop.permute.xlu0 %1219
        %vm1221 = vcmask 924672
        %v1222 = vsel %vm1221, %v1206, %v1208
        %v1223 = vsel %vm1221, %v1210, %v1212
        %v1224 = vsel %vm1221, %v1214, %v1216
        %v1225 = vsel %vm1221, %v1218, %v1220
        %v1238 = vsel %vm1221, %v1208, %v1206
        %v1239 = vsel %vm1221, %v1212, %v1210
        %v1240 = vsel %vm1221, %v1216, %v1214
        %v1241 = vsel %vm1221, %v1220, %v1218
        %v1242 = vlaneseq
        %v1243 = vshrl.u32 %v1242, 7
        %v1244 = vsub.s32 6, %v1243
        %v1245 = vrot.slane %v525, %v1244
        %v1246 = vlaneseq
        %v1247 = vshrl.u32 %v1246, 7
        %v1248 = vsub.s32 6, %v1247
        %v1249 = vrot.slane %v526, %v1248
        %v1250 = vmul.f32 %v1222, %v1245
        %v1251 = vmul.f32 %v1238, %v1249
        %v1252 = vmul.f32 %v1223, %v1245
        %v1253 = vmul.f32 %v1239, %v1249
        %v1254 = vmul.f32 %v1224, %v1245
        %v1255 = vmul.f32 %v1240, %v1249
        %v1256 = vmul.f32 %v1225, %v1245
        %v1257 = vmul.f32 %v1241, %v1249
        %1258 = vst [vmem:[#allocation2 + $0x180] sm:$0xff] %v1250
        %1259 = vst [vmem:[#allocation2 + $0x188] sm:$0xff] %v1251
        %1260 = vst [vmem:[#allocation2 + $0x190] sm:$0xff] %v1252
        %1261 = vst [vmem:[#allocation2 + $0x198] sm:$0xff] %v1253
        %1262 = vst [vmem:[#allocation2 + $0x1a0] sm:$0xff] %v1254
        %1263 = vst [vmem:[#allocation2 + $0x1a8] sm:$0xff] %v1255
        %1264 = vst [vmem:[#allocation2 + $0x1b0] sm:$0xff] %v1256
        %1265 = vst [vmem:[#allocation2 + $0x1b8] sm:$0xff] %v1257
        %1266 = vrot.lane.b32.xlu0 %v876, 112
        %v1267 = vpop.permute.xlu0 %1266
        %1268 = vrot.lane.b32.xlu0 %v877, 112
        %v1269 = vpop.permute.xlu0 %1268
        %1270 = vrot.lane.b32.xlu0 %v878, 112
        %v1271 = vpop.permute.xlu0 %1270
        %1272 = vrot.lane.b32.xlu0 %v879, 112
        %v1273 = vpop.permute.xlu0 %1272
        %1274 = vrot.lane.b32.xlu0 %v880, 112
        %v1275 = vpop.permute.xlu0 %1274
        %1276 = vrot.lane.b32.xlu0 %v881, 112
        %v1277 = vpop.permute.xlu0 %1276
        %1278 = vrot.lane.b32.xlu0 %v882, 112
        %v1279 = vpop.permute.xlu0 %1278
        %1280 = vrot.lane.b32.xlu0 %v883, 112
        %v1281 = vpop.permute.xlu0 %1280
        %vm1282 = vcmask 916480
        %v1283 = vsel %vm1282, %v1267, %v1269
        %v1284 = vsel %vm1282, %v1271, %v1273
        %v1285 = vsel %vm1282, %v1275, %v1277
        %v1286 = vsel %vm1282, %v1279, %v1281
        %v1299 = vsel %vm1282, %v1269, %v1267
        %v1300 = vsel %vm1282, %v1273, %v1271
        %v1301 = vsel %vm1282, %v1277, %v1275
        %v1302 = vsel %vm1282, %v1281, %v1279
        %v1303 = vlaneseq
        %v1304 = vshrl.u32 %v1303, 7
        %v1305 = vsub.s32 7, %v1304
        %v1306 = vrot.slane %v525, %v1305
        %v1307 = vlaneseq
        %v1308 = vshrl.u32 %v1307, 7
        %v1309 = vsub.s32 7, %v1308
        %v1310 = vrot.slane %v526, %v1309
        %v1311 = vmul.f32 %v1283, %v1306
        %v1312 = vmul.f32 %v1299, %v1310
        %v1313 = vmul.f32 %v1284, %v1306
        %v1314 = vmul.f32 %v1300, %v1310
        %v1315 = vmul.f32 %v1285, %v1306
        %v1316 = vmul.f32 %v1301, %v1310
        %v1317 = vmul.f32 %v1286, %v1306
        %v1318 = vmul.f32 %v1302, %v1310
        %1319 = vst [vmem:[#allocation2 + $0x1c0] sm:$0xff] %v1311
        %1320 = vst [vmem:[#allocation2 + $0x1c8] sm:$0xff] %v1312
        %1321 = vst [vmem:[#allocation2 + $0x1d0] sm:$0xff] %v1313
        %1322 = vst [vmem:[#allocation2 + $0x1d8] sm:$0xff] %v1314
        %1323 = vst [vmem:[#allocation2 + $0x1e0] sm:$0xff] %v1315
        %1324 = vst [vmem:[#allocation2 + $0x1e8] sm:$0xff] %v1316
        %1325 = vst [vmem:[#allocation2 + $0x1f0] sm:$0xff] %v1317
        %1326 = vst [vmem:[#allocation2 + $0x1f8] sm:$0xff] %v1318
        %1327 = vrot.lane.b32.xlu0 %v876, 111
        %v1328 = vpop.permute.xlu0 %1327
        %1329 = vrot.lane.b32.xlu0 %v877, 111
        %v1330 = vpop.permute.xlu0 %1329
        %1331 = vrot.lane.b32.xlu0 %v878, 111
        %v1332 = vpop.permute.xlu0 %1331
        %1333 = vrot.lane.b32.xlu0 %v879, 111
        %v1334 = vpop.permute.xlu0 %1333
        %1335 = vrot.lane.b32.xlu0 %v880, 111
        %v1336 = vpop.permute.xlu0 %1335
        %1337 = vrot.lane.b32.xlu0 %v881, 111
        %v1338 = vpop.permute.xlu0 %1337
        %1339 = vrot.lane.b32.xlu0 %v882, 111
        %v1340 = vpop.permute.xlu0 %1339
        %1341 = vrot.lane.b32.xlu0 %v883, 111
        %v1342 = vpop.permute.xlu0 %1341
        %vm1343 = vcmask 908288
        %v1344 = vsel %vm1343, %v1328, %v1330
        %v1345 = vsel %vm1343, %v1332, %v1334
        %v1346 = vsel %vm1343, %v1336, %v1338
        %v1347 = vsel %vm1343, %v1340, %v1342
        %v1360 = vsel %vm1343, %v1330, %v1328
        %v1361 = vsel %vm1343, %v1334, %v1332
        %v1362 = vsel %vm1343, %v1338, %v1336
        %v1363 = vsel %vm1343, %v1342, %v1340
        %v1364 = vlaneseq
        %v1365 = vshrl.u32 %v1364, 7
        %v1366 = vsub.s32 0, %v1365
        %v1367 = vrot.slane %v527, %v1366
        %v1368 = vlaneseq
        %v1369 = vshrl.u32 %v1368, 7
        %v1370 = vsub.s32 0, %v1369
        %v1371 = vrot.slane %v528, %v1370
        %v1372 = vmul.f32 %v1344, %v1367
        %v1373 = vmul.f32 %v1360, %v1371
        %v1374 = vmul.f32 %v1345, %v1367
        %v1375 = vmul.f32 %v1361, %v1371
        %v1376 = vmul.f32 %v1346, %v1367
        %v1377 = vmul.f32 %v1362, %v1371
        %v1378 = vmul.f32 %v1347, %v1367
        %v1379 = vmul.f32 %v1363, %v1371
        %1380 = vst [vmem:[#allocation2 + $0x200] sm:$0xff] %v1372
        %1381 = vst [vmem:[#allocation2 + $0x208] sm:$0xff] %v1373
        %1382 = vst [vmem:[#allocation2 + $0x210] sm:$0xff] %v1374
        %1383 = vst [vmem:[#allocation2 + $0x218] sm:$0xff] %v1375
        %1384 = vst [vmem:[#allocation2 + $0x220] sm:$0xff] %v1376
        %1385 = vst [vmem:[#allocation2 + $0x228] sm:$0xff] %v1377
        %1386 = vst [vmem:[#allocation2 + $0x230] sm:$0xff] %v1378
        %1387 = vst [vmem:[#allocation2 + $0x238] sm:$0xff] %v1379
        %v1388 = vld [vmem:[#allocation9] sm:$0xff]
        %v1389 = vld [vmem:[#allocation9 + $0x8] sm:$0xff]
        %v1390 = vld [vmem:[#allocation9 + $0x10] sm:$0xff]
        %v1391 = vld [vmem:[#allocation9 + $0x18] sm:$0xff]
        %v1392 = vld [vmem:[#allocation9 + $0x20] sm:$0xff]
        %v1393 = vld [vmem:[#allocation9 + $0x28] sm:$0xff]
        %v1394 = vld [vmem:[#allocation9 + $0x30] sm:$0xff]
        %v1395 = vld [vmem:[#allocation9 + $0x38] sm:$0xff]
        %v1396 = vld [vmem:[#allocation9 + $0x40] sm:$0xff]
        %v1397 = vld [vmem:[#allocation9 + $0x48] sm:$0xff]
        %v1398 = vld [vmem:[#allocation9 + $0x50] sm:$0xff]
        %v1399 = vld [vmem:[#allocation9 + $0x58] sm:$0xff]
        %v1400 = vld [vmem:[#allocation9 + $0x60] sm:$0xff]
        %v1401 = vld [vmem:[#allocation9 + $0x68] sm:$0xff]
        %v1402 = vld [vmem:[#allocation9 + $0x70] sm:$0xff]
        %v1403 = vld [vmem:[#allocation9 + $0x78] sm:$0xff]
        %v1404 = vld [vmem:[#allocation9 + $0x80] sm:$0xff]
        %v1405 = vld [vmem:[#allocation9 + $0x88] sm:$0xff]
        %v1406 = vld [vmem:[#allocation9 + $0x90] sm:$0xff]
        %v1407 = vld [vmem:[#allocation9 + $0x98] sm:$0xff]
        %v1408 = vld [vmem:[#allocation9 + $0xa0] sm:$0xff]
        %v1409 = vld [vmem:[#allocation9 + $0xa8] sm:$0xff]
        %v1410 = vld [vmem:[#allocation9 + $0xb0] sm:$0xff]
        %v1411 = vld [vmem:[#allocation9 + $0xb8] sm:$0xff]
        %v1412 = vld [vmem:[#allocation2] sm:$0xff]
        %v1413 = vld [vmem:[#allocation2 + $0x8] sm:$0xff]
        %v1414 = vld [vmem:[#allocation2 + $0x10] sm:$0xff]
        %v1415 = vld [vmem:[#allocation2 + $0x18] sm:$0xff]
        %v1416 = vld [vmem:[#allocation2 + $0x20] sm:$0xff]
        %v1417 = vld [vmem:[#allocation2 + $0x28] sm:$0xff]
        %v1418 = vld [vmem:[#allocation2 + $0x30] sm:$0xff]
        %v1419 = vld [vmem:[#allocation2 + $0x38] sm:$0xff]
        %v1420 = vld [vmem:[#allocation2 + $0x40] sm:$0xff]
        %v1421 = vld [vmem:[#allocation2 + $0x48] sm:$0xff]
        %v1422 = vld [vmem:[#allocation2 + $0x50] sm:$0xff]
        %v1423 = vld [vmem:[#allocation2 + $0x58] sm:$0xff]
        %v1424 = vld [vmem:[#allocation2 + $0x60] sm:$0xff]
        %v1425 = vld [vmem:[#allocation2 + $0x68] sm:$0xff]
        %v1426 = vld [vmem:[#allocation2 + $0x70] sm:$0xff]
        %v1427 = vld [vmem:[#allocation2 + $0x78] sm:$0xff]
        %v1428 = vld [vmem:[#allocation2 + $0x80] sm:$0xff]
        %v1429 = vld [vmem:[#allocation2 + $0x88] sm:$0xff]
        %v1430 = vld [vmem:[#allocation2 + $0x90] sm:$0xff]
        %v1431 = vld [vmem:[#allocation2 + $0x98] sm:$0xff]
        %v1432 = vld [vmem:[#allocation2 + $0xa0] sm:$0xff]
        %v1433 = vld [vmem:[#allocation2 + $0xa8] sm:$0xff]
        %v1434 = vld [vmem:[#allocation2 + $0xb0] sm:$0xff]
        %v1435 = vld [vmem:[#allocation2 + $0xb8] sm:$0xff]
        %v1436 = vld [vmem:[#allocation2 + $0xc0] sm:$0xff]
        %v1437 = vld [vmem:[#allocation2 + $0xc8] sm:$0xff]
        %v1438 = vld [vmem:[#allocation2 + $0xd0] sm:$0xff]
        %v1439 = vld [vmem:[#allocation2 + $0xd8] sm:$0xff]
        %v1440 = vld [vmem:[#allocation2 + $0xe0] sm:$0xff]
        %v1441 = vld [vmem:[#allocation2 + $0xe8] sm:$0xff]
        %v1442 = vld [vmem:[#allocation2 + $0xf0] sm:$0xff]
        %v1443 = vld [vmem:[#allocation2 + $0xf8] sm:$0xff]
        %v1444 = vld [vmem:[#allocation2 + $0x100] sm:$0xff]
        %v1445 = vld [vmem:[#allocation2 + $0x108] sm:$0xff]
        %v1446 = vld [vmem:[#allocation2 + $0x110] sm:$0xff]
        %v1447 = vld [vmem:[#allocation2 + $0x118] sm:$0xff]
        %v1448 = vld [vmem:[#allocation2 + $0x120] sm:$0xff]
        %v1449 = vld [vmem:[#allocation2 + $0x128] sm:$0xff]
        %v1450 = vld [vmem:[#allocation2 + $0x130] sm:$0xff]
        %v1451 = vld [vmem:[#allocation2 + $0x138] sm:$0xff]
        %v1452 = vld [vmem:[#allocation2 + $0x140] sm:$0xff]
        %v1453 = vld [vmem:[#allocation2 + $0x148] sm:$0xff]
        %v1454 = vld [vmem:[#allocation2 + $0x150] sm:$0xff]
        %v1455 = vld [vmem:[#allocation2 + $0x158] sm:$0xff]
        %v1456 = vld [vmem:[#allocation2 + $0x160] sm:$0xff]
        %v1457 = vld [vmem:[#allocation2 + $0x168] sm:$0xff]
        %v1458 = vld [vmem:[#allocation2 + $0x170] sm:$0xff]
        %v1459 = vld [vmem:[#allocation2 + $0x178] sm:$0xff]
        %v1460 = vld [vmem:[#allocation2 + $0x180] sm:$0xff]
        %v1461 = vld [vmem:[#allocation2 + $0x188] sm:$0xff]
        %v1462 = vld [vmem:[#allocation2 + $0x190] sm:$0xff]
        %v1463 = vld [vmem:[#allocation2 + $0x198] sm:$0xff]
        %v1464 = vld [vmem:[#allocation2 + $0x1a0] sm:$0xff]
        %v1465 = vld [vmem:[#allocation2 + $0x1a8] sm:$0xff]
        %v1466 = vld [vmem:[#allocation2 + $0x1b0] sm:$0xff]
        %v1467 = vld [vmem:[#allocation2 + $0x1b8] sm:$0xff]
        %v1468 = vld [vmem:[#allocation2 + $0x1c0] sm:$0xff]
        %v1469 = vld [vmem:[#allocation2 + $0x1c8] sm:$0xff]
        %v1470 = vld [vmem:[#allocation2 + $0x1d0] sm:$0xff]
        %v1471 = vld [vmem:[#allocation2 + $0x1d8] sm:$0xff]
        %v1472 = vld [vmem:[#allocation2 + $0x1e0] sm:$0xff]
        %v1473 = vld [vmem:[#allocation2 + $0x1e8] sm:$0xff]
        %v1474 = vld [vmem:[#allocation2 + $0x1f0] sm:$0xff]
        %v1475 = vld [vmem:[#allocation2 + $0x1f8] sm:$0xff]
        %v1476 = vld [vmem:[#allocation2 + $0x200] sm:$0xff]
        %v1477 = vld [vmem:[#allocation2 + $0x208] sm:$0xff]
        %v1478 = vld [vmem:[#allocation2 + $0x210] sm:$0xff]
        %v1479 = vld [vmem:[#allocation2 + $0x218] sm:$0xff]
        %v1480 = vld [vmem:[#allocation2 + $0x220] sm:$0xff]
        %v1481 = vld [vmem:[#allocation2 + $0x228] sm:$0xff]
        %v1482 = vld [vmem:[#allocation2 + $0x230] sm:$0xff]
        %v1483 = vld [vmem:[#allocation2 + $0x238] sm:$0xff]
        %v1484 = vld [vmem:[%s7] sm:$0xff]
        %v1485 = vld [vmem:[%s7 + $0x8] sm:$0xff]
        %v1486 = vld [vmem:[%s7 + $0x10] sm:$0xff]
        %v1487 = vld [vmem:[%s7 + $0x18] sm:$0xff]
        %v1488 = vld [vmem:[%s7 + $0x20] sm:$0xff]
        %v1489 = vld [vmem:[%s7 + $0x28] sm:$0xff]
        %v1490 = vld [vmem:[%s7 + $0x30] sm:$0xff]
        %v1491 = vld [vmem:[%s7 + $0x38] sm:$0xff]
        %1493 = vset.pattern.permute.xlu0 0
        %1494 = vperm.xlu0 %1493, %v1484
        %v1495 = vpop.permute.xlu0 %1494
        %1498 = vset.pattern.permute.xlu0 0
        %1499 = vperm.xlu0 %1498, %v1485
        %v1500 = vpop.permute.xlu0 %1499
        %1503 = vset.pattern.permute.xlu0 0
        %1504 = vperm.xlu0 %1503, %v1486
        %v1505 = vpop.permute.xlu0 %1504
        %1508 = vset.pattern.permute.xlu0 0
        %1509 = vperm.xlu0 %1508, %v1487
        %v1510 = vpop.permute.xlu0 %1509
        %1513 = vset.pattern.permute.xlu0 0
        %1514 = vperm.xlu0 %1513, %v1488
        %v1515 = vpop.permute.xlu0 %1514
        %1518 = vset.pattern.permute.xlu0 0
        %1519 = vperm.xlu0 %1518, %v1489
        %v1520 = vpop.permute.xlu0 %1519
        %1523 = vset.pattern.permute.xlu0 0
        %1524 = vperm.xlu0 %1523, %v1490
        %v1525 = vpop.permute.xlu0 %1524
        %1528 = vset.pattern.permute.xlu0 0
        %1529 = vperm.xlu0 %1528, %v1491
        %v1530 = vpop.permute.xlu0 %1529
        %v1533 = vsel %vm569, %v1390, 0
        %v1536 = vsel %vm569, %v1393, 0
        %v1539 = vsel %vm569, %v1396, 0
        %v1542 = vsel %vm569, %v1399, 0
        %v1545 = vsel %vm569, %v1402, 0
        %v1548 = vsel %vm569, %v1405, 0
        %v1551 = vsel %vm569, %v1408, 0
        %v1554 = vsel %vm569, %v1411, 0
        %1556 = vmatprep.subr.mxu0 %v1443
        %1557 = vmatpush1.msra.mxu0 %v1442
        %1558 = vmatprep.subr.mxu0 %v1441
        %1559 = vmatpush1.msra.mxu0 %v1440
        %1560 = vmatprep.subr.mxu0 %v1439
        %1561 = vmatpush1.msra.mxu0 %v1438
        %1562 = vmatprep.subr.mxu0 %v1437
        %1563 = vmatpush1.msra.mxu0 %v1436
        %1564 = vmatprep.subr.mxu0 %v1435
        %1565 = vmatpush1.msra.mxu0 %v1434
        %1566 = vmatprep.subr.mxu0 %v1433
        %1567 = vmatpush1.msra.mxu0 %v1432
        %1568 = vmatprep.subr.mxu0 %v1431
        %1569 = vmatpush1.msra.mxu0 %v1430
        %1570 = vmatprep.subr.mxu0 %v1429
        %1571 = vmatpush1.msra.mxu0 %v1428
        %1572 = vmatprep.subr.mxu0 %v1427
        %1573 = vmatpush1.msra.mxu0 %v1426
        %1574 = vmatprep.subr.mxu0 %v1425
        %1575 = vmatpush1.msra.mxu0 %v1424
        %1576 = vmatprep.subr.mxu0 %v1423
        %1577 = vmatpush1.msra.mxu0 %v1422
        %1578 = vmatprep.subr.mxu0 %v1421
        %1579 = vmatpush1.msra.mxu0 %v1420
        %1580 = vmatprep.subr.mxu0 %v1419
        %1581 = vmatpush1.msra.mxu0 %v1418
        %1582 = vmatprep.subr.mxu0 %v1417
        %1583 = vmatpush1.msra.mxu0 %v1416
        %1584 = vmatprep.subr.mxu0 %v1415
        %1585 = vmatpush1.msra.mxu0 %v1414
        %1586 = vmatprep.subr.mxu0 %v1413
        %1587 = vmatpush1.msra.mxu0 %v1412
        %1588 = vmatprep.subr.mxu0 %v1475
        %1589 = vmatpush2.msra.mxu0 %v1474
        %1590 = vmatprep.subr.mxu0 %v1473
        %1591 = vmatpush2.msra.mxu0 %v1472
        %1592 = vmatprep.subr.mxu0 %v1471
        %1593 = vmatpush2.msra.mxu0 %v1470
        %1594 = vmatprep.subr.mxu0 %v1469
        %1595 = vmatpush2.msra.mxu0 %v1468
        %1596 = vmatprep.subr.mxu0 %v1467
        %1597 = vmatpush2.msra.mxu0 %v1466
        %1598 = vmatprep.subr.mxu0 %v1465
        %1599 = vmatpush2.msra.mxu0 %v1464
        %1600 = vmatprep.subr.mxu0 %v1463
        %1601 = vmatpush2.msra.mxu0 %v1462
        %1602 = vmatprep.subr.mxu0 %v1461
        %1603 = vmatpush2.msra.mxu0 %v1460
        %1604 = vmatprep.subr.mxu0 %v1459
        %1605 = vmatpush2.msra.mxu0 %v1458
        %1606 = vmatprep.subr.mxu0 %v1457
        %1607 = vmatpush2.msra.mxu0 %v1456
        %1608 = vmatprep.subr.mxu0 %v1455
        %1609 = vmatpush2.msra.mxu0 %v1454
        %1610 = vmatprep.subr.mxu0 %v1453
        %1611 = vmatpush2.msra.mxu0 %v1452
        %1612 = vmatprep.subr.mxu0 %v1451
        %1613 = vmatpush2.msra.mxu0 %v1450
        %1614 = vmatprep.subr.mxu0 %v1449
        %1615 = vmatpush2.msra.mxu0 %v1448
        %1616 = vmatprep.subr.mxu0 %v1447
        %1617 = vmatpush2.msra.mxu0 %v1446
        %1618 = vmatprep.subr.mxu0 %v1445
        %1619 = vmatpush2.msra.mxu0 %v1444
        %1620 = vmatprep.mubr.f32.mxu0 %v1389
        %1621 = vmatmul.mubr.f32.gmra.mxu0 %v1388
        %v1622 = vpop.f32.mrf.mxu0
        %v1623 = vadd.f32 %v1495, %v1622
        %v1624 = vpop.f32.mrf.mxu0
        %v1625 = vadd.f32 %v1495, %v1624
        %1626 = vmatprep.mubr.f32.mxu0 %v1392
        %1627 = vmatmul.mubr.f32.gmra.mxu0 %v1391
        %v1628 = vpop.f32.mrf.mxu0
        %v1629 = vadd.f32 %v1500, %v1628
        %v1630 = vpop.f32.mrf.mxu0
        %v1631 = vadd.f32 %v1500, %v1630
        %1632 = vmatprep.mubr.f32.mxu0 %v1395
        %1633 = vmatmul.mubr.f32.gmra.mxu0 %v1394
        %v1634 = vpop.f32.mrf.mxu0
        %v1635 = vadd.f32 %v1505, %v1634
        %v1636 = vpop.f32.mrf.mxu0
        %v1637 = vadd.f32 %v1505, %v1636
        %1638 = vmatprep.mubr.f32.mxu0 %v1398
        %1639 = vmatmul.mubr.f32.gmra.mxu0 %v1397
        %v1640 = vpop.f32.mrf.mxu0
        %v1641 = vadd.f32 %v1510, %v1640
        %v1642 = vpop.f32.mrf.mxu0
        %v1643 = vadd.f32 %v1510, %v1642
        %1644 = vmatprep.mubr.f32.mxu0 %v1401
        %1645 = vmatmul.mubr.f32.gmra.mxu0 %v1400
        %v1646 = vpop.f32.mrf.mxu0
        %v1647 = vadd.f32 %v1515, %v1646
        %v1648 = vpop.f32.mrf.mxu0
        %v1649 = vadd.f32 %v1515, %v1648
        %1650 = vmatprep.mubr.f32.mxu0 %v1404
        %1651 = vmatmul.mubr.f32.gmra.mxu0 %v1403
        %v1652 = vpop.f32.mrf.mxu0
        %v1653 = vadd.f32 %v1520, %v1652
        %v1654 = vpop.f32.mrf.mxu0
        %v1655 = vadd.f32 %v1520, %v1654
        %1656 = vmatprep.mubr.f32.mxu0 %v1407
        %1657 = vmatmul.mubr.f32.gmra.mxu0 %v1406
        %v1658 = vpop.f32.mrf.mxu0
        %v1659 = vadd.f32 %v1525, %v1658
        %v1660 = vpop.f32.mrf.mxu0
        %v1661 = vadd.f32 %v1525, %v1660
        %1662 = vmatprep.mubr.f32.mxu0 %v1410
        %1663 = vmatmul.mubr.f32.gmra.mxu0 %v1409
        %v1664 = vpop.f32.mrf.mxu0
        %v1665 = vadd.f32 %v1530, %v1664
        %v1666 = vpop.f32.mrf.mxu0
        %v1667 = vadd.f32 %v1530, %v1666
        %1668 = vdwg.mxu0
        %1669 = vmatprep.subr.mxu0 0.0
        %1670 = vmatpush1.msra.mxu0 0.0
        %1671 = vmatprep.subr.mxu0 0.0
        %1672 = vmatpush1.msra.mxu0 0.0
        %1673 = vmatprep.subr.mxu0 0.0
        %1674 = vmatpush1.msra.mxu0 0.0
        %1675 = vmatprep.subr.mxu0 0.0
        %1676 = vmatpush1.msra.mxu0 0.0
        %1677 = vmatprep.subr.mxu0 0.0
        %1678 = vmatpush1.msra.mxu0 0.0
        %1679 = vmatprep.subr.mxu0 0.0
        %1680 = vmatpush1.msra.mxu0 0.0
        %1681 = vmatprep.subr.mxu0 0.0
        %1682 = vmatpush1.msra.mxu0 0.0
        %1683 = vmatprep.subr.mxu0 0.0
        %1684 = vmatpush1.msra.mxu0 0.0
        %1685 = vmatprep.subr.mxu0 0.0
        %1686 = vmatpush1.msra.mxu0 0.0
        %1687 = vmatprep.subr.mxu0 0.0
        %1688 = vmatpush1.msra.mxu0 0.0
        %1689 = vmatprep.subr.mxu0 0.0
        %1690 = vmatpush1.msra.mxu0 0.0
        %1691 = vmatprep.subr.mxu0 0.0
        %1692 = vmatpush1.msra.mxu0 0.0
        %1693 = vmatprep.subr.mxu0 %v1483
        %1694 = vmatpush1.msra.mxu0 %v1482
        %1695 = vmatprep.subr.mxu0 %v1481
        %1696 = vmatpush1.msra.mxu0 %v1480
        %1697 = vmatprep.subr.mxu0 %v1479
        %1698 = vmatpush1.msra.mxu0 %v1478
        %1699 = vmatprep.subr.mxu0 %v1477
        %1700 = vmatpush1.msra.mxu0 %v1476
        %1701 = vmatprep.subr.mxu0 0.0
        %1702 = vmatpush2.msra.mxu0 0.0
        %1703 = vmatprep.subr.mxu0 0.0
        %1704 = vmatpush2.msra.mxu0 0.0
        %1705 = vmatprep.subr.mxu0 0.0
        %1706 = vmatpush2.msra.mxu0 0.0
        %1707 = vmatprep.subr.mxu0 0.0
        %1708 = vmatpush2.msra.mxu0 0.0
        %1709 = vmatprep.subr.mxu0 0.0
        %1710 = vmatpush2.msra.mxu0 0.0
        %1711 = vmatprep.subr.mxu0 0.0
        %1712 = vmatpush2.msra.mxu0 0.0
        %1713 = vmatprep.subr.mxu0 0.0
        %1714 = vmatpush2.msra.mxu0 0.0
        %1715 = vmatprep.subr.mxu0 0.0
        %1716 = vmatpush2.msra.mxu0 0.0
        %1717 = vmatprep.subr.mxu0 0.0
        %1718 = vmatpush2.msra.mxu0 0.0
        %1719 = vmatprep.subr.mxu0 0.0
        %1720 = vmatpush2.msra.mxu0 0.0
        %1721 = vmatprep.subr.mxu0 0.0
        %1722 = vmatpush2.msra.mxu0 0.0
        %1723 = vmatprep.subr.mxu0 0.0
        %1724 = vmatpush2.msra.mxu0 0.0
        %1725 = vmatprep.subr.mxu0 0.0
        %1726 = vmatpush2.msra.mxu0 0.0
        %1727 = vmatprep.subr.mxu0 0.0
        %1728 = vmatpush2.msra.mxu0 0.0
        %1729 = vmatprep.subr.mxu0 0.0
        %1730 = vmatpush2.msra.mxu0 0.0
        %1731 = vmatprep.subr.mxu0 0.0
        %1732 = vmatpush2.msra.mxu0 0.0
        %1733 = vmatprep.mubr.f32.mxu0 0.0
        %1734 = vmatmul.mubr.f32.gmra.mxu0 %v1533
        %v1735 = vpop.f32.mrf.mxu0
        %v1736 = vadd.f32 %v1623, %v1735
        %v1737 = vpop.f32.mrf.mxu0
        %v1738 = vadd.f32 %v1625, %v1737
        %1739 = vmatprep.mubr.f32.mxu0 0.0
        %1740 = vmatmul.mubr.f32.gmra.mxu0 %v1536
        %v1741 = vpop.f32.mrf.mxu0
        %v1742 = vadd.f32 %v1629, %v1741
        %v1743 = vpop.f32.mrf.mxu0
        %v1744 = vadd.f32 %v1631, %v1743
        %1745 = vmatprep.mubr.f32.mxu0 0.0
        %1746 = vmatmul.mubr.f32.gmra.mxu0 %v1539
        %v1747 = vpop.f32.mrf.mxu0
        %v1748 = vadd.f32 %v1635, %v1747
        %v1749 = vpop.f32.mrf.mxu0
        %v1750 = vadd.f32 %v1637, %v1749
        %1751 = vmatprep.mubr.f32.mxu0 0.0
        %1752 = vmatmul.mubr.f32.gmra.mxu0 %v1542
        %v1753 = vpop.f32.mrf.mxu0
        %v1754 = vadd.f32 %v1641, %v1753
        %v1755 = vpop.f32.mrf.mxu0
        %v1756 = vadd.f32 %v1643, %v1755
        %1757 = vmatprep.mubr.f32.mxu0 0.0
        %1758 = vmatmul.mubr.f32.gmra.mxu0 %v1545
        %v1759 = vpop.f32.mrf.mxu0
        %v1760 = vadd.f32 %v1647, %v1759
        %v1761 = vpop.f32.mrf.mxu0
        %v1762 = vadd.f32 %v1649, %v1761
        %1763 = vmatprep.mubr.f32.mxu0 0.0
        %1764 = vmatmul.mubr.f32.gmra.mxu0 %v1548
        %v1765 = vpop.f32.mrf.mxu0
        %v1766 = vadd.f32 %v1653, %v1765
        %v1767 = vpop.f32.mrf.mxu0
        %v1768 = vadd.f32 %v1655, %v1767
        %1769 = vmatprep.mubr.f32.mxu0 0.0
        %1770 = vmatmul.mubr.f32.gmra.mxu0 %v1551
        %v1771 = vpop.f32.mrf.mxu0
        %v1772 = vadd.f32 %v1659, %v1771
        %v1773 = vpop.f32.mrf.mxu0
        %v1774 = vadd.f32 %v1661, %v1773
        %1775 = vmatprep.mubr.f32.mxu0 0.0
        %1776 = vmatmul.mubr.f32.gmra.mxu0 %v1554
        %v1777 = vpop.f32.mrf.mxu0
        %v1778 = vadd.f32 %v1665, %v1777
        %v1779 = vpop.f32.mrf.mxu0
        %v1780 = vadd.f32 %v1667, %v1779
        %1781 = vdwg.mxu0
        %v1782 = vld [vmem:[%s8] sm:$0xff]
        %v1783 = vld [vmem:[%s8 + $0x8] sm:$0xff]
        %v1784 = vld [vmem:[%s8 + $0x10] sm:$0xff]
        %v1785 = vld [vmem:[%s8 + $0x18] sm:$0xff]
        %v1786 = vld [vmem:[%s8 + $0x20] sm:$0xff]
        %v1787 = vld [vmem:[%s8 + $0x28] sm:$0xff]
        %v1788 = vld [vmem:[%s8 + $0x30] sm:$0xff]
        %v1789 = vld [vmem:[%s8 + $0x38] sm:$0xff]
        %v1790 = vld [vmem:[%s9] sm:$0xff]
        %v1791 = vld [vmem:[%s9 + $0x8] sm:$0xff]
        %v1792 = vld [vmem:[%s9 + $0x10] sm:$0xff]
        %v1793 = vld [vmem:[%s9 + $0x18] sm:$0xff]
        %v1794 = vld [vmem:[%s9 + $0x20] sm:$0xff]
        %v1795 = vld [vmem:[%s9 + $0x28] sm:$0xff]
        %v1796 = vld [vmem:[%s9 + $0x30] sm:$0xff]
        %v1797 = vld [vmem:[%s9 + $0x38] sm:$0xff]
        %v1798 = vadd.f32 %v1736, %v1738
        %1799 = vadd.xlane.f32.xlu0 %v1798
        %v1800 = vpop.xlane.xlu0 %1799
        %v1801 = vadd.f32 %v1742, %v1744
        %1802 = vadd.xlane.f32.xlu0 %v1801
        %v1803 = vpop.xlane.xlu0 %1802
        %v1804 = vadd.f32 %v1748, %v1750
        %1805 = vadd.xlane.f32.xlu0 %v1804
        %v1806 = vpop.xlane.xlu0 %1805
        %v1807 = vadd.f32 %v1754, %v1756
        %1808 = vadd.xlane.f32.xlu0 %v1807
        %v1809 = vpop.xlane.xlu0 %1808
        %v1810 = vadd.f32 %v1760, %v1762
        %1811 = vadd.xlane.f32.xlu0 %v1810
        %v1812 = vpop.xlane.xlu0 %1811
        %v1813 = vadd.f32 %v1766, %v1768
        %1814 = vadd.xlane.f32.xlu0 %v1813
        %v1815 = vpop.xlane.xlu0 %1814
        %v1816 = vadd.f32 %v1772, %v1774
        %1817 = vadd.xlane.f32.xlu0 %v1816
        %v1818 = vpop.xlane.xlu0 %1817
        %v1819 = vadd.f32 %v1778, %v1780
        %1820 = vadd.xlane.f32.xlu0 %v1819
        %v1821 = vpop.xlane.xlu0 %1820
        %vm1822 = vcmask 523264
        %v1824 = vsel %vm1822, %v533, 0
        %v1827 = vsel %vm1822, %v534, 0
        %v1830 = vsel %vm1822, %v535, 0
        %v1833 = vsel %vm1822, %v536, 0
        %v1836 = vsel %vm1822, %v537, 0
        %v1839 = vsel %vm1822, %v538, 0
        %v1842 = vsel %vm1822, %v539, 0
        %v1845 = vsel %vm1822, %v540, 0
        %1847 = vmatprep.subr.mxu0 0.0
        %1848 = vmatpush1.msra.mxu0 0.0
        %1849 = vmatprep.subr.mxu0 0.0
        %1850 = vmatpush1.msra.mxu0 0.0
        %1851 = vmatprep.subr.mxu0 0.0
        %1852 = vmatpush1.msra.mxu0 0.0
        %1853 = vmatprep.subr.mxu0 0.0
        %1854 = vmatpush1.msra.mxu0 0.0
        %1855 = vmatprep.subr.mxu0 0.0
        %1856 = vmatpush1.msra.mxu0 0.0
        %1857 = vmatprep.subr.mxu0 0.0
        %1858 = vmatpush1.msra.mxu0 0.0
        %1859 = vmatprep.subr.mxu0 0.0
        %1860 = vmatpush1.msra.mxu0 0.0
        %1861 = vmatprep.subr.mxu0 0.0
        %1862 = vmatpush1.msra.mxu0 0.0
        %1863 = vmatprep.subr.mxu0 0.0
        %1864 = vmatpush1.msra.mxu0 %v1821
        %1865 = vmatprep.subr.mxu0 0.0
        %1866 = vmatpush1.msra.mxu0 %v1818
        %1867 = vmatprep.subr.mxu0 0.0
        %1868 = vmatpush1.msra.mxu0 %v1815
        %1869 = vmatprep.subr.mxu0 0.0
        %1870 = vmatpush1.msra.mxu0 %v1812
        %1871 = vmatprep.subr.mxu0 0.0
        %1872 = vmatpush1.msra.mxu0 %v1809
        %1873 = vmatprep.subr.mxu0 0.0
        %1874 = vmatpush1.msra.mxu0 %v1806
        %1875 = vmatprep.subr.mxu0 0.0
        %1876 = vmatpush1.msra.mxu0 %v1803
        %1877 = vmatprep.subr.mxu0 0.0
        %1878 = vmatpush1.msra.mxu0 %v1800
        %1879 = vmatprep.subr.mxu0 0.0
        %1880 = vmatpush2.msra.mxu0 0.0
        %1881 = vmatprep.subr.mxu0 0.0
        %1882 = vmatpush2.msra.mxu0 0.0
        %1883 = vmatprep.subr.mxu0 0.0
        %1884 = vmatpush2.msra.mxu0 0.0
        %1885 = vmatprep.subr.mxu0 0.0
        %1886 = vmatpush2.msra.mxu0 0.0
        %1887 = vmatprep.subr.mxu0 0.0
        %1888 = vmatpush2.msra.mxu0 0.0
        %1889 = vmatprep.subr.mxu0 0.0
        %1890 = vmatpush2.msra.mxu0 0.0
        %1891 = vmatprep.subr.mxu0 0.0
        %1892 = vmatpush2.msra.mxu0 0.0
        %1893 = vmatprep.subr.mxu0 0.0
        %1894 = vmatpush2.msra.mxu0 0.0
        %1895 = vmatprep.subr.mxu0 0.0
        %1896 = vmatpush2.msra.mxu0 0.0
        %1897 = vmatprep.subr.mxu0 0.0
        %1898 = vmatpush2.msra.mxu0 0.0
        %1899 = vmatprep.subr.mxu0 0.0
        %1900 = vmatpush2.msra.mxu0 0.0
        %1901 = vmatprep.subr.mxu0 0.0
        %1902 = vmatpush2.msra.mxu0 0.0
        %1903 = vmatprep.subr.mxu0 0.0
        %1904 = vmatpush2.msra.mxu0 0.0
        %1905 = vmatprep.subr.mxu0 0.0
        %1906 = vmatpush2.msra.mxu0 0.0
        %1907 = vmatprep.subr.mxu0 0.0
        %1908 = vmatpush2.msra.mxu0 0.0
        %1909 = vmatprep.subr.mxu0 0.0
        %1910 = vmatpush2.msra.mxu0 0.0
        %1911 = vmatprep.mubr.f32.mxu0 0.0
        %1912 = vmatmul.mubr.f32.gmra.mxu0 %v1824
        %v1913 = vpop.f32.mrf.mxu0
        %v1914 = vadd.f32 0.0, %v1913
        %v1915 = vpop.f32.mrf.mxu0
        %1916 = vmatprep.mubr.f32.mxu0 0.0
        %1917 = vmatmul.mubr.f32.gmra.mxu0 %v1827
        %v1918 = vpop.f32.mrf.mxu0
        %v1919 = vadd.f32 0.0, %v1918
        %v1920 = vpop.f32.mrf.mxu0
        %1921 = vmatprep.mubr.f32.mxu0 0.0
        %1922 = vmatmul.mubr.f32.gmra.mxu0 %v1830
        %v1923 = vpop.f32.mrf.mxu0
        %v1924 = vadd.f32 0.0, %v1923
        %v1925 = vpop.f32.mrf.mxu0
        %1926 = vmatprep.mubr.f32.mxu0 0.0
        %1927 = vmatmul.mubr.f32.gmra.mxu0 %v1833
        %v1928 = vpop.f32.mrf.mxu0
        %v1929 = vadd.f32 0.0, %v1928
        %v1930 = vpop.f32.mrf.mxu0
        %1931 = vmatprep.mubr.f32.mxu0 0.0
        %1932 = vmatmul.mubr.f32.gmra.mxu0 %v1836
        %v1933 = vpop.f32.mrf.mxu0
        %v1934 = vadd.f32 0.0, %v1933
        %v1935 = vpop.f32.mrf.mxu0
        %1936 = vmatprep.mubr.f32.mxu0 0.0
        %1937 = vmatmul.mubr.f32.gmra.mxu0 %v1839
        %v1938 = vpop.f32.mrf.mxu0
        %v1939 = vadd.f32 0.0, %v1938
        %v1940 = vpop.f32.mrf.mxu0
        %1941 = vmatprep.mubr.f32.mxu0 0.0
        %1942 = vmatmul.mubr.f32.gmra.mxu0 %v1842
        %v1943 = vpop.f32.mrf.mxu0
        %v1944 = vadd.f32 0.0, %v1943
        %v1945 = vpop.f32.mrf.mxu0
        %1946 = vmatprep.mubr.f32.mxu0 0.0
        %1947 = vmatmul.mubr.f32.gmra.mxu0 %v1845
        %v1948 = vpop.f32.mrf.mxu0
        %v1949 = vadd.f32 0.0, %v1948
        %v1950 = vpop.f32.mrf.mxu0
        %1951 = vdwg.mxu0
        %v1952 = vmul.f32 %v1914, 0.00024414063
        %v1953 = vmul.f32 %v1919, 0.00024414063
        %v1954 = vmul.f32 %v1924, 0.00024414063
        %v1955 = vmul.f32 %v1929, 0.00024414063
        %v1956 = vmul.f32 %v1934, 0.00024414063
        %v1957 = vmul.f32 %v1939, 0.00024414063
        %v1958 = vmul.f32 %v1944, 0.00024414063
        %v1959 = vmul.f32 %v1949, 0.00024414063
        %1961 = vset.pattern.permute.xlu0 0
        %1962 = vperm.xlu0 %1961, %v1952
        %v1963 = vpop.permute.xlu0 %1962
        %1966 = vset.pattern.permute.xlu0 0
        %1967 = vperm.xlu0 %1966, %v1953
        %v1968 = vpop.permute.xlu0 %1967
        %1971 = vset.pattern.permute.xlu0 0
        %1972 = vperm.xlu0 %1971, %v1954
        %v1973 = vpop.permute.xlu0 %1972
        %1976 = vset.pattern.permute.xlu0 0
        %1977 = vperm.xlu0 %1976, %v1955
        %v1978 = vpop.permute.xlu0 %1977
        %1981 = vset.pattern.permute.xlu0 0
        %1982 = vperm.xlu0 %1981, %v1956
        %v1983 = vpop.permute.xlu0 %1982
        %1986 = vset.pattern.permute.xlu0 0
        %1987 = vperm.xlu0 %1986, %v1957
        %v1988 = vpop.permute.xlu0 %1987
        %1991 = vset.pattern.permute.xlu0 0
        %1992 = vperm.xlu0 %1991, %v1958
        %v1993 = vpop.permute.xlu0 %1992
        %1996 = vset.pattern.permute.xlu0 0
        %1997 = vperm.xlu0 %1996, %v1959
        %v1998 = vpop.permute.xlu0 %1997
        %v2000 = vsub.f32 %v1736, %v1963
        %v2001 = vsub.f32 %v1738, %v1963
        %v2002 = vsub.f32 %v1742, %v1968
        %v2003 = vsub.f32 %v1744, %v1968
        %v2004 = vsub.f32 %v1748, %v1973
        %v2005 = vsub.f32 %v1750, %v1973
        %v2006 = vsub.f32 %v1754, %v1978
        %v2007 = vsub.f32 %v1756, %v1978
        %v2008 = vsub.f32 %v1760, %v1983
        %v2009 = vsub.f32 %v1762, %v1983
        %v2010 = vsub.f32 %v1766, %v1988
        %v2011 = vsub.f32 %v1768, %v1988
        %v2012 = vsub.f32 %v1772, %v1993
        %v2013 = vsub.f32 %v1774, %v1993
        %v2014 = vsub.f32 %v1778, %v1998
        %v2015 = vsub.f32 %v1780, %v1998
        %v2016 = vmul.f32 %v2000, %v2000
        %v2017 = vmul.f32 %v2001, %v2001
        %v2018 = vmul.f32 %v2002, %v2002
        %v2019 = vmul.f32 %v2003, %v2003
        %v2020 = vmul.f32 %v2004, %v2004
        %v2021 = vmul.f32 %v2005, %v2005
        %v2022 = vmul.f32 %v2006, %v2006
        %v2023 = vmul.f32 %v2007, %v2007
        %v2024 = vmul.f32 %v2008, %v2008
        %v2025 = vmul.f32 %v2009, %v2009
        %v2026 = vmul.f32 %v2010, %v2010
        %v2027 = vmul.f32 %v2011, %v2011
        %v2028 = vmul.f32 %v2012, %v2012
        %v2029 = vmul.f32 %v2013, %v2013
        %v2030 = vmul.f32 %v2014, %v2014
        %v2031 = vmul.f32 %v2015, %v2015
        %v2032 = vadd.f32 %v2016, %v2017
        %2033 = vadd.xlane.f32.xlu0 %v2032
        %v2034 = vpop.xlane.xlu0 %2033
        %v2035 = vadd.f32 %v2018, %v2019
        %2036 = vadd.xlane.f32.xlu0 %v2035
        %v2037 = vpop.xlane.xlu0 %2036
        %v2038 = vadd.f32 %v2020, %v2021
        %2039 = vadd.xlane.f32.xlu0 %v2038
        %v2040 = vpop.xlane.xlu0 %2039
        %v2041 = vadd.f32 %v2022, %v2023
        %2042 = vadd.xlane.f32.xlu0 %v2041
        %v2043 = vpop.xlane.xlu0 %2042
        %v2044 = vadd.f32 %v2024, %v2025
        %2045 = vadd.xlane.f32.xlu0 %v2044
        %v2046 = vpop.xlane.xlu0 %2045
        %v2047 = vadd.f32 %v2026, %v2027
        %2048 = vadd.xlane.f32.xlu0 %v2047
        %v2049 = vpop.xlane.xlu0 %2048
        %v2050 = vadd.f32 %v2028, %v2029
        %2051 = vadd.xlane.f32.xlu0 %v2050
        %v2052 = vpop.xlane.xlu0 %2051
        %v2053 = vadd.f32 %v2030, %v2031
        %2054 = vadd.xlane.f32.xlu0 %v2053
        %v2055 = vpop.xlane.xlu0 %2054
        %2056 = vmatprep.subr.mxu0 0.0
        %2057 = vmatpush1.msra.mxu0 0.0
        %2058 = vmatprep.subr.mxu0 0.0
        %2059 = vmatpush1.msra.mxu0 0.0
        %2060 = vmatprep.subr.mxu0 0.0
        %2061 = vmatpush1.msra.mxu0 0.0
        %2062 = vmatprep.subr.mxu0 0.0
        %2063 = vmatpush1.msra.mxu0 0.0
        %2064 = vmatprep.subr.mxu0 0.0
        %2065 = vmatpush1.msra.mxu0 0.0
        %2066 = vmatprep.subr.mxu0 0.0
        %2067 = vmatpush1.msra.mxu0 0.0
        %2068 = vmatprep.subr.mxu0 0.0
        %2069 = vmatpush1.msra.mxu0 0.0
        %2070 = vmatprep.subr.mxu0 0.0
        %2071 = vmatpush1.msra.mxu0 0.0
        %2072 = vmatprep.subr.mxu0 0.0
        %2073 = vmatpush1.msra.mxu0 %v2055
        %2074 = vmatprep.subr.mxu0 0.0
        %2075 = vmatpush1.msra.mxu0 %v2052
        %2076 = vmatprep.subr.mxu0 0.0
        %2077 = vmatpush1.msra.mxu0 %v2049
        %2078 = vmatprep.subr.mxu0 0.0
        %2079 = vmatpush1.msra.mxu0 %v2046
        %2080 = vmatprep.subr.mxu0 0.0
        %2081 = vmatpush1.msra.mxu0 %v2043
        %2082 = vmatprep.subr.mxu0 0.0
        %2083 = vmatpush1.msra.mxu0 %v2040
        %2084 = vmatprep.subr.mxu0 0.0
        %2085 = vmatpush1.msra.mxu0 %v2037
        %2086 = vmatprep.subr.mxu0 0.0
        %2087 = vmatpush1.msra.mxu0 %v2034
        %2088 = vmatprep.subr.mxu0 0.0
        %2089 = vmatpush2.msra.mxu0 0.0
        %2090 = vmatprep.subr.mxu0 0.0
        %2091 = vmatpush2.msra.mxu0 0.0
        %2092 = vmatprep.subr.mxu0 0.0
        %2093 = vmatpush2.msra.mxu0 0.0
        %2094 = vmatprep.subr.mxu0 0.0
        %2095 = vmatpush2.msra.mxu0 0.0
        %2096 = vmatprep.subr.mxu0 0.0
        %2097 = vmatpush2.msra.mxu0 0.0
        %2098 = vmatprep.subr.mxu0 0.0
        %2099 = vmatpush2.msra.mxu0 0.0
        %2100 = vmatprep.subr.mxu0 0.0
        %2101 = vmatpush2.msra.mxu0 0.0
        %2102 = vmatprep.subr.mxu0 0.0
        %2103 = vmatpush2.msra.mxu0 0.0
        %2104 = vmatprep.subr.mxu0 0.0
        %2105 = vmatpush2.msra.mxu0 0.0
        %2106 = vmatprep.subr.mxu0 0.0
        %2107 = vmatpush2.msra.mxu0 0.0
        %2108 = vmatprep.subr.mxu0 0.0
        %2109 = vmatpush2.msra.mxu0 0.0
        %2110 = vmatprep.subr.mxu0 0.0
        %2111 = vmatpush2.msra.mxu0 0.0
        %2112 = vmatprep.subr.mxu0 0.0
        %2113 = vmatpush2.msra.mxu0 0.0
        %2114 = vmatprep.subr.mxu0 0.0
        %2115 = vmatpush2.msra.mxu0 0.0
        %2116 = vmatprep.subr.mxu0 0.0
        %2117 = vmatpush2.msra.mxu0 0.0
        %2118 = vmatprep.subr.mxu0 0.0
        %2119 = vmatpush2.msra.mxu0 0.0
        %2120 = vmatprep.mubr.f32.mxu0 0.0
        %2121 = vmatmul.mubr.f32.gmra.mxu0 %v1824
        %v2122 = vpop.f32.mrf.mxu0
        %v2123 = vadd.f32 0.0, %v2122
        %v2124 = vpop.f32.mrf.mxu0
        %2125 = vmatprep.mubr.f32.mxu0 0.0
        %2126 = vmatmul.mubr.f32.gmra.mxu0 %v1827
        %v2127 = vpop.f32.mrf.mxu0
        %v2128 = vadd.f32 0.0, %v2127
        %v2129 = vpop.f32.mrf.mxu0
        %2130 = vmatprep.mubr.f32.mxu0 0.0
        %2131 = vmatmul.mubr.f32.gmra.mxu0 %v1830
        %v2132 = vpop.f32.mrf.mxu0
        %v2133 = vadd.f32 0.0, %v2132
        %v2134 = vpop.f32.mrf.mxu0
        %2135 = vmatprep.mubr.f32.mxu0 0.0
        %2136 = vmatmul.mubr.f32.gmra.mxu0 %v1833
        %v2137 = vpop.f32.mrf.mxu0
        %v2138 = vadd.f32 0.0, %v2137
        %v2139 = vpop.f32.mrf.mxu0
        %2140 = vmatprep.mubr.f32.mxu0 0.0
        %2141 = vmatmul.mubr.f32.gmra.mxu0 %v1836
        %v2142 = vpop.f32.mrf.mxu0
        %v2143 = vadd.f32 0.0, %v2142
        %v2144 = vpop.f32.mrf.mxu0
        %2145 = vmatprep.mubr.f32.mxu0 0.0
        %2146 = vmatmul.mubr.f32.gmra.mxu0 %v1839
        %v2147 = vpop.f32.mrf.mxu0
        %v2148 = vadd.f32 0.0, %v2147
        %v2149 = vpop.f32.mrf.mxu0
        %2150 = vmatprep.mubr.f32.mxu0 0.0
        %2151 = vmatmul.mubr.f32.gmra.mxu0 %v1842
        %v2152 = vpop.f32.mrf.mxu0
        %v2153 = vadd.f32 0.0, %v2152
        %v2154 = vpop.f32.mrf.mxu0
        %2155 = vmatprep.mubr.f32.mxu0 0.0
        %2156 = vmatmul.mubr.f32.gmra.mxu0 %v1845
        %v2157 = vpop.f32.mrf.mxu0
        %v2158 = vadd.f32 0.0, %v2157
        %v2159 = vpop.f32.mrf.mxu0
        %2160 = vdwg.mxu0
        %v2161 = vmul.f32 %v2123, 0.00024414063
        %v2162 = vmul.f32 %v2128, 0.00024414063
        %v2163 = vmul.f32 %v2133, 0.00024414063
        %v2164 = vmul.f32 %v2138, 0.00024414063
        %v2165 = vmul.f32 %v2143, 0.00024414063
        %v2166 = vmul.f32 %v2148, 0.00024414063
        %v2167 = vmul.f32 %v2153, 0.00024414063
        %v2168 = vmul.f32 %v2158, 0.00024414063
        %v2169 = vadd.f32 %v2161, 1e-05
        %v2170 = vadd.f32 %v2162, 1e-05
        %v2171 = vadd.f32 %v2163, 1e-05
        %v2172 = vadd.f32 %v2164, 1e-05
        %v2173 = vadd.f32 %v2165, 1e-05
        %v2174 = vadd.f32 %v2166, 1e-05
        %v2175 = vadd.f32 %v2167, 1e-05
        %v2176 = vadd.f32 %v2168, 1e-05
        %v2177 = vrsqrt.pop %v2169
        %v2178 = vrsqrt.pop %v2170
        %v2179 = vrsqrt.pop %v2171
        %v2180 = vrsqrt.pop %v2172
        %v2181 = vrsqrt.pop %v2173
        %v2182 = vrsqrt.pop %v2174
        %v2183 = vrsqrt.pop %v2175
        %v2184 = vrsqrt.pop %v2176
        %v2185 = vmul.f32 %v2177, %v1782
        %v2186 = vmul.f32 %v2178, %v1783
        %v2187 = vmul.f32 %v2179, %v1784
        %v2188 = vmul.f32 %v2180, %v1785
        %v2189 = vmul.f32 %v2181, %v1786
        %v2190 = vmul.f32 %v2182, %v1787
        %v2191 = vmul.f32 %v2183, %v1788
        %v2192 = vmul.f32 %v2184, %v1789
        %2194 = vset.pattern.permute.xlu0 0
        %2195 = vperm.xlu0 %2194, %v2185
        %v2196 = vpop.permute.xlu0 %2195
        %2199 = vset.pattern.permute.xlu0 0
        %2200 = vperm.xlu0 %2199, %v2186
        %v2201 = vpop.permute.xlu0 %2200
        %2204 = vset.pattern.permute.xlu0 0
        %2205 = vperm.xlu0 %2204, %v2187
        %v2206 = vpop.permute.xlu0 %2205
        %2209 = vset.pattern.permute.xlu0 0
        %2210 = vperm.xlu0 %2209, %v2188
        %v2211 = vpop.permute.xlu0 %2210
        %2214 = vset.pattern.permute.xlu0 0
        %2215 = vperm.xlu0 %2214, %v2189
        %v2216 = vpop.permute.xlu0 %2215
        %2219 = vset.pattern.permute.xlu0 0
        %2220 = vperm.xlu0 %2219, %v2190
        %v2221 = vpop.permute.xlu0 %2220
        %2224 = vset.pattern.permute.xlu0 0
        %2225 = vperm.xlu0 %2224, %v2191
        %v2226 = vpop.permute.xlu0 %2225
        %2229 = vset.pattern.permute.xlu0 0
        %2230 = vperm.xlu0 %2229, %v2192
        %v2231 = vpop.permute.xlu0 %2230
        %v2233 = vmul.f32 %v2000, %v2196
        %v2234 = vmul.f32 %v2001, %v2196
        %v2235 = vmul.f32 %v2002, %v2201
        %v2236 = vmul.f32 %v2003, %v2201
        %v2237 = vmul.f32 %v2004, %v2206
        %v2238 = vmul.f32 %v2005, %v2206
        %v2239 = vmul.f32 %v2006, %v2211
        %v2240 = vmul.f32 %v2007, %v2211
        %v2241 = vmul.f32 %v2008, %v2216
        %v2242 = vmul.f32 %v2009, %v2216
        %v2243 = vmul.f32 %v2010, %v2221
        %v2244 = vmul.f32 %v2011, %v2221
        %v2245 = vmul.f32 %v2012, %v2226
        %v2246 = vmul.f32 %v2013, %v2226
        %v2247 = vmul.f32 %v2014, %v2231
        %v2248 = vmul.f32 %v2015, %v2231
        %2250 = vset.pattern.permute.xlu0 0
        %2251 = vperm.xlu0 %2250, %v1790
        %v2252 = vpop.permute.xlu0 %2251
        %2255 = vset.pattern.permute.xlu0 0
        %2256 = vperm.xlu0 %2255, %v1791
        %v2257 = vpop.permute.xlu0 %2256
        %2260 = vset.pattern.permute.xlu0 0
        %2261 = vperm.xlu0 %2260, %v1792
        %v2262 = vpop.permute.xlu0 %2261
        %2265 = vset.pattern.permute.xlu0 0
        %2266 = vperm.xlu0 %2265, %v1793
        %v2267 = vpop.permute.xlu0 %2266
        %2270 = vset.pattern.permute.xlu0 0
        %2271 = vperm.xlu0 %2270, %v1794
        %v2272 = vpop.permute.xlu0 %2271
        %2275 = vset.pattern.permute.xlu0 0
        %2276 = vperm.xlu0 %2275, %v1795
        %v2277 = vpop.permute.xlu0 %2276
        %2280 = vset.pattern.permute.xlu0 0
        %2281 = vperm.xlu0 %2280, %v1796
        %v2282 = vpop.permute.xlu0 %2281
        %2285 = vset.pattern.permute.xlu0 0
        %2286 = vperm.xlu0 %2285, %v1797
        %v2287 = vpop.permute.xlu0 %2286
        %v2289 = vadd.f32 %v2233, %v2252
        %v2290 = vadd.f32 %v2234, %v2252
        %v2291 = vadd.f32 %v2235, %v2257
        %v2292 = vadd.f32 %v2236, %v2257
        %v2293 = vadd.f32 %v2237, %v2262
        %v2294 = vadd.f32 %v2238, %v2262
        %v2295 = vadd.f32 %v2239, %v2267
        %v2296 = vadd.f32 %v2240, %v2267
        %v2297 = vadd.f32 %v2241, %v2272
        %v2298 = vadd.f32 %v2242, %v2272
        %v2299 = vadd.f32 %v2243, %v2277
        %v2300 = vadd.f32 %v2244, %v2277
        %v2301 = vadd.f32 %v2245, %v2282
        %v2302 = vadd.f32 %v2246, %v2282
        %v2303 = vadd.f32 %v2247, %v2287
        %v2304 = vadd.f32 %v2248, %v2287
        %v2305 = vmax.f32 %v2289, 0.0
        %v2306 = vmax.f32 %v2290, 0.0
        %v2307 = vmax.f32 %v2291, 0.0
        %v2308 = vmax.f32 %v2292, 0.0
        %v2309 = vmax.f32 %v2293, 0.0
        %v2310 = vmax.f32 %v2294, 0.0
        %v2311 = vmax.f32 %v2295, 0.0
        %v2312 = vmax.f32 %v2296, 0.0
        %v2313 = vmax.f32 %v2297, 0.0
        %v2314 = vmax.f32 %v2298, 0.0
        %v2315 = vmax.f32 %v2299, 0.0
        %v2316 = vmax.f32 %v2300, 0.0
        %v2317 = vmax.f32 %v2301, 0.0
        %v2318 = vmax.f32 %v2302, 0.0
        %v2319 = vmax.f32 %v2303, 0.0
        %v2320 = vmax.f32 %v2304, 0.0
        %2329 = vrot.lane.b32.xlu0 %v2306, 17
        %v2330 = vpop.permute.xlu0 %2329
        %2331 = vrot.lane.b32.xlu0 %v2308, 17
        %v2332 = vpop.permute.xlu0 %2331
        %2333 = vrot.lane.b32.xlu0 %v2310, 17
        %v2334 = vpop.permute.xlu0 %2333
        %2335 = vrot.lane.b32.xlu0 %v2312, 17
        %v2336 = vpop.permute.xlu0 %2335
        %2337 = vrot.lane.b32.xlu0 %v2314, 17
        %v2338 = vpop.permute.xlu0 %2337
        %2339 = vrot.lane.b32.xlu0 %v2316, 17
        %v2340 = vpop.permute.xlu0 %2339
        %2341 = vrot.lane.b32.xlu0 %v2318, 17
        %v2342 = vpop.permute.xlu0 %2341
        %2343 = vrot.lane.b32.xlu0 %v2320, 17
        %v2344 = vpop.permute.xlu0 %2343
        %2361 = vrot.lane.b32.xlu0 %v2305, 17
        %v2362 = vpop.permute.xlu0 %2361
        %2363 = vrot.lane.b32.xlu0 %v2307, 17
        %v2364 = vpop.permute.xlu0 %2363
        %2365 = vrot.lane.b32.xlu0 %v2309, 17
        %v2366 = vpop.permute.xlu0 %2365
        %2367 = vrot.lane.b32.xlu0 %v2311, 17
        %v2368 = vpop.permute.xlu0 %2367
        %2369 = vrot.lane.b32.xlu0 %v2313, 17
        %v2370 = vpop.permute.xlu0 %2369
        %2371 = vrot.lane.b32.xlu0 %v2315, 17
        %v2372 = vpop.permute.xlu0 %2371
        %2373 = vrot.lane.b32.xlu0 %v2317, 17
        %v2374 = vpop.permute.xlu0 %2373
        %2375 = vrot.lane.b32.xlu0 %v2319, 17
        %v2376 = vpop.permute.xlu0 %2375
        %v2377 = vsel %vm912, %v2362, %v2330
        %v2378 = vsel %vm912, %v2364, %v2332
        %v2379 = vsel %vm912, %v2366, %v2334
        %v2380 = vsel %vm912, %v2368, %v2336
        %v2381 = vsel %vm912, %v2370, %v2338
        %v2382 = vsel %vm912, %v2372, %v2340
        %v2383 = vsel %vm912, %v2374, %v2342
        %v2384 = vsel %vm912, %v2376, %v2344
        %v2401 = vsel %vm912, %v2330, %v2362
        %v2402 = vsel %vm912, %v2332, %v2364
        %v2403 = vsel %vm912, %v2334, %v2366
        %v2404 = vsel %vm912, %v2336, %v2368
        %v2405 = vsel %vm912, %v2338, %v2370
        %v2406 = vsel %vm912, %v2340, %v2372
        %v2407 = vsel %vm912, %v2342, %v2374
        %v2408 = vsel %vm912, %v2344, %v2376
        %v2409 = vmul.f32 %v2401, %v932
        %v2410 = vmul.f32 %v2377, %v936
        %v2411 = vmul.f32 %v2402, %v932
        %v2412 = vmul.f32 %v2378, %v936
        %v2413 = vmul.f32 %v2403, %v932
        %v2414 = vmul.f32 %v2379, %v936
        %v2415 = vmul.f32 %v2404, %v932
        %v2416 = vmul.f32 %v2380, %v936
        %v2417 = vmul.f32 %v2405, %v932
        %v2418 = vmul.f32 %v2381, %v936
        %v2419 = vmul.f32 %v2406, %v932
        %v2420 = vmul.f32 %v2382, %v936
        %v2421 = vmul.f32 %v2407, %v932
        %v2422 = vmul.f32 %v2383, %v936
        %v2423 = vmul.f32 %v2408, %v932
        %v2424 = vmul.f32 %v2384, %v936
        %2425 = vst [vmem:[#allocation2] sm:$0xff] %v2409
        %2426 = vst [vmem:[#allocation2 + $0x8] sm:$0xff] %v2410
        %2427 = vst [vmem:[#allocation2 + $0x10] sm:$0xff] %v2411
        %2428 = vst [vmem:[#allocation2 + $0x18] sm:$0xff] %v2412
        %2429 = vst [vmem:[#allocation2 + $0x20] sm:$0xff] %v2413
        %2430 = vst [vmem:[#allocation2 + $0x28] sm:$0xff] %v2414
        %2431 = vst [vmem:[#allocation2 + $0x30] sm:$0xff] %v2415
        %2432 = vst [vmem:[#allocation2 + $0x38] sm:$0xff] %v2416
        %2433 = vst [vmem:[#allocation2 + $0x40] sm:$0xff] %v2417
        %2434 = vst [vmem:[#allocation2 + $0x48] sm:$0xff] %v2418
        %2435 = vst [vmem:[#allocation2 + $0x50] sm:$0xff] %v2419
        %2436 = vst [vmem:[#allocation2 + $0x58] sm:$0xff] %v2420
        %2437 = vst [vmem:[#allocation2 + $0x60] sm:$0xff] %v2421
        %2438 = vst [vmem:[#allocation2 + $0x68] sm:$0xff] %v2422
        %2439 = vst [vmem:[#allocation2 + $0x70] sm:$0xff] %v2423
        %2440 = vst [vmem:[#allocation2 + $0x78] sm:$0xff] %v2424
        %2441 = vrot.lane.b32.xlu0 %v2306, 16
        %v2442 = vpop.permute.xlu0 %2441
        %2443 = vrot.lane.b32.xlu0 %v2308, 16
        %v2444 = vpop.permute.xlu0 %2443
        %2445 = vrot.lane.b32.xlu0 %v2310, 16
        %v2446 = vpop.permute.xlu0 %2445
        %2447 = vrot.lane.b32.xlu0 %v2312, 16
        %v2448 = vpop.permute.xlu0 %2447
        %2449 = vrot.lane.b32.xlu0 %v2314, 16
        %v2450 = vpop.permute.xlu0 %2449
        %2451 = vrot.lane.b32.xlu0 %v2316, 16
        %v2452 = vpop.permute.xlu0 %2451
        %2453 = vrot.lane.b32.xlu0 %v2318, 16
        %v2454 = vpop.permute.xlu0 %2453
        %2455 = vrot.lane.b32.xlu0 %v2320, 16
        %v2456 = vpop.permute.xlu0 %2455
        %2465 = vrot.lane.b32.xlu0 %v2305, 16
        %v2466 = vpop.permute.xlu0 %2465
        %2467 = vrot.lane.b32.xlu0 %v2307, 16
        %v2468 = vpop.permute.xlu0 %2467
        %2469 = vrot.lane.b32.xlu0 %v2309, 16
        %v2470 = vpop.permute.xlu0 %2469
        %2471 = vrot.lane.b32.xlu0 %v2311, 16
        %v2472 = vpop.permute.xlu0 %2471
        %2473 = vrot.lane.b32.xlu0 %v2313, 16
        %v2474 = vpop.permute.xlu0 %2473
        %2475 = vrot.lane.b32.xlu0 %v2315, 16
        %v2476 = vpop.permute.xlu0 %2475
        %2477 = vrot.lane.b32.xlu0 %v2317, 16
        %v2478 = vpop.permute.xlu0 %2477
        %2479 = vrot.lane.b32.xlu0 %v2319, 16
        %v2480 = vpop.permute.xlu0 %2479
        %v2481 = vsel %vm973, %v2466, %v2442
        %v2482 = vsel %vm973, %v2468, %v2444
        %v2483 = vsel %vm973, %v2470, %v2446
        %v2484 = vsel %vm973, %v2472, %v2448
        %v2485 = vsel %vm973, %v2474, %v2450
        %v2486 = vsel %vm973, %v2476, %v2452
        %v2487 = vsel %vm973, %v2478, %v2454
        %v2488 = vsel %vm973, %v2480, %v2456
        %v2505 = vsel %vm973, %v2442, %v2466
        %v2506 = vsel %vm973, %v2444, %v2468
        %v2507 = vsel %vm973, %v2446, %v2470
        %v2508 = vsel %vm973, %v2448, %v2472
        %v2509 = vsel %vm973, %v2450, %v2474
        %v2510 = vsel %vm973, %v2452, %v2476
        %v2511 = vsel %vm973, %v2454, %v2478
        %v2512 = vsel %vm973, %v2456, %v2480
        %v2513 = vmul.f32 %v2505, %v993
        %v2514 = vmul.f32 %v2481, %v997
        %v2515 = vmul.f32 %v2506, %v993
        %v2516 = vmul.f32 %v2482, %v997
        %v2517 = vmul.f32 %v2507, %v993
        %v2518 = vmul.f32 %v2483, %v997
        %v2519 = vmul.f32 %v2508, %v993
        %v2520 = vmul.f32 %v2484, %v997
        %v2521 = vmul.f32 %v2509, %v993
        %v2522 = vmul.f32 %v2485, %v997
        %v2523 = vmul.f32 %v2510, %v993
        %v2524 = vmul.f32 %v2486, %v997
        %v2525 = vmul.f32 %v2511, %v993
        %v2526 = vmul.f32 %v2487, %v997
        %v2527 = vmul.f32 %v2512, %v993
        %v2528 = vmul.f32 %v2488, %v997
        %2529 = vst [vmem:[#allocation2 + $0x80] sm:$0xff] %v2513
        %2530 = vst [vmem:[#allocation2 + $0x88] sm:$0xff] %v2514
        %2531 = vst [vmem:[#allocation2 + $0x90] sm:$0xff] %v2515
        %2532 = vst [vmem:[#allocation2 + $0x98] sm:$0xff] %v2516
        %2533 = vst [vmem:[#allocation2 + $0xa0] sm:$0xff] %v2517
        %2534 = vst [vmem:[#allocation2 + $0xa8] sm:$0xff] %v2518
        %2535 = vst [vmem:[#allocation2 + $0xb0] sm:$0xff] %v2519
        %2536 = vst [vmem:[#allocation2 + $0xb8] sm:$0xff] %v2520
        %2537 = vst [vmem:[#allocation2 + $0xc0] sm:$0xff] %v2521
        %2538 = vst [vmem:[#allocation2 + $0xc8] sm:$0xff] %v2522
        %2539 = vst [vmem:[#allocation2 + $0xd0] sm:$0xff] %v2523
        %2540 = vst [vmem:[#allocation2 + $0xd8] sm:$0xff] %v2524
        %2541 = vst [vmem:[#allocation2 + $0xe0] sm:$0xff] %v2525
        %2542 = vst [vmem:[#allocation2 + $0xe8] sm:$0xff] %v2526
        %2543 = vst [vmem:[#allocation2 + $0xf0] sm:$0xff] %v2527
        %2544 = vst [vmem:[#allocation2 + $0xf8] sm:$0xff] %v2528
        %2545 = vrot.lane.b32.xlu0 %v2306, 15
        %v2546 = vpop.permute.xlu0 %2545
        %2547 = vrot.lane.b32.xlu0 %v2308, 15
        %v2548 = vpop.permute.xlu0 %2547
        %2549 = vrot.lane.b32.xlu0 %v2310, 15
        %v2550 = vpop.permute.xlu0 %2549
        %2551 = vrot.lane.b32.xlu0 %v2312, 15
        %v2552 = vpop.permute.xlu0 %2551
        %2553 = vrot.lane.b32.xlu0 %v2314, 15
        %v2554 = vpop.permute.xlu0 %2553
        %2555 = vrot.lane.b32.xlu0 %v2316, 15
        %v2556 = vpop.permute.xlu0 %2555
        %2557 = vrot.lane.b32.xlu0 %v2318, 15
        %v2558 = vpop.permute.xlu0 %2557
        %2559 = vrot.lane.b32.xlu0 %v2320, 15
        %v2560 = vpop.permute.xlu0 %2559
        %2569 = vrot.lane.b32.xlu0 %v2305, 15
        %v2570 = vpop.permute.xlu0 %2569
        %2571 = vrot.lane.b32.xlu0 %v2307, 15
        %v2572 = vpop.permute.xlu0 %2571
        %2573 = vrot.lane.b32.xlu0 %v2309, 15
        %v2574 = vpop.permute.xlu0 %2573
        %2575 = vrot.lane.b32.xlu0 %v2311, 15
        %v2576 = vpop.permute.xlu0 %2575
        %2577 = vrot.lane.b32.xlu0 %v2313, 15
        %v2578 = vpop.permute.xlu0 %2577
        %2579 = vrot.lane.b32.xlu0 %v2315, 15
        %v2580 = vpop.permute.xlu0 %2579
        %2581 = vrot.lane.b32.xlu0 %v2317, 15
        %v2582 = vpop.permute.xlu0 %2581
        %2583 = vrot.lane.b32.xlu0 %v2319, 15
        %v2584 = vpop.permute.xlu0 %2583
        %v2585 = vsel %vm1034, %v2570, %v2546
        %v2586 = vsel %vm1034, %v2572, %v2548
        %v2587 = vsel %vm1034, %v2574, %v2550
        %v2588 = vsel %vm1034, %v2576, %v2552
        %v2589 = vsel %vm1034, %v2578, %v2554
        %v2590 = vsel %vm1034, %v2580, %v2556
        %v2591 = vsel %vm1034, %v2582, %v2558
        %v2592 = vsel %vm1034, %v2584, %v2560
        %v2609 = vsel %vm1034, %v2546, %v2570
        %v2610 = vsel %vm1034, %v2548, %v2572
        %v2611 = vsel %vm1034, %v2550, %v2574
        %v2612 = vsel %vm1034, %v2552, %v2576
        %v2613 = vsel %vm1034, %v2554, %v2578
        %v2614 = vsel %vm1034, %v2556, %v2580
        %v2615 = vsel %vm1034, %v2558, %v2582
        %v2616 = vsel %vm1034, %v2560, %v2584
        %v2617 = vmul.f32 %v2609, %v1054
        %v2618 = vmul.f32 %v2585, %v1058
        %v2619 = vmul.f32 %v2610, %v1054
        %v2620 = vmul.f32 %v2586, %v1058
        %v2621 = vmul.f32 %v2611, %v1054
        %v2622 = vmul.f32 %v2587, %v1058
        %v2623 = vmul.f32 %v2612, %v1054
        %v2624 = vmul.f32 %v2588, %v1058
        %v2625 = vmul.f32 %v2613, %v1054
        %v2626 = vmul.f32 %v2589, %v1058
        %v2627 = vmul.f32 %v2614, %v1054
        %v2628 = vmul.f32 %v2590, %v1058
        %v2629 = vmul.f32 %v2615, %v1054
        %v2630 = vmul.f32 %v2591, %v1058
        %v2631 = vmul.f32 %v2616, %v1054
        %v2632 = vmul.f32 %v2592, %v1058
        %2633 = vst [vmem:[#allocation2 + $0x100] sm:$0xff] %v2617
        %2634 = vst [vmem:[#allocation2 + $0x108] sm:$0xff] %v2618
        %2635 = vst [vmem:[#allocation2 + $0x110] sm:$0xff] %v2619
        %2636 = vst [vmem:[#allocation2 + $0x118] sm:$0xff] %v2620
        %2637 = vst [vmem:[#allocation2 + $0x120] sm:$0xff] %v2621
        %2638 = vst [vmem:[#allocation2 + $0x128] sm:$0xff] %v2622
        %2639 = vst [vmem:[#allocation2 + $0x130] sm:$0xff] %v2623
        %2640 = vst [vmem:[#allocation2 + $0x138] sm:$0xff] %v2624
        %2641 = vst [vmem:[#allocation2 + $0x140] sm:$0xff] %v2625
        %2642 = vst [vmem:[#allocation2 + $0x148] sm:$0xff] %v2626
        %2643 = vst [vmem:[#allocation2 + $0x150] sm:$0xff] %v2627
        %2644 = vst [vmem:[#allocation2 + $0x158] sm:$0xff] %v2628
        %2645 = vst [vmem:[#allocation2 + $0x160] sm:$0xff] %v2629
        %2646 = vst [vmem:[#allocation2 + $0x168] sm:$0xff] %v2630
        %2647 = vst [vmem:[#allocation2 + $0x170] sm:$0xff] %v2631
        %2648 = vst [vmem:[#allocation2 + $0x178] sm:$0xff] %v2632
        %2649 = vrot.lane.b32.xlu0 %v2306, 1
        %v2650 = vpop.permute.xlu0 %2649
        %2651 = vrot.lane.b32.xlu0 %v2308, 1
        %v2652 = vpop.permute.xlu0 %2651
        %2653 = vrot.lane.b32.xlu0 %v2310, 1
        %v2654 = vpop.permute.xlu0 %2653
        %2655 = vrot.lane.b32.xlu0 %v2312, 1
        %v2656 = vpop.permute.xlu0 %2655
        %2657 = vrot.lane.b32.xlu0 %v2314, 1
        %v2658 = vpop.permute.xlu0 %2657
        %2659 = vrot.lane.b32.xlu0 %v2316, 1
        %v2660 = vpop.permute.xlu0 %2659
        %2661 = vrot.lane.b32.xlu0 %v2318, 1
        %v2662 = vpop.permute.xlu0 %2661
        %2663 = vrot.lane.b32.xlu0 %v2320, 1
        %v2664 = vpop.permute.xlu0 %2663
        %2673 = vrot.lane.b32.xlu0 %v2305, 1
        %v2674 = vpop.permute.xlu0 %2673
        %2675 = vrot.lane.b32.xlu0 %v2307, 1
        %v2676 = vpop.permute.xlu0 %2675
        %2677 = vrot.lane.b32.xlu0 %v2309, 1
        %v2678 = vpop.permute.xlu0 %2677
        %2679 = vrot.lane.b32.xlu0 %v2311, 1
        %v2680 = vpop.permute.xlu0 %2679
        %2681 = vrot.lane.b32.xlu0 %v2313, 1
        %v2682 = vpop.permute.xlu0 %2681
        %2683 = vrot.lane.b32.xlu0 %v2315, 1
        %v2684 = vpop.permute.xlu0 %2683
        %2685 = vrot.lane.b32.xlu0 %v2317, 1
        %v2686 = vpop.permute.xlu0 %2685
        %2687 = vrot.lane.b32.xlu0 %v2319, 1
        %v2688 = vpop.permute.xlu0 %2687
        %v2689 = vsel %vm1095, %v2674, %v2650
        %v2690 = vsel %vm1095, %v2676, %v2652
        %v2691 = vsel %vm1095, %v2678, %v2654
        %v2692 = vsel %vm1095, %v2680, %v2656
        %v2693 = vsel %vm1095, %v2682, %v2658
        %v2694 = vsel %vm1095, %v2684, %v2660
        %v2695 = vsel %vm1095, %v2686, %v2662
        %v2696 = vsel %vm1095, %v2688, %v2664
        %v2713 = vsel %vm1095, %v2650, %v2674
        %v2714 = vsel %vm1095, %v2652, %v2676
        %v2715 = vsel %vm1095, %v2654, %v2678
        %v2716 = vsel %vm1095, %v2656, %v2680
        %v2717 = vsel %vm1095, %v2658, %v2682
        %v2718 = vsel %vm1095, %v2660, %v2684
        %v2719 = vsel %vm1095, %v2662, %v2686
        %v2720 = vsel %vm1095, %v2664, %v2688
        %v2721 = vmul.f32 %v2713, %v1115
        %v2722 = vmul.f32 %v2689, %v1119
        %v2723 = vmul.f32 %v2714, %v1115
        %v2724 = vmul.f32 %v2690, %v1119
        %v2725 = vmul.f32 %v2715, %v1115
        %v2726 = vmul.f32 %v2691, %v1119
        %v2727 = vmul.f32 %v2716, %v1115
        %v2728 = vmul.f32 %v2692, %v1119
        %v2729 = vmul.f32 %v2717, %v1115
        %v2730 = vmul.f32 %v2693, %v1119
        %v2731 = vmul.f32 %v2718, %v1115
        %v2732 = vmul.f32 %v2694, %v1119
        %v2733 = vmul.f32 %v2719, %v1115
        %v2734 = vmul.f32 %v2695, %v1119
        %v2735 = vmul.f32 %v2720, %v1115
        %v2736 = vmul.f32 %v2696, %v1119
        %2737 = vst [vmem:[#allocation2 + $0x180] sm:$0xff] %v2721
        %2738 = vst [vmem:[#allocation2 + $0x188] sm:$0xff] %v2722
        %2739 = vst [vmem:[#allocation2 + $0x190] sm:$0xff] %v2723
        %2740 = vst [vmem:[#allocation2 + $0x198] sm:$0xff] %v2724
        %2741 = vst [vmem:[#allocation2 + $0x1a0] sm:$0xff] %v2725
        %2742 = vst [vmem:[#allocation2 + $0x1a8] sm:$0xff] %v2726
        %2743 = vst [vmem:[#allocation2 + $0x1b0] sm:$0xff] %v2727
        %2744 = vst [vmem:[#allocation2 + $0x1b8] sm:$0xff] %v2728
        %2745 = vst [vmem:[#allocation2 + $0x1c0] sm:$0xff] %v2729
        %2746 = vst [vmem:[#allocation2 + $0x1c8] sm:$0xff] %v2730
        %2747 = vst [vmem:[#allocation2 + $0x1d0] sm:$0xff] %v2731
        %2748 = vst [vmem:[#allocation2 + $0x1d8] sm:$0xff] %v2732
        %2749 = vst [vmem:[#allocation2 + $0x1e0] sm:$0xff] %v2733
        %2750 = vst [vmem:[#allocation2 + $0x1e8] sm:$0xff] %v2734
        %2751 = vst [vmem:[#allocation2 + $0x1f0] sm:$0xff] %v2735
        %2752 = vst [vmem:[#allocation2 + $0x1f8] sm:$0xff] %v2736
        %2753 = vst [vmem:[#allocation2 + $0x200] sm:$0xff] %v2305
        %2754 = vst [vmem:[#allocation2 + $0x208] sm:$0xff] %v2306
        %2755 = vst [vmem:[#allocation2 + $0x210] sm:$0xff] %v2307
        %2756 = vst [vmem:[#allocation2 + $0x218] sm:$0xff] %v2308
        %2757 = vst [vmem:[#allocation2 + $0x220] sm:$0xff] %v2309
        %2758 = vst [vmem:[#allocation2 + $0x228] sm:$0xff] %v2310
        %2759 = vst [vmem:[#allocation2 + $0x230] sm:$0xff] %v2311
        %2760 = vst [vmem:[#allocation2 + $0x238] sm:$0xff] %v2312
        %2761 = vst [vmem:[#allocation2 + $0x240] sm:$0xff] %v2313
        %2762 = vst [vmem:[#allocation2 + $0x248] sm:$0xff] %v2314
        %2763 = vst [vmem:[#allocation2 + $0x250] sm:$0xff] %v2315
        %2764 = vst [vmem:[#allocation2 + $0x258] sm:$0xff] %v2316
        %2765 = vst [vmem:[#allocation2 + $0x260] sm:$0xff] %v2317
        %2766 = vst [vmem:[#allocation2 + $0x268] sm:$0xff] %v2318
        %2767 = vst [vmem:[#allocation2 + $0x270] sm:$0xff] %v2319
        %2768 = vst [vmem:[#allocation2 + $0x278] sm:$0xff] %v2320
        %2769 = vrot.lane.b32.xlu0 %v2305, 127
        %v2770 = vpop.permute.xlu0 %2769
        %2771 = vrot.lane.b32.xlu0 %v2306, 127
        %v2772 = vpop.permute.xlu0 %2771
        %2773 = vrot.lane.b32.xlu0 %v2307, 127
        %v2774 = vpop.permute.xlu0 %2773
        %2775 = vrot.lane.b32.xlu0 %v2308, 127
        %v2776 = vpop.permute.xlu0 %2775
        %2777 = vrot.lane.b32.xlu0 %v2309, 127
        %v2778 = vpop.permute.xlu0 %2777
        %2779 = vrot.lane.b32.xlu0 %v2310, 127
        %v2780 = vpop.permute.xlu0 %2779
        %2781 = vrot.lane.b32.xlu0 %v2311, 127
        %v2782 = vpop.permute.xlu0 %2781
        %2783 = vrot.lane.b32.xlu0 %v2312, 127
        %v2784 = vpop.permute.xlu0 %2783
        %2785 = vrot.lane.b32.xlu0 %v2313, 127
        %v2786 = vpop.permute.xlu0 %2785
        %2787 = vrot.lane.b32.xlu0 %v2314, 127
        %v2788 = vpop.permute.xlu0 %2787
        %2789 = vrot.lane.b32.xlu0 %v2315, 127
        %v2790 = vpop.permute.xlu0 %2789
        %2791 = vrot.lane.b32.xlu0 %v2316, 127
        %v2792 = vpop.permute.xlu0 %2791
        %2793 = vrot.lane.b32.xlu0 %v2317, 127
        %v2794 = vpop.permute.xlu0 %2793
        %2795 = vrot.lane.b32.xlu0 %v2318, 127
        %v2796 = vpop.permute.xlu0 %2795
        %2797 = vrot.lane.b32.xlu0 %v2319, 127
        %v2798 = vpop.permute.xlu0 %2797
        %2799 = vrot.lane.b32.xlu0 %v2320, 127
        %v2800 = vpop.permute.xlu0 %2799
        %v2801 = vsel %vm1160, %v2770, %v2772
        %v2802 = vsel %vm1160, %v2774, %v2776
        %v2803 = vsel %vm1160, %v2778, %v2780
        %v2804 = vsel %vm1160, %v2782, %v2784
        %v2805 = vsel %vm1160, %v2786, %v2788
        %v2806 = vsel %vm1160, %v2790, %v2792
        %v2807 = vsel %vm1160, %v2794, %v2796
        %v2808 = vsel %vm1160, %v2798, %v2800
        %v2833 = vsel %vm1160, %v2772, %v2770
        %v2834 = vsel %vm1160, %v2776, %v2774
        %v2835 = vsel %vm1160, %v2780, %v2778
        %v2836 = vsel %vm1160, %v2784, %v2782
        %v2837 = vsel %vm1160, %v2788, %v2786
        %v2838 = vsel %vm1160, %v2792, %v2790
        %v2839 = vsel %vm1160, %v2796, %v2794
        %v2840 = vsel %vm1160, %v2800, %v2798
        %v2841 = vmul.f32 %v2801, %v1184
        %v2842 = vmul.f32 %v2833, %v1188
        %v2843 = vmul.f32 %v2802, %v1184
        %v2844 = vmul.f32 %v2834, %v1188
        %v2845 = vmul.f32 %v2803, %v1184
        %v2846 = vmul.f32 %v2835, %v1188
        %v2847 = vmul.f32 %v2804, %v1184
        %v2848 = vmul.f32 %v2836, %v1188
        %v2849 = vmul.f32 %v2805, %v1184
        %v2850 = vmul.f32 %v2837, %v1188
        %v2851 = vmul.f32 %v2806, %v1184
        %v2852 = vmul.f32 %v2838, %v1188
        %v2853 = vmul.f32 %v2807, %v1184
        %v2854 = vmul.f32 %v2839, %v1188
        %v2855 = vmul.f32 %v2808, %v1184
        %v2856 = vmul.f32 %v2840, %v1188
        %2857 = vst [vmem:[#allocation2 + $0x280] sm:$0xff] %v2841
        %2858 = vst [vmem:[#allocation2 + $0x288] sm:$0xff] %v2842
        %2859 = vst [vmem:[#allocation2 + $0x290] sm:$0xff] %v2843
        %2860 = vst [vmem:[#allocation2 + $0x298] sm:$0xff] %v2844
        %2861 = vst [vmem:[#allocation2 + $0x2a0] sm:$0xff] %v2845
        %2862 = vst [vmem:[#allocation2 + $0x2a8] sm:$0xff] %v2846
        %2863 = vst [vmem:[#allocation2 + $0x2b0] sm:$0xff] %v2847
        %2864 = vst [vmem:[#allocation2 + $0x2b8] sm:$0xff] %v2848
        %2865 = vst [vmem:[#allocation2 + $0x2c0] sm:$0xff] %v2849
        %2866 = vst [vmem:[#allocation2 + $0x2c8] sm:$0xff] %v2850
        %2867 = vst [vmem:[#allocation2 + $0x2d0] sm:$0xff] %v2851
        %2868 = vst [vmem:[#allocation2 + $0x2d8] sm:$0xff] %v2852
        %2869 = vst [vmem:[#allocation2 + $0x2e0] sm:$0xff] %v2853
        %2870 = vst [vmem:[#allocation2 + $0x2e8] sm:$0xff] %v2854
        %2871 = vst [vmem:[#allocation2 + $0x2f0] sm:$0xff] %v2855
        %2872 = vst [vmem:[#allocation2 + $0x2f8] sm:$0xff] %v2856
        %2873 = vrot.lane.b32.xlu0 %v2305, 113
        %v2874 = vpop.permute.xlu0 %2873
        %2875 = vrot.lane.b32.xlu0 %v2306, 113
        %v2876 = vpop.permute.xlu0 %2875
        %2877 = vrot.lane.b32.xlu0 %v2307, 113
        %v2878 = vpop.permute.xlu0 %2877
        %2879 = vrot.lane.b32.xlu0 %v2308, 113
        %v2880 = vpop.permute.xlu0 %2879
        %2881 = vrot.lane.b32.xlu0 %v2309, 113
        %v2882 = vpop.permute.xlu0 %2881
        %2883 = vrot.lane.b32.xlu0 %v2310, 113
        %v2884 = vpop.permute.xlu0 %2883
        %2885 = vrot.lane.b32.xlu0 %v2311, 113
        %v2886 = vpop.permute.xlu0 %2885
        %2887 = vrot.lane.b32.xlu0 %v2312, 113
        %v2888 = vpop.permute.xlu0 %2887
        %2889 = vrot.lane.b32.xlu0 %v2313, 113
        %v2890 = vpop.permute.xlu0 %2889
        %2891 = vrot.lane.b32.xlu0 %v2314, 113
        %v2892 = vpop.permute.xlu0 %2891
        %2893 = vrot.lane.b32.xlu0 %v2315, 113
        %v2894 = vpop.permute.xlu0 %2893
        %2895 = vrot.lane.b32.xlu0 %v2316, 113
        %v2896 = vpop.permute.xlu0 %2895
        %2897 = vrot.lane.b32.xlu0 %v2317, 113
        %v2898 = vpop.permute.xlu0 %2897
        %2899 = vrot.lane.b32.xlu0 %v2318, 113
        %v2900 = vpop.permute.xlu0 %2899
        %2901 = vrot.lane.b32.xlu0 %v2319, 113
        %v2902 = vpop.permute.xlu0 %2901
        %2903 = vrot.lane.b32.xlu0 %v2320, 113
        %v2904 = vpop.permute.xlu0 %2903
        %v2905 = vsel %vm1221, %v2874, %v2876
        %v2906 = vsel %vm1221, %v2878, %v2880
        %v2907 = vsel %vm1221, %v2882, %v2884
        %v2908 = vsel %vm1221, %v2886, %v2888
        %v2909 = vsel %vm1221, %v2890, %v2892
        %v2910 = vsel %vm1221, %v2894, %v2896
        %v2911 = vsel %vm1221, %v2898, %v2900
        %v2912 = vsel %vm1221, %v2902, %v2904
        %v2937 = vsel %vm1221, %v2876, %v2874
        %v2938 = vsel %vm1221, %v2880, %v2878
        %v2939 = vsel %vm1221, %v2884, %v2882
        %v2940 = vsel %vm1221, %v2888, %v2886
        %v2941 = vsel %vm1221, %v2892, %v2890
        %v2942 = vsel %vm1221, %v2896, %v2894
        %v2943 = vsel %vm1221, %v2900, %v2898
        %v2944 = vsel %vm1221, %v2904, %v2902
        %v2945 = vmul.f32 %v2905, %v1245
        %v2946 = vmul.f32 %v2937, %v1249
        %v2947 = vmul.f32 %v2906, %v1245
        %v2948 = vmul.f32 %v2938, %v1249
        %v2949 = vmul.f32 %v2907, %v1245
        %v2950 = vmul.f32 %v2939, %v1249
        %v2951 = vmul.f32 %v2908, %v1245
        %v2952 = vmul.f32 %v2940, %v1249
        %v2953 = vmul.f32 %v2909, %v1245
        %v2954 = vmul.f32 %v2941, %v1249
        %v2955 = vmul.f32 %v2910, %v1245
        %v2956 = vmul.f32 %v2942, %v1249
        %v2957 = vmul.f32 %v2911, %v1245
        %v2958 = vmul.f32 %v2943, %v1249
        %v2959 = vmul.f32 %v2912, %v1245
        %v2960 = vmul.f32 %v2944, %v1249
        %2961 = vst [vmem:[#allocation2 + $0x300] sm:$0xff] %v2945
        %2962 = vst [vmem:[#allocation2 + $0x308] sm:$0xff] %v2946
        %2963 = vst [vmem:[#allocation2 + $0x310] sm:$0xff] %v2947
        %2964 = vst [vmem:[#allocation2 + $0x318] sm:$0xff] %v2948
        %2965 = vst [vmem:[#allocation2 + $0x320] sm:$0xff] %v2949
        %2966 = vst [vmem:[#allocation2 + $0x328] sm:$0xff] %v2950
        %2967 = vst [vmem:[#allocation2 + $0x330] sm:$0xff] %v2951
        %2968 = vst [vmem:[#allocation2 + $0x338] sm:$0xff] %v2952
        %2969 = vst [vmem:[#allocation2 + $0x340] sm:$0xff] %v2953
        %2970 = vst [vmem:[#allocation2 + $0x348] sm:$0xff] %v2954
        %2971 = vst [vmem:[#allocation2 + $0x350] sm:$0xff] %v2955
        %2972 = vst [vmem:[#allocation2 + $0x358] sm:$0xff] %v2956
        %2973 = vst [vmem:[#allocation2 + $0x360] sm:$0xff] %v2957
        %2974 = vst [vmem:[#allocation2 + $0x368] sm:$0xff] %v2958
        %2975 = vst [vmem:[#allocation2 + $0x370] sm:$0xff] %v2959
        %2976 = vst [vmem:[#allocation2 + $0x378] sm:$0xff] %v2960
        %2977 = vrot.lane.b32.xlu0 %v2305, 112
        %v2978 = vpop.permute.xlu0 %2977
        %2979 = vrot.lane.b32.xlu0 %v2306, 112
        %v2980 = vpop.permute.xlu0 %2979
        %2981 = vrot.lane.b32.xlu0 %v2307, 112
        %v2982 = vpop.permute.xlu0 %2981
        %2983 = vrot.lane.b32.xlu0 %v2308, 112
        %v2984 = vpop.permute.xlu0 %2983
        %2985 = vrot.lane.b32.xlu0 %v2309, 112
        %v2986 = vpop.permute.xlu0 %2985
        %2987 = vrot.lane.b32.xlu0 %v2310, 112
        %v2988 = vpop.permute.xlu0 %2987
        %2989 = vrot.lane.b32.xlu0 %v2311, 112
        %v2990 = vpop.permute.xlu0 %2989
        %2991 = vrot.lane.b32.xlu0 %v2312, 112
        %v2992 = vpop.permute.xlu0 %2991
        %2993 = vrot.lane.b32.xlu0 %v2313, 112
        %v2994 = vpop.permute.xlu0 %2993
        %2995 = vrot.lane.b32.xlu0 %v2314, 112
        %v2996 = vpop.permute.xlu0 %2995
        %2997 = vrot.lane.b32.xlu0 %v2315, 112
        %v2998 = vpop.permute.xlu0 %2997
        %2999 = vrot.lane.b32.xlu0 %v2316, 112
        %v3000 = vpop.permute.xlu0 %2999
        %3001 = vrot.lane.b32.xlu0 %v2317, 112
        %v3002 = vpop.permute.xlu0 %3001
        %3003 = vrot.lane.b32.xlu0 %v2318, 112
        %v3004 = vpop.permute.xlu0 %3003
        %3005 = vrot.lane.b32.xlu0 %v2319, 112
        %v3006 = vpop.permute.xlu0 %3005
        %3007 = vrot.lane.b32.xlu0 %v2320, 112
        %v3008 = vpop.permute.xlu0 %3007
        %v3009 = vsel %vm1282, %v2978, %v2980
        %v3010 = vsel %vm1282, %v2982, %v2984
        %v3011 = vsel %vm1282, %v2986, %v2988
        %v3012 = vsel %vm1282, %v2990, %v2992
        %v3013 = vsel %vm1282, %v2994, %v2996
        %v3014 = vsel %vm1282, %v2998, %v3000
        %v3015 = vsel %vm1282, %v3002, %v3004
        %v3016 = vsel %vm1282, %v3006, %v3008
        %v3041 = vsel %vm1282, %v2980, %v2978
        %v3042 = vsel %vm1282, %v2984, %v2982
        %v3043 = vsel %vm1282, %v2988, %v2986
        %v3044 = vsel %vm1282, %v2992, %v2990
        %v3045 = vsel %vm1282, %v2996, %v2994
        %v3046 = vsel %vm1282, %v3000, %v2998
        %v3047 = vsel %vm1282, %v3004, %v3002
        %v3048 = vsel %vm1282, %v3008, %v3006
        %v3049 = vmul.f32 %v3009, %v1306
        %v3050 = vmul.f32 %v3041, %v1310
        %v3051 = vmul.f32 %v3010, %v1306
        %v3052 = vmul.f32 %v3042, %v1310
        %v3053 = vmul.f32 %v3011, %v1306
        %v3054 = vmul.f32 %v3043, %v1310
        %v3055 = vmul.f32 %v3012, %v1306
        %v3056 = vmul.f32 %v3044, %v1310
        %v3057 = vmul.f32 %v3013, %v1306
        %v3058 = vmul.f32 %v3045, %v1310
        %v3059 = vmul.f32 %v3014, %v1306
        %v3060 = vmul.f32 %v3046, %v1310
        %v3061 = vmul.f32 %v3015, %v1306
        %v3062 = vmul.f32 %v3047, %v1310
        %v3063 = vmul.f32 %v3016, %v1306
        %v3064 = vmul.f32 %v3048, %v1310
        %3065 = vst [vmem:[#allocation2 + $0x380] sm:$0xff] %v3049
        %3066 = vst [vmem:[#allocation2 + $0x388] sm:$0xff] %v3050
        %3067 = vst [vmem:[#allocation2 + $0x390] sm:$0xff] %v3051
        %3068 = vst [vmem:[#allocation2 + $0x398] sm:$0xff] %v3052
        %3069 = vst [vmem:[#allocation2 + $0x3a0] sm:$0xff] %v3053
        %3070 = vst [vmem:[#allocation2 + $0x3a8] sm:$0xff] %v3054
        %3071 = vst [vmem:[#allocation2 + $0x3b0] sm:$0xff] %v3055
        %3072 = vst [vmem:[#allocation2 + $0x3b8] sm:$0xff] %v3056
        %3073 = vst [vmem:[#allocation2 + $0x3c0] sm:$0xff] %v3057
        %3074 = vst [vmem:[#allocation2 + $0x3c8] sm:$0xff] %v3058
        %3075 = vst [vmem:[#allocation2 + $0x3d0] sm:$0xff] %v3059
        %3076 = vst [vmem:[#allocation2 + $0x3d8] sm:$0xff] %v3060
        %3077 = vst [vmem:[#allocation2 + $0x3e0] sm:$0xff] %v3061
        %3078 = vst [vmem:[#allocation2 + $0x3e8] sm:$0xff] %v3062
        %3079 = vst [vmem:[#allocation2 + $0x3f0] sm:$0xff] %v3063
        %3080 = vst [vmem:[#allocation2 + $0x3f8] sm:$0xff] %v3064
        %3081 = vrot.lane.b32.xlu0 %v2305, 111
        %v3082 = vpop.permute.xlu0 %3081
        %3083 = vrot.lane.b32.xlu0 %v2306, 111
        %v3084 = vpop.permute.xlu0 %3083
        %3085 = vrot.lane.b32.xlu0 %v2307, 111
        %v3086 = vpop.permute.xlu0 %3085
        %3087 = vrot.lane.b32.xlu0 %v2308, 111
        %v3088 = vpop.permute.xlu0 %3087
        %3089 = vrot.lane.b32.xlu0 %v2309, 111
        %v3090 = vpop.permute.xlu0 %3089
        %3091 = vrot.lane.b32.xlu0 %v2310, 111
        %v3092 = vpop.permute.xlu0 %3091
        %3093 = vrot.lane.b32.xlu0 %v2311, 111
        %v3094 = vpop.permute.xlu0 %3093
        %3095 = vrot.lane.b32.xlu0 %v2312, 111
        %v3096 = vpop.permute.xlu0 %3095
        %3097 = vrot.lane.b32.xlu0 %v2313, 111
        %v3098 = vpop.permute.xlu0 %3097
        %3099 = vrot.lane.b32.xlu0 %v2314, 111
        %v3100 = vpop.permute.xlu0 %3099
        %3101 = vrot.lane.b32.xlu0 %v2315, 111
        %v3102 = vpop.permute.xlu0 %3101
        %3103 = vrot.lane.b32.xlu0 %v2316, 111
        %v3104 = vpop.permute.xlu0 %3103
        %3105 = vrot.lane.b32.xlu0 %v2317, 111
        %v3106 = vpop.permute.xlu0 %3105
        %3107 = vrot.lane.b32.xlu0 %v2318, 111
        %v3108 = vpop.permute.xlu0 %3107
        %3109 = vrot.lane.b32.xlu0 %v2319, 111
        %v3110 = vpop.permute.xlu0 %3109
        %3111 = vrot.lane.b32.xlu0 %v2320, 111
        %v3112 = vpop.permute.xlu0 %3111
        %v3113 = vsel %vm1343, %v3082, %v3084
        %v3114 = vsel %vm1343, %v3086, %v3088
        %v3115 = vsel %vm1343, %v3090, %v3092
        %v3116 = vsel %vm1343, %v3094, %v3096
        %v3117 = vsel %vm1343, %v3098, %v3100
        %v3118 = vsel %vm1343, %v3102, %v3104
        %v3119 = vsel %vm1343, %v3106, %v3108
        %v3120 = vsel %vm1343, %v3110, %v3112
        %v3145 = vsel %vm1343, %v3084, %v3082
        %v3146 = vsel %vm1343, %v3088, %v3086
        %v3147 = vsel %vm1343, %v3092, %v3090
        %v3148 = vsel %vm1343, %v3096, %v3094
        %v3149 = vsel %vm1343, %v3100, %v3098
        %v3150 = vsel %vm1343, %v3104, %v3102
        %v3151 = vsel %vm1343, %v3108, %v3106
        %v3152 = vsel %vm1343, %v3112, %v3110
        %v3153 = vmul.f32 %v3113, %v1367
        %v3154 = vmul.f32 %v3145, %v1371
        %v3155 = vmul.f32 %v3114, %v1367
        %v3156 = vmul.f32 %v3146, %v1371
        %v3157 = vmul.f32 %v3115, %v1367
        %v3158 = vmul.f32 %v3147, %v1371
        %v3159 = vmul.f32 %v3116, %v1367
        %v3160 = vmul.f32 %v3148, %v1371
        %v3161 = vmul.f32 %v3117, %v1367
        %v3162 = vmul.f32 %v3149, %v1371
        %v3163 = vmul.f32 %v3118, %v1367
        %v3164 = vmul.f32 %v3150, %v1371
        %v3165 = vmul.f32 %v3119, %v1367
        %v3166 = vmul.f32 %v3151, %v1371
        %v3167 = vmul.f32 %v3120, %v1367
        %v3168 = vmul.f32 %v3152, %v1371
        %3169 = vst [vmem:[#allocation2 + $0x400] sm:$0xff] %v3153
        %3170 = vst [vmem:[#allocation2 + $0x408] sm:$0xff] %v3154
        %3171 = vst [vmem:[#allocation2 + $0x410] sm:$0xff] %v3155
        %3172 = vst [vmem:[#allocation2 + $0x418] sm:$0xff] %v3156
        %3173 = vst [vmem:[#allocation2 + $0x420] sm:$0xff] %v3157
        %3174 = vst [vmem:[#allocation2 + $0x428] sm:$0xff] %v3158
        %3175 = vst [vmem:[#allocation2 + $0x430] sm:$0xff] %v3159
        %3176 = vst [vmem:[#allocation2 + $0x438] sm:$0xff] %v3160
        %3177 = vst [vmem:[#allocation2 + $0x440] sm:$0xff] %v3161
        %3178 = vst [vmem:[#allocation2 + $0x448] sm:$0xff] %v3162
        %3179 = vst [vmem:[#allocation2 + $0x450] sm:$0xff] %v3163
        %3180 = vst [vmem:[#allocation2 + $0x458] sm:$0xff] %v3164
        %3181 = vst [vmem:[#allocation2 + $0x460] sm:$0xff] %v3165
        %3182 = vst [vmem:[#allocation2 + $0x468] sm:$0xff] %v3166
        %3183 = vst [vmem:[#allocation2 + $0x470] sm:$0xff] %v3167
        %3184 = vst [vmem:[#allocation2 + $0x478] sm:$0xff] %v3168
        %v3185 = vld [vmem:[%s10] sm:$0xff]
        %v3186 = vld [vmem:[%s10 + $0x8] sm:$0xff]
        %v3187 = vld [vmem:[%s10 + $0x10] sm:$0xff]
        %v3188 = vld [vmem:[%s10 + $0x18] sm:$0xff]
        %v3189 = vld [vmem:[%s10 + $0x20] sm:$0xff]
        %v3190 = vld [vmem:[%s10 + $0x28] sm:$0xff]
        %v3191 = vld [vmem:[%s10 + $0x30] sm:$0xff]
        %v3192 = vld [vmem:[%s10 + $0x38] sm:$0xff]
        %v3193 = vld [vmem:[%s10 + $0x40] sm:$0xff]
        %v3194 = vld [vmem:[%s10 + $0x48] sm:$0xff]
        %v3195 = vld [vmem:[%s10 + $0x50] sm:$0xff]
        %v3196 = vld [vmem:[%s10 + $0x58] sm:$0xff]
        %v3197 = vld [vmem:[%s10 + $0x60] sm:$0xff]
        %v3198 = vld [vmem:[%s10 + $0x68] sm:$0xff]
        %v3199 = vld [vmem:[%s10 + $0x70] sm:$0xff]
        %v3200 = vld [vmem:[%s10 + $0x78] sm:$0xff]
        %v3201 = vld [vmem:[%s10 + $0x80] sm:$0xff]
        %v3202 = vld [vmem:[%s10 + $0x88] sm:$0xff]
        %v3203 = vld [vmem:[%s10 + $0x90] sm:$0xff]
        %v3204 = vld [vmem:[%s10 + $0x98] sm:$0xff]
        %v3205 = vld [vmem:[%s10 + $0xa0] sm:$0xff]
        %v3206 = vld [vmem:[%s10 + $0xa8] sm:$0xff]
        %v3207 = vld [vmem:[%s10 + $0xb0] sm:$0xff]
        %v3208 = vld [vmem:[%s10 + $0xb8] sm:$0xff]
        %v3209 = vld [vmem:[%s10 + $0xc0] sm:$0xff]
        %v3210 = vld [vmem:[%s10 + $0xc8] sm:$0xff]
        %v3211 = vld [vmem:[%s10 + $0xd0] sm:$0xff]
        %v3212 = vld [vmem:[%s10 + $0xd8] sm:$0xff]
        %v3213 = vld [vmem:[%s10 + $0xe0] sm:$0xff]
        %v3214 = vld [vmem:[%s10 + $0xe8] sm:$0xff]
        %v3215 = vld [vmem:[%s10 + $0xf0] sm:$0xff]
        %v3216 = vld [vmem:[%s10 + $0xf8] sm:$0xff]
        %v3217 = vld [vmem:[%s10 + $0x100] sm:$0xff]
        %v3218 = vld [vmem:[%s10 + $0x108] sm:$0xff]
        %v3219 = vld [vmem:[%s10 + $0x110] sm:$0xff]
        %v3220 = vld [vmem:[%s10 + $0x118] sm:$0xff]
        %v3221 = vld [vmem:[%s10 + $0x120] sm:$0xff]
        %v3222 = vld [vmem:[%s10 + $0x128] sm:$0xff]
        %v3223 = vld [vmem:[%s10 + $0x130] sm:$0xff]
        %v3224 = vld [vmem:[%s10 + $0x138] sm:$0xff]
        %v3225 = vld [vmem:[#allocation2] sm:$0xff]
        %v3226 = vld [vmem:[#allocation2 + $0x8] sm:$0xff]
        %v3227 = vld [vmem:[#allocation2 + $0x10] sm:$0xff]
        %v3228 = vld [vmem:[#allocation2 + $0x18] sm:$0xff]
        %v3229 = vld [vmem:[#allocation2 + $0x20] sm:$0xff]
        %v3230 = vld [vmem:[#allocation2 + $0x28] sm:$0xff]
        %v3231 = vld [vmem:[#allocation2 + $0x30] sm:$0xff]
        %v3232 = vld [vmem:[#allocation2 + $0x38] sm:$0xff]
        %v3233 = vld [vmem:[#allocation2 + $0x40] sm:$0xff]
        %v3234 = vld [vmem:[#allocation2 + $0x48] sm:$0xff]
        %v3235 = vld [vmem:[#allocation2 + $0x50] sm:$0xff]
        %v3236 = vld [vmem:[#allocation2 + $0x58] sm:$0xff]
        %v3237 = vld [vmem:[#allocation2 + $0x60] sm:$0xff]
        %v3238 = vld [vmem:[#allocation2 + $0x68] sm:$0xff]
        %v3239 = vld [vmem:[#allocation2 + $0x70] sm:$0xff]
        %v3240 = vld [vmem:[#allocation2 + $0x78] sm:$0xff]
        %v3241 = vld [vmem:[#allocation2 + $0x80] sm:$0xff]
        %v3242 = vld [vmem:[#allocation2 + $0x88] sm:$0xff]
        %v3243 = vld [vmem:[#allocation2 + $0x90] sm:$0xff]
        %v3244 = vld [vmem:[#allocation2 + $0x98] sm:$0xff]
        %v3245 = vld [vmem:[#allocation2 + $0xa0] sm:$0xff]
        %v3246 = vld [vmem:[#allocation2 + $0xa8] sm:$0xff]
        %v3247 = vld [vmem:[#allocation2 + $0xb0] sm:$0xff]
        %v3248 = vld [vmem:[#allocation2 + $0xb8] sm:$0xff]
        %v3249 = vld [vmem:[#allocation2 + $0xc0] sm:$0xff]
        %v3250 = vld [vmem:[#allocation2 + $0xc8] sm:$0xff]
        %v3251 = vld [vmem:[#allocation2 + $0xd0] sm:$0xff]
        %v3252 = vld [vmem:[#allocation2 + $0xd8] sm:$0xff]
        %v3253 = vld [vmem:[#allocation2 + $0xe0] sm:$0xff]
        %v3254 = vld [vmem:[#allocation2 + $0xe8] sm:$0xff]
        %v3255 = vld [vmem:[#allocation2 + $0xf0] sm:$0xff]
        %v3256 = vld [vmem:[#allocation2 + $0xf8] sm:$0xff]
        %v3257 = vld [vmem:[#allocation2 + $0x100] sm:$0xff]
        %v3258 = vld [vmem:[#allocation2 + $0x108] sm:$0xff]
        %v3259 = vld [vmem:[#allocation2 + $0x110] sm:$0xff]
        %v3260 = vld [vmem:[#allocation2 + $0x118] sm:$0xff]
        %v3261 = vld [vmem:[#allocation2 + $0x120] sm:$0xff]
        %v3262 = vld [vmem:[#allocation2 + $0x128] sm:$0xff]
        %v3263 = vld [vmem:[#allocation2 + $0x130] sm:$0xff]
        %v3264 = vld [vmem:[#allocation2 + $0x138] sm:$0xff]
        %v3265 = vld [vmem:[#allocation2 + $0x140] sm:$0xff]
        %v3266 = vld [vmem:[#allocation2 + $0x148] sm:$0xff]
        %v3267 = vld [vmem:[#allocation2 + $0x150] sm:$0xff]
        %v3268 = vld [vmem:[#allocation2 + $0x158] sm:$0xff]
        %v3269 = vld [vmem:[#allocation2 + $0x160] sm:$0xff]
        %v3270 = vld [vmem:[#allocation2 + $0x168] sm:$0xff]
        %v3271 = vld [vmem:[#allocation2 + $0x170] sm:$0xff]
        %v3272 = vld [vmem:[#allocation2 + $0x178] sm:$0xff]
        %v3273 = vld [vmem:[#allocation2 + $0x180] sm:$0xff]
        %v3274 = vld [vmem:[#allocation2 + $0x188] sm:$0xff]
        %v3275 = vld [vmem:[#allocation2 + $0x190] sm:$0xff]
        %v3276 = vld [vmem:[#allocation2 + $0x198] sm:$0xff]
        %v3277 = vld [vmem:[#allocation2 + $0x1a0] sm:$0xff]
        %v3278 = vld [vmem:[#allocation2 + $0x1a8] sm:$0xff]
        %v3279 = vld [vmem:[#allocation2 + $0x1b0] sm:$0xff]
        %v3280 = vld [vmem:[#allocation2 + $0x1b8] sm:$0xff]
        %v3281 = vld [vmem:[#allocation2 + $0x1c0] sm:$0xff]
        %v3282 = vld [vmem:[#allocation2 + $0x1c8] sm:$0xff]
        %v3283 = vld [vmem:[#allocation2 + $0x1d0] sm:$0xff]
        %v3284 = vld [vmem:[#allocation2 + $0x1d8] sm:$0xff]
        %v3285 = vld [vmem:[#allocation2 + $0x1e0] sm:$0xff]
        %v3286 = vld [vmem:[#allocation2 + $0x1e8] sm:$0xff]
        %v3287 = vld [vmem:[#allocation2 + $0x1f0] sm:$0xff]
        %v3288 = vld [vmem:[#allocation2 + $0x1f8] sm:$0xff]
        %v3289 = vld [vmem:[#allocation2 + $0x200] sm:$0xff]
        %v3290 = vld [vmem:[#allocation2 + $0x208] sm:$0xff]
        %v3291 = vld [vmem:[#allocation2 + $0x210] sm:$0xff]
        %v3292 = vld [vmem:[#allocation2 + $0x218] sm:$0xff]
        %v3293 = vld [vmem:[#allocation2 + $0x220] sm:$0xff]
        %v3294 = vld [vmem:[#allocation2 + $0x228] sm:$0xff]
        %v3295 = vld [vmem:[#allocation2 + $0x230] sm:$0xff]
        %v3296 = vld [vmem:[#allocation2 + $0x238] sm:$0xff]
        %v3297 = vld [vmem:[#allocation2 + $0x240] sm:$0xff]
        %v3298 = vld [vmem:[#allocation2 + $0x248] sm:$0xff]
        %v3299 = vld [vmem:[#allocation2 + $0x250] sm:$0xff]
        %v3300 = vld [vmem:[#allocation2 + $0x258] sm:$0xff]
        %v3301 = vld [vmem:[#allocation2 + $0x260] sm:$0xff]
        %v3302 = vld [vmem:[#allocation2 + $0x268] sm:$0xff]
        %v3303 = vld [vmem:[#allocation2 + $0x270] sm:$0xff]
        %v3304 = vld [vmem:[#allocation2 + $0x278] sm:$0xff]
        %v3305 = vld [vmem:[#allocation2 + $0x280] sm:$0xff]
        %v3306 = vld [vmem:[#allocation2 + $0x288] sm:$0xff]
        %v3307 = vld [vmem:[#allocation2 + $0x290] sm:$0xff]
        %v3308 = vld [vmem:[#allocation2 + $0x298] sm:$0xff]
        %v3309 = vld [vmem:[#allocation2 + $0x2a0] sm:$0xff]
        %v3310 = vld [vmem:[#allocation2 + $0x2a8] sm:$0xff]
        %v3311 = vld [vmem:[#allocation2 + $0x2b0] sm:$0xff]
        %v3312 = vld [vmem:[#allocation2 + $0x2b8] sm:$0xff]
        %v3313 = vld [vmem:[#allocation2 + $0x2c0] sm:$0xff]
        %v3314 = vld [vmem:[#allocation2 + $0x2c8] sm:$0xff]
        %v3315 = vld [vmem:[#allocation2 + $0x2d0] sm:$0xff]
        %v3316 = vld [vmem:[#allocation2 + $0x2d8] sm:$0xff]
        %v3317 = vld [vmem:[#allocation2 + $0x2e0] sm:$0xff]
        %v3318 = vld [vmem:[#allocation2 + $0x2e8] sm:$0xff]
        %v3319 = vld [vmem:[#allocation2 + $0x2f0] sm:$0xff]
        %v3320 = vld [vmem:[#allocation2 + $0x2f8] sm:$0xff]
        %v3321 = vld [vmem:[#allocation2 + $0x300] sm:$0xff]
        %v3322 = vld [vmem:[#allocation2 + $0x308] sm:$0xff]
        %v3323 = vld [vmem:[#allocation2 + $0x310] sm:$0xff]
        %v3324 = vld [vmem:[#allocation2 + $0x318] sm:$0xff]
        %v3325 = vld [vmem:[#allocation2 + $0x320] sm:$0xff]
        %v3326 = vld [vmem:[#allocation2 + $0x328] sm:$0xff]
        %v3327 = vld [vmem:[#allocation2 + $0x330] sm:$0xff]
        %v3328 = vld [vmem:[#allocation2 + $0x338] sm:$0xff]
        %v3329 = vld [vmem:[#allocation2 + $0x340] sm:$0xff]
        %v3330 = vld [vmem:[#allocation2 + $0x348] sm:$0xff]
        %v3331 = vld [vmem:[#allocation2 + $0x350] sm:$0xff]
        %v3332 = vld [vmem:[#allocation2 + $0x358] sm:$0xff]
        %v3333 = vld [vmem:[#allocation2 + $0x360] sm:$0xff]
        %v3334 = vld [vmem:[#allocation2 + $0x368] sm:$0xff]
        %v3335 = vld [vmem:[#allocation2 + $0x370] sm:$0xff]
        %v3336 = vld [vmem:[#allocation2 + $0x378] sm:$0xff]
        %v3337 = vld [vmem:[#allocation2 + $0x380] sm:$0xff]
        %v3338 = vld [vmem:[#allocation2 + $0x388] sm:$0xff]
        %v3339 = vld [vmem:[#allocation2 + $0x390] sm:$0xff]
        %v3340 = vld [vmem:[#allocation2 + $0x398] sm:$0xff]
        %v3341 = vld [vmem:[#allocation2 + $0x3a0] sm:$0xff]
        %v3342 = vld [vmem:[#allocation2 + $0x3a8] sm:$0xff]
        %v3343 = vld [vmem:[#allocation2 + $0x3b0] sm:$0xff]
        %v3344 = vld [vmem:[#allocation2 + $0x3b8] sm:$0xff]
        %v3345 = vld [vmem:[#allocation2 + $0x3c0] sm:$0xff]
        %v3346 = vld [vmem:[#allocation2 + $0x3c8] sm:$0xff]
        %v3347 = vld [vmem:[#allocation2 + $0x3d0] sm:$0xff]
        %v3348 = vld [vmem:[#allocation2 + $0x3d8] sm:$0xff]
        %v3349 = vld [vmem:[#allocation2 + $0x3e0] sm:$0xff]
        %v3350 = vld [vmem:[#allocation2 + $0x3e8] sm:$0xff]
        %v3351 = vld [vmem:[#allocation2 + $0x3f0] sm:$0xff]
        %v3352 = vld [vmem:[#allocation2 + $0x3f8] sm:$0xff]
        %v3353 = vld [vmem:[#allocation2 + $0x400] sm:$0xff]
        %v3354 = vld [vmem:[#allocation2 + $0x408] sm:$0xff]
        %v3355 = vld [vmem:[#allocation2 + $0x410] sm:$0xff]
        %v3356 = vld [vmem:[#allocation2 + $0x418] sm:$0xff]
        %v3357 = vld [vmem:[#allocation2 + $0x420] sm:$0xff]
        %v3358 = vld [vmem:[#allocation2 + $0x428] sm:$0xff]
        %v3359 = vld [vmem:[#allocation2 + $0x430] sm:$0xff]
        %v3360 = vld [vmem:[#allocation2 + $0x438] sm:$0xff]
        %v3361 = vld [vmem:[#allocation2 + $0x440] sm:$0xff]
        %v3362 = vld [vmem:[#allocation2 + $0x448] sm:$0xff]
        %v3363 = vld [vmem:[#allocation2 + $0x450] sm:$0xff]
        %v3364 = vld [vmem:[#allocation2 + $0x458] sm:$0xff]
        %v3365 = vld [vmem:[#allocation2 + $0x460] sm:$0xff]
        %v3366 = vld [vmem:[#allocation2 + $0x468] sm:$0xff]
        %v3367 = vld [vmem:[#allocation2 + $0x470] sm:$0xff]
        %v3368 = vld [vmem:[#allocation2 + $0x478] sm:$0xff]
        %v3369 = vld [vmem:[%s11] sm:$0xff]
        %v3370 = vld [vmem:[%s11 + $0x8] sm:$0xff]
        %v3371 = vld [vmem:[%s11 + $0x10] sm:$0xff]
        %v3372 = vld [vmem:[%s11 + $0x18] sm:$0xff]
        %v3373 = vld [vmem:[%s11 + $0x20] sm:$0xff]
        %v3374 = vld [vmem:[%s11 + $0x28] sm:$0xff]
        %v3375 = vld [vmem:[%s11 + $0x30] sm:$0xff]
        %v3376 = vld [vmem:[%s11 + $0x38] sm:$0xff]
        %3378 = vset.pattern.permute.xlu0 0
        %3379 = vperm.xlu0 %3378, %v3369
        %v3380 = vpop.permute.xlu0 %3379
        %3383 = vset.pattern.permute.xlu0 0
        %3384 = vperm.xlu0 %3383, %v3370
        %v3385 = vpop.permute.xlu0 %3384
        %3388 = vset.pattern.permute.xlu0 0
        %3389 = vperm.xlu0 %3388, %v3371
        %v3390 = vpop.permute.xlu0 %3389
        %3393 = vset.pattern.permute.xlu0 0
        %3394 = vperm.xlu0 %3393, %v3372
        %v3395 = vpop.permute.xlu0 %3394
        %3398 = vset.pattern.permute.xlu0 0
        %3399 = vperm.xlu0 %3398, %v3373
        %v3400 = vpop.permute.xlu0 %3399
        %3403 = vset.pattern.permute.xlu0 0
        %3404 = vperm.xlu0 %3403, %v3374
        %v3405 = vpop.permute.xlu0 %3404
        %3408 = vset.pattern.permute.xlu0 0
        %3409 = vperm.xlu0 %3408, %v3375
        %v3410 = vpop.permute.xlu0 %3409
        %3413 = vset.pattern.permute.xlu0 0
        %3414 = vperm.xlu0 %3413, %v3376
        %v3415 = vpop.permute.xlu0 %3414
        %v3418 = vsel %vm1822, %v3189, 0
        %v3421 = vsel %vm1822, %v3194, 0
        %v3424 = vsel %vm1822, %v3199, 0
        %v3427 = vsel %vm1822, %v3204, 0
        %v3430 = vsel %vm1822, %v3209, 0
        %v3433 = vsel %vm1822, %v3214, 0
        %v3436 = vsel %vm1822, %v3219, 0
        %v3439 = vsel %vm1822, %v3224, 0
        %3441 = vmatprep.subr.mxu0 %v3256
        %3442 = vmatpush1.msra.mxu0 %v3255
        %3443 = vmatprep.subr.mxu0 %v3254
        %3444 = vmatpush1.msra.mxu0 %v3253
        %3445 = vmatprep.subr.mxu0 %v3252
        %3446 = vmatpush1.msra.mxu0 %v3251
        %3447 = vmatprep.subr.mxu0 %v3250
        %3448 = vmatpush1.msra.mxu0 %v3249
        %3449 = vmatprep.subr.mxu0 %v3248
        %3450 = vmatpush1.msra.mxu0 %v3247
        %3451 = vmatprep.subr.mxu0 %v3246
        %3452 = vmatpush1.msra.mxu0 %v3245
        %3453 = vmatprep.subr.mxu0 %v3244
        %3454 = vmatpush1.msra.mxu0 %v3243
        %3455 = vmatprep.subr.mxu0 %v3242
        %3456 = vmatpush1.msra.mxu0 %v3241
        %3457 = vmatprep.subr.mxu0 %v3240
        %3458 = vmatpush1.msra.mxu0 %v3239
        %3459 = vmatprep.subr.mxu0 %v3238
        %3460 = vmatpush1.msra.mxu0 %v3237
        %3461 = vmatprep.subr.mxu0 %v3236
        %3462 = vmatpush1.msra.mxu0 %v3235
        %3463 = vmatprep.subr.mxu0 %v3234
        %3464 = vmatpush1.msra.mxu0 %v3233
        %3465 = vmatprep.subr.mxu0 %v3232
        %3466 = vmatpush1.msra.mxu0 %v3231
        %3467 = vmatprep.subr.mxu0 %v3230
        %3468 = vmatpush1.msra.mxu0 %v3229
        %3469 = vmatprep.subr.mxu0 %v3228
        %3470 = vmatpush1.msra.mxu0 %v3227
        %3471 = vmatprep.subr.mxu0 %v3226
        %3472 = vmatpush1.msra.mxu0 %v3225
        %3473 = vmatprep.subr.mxu0 %v3288
        %3474 = vmatpush2.msra.mxu0 %v3287
        %3475 = vmatprep.subr.mxu0 %v3286
        %3476 = vmatpush2.msra.mxu0 %v3285
        %3477 = vmatprep.subr.mxu0 %v3284
        %3478 = vmatpush2.msra.mxu0 %v3283
        %3479 = vmatprep.subr.mxu0 %v3282
        %3480 = vmatpush2.msra.mxu0 %v3281
        %3481 = vmatprep.subr.mxu0 %v3280
        %3482 = vmatpush2.msra.mxu0 %v3279
        %3483 = vmatprep.subr.mxu0 %v3278
        %3484 = vmatpush2.msra.mxu0 %v3277
        %3485 = vmatprep.subr.mxu0 %v3276
        %3486 = vmatpush2.msra.mxu0 %v3275
        %3487 = vmatprep.subr.mxu0 %v3274
        %3488 = vmatpush2.msra.mxu0 %v3273
        %3489 = vmatprep.subr.mxu0 %v3272
        %3490 = vmatpush2.msra.mxu0 %v3271
        %3491 = vmatprep.subr.mxu0 %v3270
        %3492 = vmatpush2.msra.mxu0 %v3269
        %3493 = vmatprep.subr.mxu0 %v3268
        %3494 = vmatpush2.msra.mxu0 %v3267
        %3495 = vmatprep.subr.mxu0 %v3266
        %3496 = vmatpush2.msra.mxu0 %v3265
        %3497 = vmatprep.subr.mxu0 %v3264
        %3498 = vmatpush2.msra.mxu0 %v3263
        %3499 = vmatprep.subr.mxu0 %v3262
        %3500 = vmatpush2.msra.mxu0 %v3261
        %3501 = vmatprep.subr.mxu0 %v3260
        %3502 = vmatpush2.msra.mxu0 %v3259
        %3503 = vmatprep.subr.mxu0 %v3258
        %3504 = vmatpush2.msra.mxu0 %v3257
        %3505 = vmatprep.mubr.f32.mxu0 %v3186
        %3506 = vmatmul.mubr.f32.gmra.mxu0 %v3185
        %v3507 = vpop.f32.mrf.mxu0
        %v3508 = vadd.f32 %v3380, %v3507
        %v3509 = vpop.f32.mrf.mxu0
        %v3510 = vadd.f32 %v3380, %v3509
        %3511 = vmatprep.mubr.f32.mxu0 %v3191
        %3512 = vmatmul.mubr.f32.gmra.mxu0 %v3190
        %v3513 = vpop.f32.mrf.mxu0
        %v3514 = vadd.f32 %v3385, %v3513
        %v3515 = vpop.f32.mrf.mxu0
        %v3516 = vadd.f32 %v3385, %v3515
        %3517 = vmatprep.mubr.f32.mxu0 %v3196
        %3518 = vmatmul.mubr.f32.gmra.mxu0 %v3195
        %v3519 = vpop.f32.mrf.mxu0
        %v3520 = vadd.f32 %v3390, %v3519
        %v3521 = vpop.f32.mrf.mxu0
        %v3522 = vadd.f32 %v3390, %v3521
        %3523 = vmatprep.mubr.f32.mxu0 %v3201
        %3524 = vmatmul.mubr.f32.gmra.mxu0 %v3200
        %v3525 = vpop.f32.mrf.mxu0
        %v3526 = vadd.f32 %v3395, %v3525
        %v3527 = vpop.f32.mrf.mxu0
        %v3528 = vadd.f32 %v3395, %v3527
        %3529 = vmatprep.mubr.f32.mxu0 %v3206
        %3530 = vmatmul.mubr.f32.gmra.mxu0 %v3205
        %v3531 = vpop.f32.mrf.mxu0
        %v3532 = vadd.f32 %v3400, %v3531
        %v3533 = vpop.f32.mrf.mxu0
        %v3534 = vadd.f32 %v3400, %v3533
        %3535 = vmatprep.mubr.f32.mxu0 %v3211
        %3536 = vmatmul.mubr.f32.gmra.mxu0 %v3210
        %v3537 = vpop.f32.mrf.mxu0
        %v3538 = vadd.f32 %v3405, %v3537
        %v3539 = vpop.f32.mrf.mxu0
        %v3540 = vadd.f32 %v3405, %v3539
        %3541 = vmatprep.mubr.f32.mxu0 %v3216
        %3542 = vmatmul.mubr.f32.gmra.mxu0 %v3215
        %v3543 = vpop.f32.mrf.mxu0
        %v3544 = vadd.f32 %v3410, %v3543
        %v3545 = vpop.f32.mrf.mxu0
        %v3546 = vadd.f32 %v3410, %v3545
        %3547 = vmatprep.mubr.f32.mxu0 %v3221
        %3548 = vmatmul.mubr.f32.gmra.mxu0 %v3220
        %v3549 = vpop.f32.mrf.mxu0
        %v3550 = vadd.f32 %v3415, %v3549
        %v3551 = vpop.f32.mrf.mxu0
        %v3552 = vadd.f32 %v3415, %v3551
        %3553 = vdwg.mxu0
        %3554 = vmatprep.subr.mxu0 %v3320
        %3555 = vmatpush1.msra.mxu0 %v3319
        %3556 = vmatprep.subr.mxu0 %v3318
        %3557 = vmatpush1.msra.mxu0 %v3317
        %3558 = vmatprep.subr.mxu0 %v3316
        %3559 = vmatpush1.msra.mxu0 %v3315
        %3560 = vmatprep.subr.mxu0 %v3314
        %3561 = vmatpush1.msra.mxu0 %v3313
        %3562 = vmatprep.subr.mxu0 %v3312
        %3563 = vmatpush1.msra.mxu0 %v3311
        %3564 = vmatprep.subr.mxu0 %v3310
        %3565 = vmatpush1.msra.mxu0 %v3309
        %3566 = vmatprep.subr.mxu0 %v3308
        %3567 = vmatpush1.msra.mxu0 %v3307
        %3568 = vmatprep.subr.mxu0 %v3306
        %3569 = vmatpush1.msra.mxu0 %v3305
        %3570 = vmatprep.subr.mxu0 %v3304
        %3571 = vmatpush1.msra.mxu0 %v3303
        %3572 = vmatprep.subr.mxu0 %v3302
        %3573 = vmatpush1.msra.mxu0 %v3301
        %3574 = vmatprep.subr.mxu0 %v3300
        %3575 = vmatpush1.msra.mxu0 %v3299
        %3576 = vmatprep.subr.mxu0 %v3298
        %3577 = vmatpush1.msra.mxu0 %v3297
        %3578 = vmatprep.subr.mxu0 %v3296
        %3579 = vmatpush1.msra.mxu0 %v3295
        %3580 = vmatprep.subr.mxu0 %v3294
        %3581 = vmatpush1.msra.mxu0 %v3293
        %3582 = vmatprep.subr.mxu0 %v3292
        %3583 = vmatpush1.msra.mxu0 %v3291
        %3584 = vmatprep.subr.mxu0 %v3290
        %3585 = vmatpush1.msra.mxu0 %v3289
        %3586 = vmatprep.subr.mxu0 %v3352
        %3587 = vmatpush2.msra.mxu0 %v3351
        %3588 = vmatprep.subr.mxu0 %v3350
        %3589 = vmatpush2.msra.mxu0 %v3349
        %3590 = vmatprep.subr.mxu0 %v3348
        %3591 = vmatpush2.msra.mxu0 %v3347
        %3592 = vmatprep.subr.mxu0 %v3346
        %3593 = vmatpush2.msra.mxu0 %v3345
        %3594 = vmatprep.subr.mxu0 %v3344
        %3595 = vmatpush2.msra.mxu0 %v3343
        %3596 = vmatprep.subr.mxu0 %v3342
        %3597 = vmatpush2.msra.mxu0 %v3341
        %3598 = vmatprep.subr.mxu0 %v3340
        %3599 = vmatpush2.msra.mxu0 %v3339
        %3600 = vmatprep.subr.mxu0 %v3338
        %3601 = vmatpush2.msra.mxu0 %v3337
        %3602 = vmatprep.subr.mxu0 %v3336
        %3603 = vmatpush2.msra.mxu0 %v3335
        %3604 = vmatprep.subr.mxu0 %v3334
        %3605 = vmatpush2.msra.mxu0 %v3333
        %3606 = vmatprep.subr.mxu0 %v3332
        %3607 = vmatpush2.msra.mxu0 %v3331
        %3608 = vmatprep.subr.mxu0 %v3330
        %3609 = vmatpush2.msra.mxu0 %v3329
        %3610 = vmatprep.subr.mxu0 %v3328
        %3611 = vmatpush2.msra.mxu0 %v3327
        %3612 = vmatprep.subr.mxu0 %v3326
        %3613 = vmatpush2.msra.mxu0 %v3325
        %3614 = vmatprep.subr.mxu0 %v3324
        %3615 = vmatpush2.msra.mxu0 %v3323
        %3616 = vmatprep.subr.mxu0 %v3322
        %3617 = vmatpush2.msra.mxu0 %v3321
        %3618 = vmatprep.mubr.f32.mxu0 %v3188
        %3619 = vmatmul.mubr.f32.gmra.mxu0 %v3187
        %v3620 = vpop.f32.mrf.mxu0
        %v3621 = vadd.f32 %v3508, %v3620
        %v3622 = vpop.f32.mrf.mxu0
        %v3623 = vadd.f32 %v3510, %v3622
        %3624 = vmatprep.mubr.f32.mxu0 %v3193
        %3625 = vmatmul.mubr.f32.gmra.mxu0 %v3192
        %v3626 = vpop.f32.mrf.mxu0
        %v3627 = vadd.f32 %v3514, %v3626
        %v3628 = vpop.f32.mrf.mxu0
        %v3629 = vadd.f32 %v3516, %v3628
        %3630 = vmatprep.mubr.f32.mxu0 %v3198
        %3631 = vmatmul.mubr.f32.gmra.mxu0 %v3197
        %v3632 = vpop.f32.mrf.mxu0
        %v3633 = vadd.f32 %v3520, %v3632
        %v3634 = vpop.f32.mrf.mxu0
        %v3635 = vadd.f32 %v3522, %v3634
        %3636 = vmatprep.mubr.f32.mxu0 %v3203
        %3637 = vmatmul.mubr.f32.gmra.mxu0 %v3202
        %v3638 = vpop.f32.mrf.mxu0
        %v3639 = vadd.f32 %v3526, %v3638
        %v3640 = vpop.f32.mrf.mxu0
        %v3641 = vadd.f32 %v3528, %v3640
        %3642 = vmatprep.mubr.f32.mxu0 %v3208
        %3643 = vmatmul.mubr.f32.gmra.mxu0 %v3207
        %v3644 = vpop.f32.mrf.mxu0
        %v3645 = vadd.f32 %v3532, %v3644
        %v3646 = vpop.f32.mrf.mxu0
        %v3647 = vadd.f32 %v3534, %v3646
        %3648 = vmatprep.mubr.f32.mxu0 %v3213
        %3649 = vmatmul.mubr.f32.gmra.mxu0 %v3212
        %v3650 = vpop.f32.mrf.mxu0
        %v3651 = vadd.f32 %v3538, %v3650
        %v3652 = vpop.f32.mrf.mxu0
        %v3653 = vadd.f32 %v3540, %v3652
        %3654 = vmatprep.mubr.f32.mxu0 %v3218
        %3655 = vmatmul.mubr.f32.gmra.mxu0 %v3217
        %v3656 = vpop.f32.mrf.mxu0
        %v3657 = vadd.f32 %v3544, %v3656
        %v3658 = vpop.f32.mrf.mxu0
        %v3659 = vadd.f32 %v3546, %v3658
        %3660 = vmatprep.mubr.f32.mxu0 %v3223
        %3661 = vmatmul.mubr.f32.gmra.mxu0 %v3222
        %v3662 = vpop.f32.mrf.mxu0
        %v3663 = vadd.f32 %v3550, %v3662
        %v3664 = vpop.f32.mrf.mxu0
        %v3665 = vadd.f32 %v3552, %v3664
        %3666 = vdwg.mxu0
        %3667 = vmatprep.subr.mxu0 0.0
        %3668 = vmatpush1.msra.mxu0 0.0
        %3669 = vmatprep.subr.mxu0 0.0
        %3670 = vmatpush1.msra.mxu0 0.0
        %3671 = vmatprep.subr.mxu0 0.0
        %3672 = vmatpush1.msra.mxu0 0.0
        %3673 = vmatprep.subr.mxu0 0.0
        %3674 = vmatpush1.msra.mxu0 0.0
        %3675 = vmatprep.subr.mxu0 0.0
        %3676 = vmatpush1.msra.mxu0 0.0
        %3677 = vmatprep.subr.mxu0 0.0
        %3678 = vmatpush1.msra.mxu0 0.0
        %3679 = vmatprep.subr.mxu0 0.0
        %3680 = vmatpush1.msra.mxu0 0.0
        %3681 = vmatprep.subr.mxu0 0.0
        %3682 = vmatpush1.msra.mxu0 0.0
        %3683 = vmatprep.subr.mxu0 %v3368
        %3684 = vmatpush1.msra.mxu0 %v3367
        %3685 = vmatprep.subr.mxu0 %v3366
        %3686 = vmatpush1.msra.mxu0 %v3365
        %3687 = vmatprep.subr.mxu0 %v3364
        %3688 = vmatpush1.msra.mxu0 %v3363
        %3689 = vmatprep.subr.mxu0 %v3362
        %3690 = vmatpush1.msra.mxu0 %v3361
        %3691 = vmatprep.subr.mxu0 %v3360
        %3692 = vmatpush1.msra.mxu0 %v3359
        %3693 = vmatprep.subr.mxu0 %v3358
        %3694 = vmatpush1.msra.mxu0 %v3357
        %3695 = vmatprep.subr.mxu0 %v3356
        %3696 = vmatpush1.msra.mxu0 %v3355
        %3697 = vmatprep.subr.mxu0 %v3354
        %3698 = vmatpush1.msra.mxu0 %v3353
        %3699 = vmatprep.subr.mxu0 0.0
        %3700 = vmatpush2.msra.mxu0 0.0
        %3701 = vmatprep.subr.mxu0 0.0
        %3702 = vmatpush2.msra.mxu0 0.0
        %3703 = vmatprep.subr.mxu0 0.0
        %3704 = vmatpush2.msra.mxu0 0.0
        %3705 = vmatprep.subr.mxu0 0.0
        %3706 = vmatpush2.msra.mxu0 0.0
        %3707 = vmatprep.subr.mxu0 0.0
        %3708 = vmatpush2.msra.mxu0 0.0
        %3709 = vmatprep.subr.mxu0 0.0
        %3710 = vmatpush2.msra.mxu0 0.0
        %3711 = vmatprep.subr.mxu0 0.0
        %3712 = vmatpush2.msra.mxu0 0.0
        %3713 = vmatprep.subr.mxu0 0.0
        %3714 = vmatpush2.msra.mxu0 0.0
        %3715 = vmatprep.subr.mxu0 0.0
        %3716 = vmatpush2.msra.mxu0 0.0
        %3717 = vmatprep.subr.mxu0 0.0
        %3718 = vmatpush2.msra.mxu0 0.0
        %3719 = vmatprep.subr.mxu0 0.0
        %3720 = vmatpush2.msra.mxu0 0.0
        %3721 = vmatprep.subr.mxu0 0.0
        %3722 = vmatpush2.msra.mxu0 0.0
        %3723 = vmatprep.subr.mxu0 0.0
        %3724 = vmatpush2.msra.mxu0 0.0
        %3725 = vmatprep.subr.mxu0 0.0
        %3726 = vmatpush2.msra.mxu0 0.0
        %3727 = vmatprep.subr.mxu0 0.0
        %3728 = vmatpush2.msra.mxu0 0.0
        %3729 = vmatprep.subr.mxu0 0.0
        %3730 = vmatpush2.msra.mxu0 0.0
        %3731 = vmatprep.mubr.f32.mxu0 0.0
        %3732 = vmatmul.mubr.f32.gmra.mxu0 %v3418
        %v3733 = vpop.f32.mrf.mxu0
        %v3734 = vadd.f32 %v3621, %v3733
        %v3735 = vpop.f32.mrf.mxu0
        %v3736 = vadd.f32 %v3623, %v3735
        %3737 = vmatprep.mubr.f32.mxu0 0.0
        %3738 = vmatmul.mubr.f32.gmra.mxu0 %v3421
        %v3739 = vpop.f32.mrf.mxu0
        %v3740 = vadd.f32 %v3627, %v3739
        %v3741 = vpop.f32.mrf.mxu0
        %v3742 = vadd.f32 %v3629, %v3741
        %3743 = vmatprep.mubr.f32.mxu0 0.0
        %3744 = vmatmul.mubr.f32.gmra.mxu0 %v3424
        %v3745 = vpop.f32.mrf.mxu0
        %v3746 = vadd.f32 %v3633, %v3745
        %v3747 = vpop.f32.mrf.mxu0
        %v3748 = vadd.f32 %v3635, %v3747
        %3749 = vmatprep.mubr.f32.mxu0 0.0
        %3750 = vmatmul.mubr.f32.gmra.mxu0 %v3427
        %v3751 = vpop.f32.mrf.mxu0
        %v3752 = vadd.f32 %v3639, %v3751
        %v3753 = vpop.f32.mrf.mxu0
        %v3754 = vadd.f32 %v3641, %v3753
        %3755 = vmatprep.mubr.f32.mxu0 0.0
        %3756 = vmatmul.mubr.f32.gmra.mxu0 %v3430
        %v3757 = vpop.f32.mrf.mxu0
        %v3758 = vadd.f32 %v3645, %v3757
        %v3759 = vpop.f32.mrf.mxu0
        %v3760 = vadd.f32 %v3647, %v3759
        %3761 = vmatprep.mubr.f32.mxu0 0.0
        %3762 = vmatmul.mubr.f32.gmra.mxu0 %v3433
        %v3763 = vpop.f32.mrf.mxu0
        %v3764 = vadd.f32 %v3651, %v3763
        %v3765 = vpop.f32.mrf.mxu0
        %v3766 = vadd.f32 %v3653, %v3765
        %3767 = vmatprep.mubr.f32.mxu0 0.0
        %3768 = vmatmul.mubr.f32.gmra.mxu0 %v3436
        %v3769 = vpop.f32.mrf.mxu0
        %v3770 = vadd.f32 %v3657, %v3769
        %v3771 = vpop.f32.mrf.mxu0
        %v3772 = vadd.f32 %v3659, %v3771
        %3773 = vmatprep.mubr.f32.mxu0 0.0
        %3774 = vmatmul.mubr.f32.gmra.mxu0 %v3439
        %v3775 = vpop.f32.mrf.mxu0
        %v3776 = vadd.f32 %v3663, %v3775
        %v3777 = vpop.f32.mrf.mxu0
        %v3778 = vadd.f32 %v3665, %v3777
        %3779 = vdwg.mxu0
        %v3780 = vld [vmem:[%s12] sm:$0xff]
        %v3781 = vld [vmem:[%s12 + $0x8] sm:$0xff]
        %v3782 = vld [vmem:[%s12 + $0x10] sm:$0xff]
        %v3783 = vld [vmem:[%s12 + $0x18] sm:$0xff]
        %v3784 = vld [vmem:[%s12 + $0x20] sm:$0xff]
        %v3785 = vld [vmem:[%s12 + $0x28] sm:$0xff]
        %v3786 = vld [vmem:[%s12 + $0x30] sm:$0xff]
        %v3787 = vld [vmem:[%s12 + $0x38] sm:$0xff]
        %v3788 = vld [vmem:[%s524] sm:$0xff]
        %v3789 = vld [vmem:[%s524 + $0x8] sm:$0xff]
        %v3790 = vld [vmem:[%s524 + $0x10] sm:$0xff]
        %v3791 = vld [vmem:[%s524 + $0x18] sm:$0xff]
        %v3792 = vld [vmem:[%s524 + $0x20] sm:$0xff]
        %v3793 = vld [vmem:[%s524 + $0x28] sm:$0xff]
        %v3794 = vld [vmem:[%s524 + $0x30] sm:$0xff]
        %v3795 = vld [vmem:[%s524 + $0x38] sm:$0xff]
        %v3796 = vld [vmem:[%s13] sm:$0xff]
        %v3797 = vld [vmem:[%s13 + $0x8] sm:$0xff]
        %v3798 = vld [vmem:[%s13 + $0x10] sm:$0xff]
        %v3799 = vld [vmem:[%s13 + $0x18] sm:$0xff]
        %v3800 = vld [vmem:[%s13 + $0x20] sm:$0xff]
        %v3801 = vld [vmem:[%s13 + $0x28] sm:$0xff]
        %v3802 = vld [vmem:[%s13 + $0x30] sm:$0xff]
        %v3803 = vld [vmem:[%s13 + $0x38] sm:$0xff]
        %3805 = vset.pattern.permute.xlu0 0
        %3806 = vperm.xlu0 %3805, %v3796
        %v3807 = vpop.permute.xlu0 %3806
        %3810 = vset.pattern.permute.xlu0 0
        %3811 = vperm.xlu0 %3810, %v3797
        %v3812 = vpop.permute.xlu0 %3811
        %3815 = vset.pattern.permute.xlu0 0
        %3816 = vperm.xlu0 %3815, %v3798
        %v3817 = vpop.permute.xlu0 %3816
        %3820 = vset.pattern.permute.xlu0 0
        %3821 = vperm.xlu0 %3820, %v3799
        %v3822 = vpop.permute.xlu0 %3821
        %3825 = vset.pattern.permute.xlu0 0
        %3826 = vperm.xlu0 %3825, %v3800
        %v3827 = vpop.permute.xlu0 %3826
        %3830 = vset.pattern.permute.xlu0 0
        %3831 = vperm.xlu0 %3830, %v3801
        %v3832 = vpop.permute.xlu0 %3831
        %3835 = vset.pattern.permute.xlu0 0
        %3836 = vperm.xlu0 %3835, %v3802
        %v3837 = vpop.permute.xlu0 %3836
        %3840 = vset.pattern.permute.xlu0 0
        %3841 = vperm.xlu0 %3840, %v3803
        %v3842 = vpop.permute.xlu0 %3841
        %v3845 = vsel %vm569, %v3780, 0
        %v3848 = vsel %vm569, %v3781, 0
        %v3851 = vsel %vm569, %v3782, 0
        %v3854 = vsel %vm569, %v3783, 0
        %v3857 = vsel %vm569, %v3784, 0
        %v3860 = vsel %vm569, %v3785, 0
        %v3863 = vsel %vm569, %v3786, 0
        %v3866 = vsel %vm569, %v3787, 0
        %3868 = vmatprep.subr.mxu0 0.0
        %3869 = vmatpush1.msra.mxu0 0.0
        %3870 = vmatprep.subr.mxu0 0.0
        %3871 = vmatpush1.msra.mxu0 0.0
        %3872 = vmatprep.subr.mxu0 0.0
        %3873 = vmatpush1.msra.mxu0 0.0
        %3874 = vmatprep.subr.mxu0 0.0
        %3875 = vmatpush1.msra.mxu0 0.0
        %3876 = vmatprep.subr.mxu0 0.0
        %3877 = vmatpush1.msra.mxu0 0.0
        %3878 = vmatprep.subr.mxu0 0.0
        %3879 = vmatpush1.msra.mxu0 0.0
        %3880 = vmatprep.subr.mxu0 0.0
        %3881 = vmatpush1.msra.mxu0 0.0
        %3882 = vmatprep.subr.mxu0 0.0
        %3883 = vmatpush1.msra.mxu0 0.0
        %3884 = vmatprep.subr.mxu0 0.0
        %3885 = vmatpush1.msra.mxu0 0.0
        %3886 = vmatprep.subr.mxu0 0.0
        %3887 = vmatpush1.msra.mxu0 0.0
        %3888 = vmatprep.subr.mxu0 0.0
        %3889 = vmatpush1.msra.mxu0 0.0
        %3890 = vmatprep.subr.mxu0 0.0
        %3891 = vmatpush1.msra.mxu0 0.0
        %3892 = vmatprep.subr.mxu0 %v3795
        %3893 = vmatpush1.msra.mxu0 %v3794
        %3894 = vmatprep.subr.mxu0 %v3793
        %3895 = vmatpush1.msra.mxu0 %v3792
        %3896 = vmatprep.subr.mxu0 %v3791
        %3897 = vmatpush1.msra.mxu0 %v3790
        %3898 = vmatprep.subr.mxu0 %v3789
        %3899 = vmatpush1.msra.mxu0 %v3788
        %3900 = vmatprep.subr.mxu0 0.0
        %3901 = vmatpush2.msra.mxu0 0.0
        %3902 = vmatprep.subr.mxu0 0.0
        %3903 = vmatpush2.msra.mxu0 0.0
        %3904 = vmatprep.subr.mxu0 0.0
        %3905 = vmatpush2.msra.mxu0 0.0
        %3906 = vmatprep.subr.mxu0 0.0
        %3907 = vmatpush2.msra.mxu0 0.0
        %3908 = vmatprep.subr.mxu0 0.0
        %3909 = vmatpush2.msra.mxu0 0.0
        %3910 = vmatprep.subr.mxu0 0.0
        %3911 = vmatpush2.msra.mxu0 0.0
        %3912 = vmatprep.subr.mxu0 0.0
        %3913 = vmatpush2.msra.mxu0 0.0
        %3914 = vmatprep.subr.mxu0 0.0
        %3915 = vmatpush2.msra.mxu0 0.0
        %3916 = vmatprep.subr.mxu0 0.0
        %3917 = vmatpush2.msra.mxu0 0.0
        %3918 = vmatprep.subr.mxu0 0.0
        %3919 = vmatpush2.msra.mxu0 0.0
        %3920 = vmatprep.subr.mxu0 0.0
        %3921 = vmatpush2.msra.mxu0 0.0
        %3922 = vmatprep.subr.mxu0 0.0
        %3923 = vmatpush2.msra.mxu0 0.0
        %3924 = vmatprep.subr.mxu0 0.0
        %3925 = vmatpush2.msra.mxu0 0.0
        %3926 = vmatprep.subr.mxu0 0.0
        %3927 = vmatpush2.msra.mxu0 0.0
        %3928 = vmatprep.subr.mxu0 0.0
        %3929 = vmatpush2.msra.mxu0 0.0
        %3930 = vmatprep.subr.mxu0 0.0
        %3931 = vmatpush2.msra.mxu0 0.0
        %3932 = vmatprep.mubr.f32.mxu0 0.0
        %3933 = vmatmul.mubr.f32.gmra.mxu0 %v3845
        %v3934 = vpop.f32.mrf.mxu0
        %v3935 = vadd.f32 %v3807, %v3934
        %v3936 = vpop.f32.mrf.mxu0
        %v3937 = vadd.f32 %v3807, %v3936
        %3938 = vmatprep.mubr.f32.mxu0 0.0
        %3939 = vmatmul.mubr.f32.gmra.mxu0 %v3848
        %v3940 = vpop.f32.mrf.mxu0
        %v3941 = vadd.f32 %v3812, %v3940
        %v3942 = vpop.f32.mrf.mxu0
        %v3943 = vadd.f32 %v3812, %v3942
        %3944 = vmatprep.mubr.f32.mxu0 0.0
        %3945 = vmatmul.mubr.f32.gmra.mxu0 %v3851
        %v3946 = vpop.f32.mrf.mxu0
        %v3947 = vadd.f32 %v3817, %v3946
        %v3948 = vpop.f32.mrf.mxu0
        %v3949 = vadd.f32 %v3817, %v3948
        %3950 = vmatprep.mubr.f32.mxu0 0.0
        %3951 = vmatmul.mubr.f32.gmra.mxu0 %v3854
        %v3952 = vpop.f32.mrf.mxu0
        %v3953 = vadd.f32 %v3822, %v3952
        %v3954 = vpop.f32.mrf.mxu0
        %v3955 = vadd.f32 %v3822, %v3954
        %3956 = vmatprep.mubr.f32.mxu0 0.0
        %3957 = vmatmul.mubr.f32.gmra.mxu0 %v3857
        %v3958 = vpop.f32.mrf.mxu0
        %v3959 = vadd.f32 %v3827, %v3958
        %v3960 = vpop.f32.mrf.mxu0
        %v3961 = vadd.f32 %v3827, %v3960
        %3962 = vmatprep.mubr.f32.mxu0 0.0
        %3963 = vmatmul.mubr.f32.gmra.mxu0 %v3860
        %v3964 = vpop.f32.mrf.mxu0
        %v3965 = vadd.f32 %v3832, %v3964
        %v3966 = vpop.f32.mrf.mxu0
        %v3967 = vadd.f32 %v3832, %v3966
        %3968 = vmatprep.mubr.f32.mxu0 0.0
        %3969 = vmatmul.mubr.f32.gmra.mxu0 %v3863
        %v3970 = vpop.f32.mrf.mxu0
        %v3971 = vadd.f32 %v3837, %v3970
        %v3972 = vpop.f32.mrf.mxu0
        %v3973 = vadd.f32 %v3837, %v3972
        %3974 = vmatprep.mubr.f32.mxu0 0.0
        %3975 = vmatmul.mubr.f32.gmra.mxu0 %v3866
        %v3976 = vpop.f32.mrf.mxu0
        %v3977 = vadd.f32 %v3842, %v3976
        %v3978 = vpop.f32.mrf.mxu0
        %v3979 = vadd.f32 %v3842, %v3978
        %3980 = vdwg.mxu0
        %v3981 = vadd.f32 %v3734, %v3935
        %v3982 = vadd.f32 %v3736, %v3937
        %v3983 = vadd.f32 %v3740, %v3941
        %v3984 = vadd.f32 %v3742, %v3943
        %v3985 = vadd.f32 %v3746, %v3947
        %v3986 = vadd.f32 %v3748, %v3949
        %v3987 = vadd.f32 %v3752, %v3953
        %v3988 = vadd.f32 %v3754, %v3955
        %v3989 = vadd.f32 %v3758, %v3959
        %v3990 = vadd.f32 %v3760, %v3961
        %v3991 = vadd.f32 %v3764, %v3965
        %v3992 = vadd.f32 %v3766, %v3967
        %v3993 = vadd.f32 %v3770, %v3971
        %v3994 = vadd.f32 %v3772, %v3973
        %v3995 = vadd.f32 %v3776, %v3977
        %v3996 = vadd.f32 %v3778, %v3979
        %3997 = vst [vmem:[%s519] sm:$0xff] %v3981
        %3998 = vst [vmem:[%s519 + $0x8] sm:$0xff] %v3982
        %3999 = vst [vmem:[%s519 + $0x10] sm:$0xff] %v3983
        %4000 = vst [vmem:[%s519 + $0x18] sm:$0xff] %v3984
        %4001 = vst [vmem:[%s519 + $0x20] sm:$0xff] %v3985
        %4002 = vst [vmem:[%s519 + $0x28] sm:$0xff] %v3986
        %4003 = vst [vmem:[%s519 + $0x30] sm:$0xff] %v3987
        %4004 = vst [vmem:[%s519 + $0x38] sm:$0xff] %v3988
        %4005 = vst [vmem:[%s519 + $0x40] sm:$0xff] %v3989
        %4006 = vst [vmem:[%s519 + $0x48] sm:$0xff] %v3990
        %4007 = vst [vmem:[%s519 + $0x50] sm:$0xff] %v3991
        %4008 = vst [vmem:[%s519 + $0x58] sm:$0xff] %v3992
        %4009 = vst [vmem:[%s519 + $0x60] sm:$0xff] %v3993
        %4010 = vst [vmem:[%s519 + $0x68] sm:$0xff] %v3994
        %4011 = vst [vmem:[%s519 + $0x70] sm:$0xff] %v3995
        %4012 = vst [vmem:[%s519 + $0x78] sm:$0xff] %v3996
        %s4013 = sand.u32 %s338, 1
        %s4014 = scalar_lea.sflag [#allocation5], %s4013
        %s4015 = sand.u32 %s338, 1
        %s4016 = smul.addr %s4015, 128
        %s4017 = scalar_lea.vmem [#allocation11], %s4016
        // Predicated region
        $region93: #{tpu_custom_call.1} parent=75 // pred_check
          %p4018 = pneg %p348
        $region94: #{tpu_custom_call.1} parent=75 // pred_check_branch
          %4020 = sbr.rel (%p4018) target = $region96
        $region95: #{tpu_custom_call.1} parent=75 // pred_region
          %s4022 = ssub.s32 2048, 2048
          %4023 = vsyncadd %s4014, %s4022
          %s4024 = smul.addr %s31, 16
          %s4025 = smul.addr %s4024, 128
          %s4026 = scalar_lea.hbm %s14, %s4025
          %s4027 = sshll.u32 %s4017, 4
          %s4028 = int_to_ptr.vmem [resolvable:$true] %s4027
          %4033 = dma.vmem_to_hbm [thread:$0]  %s4028, 2048, %s4026, %s4014, 256, 256, 16
        $region96: #{tpu_custom_call.1} parent=75 // pred_fallthru
          _
      $region76: #{tpu_custom_call.1} parent=5 // pred_fallthru
        _
      %p4034 = scmp.le.s32.totalorder 2, %s26
      // Predicated region
      $region97: #{tpu_custom_call.1} parent=5 // pred_check
        %p4035 = pneg %p4034
      $region98: #{tpu_custom_call.1} parent=5 // pred_check_branch
        %4037 = sbr.rel (%p4035) target = $region100
      $region99: #{tpu_custom_call.1} parent=5 // pred_region
        %s4038 = ssub.s32 %s26, 2
        // Predicated region
        $region101: #{tpu_custom_call.1} parent=99 // pred_check
          %p4039 = pneg %p354
        $region102: #{tpu_custom_call.1} parent=99 // pred_check_branch
          %4041 = sbr.rel (%p4039) target = $region104
        $region103: #{tpu_custom_call.1} parent=99 // pred_region
          %s4042 = sand.u32 %s339, 1
          %s4043 = scalar_lea.sflag [#allocation5], %s4042
          %s4044 = sand.u32 %s339, 1
          %s4045 = smul.addr %s4044, 128
          %s4046 = scalar_lea.vmem [#allocation11], %s4045
          %4047 = dma.done %s4043, 2048
        $region104: #{tpu_custom_call.1} parent=99 // pred_fallthru
          _
      $region100: #{tpu_custom_call.1} parent=5 // pred_fallthru
        _
    $region6: #{tpu_custom_call.1} parent=1 // loop_footer
      %s30 = sadd.s32 1, %s26
    $region7: #{tpu_custom_call.1} parent=1 // loop_footer_branch
      %25 = sbr.rel target = $region3
    $region8: #{tpu_custom_call.1} parent=1 // loop_exit
      _
    %4048 = vsyncpa [#allocation4], 1
    %s4049 = scalar_lea.sflag [#allocation4], 1
    %4050 = vsyncpa %s4049, 1
    %4051 = vsyncpa [#allocation7], 1
    %4052 = vsyncpa [#allocation10], 1
    %4053 = vsyncpa [#allocation5], 1
    %s4054 = scalar_lea.sflag [#allocation5], 1
    %4055 = vsyncpa %s4054, 1

</llo_original>
